<compile_context>
chip_gen: v7x
topology: tpu7x:2x2x1
jax: 0.10.0
libtpu: 0.0.40
codegen_flags: <defaults>
</compile_context>

<pallas_src>
import functools

import jax
import jax.numpy as jnp
from jax import lax
from jax.experimental import pallas as pl
from jax.experimental.pallas import tpu as pltpu


_SPLIT = 10.0        # lambda threshold between the two samplers
_NUM_TRIALS = 12     # PTRS rejection trials; P(all reject) <~ 0.15**12 ~ 1e-10 per element


# ----------------------------- in-kernel helpers -----------------------------

def _lgamma(x):
    """log Gamma(x) for x >= 1, shifted Stirling series.

    EUP-cheap version: the 8-term log correction is folded into 2 logs (two 4-term
    products avoid f32 overflow for large x), and the series uses one reciprocal.
    """
    z = x + 8.0
    inv_z = 1.0 / z
    s = ((z - 0.5) * jnp.log(z) - z + 0.9189385332046727
         + inv_z * (1.0 / 12.0 - inv_z * inv_z * (1.0 / 360.0)))
    corr = (jnp.log(x * (x + 1.0) * (x + 2.0) * (x + 3.0))
            + jnp.log((x + 4.0) * (x + 5.0) * (x + 6.0) * (x + 7.0)))
    return s - corr


def _poisson_small(lam, u):
    """Inverse-CDF Poisson sampler; valid for lam < 10 (truncated at k = 47).

    `u` is a uniform [0,1) array of lam's shape.  Pure VPU work + one exp.
    """
    p = jnp.exp(-lam)
    cdf = p
    k = jnp.zeros_like(lam)
    for j in range(1, 48):
        k = k + (u > cdf).astype(jnp.float32)
        p = p * (lam * (1.0 / j))        # compile-time reciprocal, no divide
        cdf = cdf + p
    return k


def _poisson_ptrs(lam, u_ref):
    """Hormann PTRS transformed-rejection sampler; valid for lam >= 10.

    `u_ref` holds 2*_NUM_TRIALS uniform [0,1) planes of lam's shape (u, v per trial).
    One reciprocal + one log + a 4-EUP-op lgamma per trial.
    """
    log_lam = jnp.log(lam)
    b = 0.931 + 2.53 * jnp.sqrt(lam)
    a = -0.059 + 0.02483 * b
    inv_alpha_h = 1.1239 + 1.1328 / (b - 3.4)
    v_r = 0.9277 - 3.6224 / (b - 2.0)

    k_out = jnp.floor(lam)                       # fallback (prob ~1e-10 per element)
    accepted = jnp.zeros(lam.shape, dtype=jnp.bool_)

    for t in range(_NUM_TRIALS):
        u = u_ref[2 * t] - 0.5
        v = u_ref[2 * t + 1]
        us = jnp.maximum(0.5 - jnp.abs(u), 1e-6)     # clamp away from 0 (no inf/NaN)
        inv_us = 1.0 / us                            # reuse the single reciprocal
        kf = jnp.floor((2.0 * a * inv_us + b) * u + lam + 0.43)

        quick_accept = (us >= 0.07) & (v <= v_r)
        quick_reject = (kf < 0.0) | ((us < 0.013) & (v > us))

        lhs = jnp.log(v * inv_alpha_h / (a * inv_us * inv_us + b))
        rhs = kf * log_lam - lam - _lgamma(kf + 1.0)
        acc = quick_accept | ((~quick_reject) & (lhs <= rhs))

        take = acc & (~accepted)
        k_out = jnp.where(take, kf, k_out)
        accepted = accepted | acc

    return k_out


# --------------------------------- kernel ------------------------------------

def _poisson_meas_kernel(x_ref, h_ref, u_ref, o_ref, *, alpha):
    # lam = relu( alpha/2 * (x + 1) @ H^T )
    xs = (x_ref[...].astype(jnp.float32) + 1.0) * (0.5 * alpha)
    lam = lax.dot_general(xs, h_ref[...].astype(jnp.float32),
                          (((1,), (1,)), ((), ())),
                          preferred_element_type=jnp.float32)
    lam = jnp.maximum(lam, 0.0)

    # Per-tile gating: only run the sampler path(s) actually needed (XLU reduce is cheap).
    lam_min = jnp.min(lam)
    lam_max = jnp.max(lam)

    @pl.when(lam_max < _SPLIT)
    def _():                                          # all low-flux: inverse CDF only
        o_ref[...] = _poisson_small(lam, u_ref[0])

    @pl.when(lam_min >= _SPLIT)
    def _():                                          # all high-flux: PTRS only
        o_ref[...] = _poisson_ptrs(lam, u_ref)

    @pl.when((lam_min < _SPLIT) & (lam_max >= _SPLIT))
    def _():                                          # mixed tile: both + select
        small = _poisson_small(jnp.minimum(lam, _SPLIT), u_ref[0])
        large = _poisson_ptrs(jnp.maximum(lam, _SPLIT), u_ref)
        o_ref[...] = jnp.where(lam < _SPLIT, small, large)


def poisson_measure(x, H, alpha, key):
    """x: (B, N), H: (M, N)  ->  (B, M) float32 Poisson counts."""
    B, N = x.shape
    M = H.shape[0]
    assert N % 128 == 0 and M % 128 == 0
    # Larger output tiles amortize per-step overhead; fall back to 128 otherwise.
    TM = 256 if M % 256 == 0 else 128

    # Uniform randoms drawn on the host side of the kernel (hardware PRNG primitives
    # are not available in interpret mode); 2 planes per PTRS trial, plane 0 doubles
    # as the small-path uniform.
    uniforms = jax.random.uniform(key, (2 * _NUM_TRIALS, B, M), jnp.float32)

    kernel = functools.partial(_poisson_meas_kernel, alpha=float(alpha))

    # TODO(synk): for production-sized B / N, add a batch grid axis (block x as (TB, N))
    # and stream H in bf16 to fit v7x's 64 MiB VMEM / v5e's HBM bandwidth.
    return pl.pallas_call(
        kernel,
        out_shape=jax.ShapeDtypeStruct((B, M), jnp.float32),
        grid=(M // TM,),
        in_specs=[
            pl.BlockSpec((B, N), lambda j: (0, 0)),                     # x: resident, DMA'd once
            pl.BlockSpec((TM, N), lambda j: (j, 0)),                    # H: one row tile
            pl.BlockSpec((2 * _NUM_TRIALS, B, TM), lambda j: (0, 0, j)),  # uniforms for the tile
        ],
        out_specs=pl.BlockSpec((B, TM), lambda j: (0, j)),
        compiler_params=pltpu.CompilerParams(
            dimension_semantics=("parallel",)),       # disjoint output tiles -> megacore-shardable
    )(x, H, uniforms)


# ---------------------------------- demo --------------------------------------

if __name__ == "__main__":
    key = jax.random.PRNGKey(0)
    kx, kh, kn = jax.random.split(key, 3)

    B, N, M = 8, 256, 256          # batch of 8 images of 16x16 pixels, 256 measurements
    alpha = 10.0                   # photon intensity

    x = jax.random.uniform(kx, (B, N), jnp.float32, minval=-1.0, maxval=1.0)
    H = jax.random.uniform(kh, (M, N), jnp.float32, minval=0.0, maxval=1.0)

    y = poisson_measure(x, H, alpha, kn)
    y = jax.block_until_ready(y)

    # Sanity checks: shape, nonnegative integer counts, sample mean close to lambda mean.
    lam_ref = jnp.maximum(alpha * 0.5 * (x + 1.0) @ H.T, 0.0)
    assert y.shape == (B, M)
    assert bool(jnp.all(jnp.isfinite(y)))
    assert bool(jnp.all(y >= 0.0))
    assert bool(jnp.all(y == jnp.round(y)))
    rel_err = abs(float(jnp.mean(y)) - float(jnp.mean(lam_ref))) / float(jnp.mean(lam_ref))
    assert rel_err < 0.05, f"Poisson sample mean off by {rel_err:.3%}"

    print("KERNEL_OK")
</pallas_src>

<mosaic_0001>
module attributes {stable_mosaic.version = 11 : i64} {
  func.func @_poisson_meas_kernel(%arg0: i32, %arg1: memref<8x256xf32, #tpu.memory_space<vmem>>, %arg2: memref<256x256xf32, #tpu.memory_space<vmem>>, %arg3: memref<24x8x256xf32, #tpu.memory_space<vmem>>, %arg4: memref<8x256xf32, #tpu.memory_space<vmem>>) attributes {dimension_semantics = [#tpu.dimension_semantics<parallel>], iteration_bounds = array<i64: 1>, scalar_prefetch = 0 : i64, scratch_operands = 0 : i64, tpu.core_type = #tpu.core_type<tc>, window_params = [{pipeline_mode = #tpu.pipeline_mode<synchronous>, transform_indices = @transform_0, window_bounds = array<i64: 8, 256>}, {transform_indices = @transform_1, window_bounds = array<i64: 256, 256>}, {transform_indices = @transform_2, window_bounds = array<i64: 24, 8, 256>}, {transform_indices = @transform_3, window_bounds = array<i64: 8, 256>}]} {
    %c0 = arith.constant 0 : index
    %c0_0 = arith.constant 0 : index
    %0 = vector.load %arg1[%c0, %c0_0] : memref<8x256xf32, #tpu.memory_space<vmem>>, vector<8x256xf32>
    %cst = arith.constant 1.000000e+00 : f32
    %1 = vector.broadcast %cst : f32 to vector<8x256xf32>
    %2 = arith.addf %0, %1 : vector<8x256xf32>
    %cst_1 = arith.constant 5.000000e+00 : f32
    %3 = vector.broadcast %cst_1 : f32 to vector<8x256xf32>
    %4 = arith.mulf %2, %3 : vector<8x256xf32>
    %c0_2 = arith.constant 0 : index
    %c0_3 = arith.constant 0 : index
    %5 = vector.load %arg2[%c0_2, %c0_3] : memref<256x256xf32, #tpu.memory_space<vmem>>, vector<256x256xf32>
    %cst_4 = arith.constant dense<0.000000e+00> : vector<8x256xf32>
    %6 = tpu.matmul %4, %5, %cst_4 {dimension_numbers = #tpu.dot_dimension_numbers<[1], [1], [0], [0], [0, 0, 1, 0], [], []>} : vector<8x256xf32>, vector<256x256xf32>, vector<8x256xf32> -> vector<8x256xf32>
    %cst_5 = arith.constant 0.000000e+00 : f32
    %7 = vector.broadcast %cst_5 : f32 to vector<8x256xf32>
    %8 = arith.maximumf %6, %7 : vector<8x256xf32>
    %9 = vector.shape_cast %8 : vector<8x256xf32> to vector<1x8x256xf32>
    %cst_6 = arith.constant dense<0x7F800000> : vector<1xf32>
    %10 = vector.multi_reduction <minimumf>, %9, %cst_6 [1, 2] : vector<1x8x256xf32> to vector<1xf32>
    %11 = vector.shape_cast %10 : vector<1xf32> to vector<1x1x1xf32>
    %12 = vector.extract %11[0, 0, 0] : f32 from vector<1x1x1xf32>
    %13 = vector.shape_cast %8 : vector<8x256xf32> to vector<1x8x256xf32>
    %cst_7 = arith.constant dense<0xFF800000> : vector<1xf32>
    %14 = vector.multi_reduction <maximumf>, %13, %cst_7 [1, 2] : vector<1x8x256xf32> to vector<1xf32>
    %15 = vector.shape_cast %14 : vector<1xf32> to vector<1x1x1xf32>
    %16 = vector.extract %15[0, 0, 0] : f32 from vector<1x1x1xf32>
    %cst_8 = arith.constant 1.000000e+01 : f32
    %17 = arith.cmpf olt, %16, %cst_8 : f32
    %18 = arith.extui %17 : i1 to i32
    %c0_i32 = arith.constant 0 : i32
    %19 = arith.cmpi ne, %18, %c0_i32 : i32
    scf.if %19 {
      %c0_14 = arith.constant 0 : index
      %c0_15 = arith.constant 0 : index
      %c0_16 = arith.constant 0 : index
      %28 = vector.load %arg3[%c0_14, %c0_15, %c0_16] : memref<24x8x256xf32, #tpu.memory_space<vmem>>, vector<1x8x256xf32>
      %29 = vector.shape_cast %28 : vector<1x8x256xf32> to vector<8x256xf32>
      %cst_17 = arith.constant 0.000000e+00 : f32
      %30 = vector.broadcast %cst_17 : f32 to vector<8x256xf32>
      %31 = arith.subf %30, %8 : vector<8x256xf32>
      %32 = math.exp %31 : vector<8x256xf32>
      %cst_18 = arith.constant 0.000000e+00 : f32
      %33 = vector.broadcast %cst_18 : f32 to vector<8x256xf32>
      %34 = arith.cmpf ogt, %29, %32 : vector<8x256xf32>
      %35 = arith.extui %34 : vector<8x256xi1> to vector<8x256xi32>
      %36 = arith.sitofp %35 : vector<8x256xi32> to vector<8x256xf32>
      %37 = arith.addf %33, %36 : vector<8x256xf32>
      %cst_19 = arith.constant 1.000000e+00 : f32
      %38 = vector.broadcast %cst_19 : f32 to vector<8x256xf32>
      %39 = arith.mulf %8, %38 : vector<8x256xf32>
      %40 = arith.mulf %32, %39 : vector<8x256xf32>
      %41 = arith.addf %32, %40 : vector<8x256xf32>
      %42 = arith.cmpf ogt, %29, %41 : vector<8x256xf32>
      %43 = arith.extui %42 : vector<8x256xi1> to vector<8x256xi32>
      %44 = arith.sitofp %43 : vector<8x256xi32> to vector<8x256xf32>
      %45 = arith.addf %37, %44 : vector<8x256xf32>
      %cst_20 = arith.constant 5.000000e-01 : f32
      %46 = vector.broadcast %cst_20 : f32 to vector<8x256xf32>
      %47 = arith.mulf %8, %46 : vector<8x256xf32>
      %48 = arith.mulf %40, %47 : vector<8x256xf32>
      %49 = arith.addf %41, %48 : vector<8x256xf32>
      %50 = arith.cmpf ogt, %29, %49 : vector<8x256xf32>
      %51 = arith.extui %50 : vector<8x256xi1> to vector<8x256xi32>
      %52 = arith.sitofp %51 : vector<8x256xi32> to vector<8x256xf32>
      %53 = arith.addf %45, %52 : vector<8x256xf32>
      %cst_21 = arith.constant 0.333333343 : f32
      %54 = vector.broadcast %cst_21 : f32 to vector<8x256xf32>
      %55 = arith.mulf %8, %54 : vector<8x256xf32>
      %56 = arith.mulf %48, %55 : vector<8x256xf32>
      %57 = arith.addf %49, %56 : vector<8x256xf32>
      %58 = arith.cmpf ogt, %29, %57 : vector<8x256xf32>
      %59 = arith.extui %58 : vector<8x256xi1> to vector<8x256xi32>
      %60 = arith.sitofp %59 : vector<8x256xi32> to vector<8x256xf32>
      %61 = arith.addf %53, %60 : vector<8x256xf32>
      %cst_22 = arith.constant 2.500000e-01 : f32
      %62 = vector.broadcast %cst_22 : f32 to vector<8x256xf32>
      %63 = arith.mulf %8, %62 : vector<8x256xf32>
      %64 = arith.mulf %56, %63 : vector<8x256xf32>
      %65 = arith.addf %57, %64 : vector<8x256xf32>
      %66 = arith.cmpf ogt, %29, %65 : vector<8x256xf32>
      %67 = arith.extui %66 : vector<8x256xi1> to vector<8x256xi32>
      %68 = arith.sitofp %67 : vector<8x256xi32> to vector<8x256xf32>
      %69 = arith.addf %61, %68 : vector<8x256xf32>
      %cst_23 = arith.constant 2.000000e-01 : f32
      %70 = vector.broadcast %cst_23 : f32 to vector<8x256xf32>
      %71 = arith.mulf %8, %70 : vector<8x256xf32>
      %72 = arith.mulf %64, %71 : vector<8x256xf32>
      %73 = arith.addf %65, %72 : vector<8x256xf32>
      %74 = arith.cmpf ogt, %29, %73 : vector<8x256xf32>
      %75 = arith.extui %74 : vector<8x256xi1> to vector<8x256xi32>
      %76 = arith.sitofp %75 : vector<8x256xi32> to vector<8x256xf32>
      %77 = arith.addf %69, %76 : vector<8x256xf32>
      %cst_24 = arith.constant 0.166666672 : f32
      %78 = vector.broadcast %cst_24 : f32 to vector<8x256xf32>
      %79 = arith.mulf %8, %78 : vector<8x256xf32>
      %80 = arith.mulf %72, %79 : vector<8x256xf32>
      %81 = arith.addf %73, %80 : vector<8x256xf32>
      %82 = arith.cmpf ogt, %29, %81 : vector<8x256xf32>
      %83 = arith.extui %82 : vector<8x256xi1> to vector<8x256xi32>
      %84 = arith.sitofp %83 : vector<8x256xi32> to vector<8x256xf32>
      %85 = arith.addf %77, %84 : vector<8x256xf32>
      %cst_25 = arith.constant 0.142857149 : f32
      %86 = vector.broadcast %cst_25 : f32 to vector<8x256xf32>
      %87 = arith.mulf %8, %86 : vector<8x256xf32>
      %88 = arith.mulf %80, %87 : vector<8x256xf32>
      %89 = arith.addf %81, %88 : vector<8x256xf32>
      %90 = arith.cmpf ogt, %29, %89 : vector<8x256xf32>
      %91 = arith.extui %90 : vector<8x256xi1> to vector<8x256xi32>
      %92 = arith.sitofp %91 : vector<8x256xi32> to vector<8x256xf32>
      %93 = arith.addf %85, %92 : vector<8x256xf32>
      %cst_26 = arith.constant 1.250000e-01 : f32
      %94 = vector.broadcast %cst_26 : f32 to vector<8x256xf32>
      %95 = arith.mulf %8, %94 : vector<8x256xf32>
      %96 = arith.mulf %88, %95 : vector<8x256xf32>
      %97 = arith.addf %89, %96 : vector<8x256xf32>
      %98 = arith.cmpf ogt, %29, %97 : vector<8x256xf32>
      %99 = arith.extui %98 : vector<8x256xi1> to vector<8x256xi32>
      %100 = arith.sitofp %99 : vector<8x256xi32> to vector<8x256xf32>
      %101 = arith.addf %93, %100 : vector<8x256xf32>
      %cst_27 = arith.constant 0.111111112 : f32
      %102 = vector.broadcast %cst_27 : f32 to vector<8x256xf32>
      %103 = arith.mulf %8, %102 : vector<8x256xf32>
      %104 = arith.mulf %96, %103 : vector<8x256xf32>
      %105 = arith.addf %97, %104 : vector<8x256xf32>
      %106 = arith.cmpf ogt, %29, %105 : vector<8x256xf32>
      %107 = arith.extui %106 : vector<8x256xi1> to vector<8x256xi32>
      %108 = arith.sitofp %107 : vector<8x256xi32> to vector<8x256xf32>
      %109 = arith.addf %101, %108 : vector<8x256xf32>
      %cst_28 = arith.constant 1.000000e-01 : f32
      %110 = vector.broadcast %cst_28 : f32 to vector<8x256xf32>
      %111 = arith.mulf %8, %110 : vector<8x256xf32>
      %112 = arith.mulf %104, %111 : vector<8x256xf32>
      %113 = arith.addf %105, %112 : vector<8x256xf32>
      %114 = arith.cmpf ogt, %29, %113 : vector<8x256xf32>
      %115 = arith.extui %114 : vector<8x256xi1> to vector<8x256xi32>
      %116 = arith.sitofp %115 : vector<8x256xi32> to vector<8x256xf32>
      %117 = arith.addf %109, %116 : vector<8x256xf32>
      %cst_29 = arith.constant 0.0909090936 : f32
      %118 = vector.broadcast %cst_29 : f32 to vector<8x256xf32>
      %119 = arith.mulf %8, %118 : vector<8x256xf32>
      %120 = arith.mulf %112, %119 : vector<8x256xf32>
      %121 = arith.addf %113, %120 : vector<8x256xf32>
      %122 = arith.cmpf ogt, %29, %121 : vector<8x256xf32>
      %123 = arith.extui %122 : vector<8x256xi1> to vector<8x256xi32>
      %124 = arith.sitofp %123 : vector<8x256xi32> to vector<8x256xf32>
      %125 = arith.addf %117, %124 : vector<8x256xf32>
      %cst_30 = arith.constant 0.0833333358 : f32
      %126 = vector.broadcast %cst_30 : f32 to vector<8x256xf32>
      %127 = arith.mulf %8, %126 : vector<8x256xf32>
      %128 = arith.mulf %120, %127 : vector<8x256xf32>
      %129 = arith.addf %121, %128 : vector<8x256xf32>
      %130 = arith.cmpf ogt, %29, %129 : vector<8x256xf32>
      %131 = arith.extui %130 : vector<8x256xi1> to vector<8x256xi32>
      %132 = arith.sitofp %131 : vector<8x256xi32> to vector<8x256xf32>
      %133 = arith.addf %125, %132 : vector<8x256xf32>
      %cst_31 = arith.constant 0.0769230798 : f32
      %134 = vector.broadcast %cst_31 : f32 to vector<8x256xf32>
      %135 = arith.mulf %8, %134 : vector<8x256xf32>
      %136 = arith.mulf %128, %135 : vector<8x256xf32>
      %137 = arith.addf %129, %136 : vector<8x256xf32>
      %138 = arith.cmpf ogt, %29, %137 : vector<8x256xf32>
      %139 = arith.extui %138 : vector<8x256xi1> to vector<8x256xi32>
      %140 = arith.sitofp %139 : vector<8x256xi32> to vector<8x256xf32>
      %141 = arith.addf %133, %140 : vector<8x256xf32>
      %cst_32 = arith.constant 0.0714285746 : f32
      %142 = vector.broadcast %cst_32 : f32 to vector<8x256xf32>
      %143 = arith.mulf %8, %142 : vector<8x256xf32>
      %144 = arith.mulf %136, %143 : vector<8x256xf32>
      %145 = arith.addf %137, %144 : vector<8x256xf32>
      %146 = arith.cmpf ogt, %29, %145 : vector<8x256xf32>
      %147 = arith.extui %146 : vector<8x256xi1> to vector<8x256xi32>
      %148 = arith.sitofp %147 : vector<8x256xi32> to vector<8x256xf32>
      %149 = arith.addf %141, %148 : vector<8x256xf32>
      %cst_33 = arith.constant 0.0666666701 : f32
      %150 = vector.broadcast %cst_33 : f32 to vector<8x256xf32>
      %151 = arith.mulf %8, %150 : vector<8x256xf32>
      %152 = arith.mulf %144, %151 : vector<8x256xf32>
      %153 = arith.addf %145, %152 : vector<8x256xf32>
      %154 = arith.cmpf ogt, %29, %153 : vector<8x256xf32>
      %155 = arith.extui %154 : vector<8x256xi1> to vector<8x256xi32>
      %156 = arith.sitofp %155 : vector<8x256xi32> to vector<8x256xf32>
      %157 = arith.addf %149, %156 : vector<8x256xf32>
      %cst_34 = arith.constant 6.250000e-02 : f32
      %158 = vector.broadcast %cst_34 : f32 to vector<8x256xf32>
      %159 = arith.mulf %8, %158 : vector<8x256xf32>
      %160 = arith.mulf %152, %159 : vector<8x256xf32>
      %161 = arith.addf %153, %160 : vector<8x256xf32>
      %162 = arith.cmpf ogt, %29, %161 : vector<8x256xf32>
      %163 = arith.extui %162 : vector<8x256xi1> to vector<8x256xi32>
      %164 = arith.sitofp %163 : vector<8x256xi32> to vector<8x256xf32>
      %165 = arith.addf %157, %164 : vector<8x256xf32>
      %cst_35 = arith.constant 0.0588235296 : f32
      %166 = vector.broadcast %cst_35 : f32 to vector<8x256xf32>
      %167 = arith.mulf %8, %166 : vector<8x256xf32>
      %168 = arith.mulf %160, %167 : vector<8x256xf32>
      %169 = arith.addf %161, %168 : vector<8x256xf32>
      %170 = arith.cmpf ogt, %29, %169 : vector<8x256xf32>
      %171 = arith.extui %170 : vector<8x256xi1> to vector<8x256xi32>
      %172 = arith.sitofp %171 : vector<8x256xi32> to vector<8x256xf32>
      %173 = arith.addf %165, %172 : vector<8x256xf32>
      %cst_36 = arith.constant 0.055555556 : f32
      %174 = vector.broadcast %cst_36 : f32 to vector<8x256xf32>
      %175 = arith.mulf %8, %174 : vector<8x256xf32>
      %176 = arith.mulf %168, %175 : vector<8x256xf32>
      %177 = arith.addf %169, %176 : vector<8x256xf32>
      %178 = arith.cmpf ogt, %29, %177 : vector<8x256xf32>
      %179 = arith.extui %178 : vector<8x256xi1> to vector<8x256xi32>
      %180 = arith.sitofp %179 : vector<8x256xi32> to vector<8x256xf32>
      %181 = arith.addf %173, %180 : vector<8x256xf32>
      %cst_37 = arith.constant 0.0526315793 : f32
      %182 = vector.broadcast %cst_37 : f32 to vector<8x256xf32>
      %183 = arith.mulf %8, %182 : vector<8x256xf32>
      %184 = arith.mulf %176, %183 : vector<8x256xf32>
      %185 = arith.addf %177, %184 : vector<8x256xf32>
      %186 = arith.cmpf ogt, %29, %185 : vector<8x256xf32>
      %187 = arith.extui %186 : vector<8x256xi1> to vector<8x256xi32>
      %188 = arith.sitofp %187 : vector<8x256xi32> to vector<8x256xf32>
      %189 = arith.addf %181, %188 : vector<8x256xf32>
      %cst_38 = arith.constant 5.000000e-02 : f32
      %190 = vector.broadcast %cst_38 : f32 to vector<8x256xf32>
      %191 = arith.mulf %8, %190 : vector<8x256xf32>
      %192 = arith.mulf %184, %191 : vector<8x256xf32>
      %193 = arith.addf %185, %192 : vector<8x256xf32>
      %194 = arith.cmpf ogt, %29, %193 : vector<8x256xf32>
      %195 = arith.extui %194 : vector<8x256xi1> to vector<8x256xi32>
      %196 = arith.sitofp %195 : vector<8x256xi32> to vector<8x256xf32>
      %197 = arith.addf %189, %196 : vector<8x256xf32>
      %cst_39 = arith.constant 0.0476190485 : f32
      %198 = vector.broadcast %cst_39 : f32 to vector<8x256xf32>
      %199 = arith.mulf %8, %198 : vector<8x256xf32>
      %200 = arith.mulf %192, %199 : vector<8x256xf32>
      %201 = arith.addf %193, %200 : vector<8x256xf32>
      %202 = arith.cmpf ogt, %29, %201 : vector<8x256xf32>
      %203 = arith.extui %202 : vector<8x256xi1> to vector<8x256xi32>
      %204 = arith.sitofp %203 : vector<8x256xi32> to vector<8x256xf32>
      %205 = arith.addf %197, %204 : vector<8x256xf32>
      %cst_40 = arith.constant 0.0454545468 : f32
      %206 = vector.broadcast %cst_40 : f32 to vector<8x256xf32>
      %207 = arith.mulf %8, %206 : vector<8x256xf32>
      %208 = arith.mulf %200, %207 : vector<8x256xf32>
      %209 = arith.addf %201, %208 : vector<8x256xf32>
      %210 = arith.cmpf ogt, %29, %209 : vector<8x256xf32>
      %211 = arith.extui %210 : vector<8x256xi1> to vector<8x256xi32>
      %212 = arith.sitofp %211 : vector<8x256xi32> to vector<8x256xf32>
      %213 = arith.addf %205, %212 : vector<8x256xf32>
      %cst_41 = arith.constant 0.0434782617 : f32
      %214 = vector.broadcast %cst_41 : f32 to vector<8x256xf32>
      %215 = arith.mulf %8, %214 : vector<8x256xf32>
      %216 = arith.mulf %208, %215 : vector<8x256xf32>
      %217 = arith.addf %209, %216 : vector<8x256xf32>
      %218 = arith.cmpf ogt, %29, %217 : vector<8x256xf32>
      %219 = arith.extui %218 : vector<8x256xi1> to vector<8x256xi32>
      %220 = arith.sitofp %219 : vector<8x256xi32> to vector<8x256xf32>
      %221 = arith.addf %213, %220 : vector<8x256xf32>
      %cst_42 = arith.constant 0.0416666679 : f32
      %222 = vector.broadcast %cst_42 : f32 to vector<8x256xf32>
      %223 = arith.mulf %8, %222 : vector<8x256xf32>
      %224 = arith.mulf %216, %223 : vector<8x256xf32>
      %225 = arith.addf %217, %224 : vector<8x256xf32>
      %226 = arith.cmpf ogt, %29, %225 : vector<8x256xf32>
      %227 = arith.extui %226 : vector<8x256xi1> to vector<8x256xi32>
      %228 = arith.sitofp %227 : vector<8x256xi32> to vector<8x256xf32>
      %229 = arith.addf %221, %228 : vector<8x256xf32>
      %cst_43 = arith.constant 4.000000e-02 : f32
      %230 = vector.broadcast %cst_43 : f32 to vector<8x256xf32>
      %231 = arith.mulf %8, %230 : vector<8x256xf32>
      %232 = arith.mulf %224, %231 : vector<8x256xf32>
      %233 = arith.addf %225, %232 : vector<8x256xf32>
      %234 = arith.cmpf ogt, %29, %233 : vector<8x256xf32>
      %235 = arith.extui %234 : vector<8x256xi1> to vector<8x256xi32>
      %236 = arith.sitofp %235 : vector<8x256xi32> to vector<8x256xf32>
      %237 = arith.addf %229, %236 : vector<8x256xf32>
      %cst_44 = arith.constant 0.0384615399 : f32
      %238 = vector.broadcast %cst_44 : f32 to vector<8x256xf32>
      %239 = arith.mulf %8, %238 : vector<8x256xf32>
      %240 = arith.mulf %232, %239 : vector<8x256xf32>
      %241 = arith.addf %233, %240 : vector<8x256xf32>
      %242 = arith.cmpf ogt, %29, %241 : vector<8x256xf32>
      %243 = arith.extui %242 : vector<8x256xi1> to vector<8x256xi32>
      %244 = arith.sitofp %243 : vector<8x256xi32> to vector<8x256xf32>
      %245 = arith.addf %237, %244 : vector<8x256xf32>
      %cst_45 = arith.constant 0.0370370373 : f32
      %246 = vector.broadcast %cst_45 : f32 to vector<8x256xf32>
      %247 = arith.mulf %8, %246 : vector<8x256xf32>
      %248 = arith.mulf %240, %247 : vector<8x256xf32>
      %249 = arith.addf %241, %248 : vector<8x256xf32>
      %250 = arith.cmpf ogt, %29, %249 : vector<8x256xf32>
      %251 = arith.extui %250 : vector<8x256xi1> to vector<8x256xi32>
      %252 = arith.sitofp %251 : vector<8x256xi32> to vector<8x256xf32>
      %253 = arith.addf %245, %252 : vector<8x256xf32>
      %cst_46 = arith.constant 0.0357142873 : f32
      %254 = vector.broadcast %cst_46 : f32 to vector<8x256xf32>
      %255 = arith.mulf %8, %254 : vector<8x256xf32>
      %256 = arith.mulf %248, %255 : vector<8x256xf32>
      %257 = arith.addf %249, %256 : vector<8x256xf32>
      %258 = arith.cmpf ogt, %29, %257 : vector<8x256xf32>
      %259 = arith.extui %258 : vector<8x256xi1> to vector<8x256xi32>
      %260 = arith.sitofp %259 : vector<8x256xi32> to vector<8x256xf32>
      %261 = arith.addf %253, %260 : vector<8x256xf32>
      %cst_47 = arith.constant 0.0344827585 : f32
      %262 = vector.broadcast %cst_47 : f32 to vector<8x256xf32>
      %263 = arith.mulf %8, %262 : vector<8x256xf32>
      %264 = arith.mulf %256, %263 : vector<8x256xf32>
      %265 = arith.addf %257, %264 : vector<8x256xf32>
      %266 = arith.cmpf ogt, %29, %265 : vector<8x256xf32>
      %267 = arith.extui %266 : vector<8x256xi1> to vector<8x256xi32>
      %268 = arith.sitofp %267 : vector<8x256xi32> to vector<8x256xf32>
      %269 = arith.addf %261, %268 : vector<8x256xf32>
      %cst_48 = arith.constant 0.0333333351 : f32
      %270 = vector.broadcast %cst_48 : f32 to vector<8x256xf32>
      %271 = arith.mulf %8, %270 : vector<8x256xf32>
      %272 = arith.mulf %264, %271 : vector<8x256xf32>
      %273 = arith.addf %265, %272 : vector<8x256xf32>
      %274 = arith.cmpf ogt, %29, %273 : vector<8x256xf32>
      %275 = arith.extui %274 : vector<8x256xi1> to vector<8x256xi32>
      %276 = arith.sitofp %275 : vector<8x256xi32> to vector<8x256xf32>
      %277 = arith.addf %269, %276 : vector<8x256xf32>
      %cst_49 = arith.constant 0.0322580636 : f32
      %278 = vector.broadcast %cst_49 : f32 to vector<8x256xf32>
      %279 = arith.mulf %8, %278 : vector<8x256xf32>
      %280 = arith.mulf %272, %279 : vector<8x256xf32>
      %281 = arith.addf %273, %280 : vector<8x256xf32>
      %282 = arith.cmpf ogt, %29, %281 : vector<8x256xf32>
      %283 = arith.extui %282 : vector<8x256xi1> to vector<8x256xi32>
      %284 = arith.sitofp %283 : vector<8x256xi32> to vector<8x256xf32>
      %285 = arith.addf %277, %284 : vector<8x256xf32>
      %cst_50 = arith.constant 3.125000e-02 : f32
      %286 = vector.broadcast %cst_50 : f32 to vector<8x256xf32>
      %287 = arith.mulf %8, %286 : vector<8x256xf32>
      %288 = arith.mulf %280, %287 : vector<8x256xf32>
      %289 = arith.addf %281, %288 : vector<8x256xf32>
      %290 = arith.cmpf ogt, %29, %289 : vector<8x256xf32>
      %291 = arith.extui %290 : vector<8x256xi1> to vector<8x256xi32>
      %292 = arith.sitofp %291 : vector<8x256xi32> to vector<8x256xf32>
      %293 = arith.addf %285, %292 : vector<8x256xf32>
      %cst_51 = arith.constant 0.0303030312 : f32
      %294 = vector.broadcast %cst_51 : f32 to vector<8x256xf32>
      %295 = arith.mulf %8, %294 : vector<8x256xf32>
      %296 = arith.mulf %288, %295 : vector<8x256xf32>
      %297 = arith.addf %289, %296 : vector<8x256xf32>
      %298 = arith.cmpf ogt, %29, %297 : vector<8x256xf32>
      %299 = arith.extui %298 : vector<8x256xi1> to vector<8x256xi32>
      %300 = arith.sitofp %299 : vector<8x256xi32> to vector<8x256xf32>
      %301 = arith.addf %293, %300 : vector<8x256xf32>
      %cst_52 = arith.constant 0.0294117648 : f32
      %302 = vector.broadcast %cst_52 : f32 to vector<8x256xf32>
      %303 = arith.mulf %8, %302 : vector<8x256xf32>
      %304 = arith.mulf %296, %303 : vector<8x256xf32>
      %305 = arith.addf %297, %304 : vector<8x256xf32>
      %306 = arith.cmpf ogt, %29, %305 : vector<8x256xf32>
      %307 = arith.extui %306 : vector<8x256xi1> to vector<8x256xi32>
      %308 = arith.sitofp %307 : vector<8x256xi32> to vector<8x256xf32>
      %309 = arith.addf %301, %308 : vector<8x256xf32>
      %cst_53 = arith.constant 0.0285714287 : f32
      %310 = vector.broadcast %cst_53 : f32 to vector<8x256xf32>
      %311 = arith.mulf %8, %310 : vector<8x256xf32>
      %312 = arith.mulf %304, %311 : vector<8x256xf32>
      %313 = arith.addf %305, %312 : vector<8x256xf32>
      %314 = arith.cmpf ogt, %29, %313 : vector<8x256xf32>
      %315 = arith.extui %314 : vector<8x256xi1> to vector<8x256xi32>
      %316 = arith.sitofp %315 : vector<8x256xi32> to vector<8x256xf32>
      %317 = arith.addf %309, %316 : vector<8x256xf32>
      %cst_54 = arith.constant 0.027777778 : f32
      %318 = vector.broadcast %cst_54 : f32 to vector<8x256xf32>
      %319 = arith.mulf %8, %318 : vector<8x256xf32>
      %320 = arith.mulf %312, %319 : vector<8x256xf32>
      %321 = arith.addf %313, %320 : vector<8x256xf32>
      %322 = arith.cmpf ogt, %29, %321 : vector<8x256xf32>
      %323 = arith.extui %322 : vector<8x256xi1> to vector<8x256xi32>
      %324 = arith.sitofp %323 : vector<8x256xi32> to vector<8x256xf32>
      %325 = arith.addf %317, %324 : vector<8x256xf32>
      %cst_55 = arith.constant 0.0270270277 : f32
      %326 = vector.broadcast %cst_55 : f32 to vector<8x256xf32>
      %327 = arith.mulf %8, %326 : vector<8x256xf32>
      %328 = arith.mulf %320, %327 : vector<8x256xf32>
      %329 = arith.addf %321, %328 : vector<8x256xf32>
      %330 = arith.cmpf ogt, %29, %329 : vector<8x256xf32>
      %331 = arith.extui %330 : vector<8x256xi1> to vector<8x256xi32>
      %332 = arith.sitofp %331 : vector<8x256xi32> to vector<8x256xf32>
      %333 = arith.addf %325, %332 : vector<8x256xf32>
      %cst_56 = arith.constant 0.0263157897 : f32
      %334 = vector.broadcast %cst_56 : f32 to vector<8x256xf32>
      %335 = arith.mulf %8, %334 : vector<8x256xf32>
      %336 = arith.mulf %328, %335 : vector<8x256xf32>
      %337 = arith.addf %329, %336 : vector<8x256xf32>
      %338 = arith.cmpf ogt, %29, %337 : vector<8x256xf32>
      %339 = arith.extui %338 : vector<8x256xi1> to vector<8x256xi32>
      %340 = arith.sitofp %339 : vector<8x256xi32> to vector<8x256xf32>
      %341 = arith.addf %333, %340 : vector<8x256xf32>
      %cst_57 = arith.constant 0.025641026 : f32
      %342 = vector.broadcast %cst_57 : f32 to vector<8x256xf32>
      %343 = arith.mulf %8, %342 : vector<8x256xf32>
      %344 = arith.mulf %336, %343 : vector<8x256xf32>
      %345 = arith.addf %337, %344 : vector<8x256xf32>
      %346 = arith.cmpf ogt, %29, %345 : vector<8x256xf32>
      %347 = arith.extui %346 : vector<8x256xi1> to vector<8x256xi32>
      %348 = arith.sitofp %347 : vector<8x256xi32> to vector<8x256xf32>
      %349 = arith.addf %341, %348 : vector<8x256xf32>
      %cst_58 = arith.constant 2.500000e-02 : f32
      %350 = vector.broadcast %cst_58 : f32 to vector<8x256xf32>
      %351 = arith.mulf %8, %350 : vector<8x256xf32>
      %352 = arith.mulf %344, %351 : vector<8x256xf32>
      %353 = arith.addf %345, %352 : vector<8x256xf32>
      %354 = arith.cmpf ogt, %29, %353 : vector<8x256xf32>
      %355 = arith.extui %354 : vector<8x256xi1> to vector<8x256xi32>
      %356 = arith.sitofp %355 : vector<8x256xi32> to vector<8x256xf32>
      %357 = arith.addf %349, %356 : vector<8x256xf32>
      %cst_59 = arith.constant 0.024390243 : f32
      %358 = vector.broadcast %cst_59 : f32 to vector<8x256xf32>
      %359 = arith.mulf %8, %358 : vector<8x256xf32>
      %360 = arith.mulf %352, %359 : vector<8x256xf32>
      %361 = arith.addf %353, %360 : vector<8x256xf32>
      %362 = arith.cmpf ogt, %29, %361 : vector<8x256xf32>
      %363 = arith.extui %362 : vector<8x256xi1> to vector<8x256xi32>
      %364 = arith.sitofp %363 : vector<8x256xi32> to vector<8x256xf32>
      %365 = arith.addf %357, %364 : vector<8x256xf32>
      %cst_60 = arith.constant 0.0238095243 : f32
      %366 = vector.broadcast %cst_60 : f32 to vector<8x256xf32>
      %367 = arith.mulf %8, %366 : vector<8x256xf32>
      %368 = arith.mulf %360, %367 : vector<8x256xf32>
      %369 = arith.addf %361, %368 : vector<8x256xf32>
      %370 = arith.cmpf ogt, %29, %369 : vector<8x256xf32>
      %371 = arith.extui %370 : vector<8x256xi1> to vector<8x256xi32>
      %372 = arith.sitofp %371 : vector<8x256xi32> to vector<8x256xf32>
      %373 = arith.addf %365, %372 : vector<8x256xf32>
      %cst_61 = arith.constant 0.0232558139 : f32
      %374 = vector.broadcast %cst_61 : f32 to vector<8x256xf32>
      %375 = arith.mulf %8, %374 : vector<8x256xf32>
      %376 = arith.mulf %368, %375 : vector<8x256xf32>
      %377 = arith.addf %369, %376 : vector<8x256xf32>
      %378 = arith.cmpf ogt, %29, %377 : vector<8x256xf32>
      %379 = arith.extui %378 : vector<8x256xi1> to vector<8x256xi32>
      %380 = arith.sitofp %379 : vector<8x256xi32> to vector<8x256xf32>
      %381 = arith.addf %373, %380 : vector<8x256xf32>
      %cst_62 = arith.constant 0.0227272734 : f32
      %382 = vector.broadcast %cst_62 : f32 to vector<8x256xf32>
      %383 = arith.mulf %8, %382 : vector<8x256xf32>
      %384 = arith.mulf %376, %383 : vector<8x256xf32>
      %385 = arith.addf %377, %384 : vector<8x256xf32>
      %386 = arith.cmpf ogt, %29, %385 : vector<8x256xf32>
      %387 = arith.extui %386 : vector<8x256xi1> to vector<8x256xi32>
      %388 = arith.sitofp %387 : vector<8x256xi32> to vector<8x256xf32>
      %389 = arith.addf %381, %388 : vector<8x256xf32>
      %cst_63 = arith.constant 0.0222222228 : f32
      %390 = vector.broadcast %cst_63 : f32 to vector<8x256xf32>
      %391 = arith.mulf %8, %390 : vector<8x256xf32>
      %392 = arith.mulf %384, %391 : vector<8x256xf32>
      %393 = arith.addf %385, %392 : vector<8x256xf32>
      %394 = arith.cmpf ogt, %29, %393 : vector<8x256xf32>
      %395 = arith.extui %394 : vector<8x256xi1> to vector<8x256xi32>
      %396 = arith.sitofp %395 : vector<8x256xi32> to vector<8x256xf32>
      %397 = arith.addf %389, %396 : vector<8x256xf32>
      %cst_64 = arith.constant 0.0217391308 : f32
      %398 = vector.broadcast %cst_64 : f32 to vector<8x256xf32>
      %399 = arith.mulf %8, %398 : vector<8x256xf32>
      %400 = arith.mulf %392, %399 : vector<8x256xf32>
      %401 = arith.addf %393, %400 : vector<8x256xf32>
      %402 = arith.cmpf ogt, %29, %401 : vector<8x256xf32>
      %403 = arith.extui %402 : vector<8x256xi1> to vector<8x256xi32>
      %404 = arith.sitofp %403 : vector<8x256xi32> to vector<8x256xf32>
      %405 = arith.addf %397, %404 : vector<8x256xf32>
      %c0_65 = arith.constant 0 : index
      %c0_66 = arith.constant 0 : index
      %406 = vector.load %arg4[%c0_65, %c0_66] : memref<8x256xf32, #tpu.memory_space<vmem>>, vector<8x256xf32>
      tpu.vector_store %arg4[%c0_65, %c0_66], %405 {strides = array<i32>} : memref<8x256xf32, #tpu.memory_space<vmem>>, vector<8x256xf32>,
    } else {
    }
    %cst_9 = arith.constant 1.000000e+01 : f32
    %20 = arith.cmpf oge, %12, %cst_9 : f32
    %21 = arith.extui %20 : i1 to i32
    %c0_i32_10 = arith.constant 0 : i32
    %22 = arith.cmpi ne, %21, %c0_i32_10 : i32
    scf.if %22 {
      %28 = math.log %8 : vector<8x256xf32>
      %29 = math.sqrt %8 : vector<8x256xf32>
      %cst_14 = arith.constant 2.530000e+00 : f32
      %30 = vector.broadcast %cst_14 : f32 to vector<8x256xf32>
      %31 = arith.mulf %30, %29 : vector<8x256xf32>
      %cst_15 = arith.constant 9.310000e-01 : f32
      %32 = vector.broadcast %cst_15 : f32 to vector<8x256xf32>
      %33 = arith.addf %32, %31 : vector<8x256xf32>
      %cst_16 = arith.constant 2.483000e-02 : f32
      %34 = vector.broadcast %cst_16 : f32 to vector<8x256xf32>
      %35 = arith.mulf %34, %33 : vector<8x256xf32>
      %cst_17 = arith.constant -5.900000e-02 : f32
      %36 = vector.broadcast %cst_17 : f32 to vector<8x256xf32>
      %37 = arith.addf %36, %35 : vector<8x256xf32>
      %cst_18 = arith.constant 3.400000e+00 : f32
      %38 = vector.broadcast %cst_18 : f32 to vector<8x256xf32>
      %39 = arith.subf %33, %38 : vector<8x256xf32>
      %cst_19 = arith.constant 1.132800e+00 : f32
      %40 = vector.broadcast %cst_19 : f32 to vector<8x256xf32>
      %41 = arith.divf %40, %39 : vector<8x256xf32>
      %cst_20 = arith.constant 1.123900e+00 : f32
      %42 = vector.broadcast %cst_20 : f32 to vector<8x256xf32>
      %43 = arith.addf %42, %41 : vector<8x256xf32>
      %cst_21 = arith.constant 2.000000e+00 : f32
      %44 = vector.broadcast %cst_21 : f32 to vector<8x256xf32>
      %45 = arith.subf %33, %44 : vector<8x256xf32>
      %cst_22 = arith.constant 3.622400e+00 : f32
      %46 = vector.broadcast %cst_22 : f32 to vector<8x256xf32>
      %47 = arith.divf %46, %45 : vector<8x256xf32>
      %cst_23 = arith.constant 0.927699983 : f32
      %48 = vector.broadcast %cst_23 : f32 to vector<8x256xf32>
      %49 = arith.subf %48, %47 : vector<8x256xf32>
      %50 = math.floor %8 : vector<8x256xf32>
      %false = arith.constant false
      %51 = vector.broadcast %false : i1 to vector<8x256xi1>
      %c0_24 = arith.constant 0 : index
      %c0_25 = arith.constant 0 : index
      %c0_26 = arith.constant 0 : index
      %52 = vector.load %arg3[%c0_24, %c0_25, %c0_26] : memref<24x8x256xf32, #tpu.memory_space<vmem>>, vector<1x8x256xf32>
      %53 = vector.shape_cast %52 : vector<1x8x256xf32> to vector<8x256xf32>
      %cst_27 = arith.constant 5.000000e-01 : f32
      %54 = vector.broadcast %cst_27 : f32 to vector<8x256xf32>
      %55 = arith.subf %53, %54 : vector<8x256xf32>
      %c1 = arith.constant 1 : index
      %c0_28 = arith.constant 0 : index
      %c0_29 = arith.constant 0 : index
      %56 = vector.load %arg3[%c1, %c0_28, %c0_29] : memref<24x8x256xf32, #tpu.memory_space<vmem>>, vector<1x8x256xf32>
      %57 = vector.shape_cast %56 : vector<1x8x256xf32> to vector<8x256xf32>
      %58 = math.absf %55 : vector<8x256xf32>
      %cst_30 = arith.constant 5.000000e-01 : f32
      %59 = vector.broadcast %cst_30 : f32 to vector<8x256xf32>
      %60 = arith.subf %59, %58 : vector<8x256xf32>
      %cst_31 = arith.constant 9.99999997E-7 : f32
      %61 = vector.broadcast %cst_31 : f32 to vector<8x256xf32>
      %62 = arith.maximumf %60, %61 : vector<8x256xf32>
      %cst_32 = arith.constant 1.000000e+00 : f32
      %63 = vector.broadcast %cst_32 : f32 to vector<8x256xf32>
      %64 = arith.divf %63, %62 : vector<8x256xf32>
      %cst_33 = arith.constant 2.000000e+00 : f32
      %65 = vector.broadcast %cst_33 : f32 to vector<8x256xf32>
      %66 = arith.mulf %65, %37 : vector<8x256xf32>
      %67 = arith.mulf %66, %64 : vector<8x256xf32>
      %68 = arith.addf %67, %33 : vector<8x256xf32>
      %69 = arith.mulf %68, %55 : vector<8x256xf32>
      %70 = arith.addf %69, %8 : vector<8x256xf32>
      %cst_34 = arith.constant 4.300000e-01 : f32
      %71 = vector.broadcast %cst_34 : f32 to vector<8x256xf32>
      %72 = arith.addf %70, %71 : vector<8x256xf32>
      %73 = math.floor %72 : vector<8x256xf32>
      %cst_35 = arith.constant 7.000000e-02 : f32
      %74 = vector.broadcast %cst_35 : f32 to vector<8x256xf32>
      %75 = arith.cmpf oge, %62, %74 : vector<8x256xf32>
      %76 = arith.cmpf ole, %57, %49 : vector<8x256xf32>
      %77 = arith.andi %75, %76 : vector<8x256xi1>
      %cst_36 = arith.constant 0.000000e+00 : f32
      %78 = vector.broadcast %cst_36 : f32 to vector<8x256xf32>
      %79 = arith.cmpf olt, %73, %78 : vector<8x256xf32>
      %cst_37 = arith.constant 1.300000e-02 : f32
      %80 = vector.broadcast %cst_37 : f32 to vector<8x256xf32>
      %81 = arith.cmpf olt, %62, %80 : vector<8x256xf32>
      %82 = arith.cmpf ogt, %57, %62 : vector<8x256xf32>
      %83 = arith.andi %81, %82 : vector<8x256xi1>
      %84 = arith.ori %79, %83 : vector<8x256xi1>
      %85 = arith.mulf %57, %43 : vector<8x256xf32>
      %86 = arith.mulf %37, %64 : vector<8x256xf32>
      %87 = arith.mulf %86, %64 : vector<8x256xf32>
      %88 = arith.addf %87, %33 : vector<8x256xf32>
      %89 = arith.divf %85, %88 : vector<8x256xf32>
      %90 = math.log %89 : vector<8x256xf32>
      %91 = arith.mulf %73, %28 : vector<8x256xf32>
      %92 = arith.subf %91, %8 : vector<8x256xf32>
      %cst_38 = arith.constant 1.000000e+00 : f32
      %93 = vector.broadcast %cst_38 : f32 to vector<8x256xf32>
      %94 = arith.addf %73, %93 : vector<8x256xf32>
      %cst_39 = arith.constant 8.000000e+00 : f32
      %95 = vector.broadcast %cst_39 : f32 to vector<8x256xf32>
      %96 = arith.addf %94, %95 : vector<8x256xf32>
      %cst_40 = arith.constant 1.000000e+00 : f32
      %97 = vector.broadcast %cst_40 : f32 to vector<8x256xf32>
      %98 = arith.divf %97, %96 : vector<8x256xf32>
      %cst_41 = arith.constant 5.000000e-01 : f32
      %99 = vector.broadcast %cst_41 : f32 to vector<8x256xf32>
      %100 = arith.subf %96, %99 : vector<8x256xf32>
      %101 = math.log %96 : vector<8x256xf32>
      %102 = arith.mulf %100, %101 : vector<8x256xf32>
      %103 = arith.subf %102, %96 : vector<8x256xf32>
      %cst_42 = arith.constant 0.918938517 : f32
      %104 = vector.broadcast %cst_42 : f32 to vector<8x256xf32>
      %105 = arith.addf %103, %104 : vector<8x256xf32>
      %106 = arith.mulf %98, %98 : vector<8x256xf32>
      %cst_43 = arith.constant 0.00277777785 : f32
      %107 = vector.broadcast %cst_43 : f32 to vector<8x256xf32>
      %108 = arith.mulf %106, %107 : vector<8x256xf32>
      %cst_44 = arith.constant 0.0833333358 : f32
      %109 = vector.broadcast %cst_44 : f32 to vector<8x256xf32>
      %110 = arith.subf %109, %108 : vector<8x256xf32>
      %111 = arith.mulf %98, %110 : vector<8x256xf32>
      %112 = arith.addf %105, %111 : vector<8x256xf32>
      %cst_45 = arith.constant 1.000000e+00 : f32
      %113 = vector.broadcast %cst_45 : f32 to vector<8x256xf32>
      %114 = arith.addf %94, %113 : vector<8x256xf32>
      %115 = arith.mulf %94, %114 : vector<8x256xf32>
      %cst_46 = arith.constant 2.000000e+00 : f32
      %116 = vector.broadcast %cst_46 : f32 to vector<8x256xf32>
      %117 = arith.addf %94, %116 : vector<8x256xf32>
      %118 = arith.mulf %115, %117 : vector<8x256xf32>
      %cst_47 = arith.constant 3.000000e+00 : f32
      %119 = vector.broadcast %cst_47 : f32 to vector<8x256xf32>
      %120 = arith.addf %94, %119 : vector<8x256xf32>
      %121 = arith.mulf %118, %120 : vector<8x256xf32>
      %122 = math.log %121 : vector<8x256xf32>
      %cst_48 = arith.constant 4.000000e+00 : f32
      %123 = vector.broadcast %cst_48 : f32 to vector<8x256xf32>
      %124 = arith.addf %94, %123 : vector<8x256xf32>
      %cst_49 = arith.constant 5.000000e+00 : f32
      %125 = vector.broadcast %cst_49 : f32 to vector<8x256xf32>
      %126 = arith.addf %94, %125 : vector<8x256xf32>
      %127 = arith.mulf %124, %126 : vector<8x256xf32>
      %cst_50 = arith.constant 6.000000e+00 : f32
      %128 = vector.broadcast %cst_50 : f32 to vector<8x256xf32>
      %129 = arith.addf %94, %128 : vector<8x256xf32>
      %130 = arith.mulf %127, %129 : vector<8x256xf32>
      %cst_51 = arith.constant 7.000000e+00 : f32
      %131 = vector.broadcast %cst_51 : f32 to vector<8x256xf32>
      %132 = arith.addf %94, %131 : vector<8x256xf32>
      %133 = arith.mulf %130, %132 : vector<8x256xf32>
      %134 = math.log %133 : vector<8x256xf32>
      %135 = arith.addf %122, %134 : vector<8x256xf32>
      %136 = arith.subf %112, %135 : vector<8x256xf32>
      %137 = arith.subf %92, %136 : vector<8x256xf32>
      %cst_52 = arith.constant dense<true> : vector<8x256xi1>
      %138 = arith.xori %84, %cst_52 : vector<8x256xi1>
      %139 = arith.cmpf ole, %90, %137 : vector<8x256xf32>
      %140 = arith.andi %138, %139 : vector<8x256xi1>
      %141 = arith.ori %77, %140 : vector<8x256xi1>
      %cst_53 = arith.constant dense<true> : vector<8x256xi1>
      %142 = arith.xori %51, %cst_53 : vector<8x256xi1>
      %143 = arith.andi %141, %142 : vector<8x256xi1>
      %144 = arith.select %143, %73, %50 : vector<8x256xi1>, vector<8x256xf32>
      %145 = arith.ori %51, %141 : vector<8x256xi1>
      %c2 = arith.constant 2 : index
      %c0_54 = arith.constant 0 : index
      %c0_55 = arith.constant 0 : index
      %146 = vector.load %arg3[%c2, %c0_54, %c0_55] : memref<24x8x256xf32, #tpu.memory_space<vmem>>, vector<1x8x256xf32>
      %147 = vector.shape_cast %146 : vector<1x8x256xf32> to vector<8x256xf32>
      %cst_56 = arith.constant 5.000000e-01 : f32
      %148 = vector.broadcast %cst_56 : f32 to vector<8x256xf32>
      %149 = arith.subf %147, %148 : vector<8x256xf32>
      %c3 = arith.constant 3 : index
      %c0_57 = arith.constant 0 : index
      %c0_58 = arith.constant 0 : index
      %150 = vector.load %arg3[%c3, %c0_57, %c0_58] : memref<24x8x256xf32, #tpu.memory_space<vmem>>, vector<1x8x256xf32>
      %151 = vector.shape_cast %150 : vector<1x8x256xf32> to vector<8x256xf32>
      %152 = math.absf %149 : vector<8x256xf32>
      %cst_59 = arith.constant 5.000000e-01 : f32
      %153 = vector.broadcast %cst_59 : f32 to vector<8x256xf32>
      %154 = arith.subf %153, %152 : vector<8x256xf32>
      %cst_60 = arith.constant 9.99999997E-7 : f32
      %155 = vector.broadcast %cst_60 : f32 to vector<8x256xf32>
      %156 = arith.maximumf %154, %155 : vector<8x256xf32>
      %cst_61 = arith.constant 1.000000e+00 : f32
      %157 = vector.broadcast %cst_61 : f32 to vector<8x256xf32>
      %158 = arith.divf %157, %156 : vector<8x256xf32>
      %cst_62 = arith.constant 2.000000e+00 : f32
      %159 = vector.broadcast %cst_62 : f32 to vector<8x256xf32>
      %160 = arith.mulf %159, %37 : vector<8x256xf32>
      %161 = arith.mulf %160, %158 : vector<8x256xf32>
      %162 = arith.addf %161, %33 : vector<8x256xf32>
      %163 = arith.mulf %162, %149 : vector<8x256xf32>
      %164 = arith.addf %163, %8 : vector<8x256xf32>
      %cst_63 = arith.constant 4.300000e-01 : f32
      %165 = vector.broadcast %cst_63 : f32 to vector<8x256xf32>
      %166 = arith.addf %164, %165 : vector<8x256xf32>
      %167 = math.floor %166 : vector<8x256xf32>
      %cst_64 = arith.constant 7.000000e-02 : f32
      %168 = vector.broadcast %cst_64 : f32 to vector<8x256xf32>
      %169 = arith.cmpf oge, %156, %168 : vector<8x256xf32>
      %170 = arith.cmpf ole, %151, %49 : vector<8x256xf32>
      %171 = arith.andi %169, %170 : vector<8x256xi1>
      %cst_65 = arith.constant 0.000000e+00 : f32
      %172 = vector.broadcast %cst_65 : f32 to vector<8x256xf32>
      %173 = arith.cmpf olt, %167, %172 : vector<8x256xf32>
      %cst_66 = arith.constant 1.300000e-02 : f32
      %174 = vector.broadcast %cst_66 : f32 to vector<8x256xf32>
      %175 = arith.cmpf olt, %156, %174 : vector<8x256xf32>
      %176 = arith.cmpf ogt, %151, %156 : vector<8x256xf32>
      %177 = arith.andi %175, %176 : vector<8x256xi1>
      %178 = arith.ori %173, %177 : vector<8x256xi1>
      %179 = arith.mulf %151, %43 : vector<8x256xf32>
      %180 = arith.mulf %37, %158 : vector<8x256xf32>
      %181 = arith.mulf %180, %158 : vector<8x256xf32>
      %182 = arith.addf %181, %33 : vector<8x256xf32>
      %183 = arith.divf %179, %182 : vector<8x256xf32>
      %184 = math.log %183 : vector<8x256xf32>
      %185 = arith.mulf %167, %28 : vector<8x256xf32>
      %186 = arith.subf %185, %8 : vector<8x256xf32>
      %cst_67 = arith.constant 1.000000e+00 : f32
      %187 = vector.broadcast %cst_67 : f32 to vector<8x256xf32>
      %188 = arith.addf %167, %187 : vector<8x256xf32>
      %cst_68 = arith.constant 8.000000e+00 : f32
      %189 = vector.broadcast %cst_68 : f32 to vector<8x256xf32>
      %190 = arith.addf %188, %189 : vector<8x256xf32>
      %cst_69 = arith.constant 1.000000e+00 : f32
      %191 = vector.broadcast %cst_69 : f32 to vector<8x256xf32>
      %192 = arith.divf %191, %190 : vector<8x256xf32>
      %cst_70 = arith.constant 5.000000e-01 : f32
      %193 = vector.broadcast %cst_70 : f32 to vector<8x256xf32>
      %194 = arith.subf %190, %193 : vector<8x256xf32>
      %195 = math.log %190 : vector<8x256xf32>
      %196 = arith.mulf %194, %195 : vector<8x256xf32>
      %197 = arith.subf %196, %190 : vector<8x256xf32>
      %cst_71 = arith.constant 0.918938517 : f32
      %198 = vector.broadcast %cst_71 : f32 to vector<8x256xf32>
      %199 = arith.addf %197, %198 : vector<8x256xf32>
      %200 = arith.mulf %192, %192 : vector<8x256xf32>
      %cst_72 = arith.constant 0.00277777785 : f32
      %201 = vector.broadcast %cst_72 : f32 to vector<8x256xf32>
      %202 = arith.mulf %200, %201 : vector<8x256xf32>
      %cst_73 = arith.constant 0.0833333358 : f32
      %203 = vector.broadcast %cst_73 : f32 to vector<8x256xf32>
      %204 = arith.subf %203, %202 : vector<8x256xf32>
      %205 = arith.mulf %192, %204 : vector<8x256xf32>
      %206 = arith.addf %199, %205 : vector<8x256xf32>
      %cst_74 = arith.constant 1.000000e+00 : f32
      %207 = vector.broadcast %cst_74 : f32 to vector<8x256xf32>
      %208 = arith.addf %188, %207 : vector<8x256xf32>
      %209 = arith.mulf %188, %208 : vector<8x256xf32>
      %cst_75 = arith.constant 2.000000e+00 : f32
      %210 = vector.broadcast %cst_75 : f32 to vector<8x256xf32>
      %211 = arith.addf %188, %210 : vector<8x256xf32>
      %212 = arith.mulf %209, %211 : vector<8x256xf32>
      %cst_76 = arith.constant 3.000000e+00 : f32
      %213 = vector.broadcast %cst_76 : f32 to vector<8x256xf32>
      %214 = arith.addf %188, %213 : vector<8x256xf32>
      %215 = arith.mulf %212, %214 : vector<8x256xf32>
      %216 = math.log %215 : vector<8x256xf32>
      %cst_77 = arith.constant 4.000000e+00 : f32
      %217 = vector.broadcast %cst_77 : f32 to vector<8x256xf32>
      %218 = arith.addf %188, %217 : vector<8x256xf32>
      %cst_78 = arith.constant 5.000000e+00 : f32
      %219 = vector.broadcast %cst_78 : f32 to vector<8x256xf32>
      %220 = arith.addf %188, %219 : vector<8x256xf32>
      %221 = arith.mulf %218, %220 : vector<8x256xf32>
      %cst_79 = arith.constant 6.000000e+00 : f32
      %222 = vector.broadcast %cst_79 : f32 to vector<8x256xf32>
      %223 = arith.addf %188, %222 : vector<8x256xf32>
      %224 = arith.mulf %221, %223 : vector<8x256xf32>
      %cst_80 = arith.constant 7.000000e+00 : f32
      %225 = vector.broadcast %cst_80 : f32 to vector<8x256xf32>
      %226 = arith.addf %188, %225 : vector<8x256xf32>
      %227 = arith.mulf %224, %226 : vector<8x256xf32>
      %228 = math.log %227 : vector<8x256xf32>
      %229 = arith.addf %216, %228 : vector<8x256xf32>
      %230 = arith.subf %206, %229 : vector<8x256xf32>
      %231 = arith.subf %186, %230 : vector<8x256xf32>
      %cst_81 = arith.constant dense<true> : vector<8x256xi1>
      %232 = arith.xori %178, %cst_81 : vector<8x256xi1>
      %233 = arith.cmpf ole, %184, %231 : vector<8x256xf32>
      %234 = arith.andi %232, %233 : vector<8x256xi1>
      %235 = arith.ori %171, %234 : vector<8x256xi1>
      %cst_82 = arith.constant dense<true> : vector<8x256xi1>
      %236 = arith.xori %145, %cst_82 : vector<8x256xi1>
      %237 = arith.andi %235, %236 : vector<8x256xi1>
      %238 = arith.select %237, %167, %144 : vector<8x256xi1>, vector<8x256xf32>
      %239 = arith.ori %145, %235 : vector<8x256xi1>
      %c4 = arith.constant 4 : index
      %c0_83 = arith.constant 0 : index
      %c0_84 = arith.constant 0 : index
      %240 = vector.load %arg3[%c4, %c0_83, %c0_84] : memref<24x8x256xf32, #tpu.memory_space<vmem>>, vector<1x8x256xf32>
      %241 = vector.shape_cast %240 : vector<1x8x256xf32> to vector<8x256xf32>
      %cst_85 = arith.constant 5.000000e-01 : f32
      %242 = vector.broadcast %cst_85 : f32 to vector<8x256xf32>
      %243 = arith.subf %241, %242 : vector<8x256xf32>
      %c5 = arith.constant 5 : index
      %c0_86 = arith.constant 0 : index
      %c0_87 = arith.constant 0 : index
      %244 = vector.load %arg3[%c5, %c0_86, %c0_87] : memref<24x8x256xf32, #tpu.memory_space<vmem>>, vector<1x8x256xf32>
      %245 = vector.shape_cast %244 : vector<1x8x256xf32> to vector<8x256xf32>
      %246 = math.absf %243 : vector<8x256xf32>
      %cst_88 = arith.constant 5.000000e-01 : f32
      %247 = vector.broadcast %cst_88 : f32 to vector<8x256xf32>
      %248 = arith.subf %247, %246 : vector<8x256xf32>
      %cst_89 = arith.constant 9.99999997E-7 : f32
      %249 = vector.broadcast %cst_89 : f32 to vector<8x256xf32>
      %250 = arith.maximumf %248, %249 : vector<8x256xf32>
      %cst_90 = arith.constant 1.000000e+00 : f32
      %251 = vector.broadcast %cst_90 : f32 to vector<8x256xf32>
      %252 = arith.divf %251, %250 : vector<8x256xf32>
      %cst_91 = arith.constant 2.000000e+00 : f32
      %253 = vector.broadcast %cst_91 : f32 to vector<8x256xf32>
      %254 = arith.mulf %253, %37 : vector<8x256xf32>
      %255 = arith.mulf %254, %252 : vector<8x256xf32>
      %256 = arith.addf %255, %33 : vector<8x256xf32>
      %257 = arith.mulf %256, %243 : vector<8x256xf32>
      %258 = arith.addf %257, %8 : vector<8x256xf32>
      %cst_92 = arith.constant 4.300000e-01 : f32
      %259 = vector.broadcast %cst_92 : f32 to vector<8x256xf32>
      %260 = arith.addf %258, %259 : vector<8x256xf32>
      %261 = math.floor %260 : vector<8x256xf32>
      %cst_93 = arith.constant 7.000000e-02 : f32
      %262 = vector.broadcast %cst_93 : f32 to vector<8x256xf32>
      %263 = arith.cmpf oge, %250, %262 : vector<8x256xf32>
      %264 = arith.cmpf ole, %245, %49 : vector<8x256xf32>
      %265 = arith.andi %263, %264 : vector<8x256xi1>
      %cst_94 = arith.constant 0.000000e+00 : f32
      %266 = vector.broadcast %cst_94 : f32 to vector<8x256xf32>
      %267 = arith.cmpf olt, %261, %266 : vector<8x256xf32>
      %cst_95 = arith.constant 1.300000e-02 : f32
      %268 = vector.broadcast %cst_95 : f32 to vector<8x256xf32>
      %269 = arith.cmpf olt, %250, %268 : vector<8x256xf32>
      %270 = arith.cmpf ogt, %245, %250 : vector<8x256xf32>
      %271 = arith.andi %269, %270 : vector<8x256xi1>
      %272 = arith.ori %267, %271 : vector<8x256xi1>
      %273 = arith.mulf %245, %43 : vector<8x256xf32>
      %274 = arith.mulf %37, %252 : vector<8x256xf32>
      %275 = arith.mulf %274, %252 : vector<8x256xf32>
      %276 = arith.addf %275, %33 : vector<8x256xf32>
      %277 = arith.divf %273, %276 : vector<8x256xf32>
      %278 = math.log %277 : vector<8x256xf32>
      %279 = arith.mulf %261, %28 : vector<8x256xf32>
      %280 = arith.subf %279, %8 : vector<8x256xf32>
      %cst_96 = arith.constant 1.000000e+00 : f32
      %281 = vector.broadcast %cst_96 : f32 to vector<8x256xf32>
      %282 = arith.addf %261, %281 : vector<8x256xf32>
      %cst_97 = arith.constant 8.000000e+00 : f32
      %283 = vector.broadcast %cst_97 : f32 to vector<8x256xf32>
      %284 = arith.addf %282, %283 : vector<8x256xf32>
      %cst_98 = arith.constant 1.000000e+00 : f32
      %285 = vector.broadcast %cst_98 : f32 to vector<8x256xf32>
      %286 = arith.divf %285, %284 : vector<8x256xf32>
      %cst_99 = arith.constant 5.000000e-01 : f32
      %287 = vector.broadcast %cst_99 : f32 to vector<8x256xf32>
      %288 = arith.subf %284, %287 : vector<8x256xf32>
      %289 = math.log %284 : vector<8x256xf32>
      %290 = arith.mulf %288, %289 : vector<8x256xf32>
      %291 = arith.subf %290, %284 : vector<8x256xf32>
      %cst_100 = arith.constant 0.918938517 : f32
      %292 = vector.broadcast %cst_100 : f32 to vector<8x256xf32>
      %293 = arith.addf %291, %292 : vector<8x256xf32>
      %294 = arith.mulf %286, %286 : vector<8x256xf32>
      %cst_101 = arith.constant 0.00277777785 : f32
      %295 = vector.broadcast %cst_101 : f32 to vector<8x256xf32>
      %296 = arith.mulf %294, %295 : vector<8x256xf32>
      %cst_102 = arith.constant 0.0833333358 : f32
      %297 = vector.broadcast %cst_102 : f32 to vector<8x256xf32>
      %298 = arith.subf %297, %296 : vector<8x256xf32>
      %299 = arith.mulf %286, %298 : vector<8x256xf32>
      %300 = arith.addf %293, %299 : vector<8x256xf32>
      %cst_103 = arith.constant 1.000000e+00 : f32
      %301 = vector.broadcast %cst_103 : f32 to vector<8x256xf32>
      %302 = arith.addf %282, %301 : vector<8x256xf32>
      %303 = arith.mulf %282, %302 : vector<8x256xf32>
      %cst_104 = arith.constant 2.000000e+00 : f32
      %304 = vector.broadcast %cst_104 : f32 to vector<8x256xf32>
      %305 = arith.addf %282, %304 : vector<8x256xf32>
      %306 = arith.mulf %303, %305 : vector<8x256xf32>
      %cst_105 = arith.constant 3.000000e+00 : f32
      %307 = vector.broadcast %cst_105 : f32 to vector<8x256xf32>
      %308 = arith.addf %282, %307 : vector<8x256xf32>
      %309 = arith.mulf %306, %308 : vector<8x256xf32>
      %310 = math.log %309 : vector<8x256xf32>
      %cst_106 = arith.constant 4.000000e+00 : f32
      %311 = vector.broadcast %cst_106 : f32 to vector<8x256xf32>
      %312 = arith.addf %282, %311 : vector<8x256xf32>
      %cst_107 = arith.constant 5.000000e+00 : f32
      %313 = vector.broadcast %cst_107 : f32 to vector<8x256xf32>
      %314 = arith.addf %282, %313 : vector<8x256xf32>
      %315 = arith.mulf %312, %314 : vector<8x256xf32>
      %cst_108 = arith.constant 6.000000e+00 : f32
      %316 = vector.broadcast %cst_108 : f32 to vector<8x256xf32>
      %317 = arith.addf %282, %316 : vector<8x256xf32>
      %318 = arith.mulf %315, %317 : vector<8x256xf32>
      %cst_109 = arith.constant 7.000000e+00 : f32
      %319 = vector.broadcast %cst_109 : f32 to vector<8x256xf32>
      %320 = arith.addf %282, %319 : vector<8x256xf32>
      %321 = arith.mulf %318, %320 : vector<8x256xf32>
      %322 = math.log %321 : vector<8x256xf32>
      %323 = arith.addf %310, %322 : vector<8x256xf32>
      %324 = arith.subf %300, %323 : vector<8x256xf32>
      %325 = arith.subf %280, %324 : vector<8x256xf32>
      %cst_110 = arith.constant dense<true> : vector<8x256xi1>
      %326 = arith.xori %272, %cst_110 : vector<8x256xi1>
      %327 = arith.cmpf ole, %278, %325 : vector<8x256xf32>
      %328 = arith.andi %326, %327 : vector<8x256xi1>
      %329 = arith.ori %265, %328 : vector<8x256xi1>
      %cst_111 = arith.constant dense<true> : vector<8x256xi1>
      %330 = arith.xori %239, %cst_111 : vector<8x256xi1>
      %331 = arith.andi %329, %330 : vector<8x256xi1>
      %332 = arith.select %331, %261, %238 : vector<8x256xi1>, vector<8x256xf32>
      %333 = arith.ori %239, %329 : vector<8x256xi1>
      %c6 = arith.constant 6 : index
      %c0_112 = arith.constant 0 : index
      %c0_113 = arith.constant 0 : index
      %334 = vector.load %arg3[%c6, %c0_112, %c0_113] : memref<24x8x256xf32, #tpu.memory_space<vmem>>, vector<1x8x256xf32>
      %335 = vector.shape_cast %334 : vector<1x8x256xf32> to vector<8x256xf32>
      %cst_114 = arith.constant 5.000000e-01 : f32
      %336 = vector.broadcast %cst_114 : f32 to vector<8x256xf32>
      %337 = arith.subf %335, %336 : vector<8x256xf32>
      %c7 = arith.constant 7 : index
      %c0_115 = arith.constant 0 : index
      %c0_116 = arith.constant 0 : index
      %338 = vector.load %arg3[%c7, %c0_115, %c0_116] : memref<24x8x256xf32, #tpu.memory_space<vmem>>, vector<1x8x256xf32>
      %339 = vector.shape_cast %338 : vector<1x8x256xf32> to vector<8x256xf32>
      %340 = math.absf %337 : vector<8x256xf32>
      %cst_117 = arith.constant 5.000000e-01 : f32
      %341 = vector.broadcast %cst_117 : f32 to vector<8x256xf32>
      %342 = arith.subf %341, %340 : vector<8x256xf32>
      %cst_118 = arith.constant 9.99999997E-7 : f32
      %343 = vector.broadcast %cst_118 : f32 to vector<8x256xf32>
      %344 = arith.maximumf %342, %343 : vector<8x256xf32>
      %cst_119 = arith.constant 1.000000e+00 : f32
      %345 = vector.broadcast %cst_119 : f32 to vector<8x256xf32>
      %346 = arith.divf %345, %344 : vector<8x256xf32>
      %cst_120 = arith.constant 2.000000e+00 : f32
      %347 = vector.broadcast %cst_120 : f32 to vector<8x256xf32>
      %348 = arith.mulf %347, %37 : vector<8x256xf32>
      %349 = arith.mulf %348, %346 : vector<8x256xf32>
      %350 = arith.addf %349, %33 : vector<8x256xf32>
      %351 = arith.mulf %350, %337 : vector<8x256xf32>
      %352 = arith.addf %351, %8 : vector<8x256xf32>
      %cst_121 = arith.constant 4.300000e-01 : f32
      %353 = vector.broadcast %cst_121 : f32 to vector<8x256xf32>
      %354 = arith.addf %352, %353 : vector<8x256xf32>
      %355 = math.floor %354 : vector<8x256xf32>
      %cst_122 = arith.constant 7.000000e-02 : f32
      %356 = vector.broadcast %cst_122 : f32 to vector<8x256xf32>
      %357 = arith.cmpf oge, %344, %356 : vector<8x256xf32>
      %358 = arith.cmpf ole, %339, %49 : vector<8x256xf32>
      %359 = arith.andi %357, %358 : vector<8x256xi1>
      %cst_123 = arith.constant 0.000000e+00 : f32
      %360 = vector.broadcast %cst_123 : f32 to vector<8x256xf32>
      %361 = arith.cmpf olt, %355, %360 : vector<8x256xf32>
      %cst_124 = arith.constant 1.300000e-02 : f32
      %362 = vector.broadcast %cst_124 : f32 to vector<8x256xf32>
      %363 = arith.cmpf olt, %344, %362 : vector<8x256xf32>
      %364 = arith.cmpf ogt, %339, %344 : vector<8x256xf32>
      %365 = arith.andi %363, %364 : vector<8x256xi1>
      %366 = arith.ori %361, %365 : vector<8x256xi1>
      %367 = arith.mulf %339, %43 : vector<8x256xf32>
      %368 = arith.mulf %37, %346 : vector<8x256xf32>
      %369 = arith.mulf %368, %346 : vector<8x256xf32>
      %370 = arith.addf %369, %33 : vector<8x256xf32>
      %371 = arith.divf %367, %370 : vector<8x256xf32>
      %372 = math.log %371 : vector<8x256xf32>
      %373 = arith.mulf %355, %28 : vector<8x256xf32>
      %374 = arith.subf %373, %8 : vector<8x256xf32>
      %cst_125 = arith.constant 1.000000e+00 : f32
      %375 = vector.broadcast %cst_125 : f32 to vector<8x256xf32>
      %376 = arith.addf %355, %375 : vector<8x256xf32>
      %cst_126 = arith.constant 8.000000e+00 : f32
      %377 = vector.broadcast %cst_126 : f32 to vector<8x256xf32>
      %378 = arith.addf %376, %377 : vector<8x256xf32>
      %cst_127 = arith.constant 1.000000e+00 : f32
      %379 = vector.broadcast %cst_127 : f32 to vector<8x256xf32>
      %380 = arith.divf %379, %378 : vector<8x256xf32>
      %cst_128 = arith.constant 5.000000e-01 : f32
      %381 = vector.broadcast %cst_128 : f32 to vector<8x256xf32>
      %382 = arith.subf %378, %381 : vector<8x256xf32>
      %383 = math.log %378 : vector<8x256xf32>
      %384 = arith.mulf %382, %383 : vector<8x256xf32>
      %385 = arith.subf %384, %378 : vector<8x256xf32>
      %cst_129 = arith.constant 0.918938517 : f32
      %386 = vector.broadcast %cst_129 : f32 to vector<8x256xf32>
      %387 = arith.addf %385, %386 : vector<8x256xf32>
      %388 = arith.mulf %380, %380 : vector<8x256xf32>
      %cst_130 = arith.constant 0.00277777785 : f32
      %389 = vector.broadcast %cst_130 : f32 to vector<8x256xf32>
      %390 = arith.mulf %388, %389 : vector<8x256xf32>
      %cst_131 = arith.constant 0.0833333358 : f32
      %391 = vector.broadcast %cst_131 : f32 to vector<8x256xf32>
      %392 = arith.subf %391, %390 : vector<8x256xf32>
      %393 = arith.mulf %380, %392 : vector<8x256xf32>
      %394 = arith.addf %387, %393 : vector<8x256xf32>
      %cst_132 = arith.constant 1.000000e+00 : f32
      %395 = vector.broadcast %cst_132 : f32 to vector<8x256xf32>
      %396 = arith.addf %376, %395 : vector<8x256xf32>
      %397 = arith.mulf %376, %396 : vector<8x256xf32>
      %cst_133 = arith.constant 2.000000e+00 : f32
      %398 = vector.broadcast %cst_133 : f32 to vector<8x256xf32>
      %399 = arith.addf %376, %398 : vector<8x256xf32>
      %400 = arith.mulf %397, %399 : vector<8x256xf32>
      %cst_134 = arith.constant 3.000000e+00 : f32
      %401 = vector.broadcast %cst_134 : f32 to vector<8x256xf32>
      %402 = arith.addf %376, %401 : vector<8x256xf32>
      %403 = arith.mulf %400, %402 : vector<8x256xf32>
      %404 = math.log %403 : vector<8x256xf32>
      %cst_135 = arith.constant 4.000000e+00 : f32
      %405 = vector.broadcast %cst_135 : f32 to vector<8x256xf32>
      %406 = arith.addf %376, %405 : vector<8x256xf32>
      %cst_136 = arith.constant 5.000000e+00 : f32
      %407 = vector.broadcast %cst_136 : f32 to vector<8x256xf32>
      %408 = arith.addf %376, %407 : vector<8x256xf32>
      %409 = arith.mulf %406, %408 : vector<8x256xf32>
      %cst_137 = arith.constant 6.000000e+00 : f32
      %410 = vector.broadcast %cst_137 : f32 to vector<8x256xf32>
      %411 = arith.addf %376, %410 : vector<8x256xf32>
      %412 = arith.mulf %409, %411 : vector<8x256xf32>
      %cst_138 = arith.constant 7.000000e+00 : f32
      %413 = vector.broadcast %cst_138 : f32 to vector<8x256xf32>
      %414 = arith.addf %376, %413 : vector<8x256xf32>
      %415 = arith.mulf %412, %414 : vector<8x256xf32>
      %416 = math.log %415 : vector<8x256xf32>
      %417 = arith.addf %404, %416 : vector<8x256xf32>
      %418 = arith.subf %394, %417 : vector<8x256xf32>
      %419 = arith.subf %374, %418 : vector<8x256xf32>
      %cst_139 = arith.constant dense<true> : vector<8x256xi1>
      %420 = arith.xori %366, %cst_139 : vector<8x256xi1>
      %421 = arith.cmpf ole, %372, %419 : vector<8x256xf32>
      %422 = arith.andi %420, %421 : vector<8x256xi1>
      %423 = arith.ori %359, %422 : vector<8x256xi1>
      %cst_140 = arith.constant dense<true> : vector<8x256xi1>
      %424 = arith.xori %333, %cst_140 : vector<8x256xi1>
      %425 = arith.andi %423, %424 : vector<8x256xi1>
      %426 = arith.select %425, %355, %332 : vector<8x256xi1>, vector<8x256xf32>
      %427 = arith.ori %333, %423 : vector<8x256xi1>
      %c8 = arith.constant 8 : index
      %c0_141 = arith.constant 0 : index
      %c0_142 = arith.constant 0 : index
      %428 = vector.load %arg3[%c8, %c0_141, %c0_142] : memref<24x8x256xf32, #tpu.memory_space<vmem>>, vector<1x8x256xf32>
      %429 = vector.shape_cast %428 : vector<1x8x256xf32> to vector<8x256xf32>
      %cst_143 = arith.constant 5.000000e-01 : f32
      %430 = vector.broadcast %cst_143 : f32 to vector<8x256xf32>
      %431 = arith.subf %429, %430 : vector<8x256xf32>
      %c9 = arith.constant 9 : index
      %c0_144 = arith.constant 0 : index
      %c0_145 = arith.constant 0 : index
      %432 = vector.load %arg3[%c9, %c0_144, %c0_145] : memref<24x8x256xf32, #tpu.memory_space<vmem>>, vector<1x8x256xf32>
      %433 = vector.shape_cast %432 : vector<1x8x256xf32> to vector<8x256xf32>
      %434 = math.absf %431 : vector<8x256xf32>
      %cst_146 = arith.constant 5.000000e-01 : f32
      %435 = vector.broadcast %cst_146 : f32 to vector<8x256xf32>
      %436 = arith.subf %435, %434 : vector<8x256xf32>
      %cst_147 = arith.constant 9.99999997E-7 : f32
      %437 = vector.broadcast %cst_147 : f32 to vector<8x256xf32>
      %438 = arith.maximumf %436, %437 : vector<8x256xf32>
      %cst_148 = arith.constant 1.000000e+00 : f32
      %439 = vector.broadcast %cst_148 : f32 to vector<8x256xf32>
      %440 = arith.divf %439, %438 : vector<8x256xf32>
      %cst_149 = arith.constant 2.000000e+00 : f32
      %441 = vector.broadcast %cst_149 : f32 to vector<8x256xf32>
      %442 = arith.mulf %441, %37 : vector<8x256xf32>
      %443 = arith.mulf %442, %440 : vector<8x256xf32>
      %444 = arith.addf %443, %33 : vector<8x256xf32>
      %445 = arith.mulf %444, %431 : vector<8x256xf32>
      %446 = arith.addf %445, %8 : vector<8x256xf32>
      %cst_150 = arith.constant 4.300000e-01 : f32
      %447 = vector.broadcast %cst_150 : f32 to vector<8x256xf32>
      %448 = arith.addf %446, %447 : vector<8x256xf32>
      %449 = math.floor %448 : vector<8x256xf32>
      %cst_151 = arith.constant 7.000000e-02 : f32
      %450 = vector.broadcast %cst_151 : f32 to vector<8x256xf32>
      %451 = arith.cmpf oge, %438, %450 : vector<8x256xf32>
      %452 = arith.cmpf ole, %433, %49 : vector<8x256xf32>
      %453 = arith.andi %451, %452 : vector<8x256xi1>
      %cst_152 = arith.constant 0.000000e+00 : f32
      %454 = vector.broadcast %cst_152 : f32 to vector<8x256xf32>
      %455 = arith.cmpf olt, %449, %454 : vector<8x256xf32>
      %cst_153 = arith.constant 1.300000e-02 : f32
      %456 = vector.broadcast %cst_153 : f32 to vector<8x256xf32>
      %457 = arith.cmpf olt, %438, %456 : vector<8x256xf32>
      %458 = arith.cmpf ogt, %433, %438 : vector<8x256xf32>
      %459 = arith.andi %457, %458 : vector<8x256xi1>
      %460 = arith.ori %455, %459 : vector<8x256xi1>
      %461 = arith.mulf %433, %43 : vector<8x256xf32>
      %462 = arith.mulf %37, %440 : vector<8x256xf32>
      %463 = arith.mulf %462, %440 : vector<8x256xf32>
      %464 = arith.addf %463, %33 : vector<8x256xf32>
      %465 = arith.divf %461, %464 : vector<8x256xf32>
      %466 = math.log %465 : vector<8x256xf32>
      %467 = arith.mulf %449, %28 : vector<8x256xf32>
      %468 = arith.subf %467, %8 : vector<8x256xf32>
      %cst_154 = arith.constant 1.000000e+00 : f32
      %469 = vector.broadcast %cst_154 : f32 to vector<8x256xf32>
      %470 = arith.addf %449, %469 : vector<8x256xf32>
      %cst_155 = arith.constant 8.000000e+00 : f32
      %471 = vector.broadcast %cst_155 : f32 to vector<8x256xf32>
      %472 = arith.addf %470, %471 : vector<8x256xf32>
      %cst_156 = arith.constant 1.000000e+00 : f32
      %473 = vector.broadcast %cst_156 : f32 to vector<8x256xf32>
      %474 = arith.divf %473, %472 : vector<8x256xf32>
      %cst_157 = arith.constant 5.000000e-01 : f32
      %475 = vector.broadcast %cst_157 : f32 to vector<8x256xf32>
      %476 = arith.subf %472, %475 : vector<8x256xf32>
      %477 = math.log %472 : vector<8x256xf32>
      %478 = arith.mulf %476, %477 : vector<8x256xf32>
      %479 = arith.subf %478, %472 : vector<8x256xf32>
      %cst_158 = arith.constant 0.918938517 : f32
      %480 = vector.broadcast %cst_158 : f32 to vector<8x256xf32>
      %481 = arith.addf %479, %480 : vector<8x256xf32>
      %482 = arith.mulf %474, %474 : vector<8x256xf32>
      %cst_159 = arith.constant 0.00277777785 : f32
      %483 = vector.broadcast %cst_159 : f32 to vector<8x256xf32>
      %484 = arith.mulf %482, %483 : vector<8x256xf32>
      %cst_160 = arith.constant 0.0833333358 : f32
      %485 = vector.broadcast %cst_160 : f32 to vector<8x256xf32>
      %486 = arith.subf %485, %484 : vector<8x256xf32>
      %487 = arith.mulf %474, %486 : vector<8x256xf32>
      %488 = arith.addf %481, %487 : vector<8x256xf32>
      %cst_161 = arith.constant 1.000000e+00 : f32
      %489 = vector.broadcast %cst_161 : f32 to vector<8x256xf32>
      %490 = arith.addf %470, %489 : vector<8x256xf32>
      %491 = arith.mulf %470, %490 : vector<8x256xf32>
      %cst_162 = arith.constant 2.000000e+00 : f32
      %492 = vector.broadcast %cst_162 : f32 to vector<8x256xf32>
      %493 = arith.addf %470, %492 : vector<8x256xf32>
      %494 = arith.mulf %491, %493 : vector<8x256xf32>
      %cst_163 = arith.constant 3.000000e+00 : f32
      %495 = vector.broadcast %cst_163 : f32 to vector<8x256xf32>
      %496 = arith.addf %470, %495 : vector<8x256xf32>
      %497 = arith.mulf %494, %496 : vector<8x256xf32>
      %498 = math.log %497 : vector<8x256xf32>
      %cst_164 = arith.constant 4.000000e+00 : f32
      %499 = vector.broadcast %cst_164 : f32 to vector<8x256xf32>
      %500 = arith.addf %470, %499 : vector<8x256xf32>
      %cst_165 = arith.constant 5.000000e+00 : f32
      %501 = vector.broadcast %cst_165 : f32 to vector<8x256xf32>
      %502 = arith.addf %470, %501 : vector<8x256xf32>
      %503 = arith.mulf %500, %502 : vector<8x256xf32>
      %cst_166 = arith.constant 6.000000e+00 : f32
      %504 = vector.broadcast %cst_166 : f32 to vector<8x256xf32>
      %505 = arith.addf %470, %504 : vector<8x256xf32>
      %506 = arith.mulf %503, %505 : vector<8x256xf32>
      %cst_167 = arith.constant 7.000000e+00 : f32
      %507 = vector.broadcast %cst_167 : f32 to vector<8x256xf32>
      %508 = arith.addf %470, %507 : vector<8x256xf32>
      %509 = arith.mulf %506, %508 : vector<8x256xf32>
      %510 = math.log %509 : vector<8x256xf32>
      %511 = arith.addf %498, %510 : vector<8x256xf32>
      %512 = arith.subf %488, %511 : vector<8x256xf32>
      %513 = arith.subf %468, %512 : vector<8x256xf32>
      %cst_168 = arith.constant dense<true> : vector<8x256xi1>
      %514 = arith.xori %460, %cst_168 : vector<8x256xi1>
      %515 = arith.cmpf ole, %466, %513 : vector<8x256xf32>
      %516 = arith.andi %514, %515 : vector<8x256xi1>
      %517 = arith.ori %453, %516 : vector<8x256xi1>
      %cst_169 = arith.constant dense<true> : vector<8x256xi1>
      %518 = arith.xori %427, %cst_169 : vector<8x256xi1>
      %519 = arith.andi %517, %518 : vector<8x256xi1>
      %520 = arith.select %519, %449, %426 : vector<8x256xi1>, vector<8x256xf32>
      %521 = arith.ori %427, %517 : vector<8x256xi1>
      %c10 = arith.constant 10 : index
      %c0_170 = arith.constant 0 : index
      %c0_171 = arith.constant 0 : index
      %522 = vector.load %arg3[%c10, %c0_170, %c0_171] : memref<24x8x256xf32, #tpu.memory_space<vmem>>, vector<1x8x256xf32>
      %523 = vector.shape_cast %522 : vector<1x8x256xf32> to vector<8x256xf32>
      %cst_172 = arith.constant 5.000000e-01 : f32
      %524 = vector.broadcast %cst_172 : f32 to vector<8x256xf32>
      %525 = arith.subf %523, %524 : vector<8x256xf32>
      %c11 = arith.constant 11 : index
      %c0_173 = arith.constant 0 : index
      %c0_174 = arith.constant 0 : index
      %526 = vector.load %arg3[%c11, %c0_173, %c0_174] : memref<24x8x256xf32, #tpu.memory_space<vmem>>, vector<1x8x256xf32>
      %527 = vector.shape_cast %526 : vector<1x8x256xf32> to vector<8x256xf32>
      %528 = math.absf %525 : vector<8x256xf32>
      %cst_175 = arith.constant 5.000000e-01 : f32
      %529 = vector.broadcast %cst_175 : f32 to vector<8x256xf32>
      %530 = arith.subf %529, %528 : vector<8x256xf32>
      %cst_176 = arith.constant 9.99999997E-7 : f32
      %531 = vector.broadcast %cst_176 : f32 to vector<8x256xf32>
      %532 = arith.maximumf %530, %531 : vector<8x256xf32>
      %cst_177 = arith.constant 1.000000e+00 : f32
      %533 = vector.broadcast %cst_177 : f32 to vector<8x256xf32>
      %534 = arith.divf %533, %532 : vector<8x256xf32>
      %cst_178 = arith.constant 2.000000e+00 : f32
      %535 = vector.broadcast %cst_178 : f32 to vector<8x256xf32>
      %536 = arith.mulf %535, %37 : vector<8x256xf32>
      %537 = arith.mulf %536, %534 : vector<8x256xf32>
      %538 = arith.addf %537, %33 : vector<8x256xf32>
      %539 = arith.mulf %538, %525 : vector<8x256xf32>
      %540 = arith.addf %539, %8 : vector<8x256xf32>
      %cst_179 = arith.constant 4.300000e-01 : f32
      %541 = vector.broadcast %cst_179 : f32 to vector<8x256xf32>
      %542 = arith.addf %540, %541 : vector<8x256xf32>
      %543 = math.floor %542 : vector<8x256xf32>
      %cst_180 = arith.constant 7.000000e-02 : f32
      %544 = vector.broadcast %cst_180 : f32 to vector<8x256xf32>
      %545 = arith.cmpf oge, %532, %544 : vector<8x256xf32>
      %546 = arith.cmpf ole, %527, %49 : vector<8x256xf32>
      %547 = arith.andi %545, %546 : vector<8x256xi1>
      %cst_181 = arith.constant 0.000000e+00 : f32
      %548 = vector.broadcast %cst_181 : f32 to vector<8x256xf32>
      %549 = arith.cmpf olt, %543, %548 : vector<8x256xf32>
      %cst_182 = arith.constant 1.300000e-02 : f32
      %550 = vector.broadcast %cst_182 : f32 to vector<8x256xf32>
      %551 = arith.cmpf olt, %532, %550 : vector<8x256xf32>
      %552 = arith.cmpf ogt, %527, %532 : vector<8x256xf32>
      %553 = arith.andi %551, %552 : vector<8x256xi1>
      %554 = arith.ori %549, %553 : vector<8x256xi1>
      %555 = arith.mulf %527, %43 : vector<8x256xf32>
      %556 = arith.mulf %37, %534 : vector<8x256xf32>
      %557 = arith.mulf %556, %534 : vector<8x256xf32>
      %558 = arith.addf %557, %33 : vector<8x256xf32>
      %559 = arith.divf %555, %558 : vector<8x256xf32>
      %560 = math.log %559 : vector<8x256xf32>
      %561 = arith.mulf %543, %28 : vector<8x256xf32>
      %562 = arith.subf %561, %8 : vector<8x256xf32>
      %cst_183 = arith.constant 1.000000e+00 : f32
      %563 = vector.broadcast %cst_183 : f32 to vector<8x256xf32>
      %564 = arith.addf %543, %563 : vector<8x256xf32>
      %cst_184 = arith.constant 8.000000e+00 : f32
      %565 = vector.broadcast %cst_184 : f32 to vector<8x256xf32>
      %566 = arith.addf %564, %565 : vector<8x256xf32>
      %cst_185 = arith.constant 1.000000e+00 : f32
      %567 = vector.broadcast %cst_185 : f32 to vector<8x256xf32>
      %568 = arith.divf %567, %566 : vector<8x256xf32>
      %cst_186 = arith.constant 5.000000e-01 : f32
      %569 = vector.broadcast %cst_186 : f32 to vector<8x256xf32>
      %570 = arith.subf %566, %569 : vector<8x256xf32>
      %571 = math.log %566 : vector<8x256xf32>
      %572 = arith.mulf %570, %571 : vector<8x256xf32>
      %573 = arith.subf %572, %566 : vector<8x256xf32>
      %cst_187 = arith.constant 0.918938517 : f32
      %574 = vector.broadcast %cst_187 : f32 to vector<8x256xf32>
      %575 = arith.addf %573, %574 : vector<8x256xf32>
      %576 = arith.mulf %568, %568 : vector<8x256xf32>
      %cst_188 = arith.constant 0.00277777785 : f32
      %577 = vector.broadcast %cst_188 : f32 to vector<8x256xf32>
      %578 = arith.mulf %576, %577 : vector<8x256xf32>
      %cst_189 = arith.constant 0.0833333358 : f32
      %579 = vector.broadcast %cst_189 : f32 to vector<8x256xf32>
      %580 = arith.subf %579, %578 : vector<8x256xf32>
      %581 = arith.mulf %568, %580 : vector<8x256xf32>
      %582 = arith.addf %575, %581 : vector<8x256xf32>
      %cst_190 = arith.constant 1.000000e+00 : f32
      %583 = vector.broadcast %cst_190 : f32 to vector<8x256xf32>
      %584 = arith.addf %564, %583 : vector<8x256xf32>
      %585 = arith.mulf %564, %584 : vector<8x256xf32>
      %cst_191 = arith.constant 2.000000e+00 : f32
      %586 = vector.broadcast %cst_191 : f32 to vector<8x256xf32>
      %587 = arith.addf %564, %586 : vector<8x256xf32>
      %588 = arith.mulf %585, %587 : vector<8x256xf32>
      %cst_192 = arith.constant 3.000000e+00 : f32
      %589 = vector.broadcast %cst_192 : f32 to vector<8x256xf32>
      %590 = arith.addf %564, %589 : vector<8x256xf32>
      %591 = arith.mulf %588, %590 : vector<8x256xf32>
      %592 = math.log %591 : vector<8x256xf32>
      %cst_193 = arith.constant 4.000000e+00 : f32
      %593 = vector.broadcast %cst_193 : f32 to vector<8x256xf32>
      %594 = arith.addf %564, %593 : vector<8x256xf32>
      %cst_194 = arith.constant 5.000000e+00 : f32
      %595 = vector.broadcast %cst_194 : f32 to vector<8x256xf32>
      %596 = arith.addf %564, %595 : vector<8x256xf32>
      %597 = arith.mulf %594, %596 : vector<8x256xf32>
      %cst_195 = arith.constant 6.000000e+00 : f32
      %598 = vector.broadcast %cst_195 : f32 to vector<8x256xf32>
      %599 = arith.addf %564, %598 : vector<8x256xf32>
      %600 = arith.mulf %597, %599 : vector<8x256xf32>
      %cst_196 = arith.constant 7.000000e+00 : f32
      %601 = vector.broadcast %cst_196 : f32 to vector<8x256xf32>
      %602 = arith.addf %564, %601 : vector<8x256xf32>
      %603 = arith.mulf %600, %602 : vector<8x256xf32>
      %604 = math.log %603 : vector<8x256xf32>
      %605 = arith.addf %592, %604 : vector<8x256xf32>
      %606 = arith.subf %582, %605 : vector<8x256xf32>
      %607 = arith.subf %562, %606 : vector<8x256xf32>
      %cst_197 = arith.constant dense<true> : vector<8x256xi1>
      %608 = arith.xori %554, %cst_197 : vector<8x256xi1>
      %609 = arith.cmpf ole, %560, %607 : vector<8x256xf32>
      %610 = arith.andi %608, %609 : vector<8x256xi1>
      %611 = arith.ori %547, %610 : vector<8x256xi1>
      %cst_198 = arith.constant dense<true> : vector<8x256xi1>
      %612 = arith.xori %521, %cst_198 : vector<8x256xi1>
      %613 = arith.andi %611, %612 : vector<8x256xi1>
      %614 = arith.select %613, %543, %520 : vector<8x256xi1>, vector<8x256xf32>
      %615 = arith.ori %521, %611 : vector<8x256xi1>
      %c12 = arith.constant 12 : index
      %c0_199 = arith.constant 0 : index
      %c0_200 = arith.constant 0 : index
      %616 = vector.load %arg3[%c12, %c0_199, %c0_200] : memref<24x8x256xf32, #tpu.memory_space<vmem>>, vector<1x8x256xf32>
      %617 = vector.shape_cast %616 : vector<1x8x256xf32> to vector<8x256xf32>
      %cst_201 = arith.constant 5.000000e-01 : f32
      %618 = vector.broadcast %cst_201 : f32 to vector<8x256xf32>
      %619 = arith.subf %617, %618 : vector<8x256xf32>
      %c13 = arith.constant 13 : index
      %c0_202 = arith.constant 0 : index
      %c0_203 = arith.constant 0 : index
      %620 = vector.load %arg3[%c13, %c0_202, %c0_203] : memref<24x8x256xf32, #tpu.memory_space<vmem>>, vector<1x8x256xf32>
      %621 = vector.shape_cast %620 : vector<1x8x256xf32> to vector<8x256xf32>
      %622 = math.absf %619 : vector<8x256xf32>
      %cst_204 = arith.constant 5.000000e-01 : f32
      %623 = vector.broadcast %cst_204 : f32 to vector<8x256xf32>
      %624 = arith.subf %623, %622 : vector<8x256xf32>
      %cst_205 = arith.constant 9.99999997E-7 : f32
      %625 = vector.broadcast %cst_205 : f32 to vector<8x256xf32>
      %626 = arith.maximumf %624, %625 : vector<8x256xf32>
      %cst_206 = arith.constant 1.000000e+00 : f32
      %627 = vector.broadcast %cst_206 : f32 to vector<8x256xf32>
      %628 = arith.divf %627, %626 : vector<8x256xf32>
      %cst_207 = arith.constant 2.000000e+00 : f32
      %629 = vector.broadcast %cst_207 : f32 to vector<8x256xf32>
      %630 = arith.mulf %629, %37 : vector<8x256xf32>
      %631 = arith.mulf %630, %628 : vector<8x256xf32>
      %632 = arith.addf %631, %33 : vector<8x256xf32>
      %633 = arith.mulf %632, %619 : vector<8x256xf32>
      %634 = arith.addf %633, %8 : vector<8x256xf32>
      %cst_208 = arith.constant 4.300000e-01 : f32
      %635 = vector.broadcast %cst_208 : f32 to vector<8x256xf32>
      %636 = arith.addf %634, %635 : vector<8x256xf32>
      %637 = math.floor %636 : vector<8x256xf32>
      %cst_209 = arith.constant 7.000000e-02 : f32
      %638 = vector.broadcast %cst_209 : f32 to vector<8x256xf32>
      %639 = arith.cmpf oge, %626, %638 : vector<8x256xf32>
      %640 = arith.cmpf ole, %621, %49 : vector<8x256xf32>
      %641 = arith.andi %639, %640 : vector<8x256xi1>
      %cst_210 = arith.constant 0.000000e+00 : f32
      %642 = vector.broadcast %cst_210 : f32 to vector<8x256xf32>
      %643 = arith.cmpf olt, %637, %642 : vector<8x256xf32>
      %cst_211 = arith.constant 1.300000e-02 : f32
      %644 = vector.broadcast %cst_211 : f32 to vector<8x256xf32>
      %645 = arith.cmpf olt, %626, %644 : vector<8x256xf32>
      %646 = arith.cmpf ogt, %621, %626 : vector<8x256xf32>
      %647 = arith.andi %645, %646 : vector<8x256xi1>
      %648 = arith.ori %643, %647 : vector<8x256xi1>
      %649 = arith.mulf %621, %43 : vector<8x256xf32>
      %650 = arith.mulf %37, %628 : vector<8x256xf32>
      %651 = arith.mulf %650, %628 : vector<8x256xf32>
      %652 = arith.addf %651, %33 : vector<8x256xf32>
      %653 = arith.divf %649, %652 : vector<8x256xf32>
      %654 = math.log %653 : vector<8x256xf32>
      %655 = arith.mulf %637, %28 : vector<8x256xf32>
      %656 = arith.subf %655, %8 : vector<8x256xf32>
      %cst_212 = arith.constant 1.000000e+00 : f32
      %657 = vector.broadcast %cst_212 : f32 to vector<8x256xf32>
      %658 = arith.addf %637, %657 : vector<8x256xf32>
      %cst_213 = arith.constant 8.000000e+00 : f32
      %659 = vector.broadcast %cst_213 : f32 to vector<8x256xf32>
      %660 = arith.addf %658, %659 : vector<8x256xf32>
      %cst_214 = arith.constant 1.000000e+00 : f32
      %661 = vector.broadcast %cst_214 : f32 to vector<8x256xf32>
      %662 = arith.divf %661, %660 : vector<8x256xf32>
      %cst_215 = arith.constant 5.000000e-01 : f32
      %663 = vector.broadcast %cst_215 : f32 to vector<8x256xf32>
      %664 = arith.subf %660, %663 : vector<8x256xf32>
      %665 = math.log %660 : vector<8x256xf32>
      %666 = arith.mulf %664, %665 : vector<8x256xf32>
      %667 = arith.subf %666, %660 : vector<8x256xf32>
      %cst_216 = arith.constant 0.918938517 : f32
      %668 = vector.broadcast %cst_216 : f32 to vector<8x256xf32>
      %669 = arith.addf %667, %668 : vector<8x256xf32>
      %670 = arith.mulf %662, %662 : vector<8x256xf32>
      %cst_217 = arith.constant 0.00277777785 : f32
      %671 = vector.broadcast %cst_217 : f32 to vector<8x256xf32>
      %672 = arith.mulf %670, %671 : vector<8x256xf32>
      %cst_218 = arith.constant 0.0833333358 : f32
      %673 = vector.broadcast %cst_218 : f32 to vector<8x256xf32>
      %674 = arith.subf %673, %672 : vector<8x256xf32>
      %675 = arith.mulf %662, %674 : vector<8x256xf32>
      %676 = arith.addf %669, %675 : vector<8x256xf32>
      %cst_219 = arith.constant 1.000000e+00 : f32
      %677 = vector.broadcast %cst_219 : f32 to vector<8x256xf32>
      %678 = arith.addf %658, %677 : vector<8x256xf32>
      %679 = arith.mulf %658, %678 : vector<8x256xf32>
      %cst_220 = arith.constant 2.000000e+00 : f32
      %680 = vector.broadcast %cst_220 : f32 to vector<8x256xf32>
      %681 = arith.addf %658, %680 : vector<8x256xf32>
      %682 = arith.mulf %679, %681 : vector<8x256xf32>
      %cst_221 = arith.constant 3.000000e+00 : f32
      %683 = vector.broadcast %cst_221 : f32 to vector<8x256xf32>
      %684 = arith.addf %658, %683 : vector<8x256xf32>
      %685 = arith.mulf %682, %684 : vector<8x256xf32>
      %686 = math.log %685 : vector<8x256xf32>
      %cst_222 = arith.constant 4.000000e+00 : f32
      %687 = vector.broadcast %cst_222 : f32 to vector<8x256xf32>
      %688 = arith.addf %658, %687 : vector<8x256xf32>
      %cst_223 = arith.constant 5.000000e+00 : f32
      %689 = vector.broadcast %cst_223 : f32 to vector<8x256xf32>
      %690 = arith.addf %658, %689 : vector<8x256xf32>
      %691 = arith.mulf %688, %690 : vector<8x256xf32>
      %cst_224 = arith.constant 6.000000e+00 : f32
      %692 = vector.broadcast %cst_224 : f32 to vector<8x256xf32>
      %693 = arith.addf %658, %692 : vector<8x256xf32>
      %694 = arith.mulf %691, %693 : vector<8x256xf32>
      %cst_225 = arith.constant 7.000000e+00 : f32
      %695 = vector.broadcast %cst_225 : f32 to vector<8x256xf32>
      %696 = arith.addf %658, %695 : vector<8x256xf32>
      %697 = arith.mulf %694, %696 : vector<8x256xf32>
      %698 = math.log %697 : vector<8x256xf32>
      %699 = arith.addf %686, %698 : vector<8x256xf32>
      %700 = arith.subf %676, %699 : vector<8x256xf32>
      %701 = arith.subf %656, %700 : vector<8x256xf32>
      %cst_226 = arith.constant dense<true> : vector<8x256xi1>
      %702 = arith.xori %648, %cst_226 : vector<8x256xi1>
      %703 = arith.cmpf ole, %654, %701 : vector<8x256xf32>
      %704 = arith.andi %702, %703 : vector<8x256xi1>
      %705 = arith.ori %641, %704 : vector<8x256xi1>
      %cst_227 = arith.constant dense<true> : vector<8x256xi1>
      %706 = arith.xori %615, %cst_227 : vector<8x256xi1>
      %707 = arith.andi %705, %706 : vector<8x256xi1>
      %708 = arith.select %707, %637, %614 : vector<8x256xi1>, vector<8x256xf32>
      %709 = arith.ori %615, %705 : vector<8x256xi1>
      %c14 = arith.constant 14 : index
      %c0_228 = arith.constant 0 : index
      %c0_229 = arith.constant 0 : index
      %710 = vector.load %arg3[%c14, %c0_228, %c0_229] : memref<24x8x256xf32, #tpu.memory_space<vmem>>, vector<1x8x256xf32>
      %711 = vector.shape_cast %710 : vector<1x8x256xf32> to vector<8x256xf32>
      %cst_230 = arith.constant 5.000000e-01 : f32
      %712 = vector.broadcast %cst_230 : f32 to vector<8x256xf32>
      %713 = arith.subf %711, %712 : vector<8x256xf32>
      %c15 = arith.constant 15 : index
      %c0_231 = arith.constant 0 : index
      %c0_232 = arith.constant 0 : index
      %714 = vector.load %arg3[%c15, %c0_231, %c0_232] : memref<24x8x256xf32, #tpu.memory_space<vmem>>, vector<1x8x256xf32>
      %715 = vector.shape_cast %714 : vector<1x8x256xf32> to vector<8x256xf32>
      %716 = math.absf %713 : vector<8x256xf32>
      %cst_233 = arith.constant 5.000000e-01 : f32
      %717 = vector.broadcast %cst_233 : f32 to vector<8x256xf32>
      %718 = arith.subf %717, %716 : vector<8x256xf32>
      %cst_234 = arith.constant 9.99999997E-7 : f32
      %719 = vector.broadcast %cst_234 : f32 to vector<8x256xf32>
      %720 = arith.maximumf %718, %719 : vector<8x256xf32>
      %cst_235 = arith.constant 1.000000e+00 : f32
      %721 = vector.broadcast %cst_235 : f32 to vector<8x256xf32>
      %722 = arith.divf %721, %720 : vector<8x256xf32>
      %cst_236 = arith.constant 2.000000e+00 : f32
      %723 = vector.broadcast %cst_236 : f32 to vector<8x256xf32>
      %724 = arith.mulf %723, %37 : vector<8x256xf32>
      %725 = arith.mulf %724, %722 : vector<8x256xf32>
      %726 = arith.addf %725, %33 : vector<8x256xf32>
      %727 = arith.mulf %726, %713 : vector<8x256xf32>
      %728 = arith.addf %727, %8 : vector<8x256xf32>
      %cst_237 = arith.constant 4.300000e-01 : f32
      %729 = vector.broadcast %cst_237 : f32 to vector<8x256xf32>
      %730 = arith.addf %728, %729 : vector<8x256xf32>
      %731 = math.floor %730 : vector<8x256xf32>
      %cst_238 = arith.constant 7.000000e-02 : f32
      %732 = vector.broadcast %cst_238 : f32 to vector<8x256xf32>
      %733 = arith.cmpf oge, %720, %732 : vector<8x256xf32>
      %734 = arith.cmpf ole, %715, %49 : vector<8x256xf32>
      %735 = arith.andi %733, %734 : vector<8x256xi1>
      %cst_239 = arith.constant 0.000000e+00 : f32
      %736 = vector.broadcast %cst_239 : f32 to vector<8x256xf32>
      %737 = arith.cmpf olt, %731, %736 : vector<8x256xf32>
      %cst_240 = arith.constant 1.300000e-02 : f32
      %738 = vector.broadcast %cst_240 : f32 to vector<8x256xf32>
      %739 = arith.cmpf olt, %720, %738 : vector<8x256xf32>
      %740 = arith.cmpf ogt, %715, %720 : vector<8x256xf32>
      %741 = arith.andi %739, %740 : vector<8x256xi1>
      %742 = arith.ori %737, %741 : vector<8x256xi1>
      %743 = arith.mulf %715, %43 : vector<8x256xf32>
      %744 = arith.mulf %37, %722 : vector<8x256xf32>
      %745 = arith.mulf %744, %722 : vector<8x256xf32>
      %746 = arith.addf %745, %33 : vector<8x256xf32>
      %747 = arith.divf %743, %746 : vector<8x256xf32>
      %748 = math.log %747 : vector<8x256xf32>
      %749 = arith.mulf %731, %28 : vector<8x256xf32>
      %750 = arith.subf %749, %8 : vector<8x256xf32>
      %cst_241 = arith.constant 1.000000e+00 : f32
      %751 = vector.broadcast %cst_241 : f32 to vector<8x256xf32>
      %752 = arith.addf %731, %751 : vector<8x256xf32>
      %cst_242 = arith.constant 8.000000e+00 : f32
      %753 = vector.broadcast %cst_242 : f32 to vector<8x256xf32>
      %754 = arith.addf %752, %753 : vector<8x256xf32>
      %cst_243 = arith.constant 1.000000e+00 : f32
      %755 = vector.broadcast %cst_243 : f32 to vector<8x256xf32>
      %756 = arith.divf %755, %754 : vector<8x256xf32>
      %cst_244 = arith.constant 5.000000e-01 : f32
      %757 = vector.broadcast %cst_244 : f32 to vector<8x256xf32>
      %758 = arith.subf %754, %757 : vector<8x256xf32>
      %759 = math.log %754 : vector<8x256xf32>
      %760 = arith.mulf %758, %759 : vector<8x256xf32>
      %761 = arith.subf %760, %754 : vector<8x256xf32>
      %cst_245 = arith.constant 0.918938517 : f32
      %762 = vector.broadcast %cst_245 : f32 to vector<8x256xf32>
      %763 = arith.addf %761, %762 : vector<8x256xf32>
      %764 = arith.mulf %756, %756 : vector<8x256xf32>
      %cst_246 = arith.constant 0.00277777785 : f32
      %765 = vector.broadcast %cst_246 : f32 to vector<8x256xf32>
      %766 = arith.mulf %764, %765 : vector<8x256xf32>
      %cst_247 = arith.constant 0.0833333358 : f32
      %767 = vector.broadcast %cst_247 : f32 to vector<8x256xf32>
      %768 = arith.subf %767, %766 : vector<8x256xf32>
      %769 = arith.mulf %756, %768 : vector<8x256xf32>
      %770 = arith.addf %763, %769 : vector<8x256xf32>
      %cst_248 = arith.constant 1.000000e+00 : f32
      %771 = vector.broadcast %cst_248 : f32 to vector<8x256xf32>
      %772 = arith.addf %752, %771 : vector<8x256xf32>
      %773 = arith.mulf %752, %772 : vector<8x256xf32>
      %cst_249 = arith.constant 2.000000e+00 : f32
      %774 = vector.broadcast %cst_249 : f32 to vector<8x256xf32>
      %775 = arith.addf %752, %774 : vector<8x256xf32>
      %776 = arith.mulf %773, %775 : vector<8x256xf32>
      %cst_250 = arith.constant 3.000000e+00 : f32
      %777 = vector.broadcast %cst_250 : f32 to vector<8x256xf32>
      %778 = arith.addf %752, %777 : vector<8x256xf32>
      %779 = arith.mulf %776, %778 : vector<8x256xf32>
      %780 = math.log %779 : vector<8x256xf32>
      %cst_251 = arith.constant 4.000000e+00 : f32
      %781 = vector.broadcast %cst_251 : f32 to vector<8x256xf32>
      %782 = arith.addf %752, %781 : vector<8x256xf32>
      %cst_252 = arith.constant 5.000000e+00 : f32
      %783 = vector.broadcast %cst_252 : f32 to vector<8x256xf32>
      %784 = arith.addf %752, %783 : vector<8x256xf32>
      %785 = arith.mulf %782, %784 : vector<8x256xf32>
      %cst_253 = arith.constant 6.000000e+00 : f32
      %786 = vector.broadcast %cst_253 : f32 to vector<8x256xf32>
      %787 = arith.addf %752, %786 : vector<8x256xf32>
      %788 = arith.mulf %785, %787 : vector<8x256xf32>
      %cst_254 = arith.constant 7.000000e+00 : f32
      %789 = vector.broadcast %cst_254 : f32 to vector<8x256xf32>
      %790 = arith.addf %752, %789 : vector<8x256xf32>
      %791 = arith.mulf %788, %790 : vector<8x256xf32>
      %792 = math.log %791 : vector<8x256xf32>
      %793 = arith.addf %780, %792 : vector<8x256xf32>
      %794 = arith.subf %770, %793 : vector<8x256xf32>
      %795 = arith.subf %750, %794 : vector<8x256xf32>
      %cst_255 = arith.constant dense<true> : vector<8x256xi1>
      %796 = arith.xori %742, %cst_255 : vector<8x256xi1>
      %797 = arith.cmpf ole, %748, %795 : vector<8x256xf32>
      %798 = arith.andi %796, %797 : vector<8x256xi1>
      %799 = arith.ori %735, %798 : vector<8x256xi1>
      %cst_256 = arith.constant dense<true> : vector<8x256xi1>
      %800 = arith.xori %709, %cst_256 : vector<8x256xi1>
      %801 = arith.andi %799, %800 : vector<8x256xi1>
      %802 = arith.select %801, %731, %708 : vector<8x256xi1>, vector<8x256xf32>
      %803 = arith.ori %709, %799 : vector<8x256xi1>
      %c16 = arith.constant 16 : index
      %c0_257 = arith.constant 0 : index
      %c0_258 = arith.constant 0 : index
      %804 = vector.load %arg3[%c16, %c0_257, %c0_258] : memref<24x8x256xf32, #tpu.memory_space<vmem>>, vector<1x8x256xf32>
      %805 = vector.shape_cast %804 : vector<1x8x256xf32> to vector<8x256xf32>
      %cst_259 = arith.constant 5.000000e-01 : f32
      %806 = vector.broadcast %cst_259 : f32 to vector<8x256xf32>
      %807 = arith.subf %805, %806 : vector<8x256xf32>
      %c17 = arith.constant 17 : index
      %c0_260 = arith.constant 0 : index
      %c0_261 = arith.constant 0 : index
      %808 = vector.load %arg3[%c17, %c0_260, %c0_261] : memref<24x8x256xf32, #tpu.memory_space<vmem>>, vector<1x8x256xf32>
      %809 = vector.shape_cast %808 : vector<1x8x256xf32> to vector<8x256xf32>
      %810 = math.absf %807 : vector<8x256xf32>
      %cst_262 = arith.constant 5.000000e-01 : f32
      %811 = vector.broadcast %cst_262 : f32 to vector<8x256xf32>
      %812 = arith.subf %811, %810 : vector<8x256xf32>
      %cst_263 = arith.constant 9.99999997E-7 : f32
      %813 = vector.broadcast %cst_263 : f32 to vector<8x256xf32>
      %814 = arith.maximumf %812, %813 : vector<8x256xf32>
      %cst_264 = arith.constant 1.000000e+00 : f32
      %815 = vector.broadcast %cst_264 : f32 to vector<8x256xf32>
      %816 = arith.divf %815, %814 : vector<8x256xf32>
      %cst_265 = arith.constant 2.000000e+00 : f32
      %817 = vector.broadcast %cst_265 : f32 to vector<8x256xf32>
      %818 = arith.mulf %817, %37 : vector<8x256xf32>
      %819 = arith.mulf %818, %816 : vector<8x256xf32>
      %820 = arith.addf %819, %33 : vector<8x256xf32>
      %821 = arith.mulf %820, %807 : vector<8x256xf32>
      %822 = arith.addf %821, %8 : vector<8x256xf32>
      %cst_266 = arith.constant 4.300000e-01 : f32
      %823 = vector.broadcast %cst_266 : f32 to vector<8x256xf32>
      %824 = arith.addf %822, %823 : vector<8x256xf32>
      %825 = math.floor %824 : vector<8x256xf32>
      %cst_267 = arith.constant 7.000000e-02 : f32
      %826 = vector.broadcast %cst_267 : f32 to vector<8x256xf32>
      %827 = arith.cmpf oge, %814, %826 : vector<8x256xf32>
      %828 = arith.cmpf ole, %809, %49 : vector<8x256xf32>
      %829 = arith.andi %827, %828 : vector<8x256xi1>
      %cst_268 = arith.constant 0.000000e+00 : f32
      %830 = vector.broadcast %cst_268 : f32 to vector<8x256xf32>
      %831 = arith.cmpf olt, %825, %830 : vector<8x256xf32>
      %cst_269 = arith.constant 1.300000e-02 : f32
      %832 = vector.broadcast %cst_269 : f32 to vector<8x256xf32>
      %833 = arith.cmpf olt, %814, %832 : vector<8x256xf32>
      %834 = arith.cmpf ogt, %809, %814 : vector<8x256xf32>
      %835 = arith.andi %833, %834 : vector<8x256xi1>
      %836 = arith.ori %831, %835 : vector<8x256xi1>
      %837 = arith.mulf %809, %43 : vector<8x256xf32>
      %838 = arith.mulf %37, %816 : vector<8x256xf32>
      %839 = arith.mulf %838, %816 : vector<8x256xf32>
      %840 = arith.addf %839, %33 : vector<8x256xf32>
      %841 = arith.divf %837, %840 : vector<8x256xf32>
      %842 = math.log %841 : vector<8x256xf32>
      %843 = arith.mulf %825, %28 : vector<8x256xf32>
      %844 = arith.subf %843, %8 : vector<8x256xf32>
      %cst_270 = arith.constant 1.000000e+00 : f32
      %845 = vector.broadcast %cst_270 : f32 to vector<8x256xf32>
      %846 = arith.addf %825, %845 : vector<8x256xf32>
      %cst_271 = arith.constant 8.000000e+00 : f32
      %847 = vector.broadcast %cst_271 : f32 to vector<8x256xf32>
      %848 = arith.addf %846, %847 : vector<8x256xf32>
      %cst_272 = arith.constant 1.000000e+00 : f32
      %849 = vector.broadcast %cst_272 : f32 to vector<8x256xf32>
      %850 = arith.divf %849, %848 : vector<8x256xf32>
      %cst_273 = arith.constant 5.000000e-01 : f32
      %851 = vector.broadcast %cst_273 : f32 to vector<8x256xf32>
      %852 = arith.subf %848, %851 : vector<8x256xf32>
      %853 = math.log %848 : vector<8x256xf32>
      %854 = arith.mulf %852, %853 : vector<8x256xf32>
      %855 = arith.subf %854, %848 : vector<8x256xf32>
      %cst_274 = arith.constant 0.918938517 : f32
      %856 = vector.broadcast %cst_274 : f32 to vector<8x256xf32>
      %857 = arith.addf %855, %856 : vector<8x256xf32>
      %858 = arith.mulf %850, %850 : vector<8x256xf32>
      %cst_275 = arith.constant 0.00277777785 : f32
      %859 = vector.broadcast %cst_275 : f32 to vector<8x256xf32>
      %860 = arith.mulf %858, %859 : vector<8x256xf32>
      %cst_276 = arith.constant 0.0833333358 : f32
      %861 = vector.broadcast %cst_276 : f32 to vector<8x256xf32>
      %862 = arith.subf %861, %860 : vector<8x256xf32>
      %863 = arith.mulf %850, %862 : vector<8x256xf32>
      %864 = arith.addf %857, %863 : vector<8x256xf32>
      %cst_277 = arith.constant 1.000000e+00 : f32
      %865 = vector.broadcast %cst_277 : f32 to vector<8x256xf32>
      %866 = arith.addf %846, %865 : vector<8x256xf32>
      %867 = arith.mulf %846, %866 : vector<8x256xf32>
      %cst_278 = arith.constant 2.000000e+00 : f32
      %868 = vector.broadcast %cst_278 : f32 to vector<8x256xf32>
      %869 = arith.addf %846, %868 : vector<8x256xf32>
      %870 = arith.mulf %867, %869 : vector<8x256xf32>
      %cst_279 = arith.constant 3.000000e+00 : f32
      %871 = vector.broadcast %cst_279 : f32 to vector<8x256xf32>
      %872 = arith.addf %846, %871 : vector<8x256xf32>
      %873 = arith.mulf %870, %872 : vector<8x256xf32>
      %874 = math.log %873 : vector<8x256xf32>
      %cst_280 = arith.constant 4.000000e+00 : f32
      %875 = vector.broadcast %cst_280 : f32 to vector<8x256xf32>
      %876 = arith.addf %846, %875 : vector<8x256xf32>
      %cst_281 = arith.constant 5.000000e+00 : f32
      %877 = vector.broadcast %cst_281 : f32 to vector<8x256xf32>
      %878 = arith.addf %846, %877 : vector<8x256xf32>
      %879 = arith.mulf %876, %878 : vector<8x256xf32>
      %cst_282 = arith.constant 6.000000e+00 : f32
      %880 = vector.broadcast %cst_282 : f32 to vector<8x256xf32>
      %881 = arith.addf %846, %880 : vector<8x256xf32>
      %882 = arith.mulf %879, %881 : vector<8x256xf32>
      %cst_283 = arith.constant 7.000000e+00 : f32
      %883 = vector.broadcast %cst_283 : f32 to vector<8x256xf32>
      %884 = arith.addf %846, %883 : vector<8x256xf32>
      %885 = arith.mulf %882, %884 : vector<8x256xf32>
      %886 = math.log %885 : vector<8x256xf32>
      %887 = arith.addf %874, %886 : vector<8x256xf32>
      %888 = arith.subf %864, %887 : vector<8x256xf32>
      %889 = arith.subf %844, %888 : vector<8x256xf32>
      %cst_284 = arith.constant dense<true> : vector<8x256xi1>
      %890 = arith.xori %836, %cst_284 : vector<8x256xi1>
      %891 = arith.cmpf ole, %842, %889 : vector<8x256xf32>
      %892 = arith.andi %890, %891 : vector<8x256xi1>
      %893 = arith.ori %829, %892 : vector<8x256xi1>
      %cst_285 = arith.constant dense<true> : vector<8x256xi1>
      %894 = arith.xori %803, %cst_285 : vector<8x256xi1>
      %895 = arith.andi %893, %894 : vector<8x256xi1>
      %896 = arith.select %895, %825, %802 : vector<8x256xi1>, vector<8x256xf32>
      %897 = arith.ori %803, %893 : vector<8x256xi1>
      %c18 = arith.constant 18 : index
      %c0_286 = arith.constant 0 : index
      %c0_287 = arith.constant 0 : index
      %898 = vector.load %arg3[%c18, %c0_286, %c0_287] : memref<24x8x256xf32, #tpu.memory_space<vmem>>, vector<1x8x256xf32>
      %899 = vector.shape_cast %898 : vector<1x8x256xf32> to vector<8x256xf32>
      %cst_288 = arith.constant 5.000000e-01 : f32
      %900 = vector.broadcast %cst_288 : f32 to vector<8x256xf32>
      %901 = arith.subf %899, %900 : vector<8x256xf32>
      %c19 = arith.constant 19 : index
      %c0_289 = arith.constant 0 : index
      %c0_290 = arith.constant 0 : index
      %902 = vector.load %arg3[%c19, %c0_289, %c0_290] : memref<24x8x256xf32, #tpu.memory_space<vmem>>, vector<1x8x256xf32>
      %903 = vector.shape_cast %902 : vector<1x8x256xf32> to vector<8x256xf32>
      %904 = math.absf %901 : vector<8x256xf32>
      %cst_291 = arith.constant 5.000000e-01 : f32
      %905 = vector.broadcast %cst_291 : f32 to vector<8x256xf32>
      %906 = arith.subf %905, %904 : vector<8x256xf32>
      %cst_292 = arith.constant 9.99999997E-7 : f32
      %907 = vector.broadcast %cst_292 : f32 to vector<8x256xf32>
      %908 = arith.maximumf %906, %907 : vector<8x256xf32>
      %cst_293 = arith.constant 1.000000e+00 : f32
      %909 = vector.broadcast %cst_293 : f32 to vector<8x256xf32>
      %910 = arith.divf %909, %908 : vector<8x256xf32>
      %cst_294 = arith.constant 2.000000e+00 : f32
      %911 = vector.broadcast %cst_294 : f32 to vector<8x256xf32>
      %912 = arith.mulf %911, %37 : vector<8x256xf32>
      %913 = arith.mulf %912, %910 : vector<8x256xf32>
      %914 = arith.addf %913, %33 : vector<8x256xf32>
      %915 = arith.mulf %914, %901 : vector<8x256xf32>
      %916 = arith.addf %915, %8 : vector<8x256xf32>
      %cst_295 = arith.constant 4.300000e-01 : f32
      %917 = vector.broadcast %cst_295 : f32 to vector<8x256xf32>
      %918 = arith.addf %916, %917 : vector<8x256xf32>
      %919 = math.floor %918 : vector<8x256xf32>
      %cst_296 = arith.constant 7.000000e-02 : f32
      %920 = vector.broadcast %cst_296 : f32 to vector<8x256xf32>
      %921 = arith.cmpf oge, %908, %920 : vector<8x256xf32>
      %922 = arith.cmpf ole, %903, %49 : vector<8x256xf32>
      %923 = arith.andi %921, %922 : vector<8x256xi1>
      %cst_297 = arith.constant 0.000000e+00 : f32
      %924 = vector.broadcast %cst_297 : f32 to vector<8x256xf32>
      %925 = arith.cmpf olt, %919, %924 : vector<8x256xf32>
      %cst_298 = arith.constant 1.300000e-02 : f32
      %926 = vector.broadcast %cst_298 : f32 to vector<8x256xf32>
      %927 = arith.cmpf olt, %908, %926 : vector<8x256xf32>
      %928 = arith.cmpf ogt, %903, %908 : vector<8x256xf32>
      %929 = arith.andi %927, %928 : vector<8x256xi1>
      %930 = arith.ori %925, %929 : vector<8x256xi1>
      %931 = arith.mulf %903, %43 : vector<8x256xf32>
      %932 = arith.mulf %37, %910 : vector<8x256xf32>
      %933 = arith.mulf %932, %910 : vector<8x256xf32>
      %934 = arith.addf %933, %33 : vector<8x256xf32>
      %935 = arith.divf %931, %934 : vector<8x256xf32>
      %936 = math.log %935 : vector<8x256xf32>
      %937 = arith.mulf %919, %28 : vector<8x256xf32>
      %938 = arith.subf %937, %8 : vector<8x256xf32>
      %cst_299 = arith.constant 1.000000e+00 : f32
      %939 = vector.broadcast %cst_299 : f32 to vector<8x256xf32>
      %940 = arith.addf %919, %939 : vector<8x256xf32>
      %cst_300 = arith.constant 8.000000e+00 : f32
      %941 = vector.broadcast %cst_300 : f32 to vector<8x256xf32>
      %942 = arith.addf %940, %941 : vector<8x256xf32>
      %cst_301 = arith.constant 1.000000e+00 : f32
      %943 = vector.broadcast %cst_301 : f32 to vector<8x256xf32>
      %944 = arith.divf %943, %942 : vector<8x256xf32>
      %cst_302 = arith.constant 5.000000e-01 : f32
      %945 = vector.broadcast %cst_302 : f32 to vector<8x256xf32>
      %946 = arith.subf %942, %945 : vector<8x256xf32>
      %947 = math.log %942 : vector<8x256xf32>
      %948 = arith.mulf %946, %947 : vector<8x256xf32>
      %949 = arith.subf %948, %942 : vector<8x256xf32>
      %cst_303 = arith.constant 0.918938517 : f32
      %950 = vector.broadcast %cst_303 : f32 to vector<8x256xf32>
      %951 = arith.addf %949, %950 : vector<8x256xf32>
      %952 = arith.mulf %944, %944 : vector<8x256xf32>
      %cst_304 = arith.constant 0.00277777785 : f32
      %953 = vector.broadcast %cst_304 : f32 to vector<8x256xf32>
      %954 = arith.mulf %952, %953 : vector<8x256xf32>
      %cst_305 = arith.constant 0.0833333358 : f32
      %955 = vector.broadcast %cst_305 : f32 to vector<8x256xf32>
      %956 = arith.subf %955, %954 : vector<8x256xf32>
      %957 = arith.mulf %944, %956 : vector<8x256xf32>
      %958 = arith.addf %951, %957 : vector<8x256xf32>
      %cst_306 = arith.constant 1.000000e+00 : f32
      %959 = vector.broadcast %cst_306 : f32 to vector<8x256xf32>
      %960 = arith.addf %940, %959 : vector<8x256xf32>
      %961 = arith.mulf %940, %960 : vector<8x256xf32>
      %cst_307 = arith.constant 2.000000e+00 : f32
      %962 = vector.broadcast %cst_307 : f32 to vector<8x256xf32>
      %963 = arith.addf %940, %962 : vector<8x256xf32>
      %964 = arith.mulf %961, %963 : vector<8x256xf32>
      %cst_308 = arith.constant 3.000000e+00 : f32
      %965 = vector.broadcast %cst_308 : f32 to vector<8x256xf32>
      %966 = arith.addf %940, %965 : vector<8x256xf32>
      %967 = arith.mulf %964, %966 : vector<8x256xf32>
      %968 = math.log %967 : vector<8x256xf32>
      %cst_309 = arith.constant 4.000000e+00 : f32
      %969 = vector.broadcast %cst_309 : f32 to vector<8x256xf32>
      %970 = arith.addf %940, %969 : vector<8x256xf32>
      %cst_310 = arith.constant 5.000000e+00 : f32
      %971 = vector.broadcast %cst_310 : f32 to vector<8x256xf32>
      %972 = arith.addf %940, %971 : vector<8x256xf32>
      %973 = arith.mulf %970, %972 : vector<8x256xf32>
      %cst_311 = arith.constant 6.000000e+00 : f32
      %974 = vector.broadcast %cst_311 : f32 to vector<8x256xf32>
      %975 = arith.addf %940, %974 : vector<8x256xf32>
      %976 = arith.mulf %973, %975 : vector<8x256xf32>
      %cst_312 = arith.constant 7.000000e+00 : f32
      %977 = vector.broadcast %cst_312 : f32 to vector<8x256xf32>
      %978 = arith.addf %940, %977 : vector<8x256xf32>
      %979 = arith.mulf %976, %978 : vector<8x256xf32>
      %980 = math.log %979 : vector<8x256xf32>
      %981 = arith.addf %968, %980 : vector<8x256xf32>
      %982 = arith.subf %958, %981 : vector<8x256xf32>
      %983 = arith.subf %938, %982 : vector<8x256xf32>
      %cst_313 = arith.constant dense<true> : vector<8x256xi1>
      %984 = arith.xori %930, %cst_313 : vector<8x256xi1>
      %985 = arith.cmpf ole, %936, %983 : vector<8x256xf32>
      %986 = arith.andi %984, %985 : vector<8x256xi1>
      %987 = arith.ori %923, %986 : vector<8x256xi1>
      %cst_314 = arith.constant dense<true> : vector<8x256xi1>
      %988 = arith.xori %897, %cst_314 : vector<8x256xi1>
      %989 = arith.andi %987, %988 : vector<8x256xi1>
      %990 = arith.select %989, %919, %896 : vector<8x256xi1>, vector<8x256xf32>
      %991 = arith.ori %897, %987 : vector<8x256xi1>
      %c20 = arith.constant 20 : index
      %c0_315 = arith.constant 0 : index
      %c0_316 = arith.constant 0 : index
      %992 = vector.load %arg3[%c20, %c0_315, %c0_316] : memref<24x8x256xf32, #tpu.memory_space<vmem>>, vector<1x8x256xf32>
      %993 = vector.shape_cast %992 : vector<1x8x256xf32> to vector<8x256xf32>
      %cst_317 = arith.constant 5.000000e-01 : f32
      %994 = vector.broadcast %cst_317 : f32 to vector<8x256xf32>
      %995 = arith.subf %993, %994 : vector<8x256xf32>
      %c21 = arith.constant 21 : index
      %c0_318 = arith.constant 0 : index
      %c0_319 = arith.constant 0 : index
      %996 = vector.load %arg3[%c21, %c0_318, %c0_319] : memref<24x8x256xf32, #tpu.memory_space<vmem>>, vector<1x8x256xf32>
      %997 = vector.shape_cast %996 : vector<1x8x256xf32> to vector<8x256xf32>
      %998 = math.absf %995 : vector<8x256xf32>
      %cst_320 = arith.constant 5.000000e-01 : f32
      %999 = vector.broadcast %cst_320 : f32 to vector<8x256xf32>
      %1000 = arith.subf %999, %998 : vector<8x256xf32>
      %cst_321 = arith.constant 9.99999997E-7 : f32
      %1001 = vector.broadcast %cst_321 : f32 to vector<8x256xf32>
      %1002 = arith.maximumf %1000, %1001 : vector<8x256xf32>
      %cst_322 = arith.constant 1.000000e+00 : f32
      %1003 = vector.broadcast %cst_322 : f32 to vector<8x256xf32>
      %1004 = arith.divf %1003, %1002 : vector<8x256xf32>
      %cst_323 = arith.constant 2.000000e+00 : f32
      %1005 = vector.broadcast %cst_323 : f32 to vector<8x256xf32>
      %1006 = arith.mulf %1005, %37 : vector<8x256xf32>
      %1007 = arith.mulf %1006, %1004 : vector<8x256xf32>
      %1008 = arith.addf %1007, %33 : vector<8x256xf32>
      %1009 = arith.mulf %1008, %995 : vector<8x256xf32>
      %1010 = arith.addf %1009, %8 : vector<8x256xf32>
      %cst_324 = arith.constant 4.300000e-01 : f32
      %1011 = vector.broadcast %cst_324 : f32 to vector<8x256xf32>
      %1012 = arith.addf %1010, %1011 : vector<8x256xf32>
      %1013 = math.floor %1012 : vector<8x256xf32>
      %cst_325 = arith.constant 7.000000e-02 : f32
      %1014 = vector.broadcast %cst_325 : f32 to vector<8x256xf32>
      %1015 = arith.cmpf oge, %1002, %1014 : vector<8x256xf32>
      %1016 = arith.cmpf ole, %997, %49 : vector<8x256xf32>
      %1017 = arith.andi %1015, %1016 : vector<8x256xi1>
      %cst_326 = arith.constant 0.000000e+00 : f32
      %1018 = vector.broadcast %cst_326 : f32 to vector<8x256xf32>
      %1019 = arith.cmpf olt, %1013, %1018 : vector<8x256xf32>
      %cst_327 = arith.constant 1.300000e-02 : f32
      %1020 = vector.broadcast %cst_327 : f32 to vector<8x256xf32>
      %1021 = arith.cmpf olt, %1002, %1020 : vector<8x256xf32>
      %1022 = arith.cmpf ogt, %997, %1002 : vector<8x256xf32>
      %1023 = arith.andi %1021, %1022 : vector<8x256xi1>
      %1024 = arith.ori %1019, %1023 : vector<8x256xi1>
      %1025 = arith.mulf %997, %43 : vector<8x256xf32>
      %1026 = arith.mulf %37, %1004 : vector<8x256xf32>
      %1027 = arith.mulf %1026, %1004 : vector<8x256xf32>
      %1028 = arith.addf %1027, %33 : vector<8x256xf32>
      %1029 = arith.divf %1025, %1028 : vector<8x256xf32>
      %1030 = math.log %1029 : vector<8x256xf32>
      %1031 = arith.mulf %1013, %28 : vector<8x256xf32>
      %1032 = arith.subf %1031, %8 : vector<8x256xf32>
      %cst_328 = arith.constant 1.000000e+00 : f32
      %1033 = vector.broadcast %cst_328 : f32 to vector<8x256xf32>
      %1034 = arith.addf %1013, %1033 : vector<8x256xf32>
      %cst_329 = arith.constant 8.000000e+00 : f32
      %1035 = vector.broadcast %cst_329 : f32 to vector<8x256xf32>
      %1036 = arith.addf %1034, %1035 : vector<8x256xf32>
      %cst_330 = arith.constant 1.000000e+00 : f32
      %1037 = vector.broadcast %cst_330 : f32 to vector<8x256xf32>
      %1038 = arith.divf %1037, %1036 : vector<8x256xf32>
      %cst_331 = arith.constant 5.000000e-01 : f32
      %1039 = vector.broadcast %cst_331 : f32 to vector<8x256xf32>
      %1040 = arith.subf %1036, %1039 : vector<8x256xf32>
      %1041 = math.log %1036 : vector<8x256xf32>
      %1042 = arith.mulf %1040, %1041 : vector<8x256xf32>
      %1043 = arith.subf %1042, %1036 : vector<8x256xf32>
      %cst_332 = arith.constant 0.918938517 : f32
      %1044 = vector.broadcast %cst_332 : f32 to vector<8x256xf32>
      %1045 = arith.addf %1043, %1044 : vector<8x256xf32>
      %1046 = arith.mulf %1038, %1038 : vector<8x256xf32>
      %cst_333 = arith.constant 0.00277777785 : f32
      %1047 = vector.broadcast %cst_333 : f32 to vector<8x256xf32>
      %1048 = arith.mulf %1046, %1047 : vector<8x256xf32>
      %cst_334 = arith.constant 0.0833333358 : f32
      %1049 = vector.broadcast %cst_334 : f32 to vector<8x256xf32>
      %1050 = arith.subf %1049, %1048 : vector<8x256xf32>
      %1051 = arith.mulf %1038, %1050 : vector<8x256xf32>
      %1052 = arith.addf %1045, %1051 : vector<8x256xf32>
      %cst_335 = arith.constant 1.000000e+00 : f32
      %1053 = vector.broadcast %cst_335 : f32 to vector<8x256xf32>
      %1054 = arith.addf %1034, %1053 : vector<8x256xf32>
      %1055 = arith.mulf %1034, %1054 : vector<8x256xf32>
      %cst_336 = arith.constant 2.000000e+00 : f32
      %1056 = vector.broadcast %cst_336 : f32 to vector<8x256xf32>
      %1057 = arith.addf %1034, %1056 : vector<8x256xf32>
      %1058 = arith.mulf %1055, %1057 : vector<8x256xf32>
      %cst_337 = arith.constant 3.000000e+00 : f32
      %1059 = vector.broadcast %cst_337 : f32 to vector<8x256xf32>
      %1060 = arith.addf %1034, %1059 : vector<8x256xf32>
      %1061 = arith.mulf %1058, %1060 : vector<8x256xf32>
      %1062 = math.log %1061 : vector<8x256xf32>
      %cst_338 = arith.constant 4.000000e+00 : f32
      %1063 = vector.broadcast %cst_338 : f32 to vector<8x256xf32>
      %1064 = arith.addf %1034, %1063 : vector<8x256xf32>
      %cst_339 = arith.constant 5.000000e+00 : f32
      %1065 = vector.broadcast %cst_339 : f32 to vector<8x256xf32>
      %1066 = arith.addf %1034, %1065 : vector<8x256xf32>
      %1067 = arith.mulf %1064, %1066 : vector<8x256xf32>
      %cst_340 = arith.constant 6.000000e+00 : f32
      %1068 = vector.broadcast %cst_340 : f32 to vector<8x256xf32>
      %1069 = arith.addf %1034, %1068 : vector<8x256xf32>
      %1070 = arith.mulf %1067, %1069 : vector<8x256xf32>
      %cst_341 = arith.constant 7.000000e+00 : f32
      %1071 = vector.broadcast %cst_341 : f32 to vector<8x256xf32>
      %1072 = arith.addf %1034, %1071 : vector<8x256xf32>
      %1073 = arith.mulf %1070, %1072 : vector<8x256xf32>
      %1074 = math.log %1073 : vector<8x256xf32>
      %1075 = arith.addf %1062, %1074 : vector<8x256xf32>
      %1076 = arith.subf %1052, %1075 : vector<8x256xf32>
      %1077 = arith.subf %1032, %1076 : vector<8x256xf32>
      %cst_342 = arith.constant dense<true> : vector<8x256xi1>
      %1078 = arith.xori %1024, %cst_342 : vector<8x256xi1>
      %1079 = arith.cmpf ole, %1030, %1077 : vector<8x256xf32>
      %1080 = arith.andi %1078, %1079 : vector<8x256xi1>
      %1081 = arith.ori %1017, %1080 : vector<8x256xi1>
      %cst_343 = arith.constant dense<true> : vector<8x256xi1>
      %1082 = arith.xori %991, %cst_343 : vector<8x256xi1>
      %1083 = arith.andi %1081, %1082 : vector<8x256xi1>
      %1084 = arith.select %1083, %1013, %990 : vector<8x256xi1>, vector<8x256xf32>
      %1085 = arith.ori %991, %1081 : vector<8x256xi1>
      %c22 = arith.constant 22 : index
      %c0_344 = arith.constant 0 : index
      %c0_345 = arith.constant 0 : index
      %1086 = vector.load %arg3[%c22, %c0_344, %c0_345] : memref<24x8x256xf32, #tpu.memory_space<vmem>>, vector<1x8x256xf32>
      %1087 = vector.shape_cast %1086 : vector<1x8x256xf32> to vector<8x256xf32>
      %cst_346 = arith.constant 5.000000e-01 : f32
      %1088 = vector.broadcast %cst_346 : f32 to vector<8x256xf32>
      %1089 = arith.subf %1087, %1088 : vector<8x256xf32>
      %c23 = arith.constant 23 : index
      %c0_347 = arith.constant 0 : index
      %c0_348 = arith.constant 0 : index
      %1090 = vector.load %arg3[%c23, %c0_347, %c0_348] : memref<24x8x256xf32, #tpu.memory_space<vmem>>, vector<1x8x256xf32>
      %1091 = vector.shape_cast %1090 : vector<1x8x256xf32> to vector<8x256xf32>
      %1092 = math.absf %1089 : vector<8x256xf32>
      %cst_349 = arith.constant 5.000000e-01 : f32
      %1093 = vector.broadcast %cst_349 : f32 to vector<8x256xf32>
      %1094 = arith.subf %1093, %1092 : vector<8x256xf32>
      %cst_350 = arith.constant 9.99999997E-7 : f32
      %1095 = vector.broadcast %cst_350 : f32 to vector<8x256xf32>
      %1096 = arith.maximumf %1094, %1095 : vector<8x256xf32>
      %cst_351 = arith.constant 1.000000e+00 : f32
      %1097 = vector.broadcast %cst_351 : f32 to vector<8x256xf32>
      %1098 = arith.divf %1097, %1096 : vector<8x256xf32>
      %cst_352 = arith.constant 2.000000e+00 : f32
      %1099 = vector.broadcast %cst_352 : f32 to vector<8x256xf32>
      %1100 = arith.mulf %1099, %37 : vector<8x256xf32>
      %1101 = arith.mulf %1100, %1098 : vector<8x256xf32>
      %1102 = arith.addf %1101, %33 : vector<8x256xf32>
      %1103 = arith.mulf %1102, %1089 : vector<8x256xf32>
      %1104 = arith.addf %1103, %8 : vector<8x256xf32>
      %cst_353 = arith.constant 4.300000e-01 : f32
      %1105 = vector.broadcast %cst_353 : f32 to vector<8x256xf32>
      %1106 = arith.addf %1104, %1105 : vector<8x256xf32>
      %1107 = math.floor %1106 : vector<8x256xf32>
      %cst_354 = arith.constant 7.000000e-02 : f32
      %1108 = vector.broadcast %cst_354 : f32 to vector<8x256xf32>
      %1109 = arith.cmpf oge, %1096, %1108 : vector<8x256xf32>
      %1110 = arith.cmpf ole, %1091, %49 : vector<8x256xf32>
      %1111 = arith.andi %1109, %1110 : vector<8x256xi1>
      %cst_355 = arith.constant 0.000000e+00 : f32
      %1112 = vector.broadcast %cst_355 : f32 to vector<8x256xf32>
      %1113 = arith.cmpf olt, %1107, %1112 : vector<8x256xf32>
      %cst_356 = arith.constant 1.300000e-02 : f32
      %1114 = vector.broadcast %cst_356 : f32 to vector<8x256xf32>
      %1115 = arith.cmpf olt, %1096, %1114 : vector<8x256xf32>
      %1116 = arith.cmpf ogt, %1091, %1096 : vector<8x256xf32>
      %1117 = arith.andi %1115, %1116 : vector<8x256xi1>
      %1118 = arith.ori %1113, %1117 : vector<8x256xi1>
      %1119 = arith.mulf %1091, %43 : vector<8x256xf32>
      %1120 = arith.mulf %37, %1098 : vector<8x256xf32>
      %1121 = arith.mulf %1120, %1098 : vector<8x256xf32>
      %1122 = arith.addf %1121, %33 : vector<8x256xf32>
      %1123 = arith.divf %1119, %1122 : vector<8x256xf32>
      %1124 = math.log %1123 : vector<8x256xf32>
      %1125 = arith.mulf %1107, %28 : vector<8x256xf32>
      %1126 = arith.subf %1125, %8 : vector<8x256xf32>
      %cst_357 = arith.constant 1.000000e+00 : f32
      %1127 = vector.broadcast %cst_357 : f32 to vector<8x256xf32>
      %1128 = arith.addf %1107, %1127 : vector<8x256xf32>
      %cst_358 = arith.constant 8.000000e+00 : f32
      %1129 = vector.broadcast %cst_358 : f32 to vector<8x256xf32>
      %1130 = arith.addf %1128, %1129 : vector<8x256xf32>
      %cst_359 = arith.constant 1.000000e+00 : f32
      %1131 = vector.broadcast %cst_359 : f32 to vector<8x256xf32>
      %1132 = arith.divf %1131, %1130 : vector<8x256xf32>
      %cst_360 = arith.constant 5.000000e-01 : f32
      %1133 = vector.broadcast %cst_360 : f32 to vector<8x256xf32>
      %1134 = arith.subf %1130, %1133 : vector<8x256xf32>
      %1135 = math.log %1130 : vector<8x256xf32>
      %1136 = arith.mulf %1134, %1135 : vector<8x256xf32>
      %1137 = arith.subf %1136, %1130 : vector<8x256xf32>
      %cst_361 = arith.constant 0.918938517 : f32
      %1138 = vector.broadcast %cst_361 : f32 to vector<8x256xf32>
      %1139 = arith.addf %1137, %1138 : vector<8x256xf32>
      %1140 = arith.mulf %1132, %1132 : vector<8x256xf32>
      %cst_362 = arith.constant 0.00277777785 : f32
      %1141 = vector.broadcast %cst_362 : f32 to vector<8x256xf32>
      %1142 = arith.mulf %1140, %1141 : vector<8x256xf32>
      %cst_363 = arith.constant 0.0833333358 : f32
      %1143 = vector.broadcast %cst_363 : f32 to vector<8x256xf32>
      %1144 = arith.subf %1143, %1142 : vector<8x256xf32>
      %1145 = arith.mulf %1132, %1144 : vector<8x256xf32>
      %1146 = arith.addf %1139, %1145 : vector<8x256xf32>
      %cst_364 = arith.constant 1.000000e+00 : f32
      %1147 = vector.broadcast %cst_364 : f32 to vector<8x256xf32>
      %1148 = arith.addf %1128, %1147 : vector<8x256xf32>
      %1149 = arith.mulf %1128, %1148 : vector<8x256xf32>
      %cst_365 = arith.constant 2.000000e+00 : f32
      %1150 = vector.broadcast %cst_365 : f32 to vector<8x256xf32>
      %1151 = arith.addf %1128, %1150 : vector<8x256xf32>
      %1152 = arith.mulf %1149, %1151 : vector<8x256xf32>
      %cst_366 = arith.constant 3.000000e+00 : f32
      %1153 = vector.broadcast %cst_366 : f32 to vector<8x256xf32>
      %1154 = arith.addf %1128, %1153 : vector<8x256xf32>
      %1155 = arith.mulf %1152, %1154 : vector<8x256xf32>
      %1156 = math.log %1155 : vector<8x256xf32>
      %cst_367 = arith.constant 4.000000e+00 : f32
      %1157 = vector.broadcast %cst_367 : f32 to vector<8x256xf32>
      %1158 = arith.addf %1128, %1157 : vector<8x256xf32>
      %cst_368 = arith.constant 5.000000e+00 : f32
      %1159 = vector.broadcast %cst_368 : f32 to vector<8x256xf32>
      %1160 = arith.addf %1128, %1159 : vector<8x256xf32>
      %1161 = arith.mulf %1158, %1160 : vector<8x256xf32>
      %cst_369 = arith.constant 6.000000e+00 : f32
      %1162 = vector.broadcast %cst_369 : f32 to vector<8x256xf32>
      %1163 = arith.addf %1128, %1162 : vector<8x256xf32>
      %1164 = arith.mulf %1161, %1163 : vector<8x256xf32>
      %cst_370 = arith.constant 7.000000e+00 : f32
      %1165 = vector.broadcast %cst_370 : f32 to vector<8x256xf32>
      %1166 = arith.addf %1128, %1165 : vector<8x256xf32>
      %1167 = arith.mulf %1164, %1166 : vector<8x256xf32>
      %1168 = math.log %1167 : vector<8x256xf32>
      %1169 = arith.addf %1156, %1168 : vector<8x256xf32>
      %1170 = arith.subf %1146, %1169 : vector<8x256xf32>
      %1171 = arith.subf %1126, %1170 : vector<8x256xf32>
      %cst_371 = arith.constant dense<true> : vector<8x256xi1>
      %1172 = arith.xori %1118, %cst_371 : vector<8x256xi1>
      %1173 = arith.cmpf ole, %1124, %1171 : vector<8x256xf32>
      %1174 = arith.andi %1172, %1173 : vector<8x256xi1>
      %1175 = arith.ori %1111, %1174 : vector<8x256xi1>
      %cst_372 = arith.constant dense<true> : vector<8x256xi1>
      %1176 = arith.xori %1085, %cst_372 : vector<8x256xi1>
      %1177 = arith.andi %1175, %1176 : vector<8x256xi1>
      %1178 = arith.select %1177, %1107, %1084 : vector<8x256xi1>, vector<8x256xf32>
      %c0_373 = arith.constant 0 : index
      %c0_374 = arith.constant 0 : index
      %1179 = vector.load %arg4[%c0_373, %c0_374] : memref<8x256xf32, #tpu.memory_space<vmem>>, vector<8x256xf32>
      tpu.vector_store %arg4[%c0_373, %c0_374], %1178 {strides = array<i32>} : memref<8x256xf32, #tpu.memory_space<vmem>>, vector<8x256xf32>,
    } else {
    }
    %cst_11 = arith.constant 1.000000e+01 : f32
    %23 = arith.cmpf olt, %12, %cst_11 : f32
    %cst_12 = arith.constant 1.000000e+01 : f32
    %24 = arith.cmpf oge, %16, %cst_12 : f32
    %25 = arith.andi %23, %24 : i1
    %26 = arith.extui %25 : i1 to i32
    %c0_i32_13 = arith.constant 0 : i32
    %27 = arith.cmpi ne, %26, %c0_i32_13 : i32
    scf.if %27 {
      %cst_14 = arith.constant 1.000000e+01 : f32
      %28 = vector.broadcast %cst_14 : f32 to vector<8x256xf32>
      %29 = arith.minimumf %8, %28 : vector<8x256xf32>
      %c0_15 = arith.constant 0 : index
      %c0_16 = arith.constant 0 : index
      %c0_17 = arith.constant 0 : index
      %30 = vector.load %arg3[%c0_15, %c0_16, %c0_17] : memref<24x8x256xf32, #tpu.memory_space<vmem>>, vector<1x8x256xf32>
      %31 = vector.shape_cast %30 : vector<1x8x256xf32> to vector<8x256xf32>
      %cst_18 = arith.constant 0.000000e+00 : f32
      %32 = vector.broadcast %cst_18 : f32 to vector<8x256xf32>
      %33 = arith.subf %32, %29 : vector<8x256xf32>
      %34 = math.exp %33 : vector<8x256xf32>
      %cst_19 = arith.constant 0.000000e+00 : f32
      %35 = vector.broadcast %cst_19 : f32 to vector<8x256xf32>
      %36 = arith.cmpf ogt, %31, %34 : vector<8x256xf32>
      %37 = arith.extui %36 : vector<8x256xi1> to vector<8x256xi32>
      %38 = arith.sitofp %37 : vector<8x256xi32> to vector<8x256xf32>
      %39 = arith.addf %35, %38 : vector<8x256xf32>
      %cst_20 = arith.constant 1.000000e+00 : f32
      %40 = vector.broadcast %cst_20 : f32 to vector<8x256xf32>
      %41 = arith.mulf %29, %40 : vector<8x256xf32>
      %42 = arith.mulf %34, %41 : vector<8x256xf32>
      %43 = arith.addf %34, %42 : vector<8x256xf32>
      %44 = arith.cmpf ogt, %31, %43 : vector<8x256xf32>
      %45 = arith.extui %44 : vector<8x256xi1> to vector<8x256xi32>
      %46 = arith.sitofp %45 : vector<8x256xi32> to vector<8x256xf32>
      %47 = arith.addf %39, %46 : vector<8x256xf32>
      %cst_21 = arith.constant 5.000000e-01 : f32
      %48 = vector.broadcast %cst_21 : f32 to vector<8x256xf32>
      %49 = arith.mulf %29, %48 : vector<8x256xf32>
      %50 = arith.mulf %42, %49 : vector<8x256xf32>
      %51 = arith.addf %43, %50 : vector<8x256xf32>
      %52 = arith.cmpf ogt, %31, %51 : vector<8x256xf32>
      %53 = arith.extui %52 : vector<8x256xi1> to vector<8x256xi32>
      %54 = arith.sitofp %53 : vector<8x256xi32> to vector<8x256xf32>
      %55 = arith.addf %47, %54 : vector<8x256xf32>
      %cst_22 = arith.constant 0.333333343 : f32
      %56 = vector.broadcast %cst_22 : f32 to vector<8x256xf32>
      %57 = arith.mulf %29, %56 : vector<8x256xf32>
      %58 = arith.mulf %50, %57 : vector<8x256xf32>
      %59 = arith.addf %51, %58 : vector<8x256xf32>
      %60 = arith.cmpf ogt, %31, %59 : vector<8x256xf32>
      %61 = arith.extui %60 : vector<8x256xi1> to vector<8x256xi32>
      %62 = arith.sitofp %61 : vector<8x256xi32> to vector<8x256xf32>
      %63 = arith.addf %55, %62 : vector<8x256xf32>
      %cst_23 = arith.constant 2.500000e-01 : f32
      %64 = vector.broadcast %cst_23 : f32 to vector<8x256xf32>
      %65 = arith.mulf %29, %64 : vector<8x256xf32>
      %66 = arith.mulf %58, %65 : vector<8x256xf32>
      %67 = arith.addf %59, %66 : vector<8x256xf32>
      %68 = arith.cmpf ogt, %31, %67 : vector<8x256xf32>
      %69 = arith.extui %68 : vector<8x256xi1> to vector<8x256xi32>
      %70 = arith.sitofp %69 : vector<8x256xi32> to vector<8x256xf32>
      %71 = arith.addf %63, %70 : vector<8x256xf32>
      %cst_24 = arith.constant 2.000000e-01 : f32
      %72 = vector.broadcast %cst_24 : f32 to vector<8x256xf32>
      %73 = arith.mulf %29, %72 : vector<8x256xf32>
      %74 = arith.mulf %66, %73 : vector<8x256xf32>
      %75 = arith.addf %67, %74 : vector<8x256xf32>
      %76 = arith.cmpf ogt, %31, %75 : vector<8x256xf32>
      %77 = arith.extui %76 : vector<8x256xi1> to vector<8x256xi32>
      %78 = arith.sitofp %77 : vector<8x256xi32> to vector<8x256xf32>
      %79 = arith.addf %71, %78 : vector<8x256xf32>
      %cst_25 = arith.constant 0.166666672 : f32
      %80 = vector.broadcast %cst_25 : f32 to vector<8x256xf32>
      %81 = arith.mulf %29, %80 : vector<8x256xf32>
      %82 = arith.mulf %74, %81 : vector<8x256xf32>
      %83 = arith.addf %75, %82 : vector<8x256xf32>
      %84 = arith.cmpf ogt, %31, %83 : vector<8x256xf32>
      %85 = arith.extui %84 : vector<8x256xi1> to vector<8x256xi32>
      %86 = arith.sitofp %85 : vector<8x256xi32> to vector<8x256xf32>
      %87 = arith.addf %79, %86 : vector<8x256xf32>
      %cst_26 = arith.constant 0.142857149 : f32
      %88 = vector.broadcast %cst_26 : f32 to vector<8x256xf32>
      %89 = arith.mulf %29, %88 : vector<8x256xf32>
      %90 = arith.mulf %82, %89 : vector<8x256xf32>
      %91 = arith.addf %83, %90 : vector<8x256xf32>
      %92 = arith.cmpf ogt, %31, %91 : vector<8x256xf32>
      %93 = arith.extui %92 : vector<8x256xi1> to vector<8x256xi32>
      %94 = arith.sitofp %93 : vector<8x256xi32> to vector<8x256xf32>
      %95 = arith.addf %87, %94 : vector<8x256xf32>
      %cst_27 = arith.constant 1.250000e-01 : f32
      %96 = vector.broadcast %cst_27 : f32 to vector<8x256xf32>
      %97 = arith.mulf %29, %96 : vector<8x256xf32>
      %98 = arith.mulf %90, %97 : vector<8x256xf32>
      %99 = arith.addf %91, %98 : vector<8x256xf32>
      %100 = arith.cmpf ogt, %31, %99 : vector<8x256xf32>
      %101 = arith.extui %100 : vector<8x256xi1> to vector<8x256xi32>
      %102 = arith.sitofp %101 : vector<8x256xi32> to vector<8x256xf32>
      %103 = arith.addf %95, %102 : vector<8x256xf32>
      %cst_28 = arith.constant 0.111111112 : f32
      %104 = vector.broadcast %cst_28 : f32 to vector<8x256xf32>
      %105 = arith.mulf %29, %104 : vector<8x256xf32>
      %106 = arith.mulf %98, %105 : vector<8x256xf32>
      %107 = arith.addf %99, %106 : vector<8x256xf32>
      %108 = arith.cmpf ogt, %31, %107 : vector<8x256xf32>
      %109 = arith.extui %108 : vector<8x256xi1> to vector<8x256xi32>
      %110 = arith.sitofp %109 : vector<8x256xi32> to vector<8x256xf32>
      %111 = arith.addf %103, %110 : vector<8x256xf32>
      %cst_29 = arith.constant 1.000000e-01 : f32
      %112 = vector.broadcast %cst_29 : f32 to vector<8x256xf32>
      %113 = arith.mulf %29, %112 : vector<8x256xf32>
      %114 = arith.mulf %106, %113 : vector<8x256xf32>
      %115 = arith.addf %107, %114 : vector<8x256xf32>
      %116 = arith.cmpf ogt, %31, %115 : vector<8x256xf32>
      %117 = arith.extui %116 : vector<8x256xi1> to vector<8x256xi32>
      %118 = arith.sitofp %117 : vector<8x256xi32> to vector<8x256xf32>
      %119 = arith.addf %111, %118 : vector<8x256xf32>
      %cst_30 = arith.constant 0.0909090936 : f32
      %120 = vector.broadcast %cst_30 : f32 to vector<8x256xf32>
      %121 = arith.mulf %29, %120 : vector<8x256xf32>
      %122 = arith.mulf %114, %121 : vector<8x256xf32>
      %123 = arith.addf %115, %122 : vector<8x256xf32>
      %124 = arith.cmpf ogt, %31, %123 : vector<8x256xf32>
      %125 = arith.extui %124 : vector<8x256xi1> to vector<8x256xi32>
      %126 = arith.sitofp %125 : vector<8x256xi32> to vector<8x256xf32>
      %127 = arith.addf %119, %126 : vector<8x256xf32>
      %cst_31 = arith.constant 0.0833333358 : f32
      %128 = vector.broadcast %cst_31 : f32 to vector<8x256xf32>
      %129 = arith.mulf %29, %128 : vector<8x256xf32>
      %130 = arith.mulf %122, %129 : vector<8x256xf32>
      %131 = arith.addf %123, %130 : vector<8x256xf32>
      %132 = arith.cmpf ogt, %31, %131 : vector<8x256xf32>
      %133 = arith.extui %132 : vector<8x256xi1> to vector<8x256xi32>
      %134 = arith.sitofp %133 : vector<8x256xi32> to vector<8x256xf32>
      %135 = arith.addf %127, %134 : vector<8x256xf32>
      %cst_32 = arith.constant 0.0769230798 : f32
      %136 = vector.broadcast %cst_32 : f32 to vector<8x256xf32>
      %137 = arith.mulf %29, %136 : vector<8x256xf32>
      %138 = arith.mulf %130, %137 : vector<8x256xf32>
      %139 = arith.addf %131, %138 : vector<8x256xf32>
      %140 = arith.cmpf ogt, %31, %139 : vector<8x256xf32>
      %141 = arith.extui %140 : vector<8x256xi1> to vector<8x256xi32>
      %142 = arith.sitofp %141 : vector<8x256xi32> to vector<8x256xf32>
      %143 = arith.addf %135, %142 : vector<8x256xf32>
      %cst_33 = arith.constant 0.0714285746 : f32
      %144 = vector.broadcast %cst_33 : f32 to vector<8x256xf32>
      %145 = arith.mulf %29, %144 : vector<8x256xf32>
      %146 = arith.mulf %138, %145 : vector<8x256xf32>
      %147 = arith.addf %139, %146 : vector<8x256xf32>
      %148 = arith.cmpf ogt, %31, %147 : vector<8x256xf32>
      %149 = arith.extui %148 : vector<8x256xi1> to vector<8x256xi32>
      %150 = arith.sitofp %149 : vector<8x256xi32> to vector<8x256xf32>
      %151 = arith.addf %143, %150 : vector<8x256xf32>
      %cst_34 = arith.constant 0.0666666701 : f32
      %152 = vector.broadcast %cst_34 : f32 to vector<8x256xf32>
      %153 = arith.mulf %29, %152 : vector<8x256xf32>
      %154 = arith.mulf %146, %153 : vector<8x256xf32>
      %155 = arith.addf %147, %154 : vector<8x256xf32>
      %156 = arith.cmpf ogt, %31, %155 : vector<8x256xf32>
      %157 = arith.extui %156 : vector<8x256xi1> to vector<8x256xi32>
      %158 = arith.sitofp %157 : vector<8x256xi32> to vector<8x256xf32>
      %159 = arith.addf %151, %158 : vector<8x256xf32>
      %cst_35 = arith.constant 6.250000e-02 : f32
      %160 = vector.broadcast %cst_35 : f32 to vector<8x256xf32>
      %161 = arith.mulf %29, %160 : vector<8x256xf32>
      %162 = arith.mulf %154, %161 : vector<8x256xf32>
      %163 = arith.addf %155, %162 : vector<8x256xf32>
      %164 = arith.cmpf ogt, %31, %163 : vector<8x256xf32>
      %165 = arith.extui %164 : vector<8x256xi1> to vector<8x256xi32>
      %166 = arith.sitofp %165 : vector<8x256xi32> to vector<8x256xf32>
      %167 = arith.addf %159, %166 : vector<8x256xf32>
      %cst_36 = arith.constant 0.0588235296 : f32
      %168 = vector.broadcast %cst_36 : f32 to vector<8x256xf32>
      %169 = arith.mulf %29, %168 : vector<8x256xf32>
      %170 = arith.mulf %162, %169 : vector<8x256xf32>
      %171 = arith.addf %163, %170 : vector<8x256xf32>
      %172 = arith.cmpf ogt, %31, %171 : vector<8x256xf32>
      %173 = arith.extui %172 : vector<8x256xi1> to vector<8x256xi32>
      %174 = arith.sitofp %173 : vector<8x256xi32> to vector<8x256xf32>
      %175 = arith.addf %167, %174 : vector<8x256xf32>
      %cst_37 = arith.constant 0.055555556 : f32
      %176 = vector.broadcast %cst_37 : f32 to vector<8x256xf32>
      %177 = arith.mulf %29, %176 : vector<8x256xf32>
      %178 = arith.mulf %170, %177 : vector<8x256xf32>
      %179 = arith.addf %171, %178 : vector<8x256xf32>
      %180 = arith.cmpf ogt, %31, %179 : vector<8x256xf32>
      %181 = arith.extui %180 : vector<8x256xi1> to vector<8x256xi32>
      %182 = arith.sitofp %181 : vector<8x256xi32> to vector<8x256xf32>
      %183 = arith.addf %175, %182 : vector<8x256xf32>
      %cst_38 = arith.constant 0.0526315793 : f32
      %184 = vector.broadcast %cst_38 : f32 to vector<8x256xf32>
      %185 = arith.mulf %29, %184 : vector<8x256xf32>
      %186 = arith.mulf %178, %185 : vector<8x256xf32>
      %187 = arith.addf %179, %186 : vector<8x256xf32>
      %188 = arith.cmpf ogt, %31, %187 : vector<8x256xf32>
      %189 = arith.extui %188 : vector<8x256xi1> to vector<8x256xi32>
      %190 = arith.sitofp %189 : vector<8x256xi32> to vector<8x256xf32>
      %191 = arith.addf %183, %190 : vector<8x256xf32>
      %cst_39 = arith.constant 5.000000e-02 : f32
      %192 = vector.broadcast %cst_39 : f32 to vector<8x256xf32>
      %193 = arith.mulf %29, %192 : vector<8x256xf32>
      %194 = arith.mulf %186, %193 : vector<8x256xf32>
      %195 = arith.addf %187, %194 : vector<8x256xf32>
      %196 = arith.cmpf ogt, %31, %195 : vector<8x256xf32>
      %197 = arith.extui %196 : vector<8x256xi1> to vector<8x256xi32>
      %198 = arith.sitofp %197 : vector<8x256xi32> to vector<8x256xf32>
      %199 = arith.addf %191, %198 : vector<8x256xf32>
      %cst_40 = arith.constant 0.0476190485 : f32
      %200 = vector.broadcast %cst_40 : f32 to vector<8x256xf32>
      %201 = arith.mulf %29, %200 : vector<8x256xf32>
      %202 = arith.mulf %194, %201 : vector<8x256xf32>
      %203 = arith.addf %195, %202 : vector<8x256xf32>
      %204 = arith.cmpf ogt, %31, %203 : vector<8x256xf32>
      %205 = arith.extui %204 : vector<8x256xi1> to vector<8x256xi32>
      %206 = arith.sitofp %205 : vector<8x256xi32> to vector<8x256xf32>
      %207 = arith.addf %199, %206 : vector<8x256xf32>
      %cst_41 = arith.constant 0.0454545468 : f32
      %208 = vector.broadcast %cst_41 : f32 to vector<8x256xf32>
      %209 = arith.mulf %29, %208 : vector<8x256xf32>
      %210 = arith.mulf %202, %209 : vector<8x256xf32>
      %211 = arith.addf %203, %210 : vector<8x256xf32>
      %212 = arith.cmpf ogt, %31, %211 : vector<8x256xf32>
      %213 = arith.extui %212 : vector<8x256xi1> to vector<8x256xi32>
      %214 = arith.sitofp %213 : vector<8x256xi32> to vector<8x256xf32>
      %215 = arith.addf %207, %214 : vector<8x256xf32>
      %cst_42 = arith.constant 0.0434782617 : f32
      %216 = vector.broadcast %cst_42 : f32 to vector<8x256xf32>
      %217 = arith.mulf %29, %216 : vector<8x256xf32>
      %218 = arith.mulf %210, %217 : vector<8x256xf32>
      %219 = arith.addf %211, %218 : vector<8x256xf32>
      %220 = arith.cmpf ogt, %31, %219 : vector<8x256xf32>
      %221 = arith.extui %220 : vector<8x256xi1> to vector<8x256xi32>
      %222 = arith.sitofp %221 : vector<8x256xi32> to vector<8x256xf32>
      %223 = arith.addf %215, %222 : vector<8x256xf32>
      %cst_43 = arith.constant 0.0416666679 : f32
      %224 = vector.broadcast %cst_43 : f32 to vector<8x256xf32>
      %225 = arith.mulf %29, %224 : vector<8x256xf32>
      %226 = arith.mulf %218, %225 : vector<8x256xf32>
      %227 = arith.addf %219, %226 : vector<8x256xf32>
      %228 = arith.cmpf ogt, %31, %227 : vector<8x256xf32>
      %229 = arith.extui %228 : vector<8x256xi1> to vector<8x256xi32>
      %230 = arith.sitofp %229 : vector<8x256xi32> to vector<8x256xf32>
      %231 = arith.addf %223, %230 : vector<8x256xf32>
      %cst_44 = arith.constant 4.000000e-02 : f32
      %232 = vector.broadcast %cst_44 : f32 to vector<8x256xf32>
      %233 = arith.mulf %29, %232 : vector<8x256xf32>
      %234 = arith.mulf %226, %233 : vector<8x256xf32>
      %235 = arith.addf %227, %234 : vector<8x256xf32>
      %236 = arith.cmpf ogt, %31, %235 : vector<8x256xf32>
      %237 = arith.extui %236 : vector<8x256xi1> to vector<8x256xi32>
      %238 = arith.sitofp %237 : vector<8x256xi32> to vector<8x256xf32>
      %239 = arith.addf %231, %238 : vector<8x256xf32>
      %cst_45 = arith.constant 0.0384615399 : f32
      %240 = vector.broadcast %cst_45 : f32 to vector<8x256xf32>
      %241 = arith.mulf %29, %240 : vector<8x256xf32>
      %242 = arith.mulf %234, %241 : vector<8x256xf32>
      %243 = arith.addf %235, %242 : vector<8x256xf32>
      %244 = arith.cmpf ogt, %31, %243 : vector<8x256xf32>
      %245 = arith.extui %244 : vector<8x256xi1> to vector<8x256xi32>
      %246 = arith.sitofp %245 : vector<8x256xi32> to vector<8x256xf32>
      %247 = arith.addf %239, %246 : vector<8x256xf32>
      %cst_46 = arith.constant 0.0370370373 : f32
      %248 = vector.broadcast %cst_46 : f32 to vector<8x256xf32>
      %249 = arith.mulf %29, %248 : vector<8x256xf32>
      %250 = arith.mulf %242, %249 : vector<8x256xf32>
      %251 = arith.addf %243, %250 : vector<8x256xf32>
      %252 = arith.cmpf ogt, %31, %251 : vector<8x256xf32>
      %253 = arith.extui %252 : vector<8x256xi1> to vector<8x256xi32>
      %254 = arith.sitofp %253 : vector<8x256xi32> to vector<8x256xf32>
      %255 = arith.addf %247, %254 : vector<8x256xf32>
      %cst_47 = arith.constant 0.0357142873 : f32
      %256 = vector.broadcast %cst_47 : f32 to vector<8x256xf32>
      %257 = arith.mulf %29, %256 : vector<8x256xf32>
      %258 = arith.mulf %250, %257 : vector<8x256xf32>
      %259 = arith.addf %251, %258 : vector<8x256xf32>
      %260 = arith.cmpf ogt, %31, %259 : vector<8x256xf32>
      %261 = arith.extui %260 : vector<8x256xi1> to vector<8x256xi32>
      %262 = arith.sitofp %261 : vector<8x256xi32> to vector<8x256xf32>
      %263 = arith.addf %255, %262 : vector<8x256xf32>
      %cst_48 = arith.constant 0.0344827585 : f32
      %264 = vector.broadcast %cst_48 : f32 to vector<8x256xf32>
      %265 = arith.mulf %29, %264 : vector<8x256xf32>
      %266 = arith.mulf %258, %265 : vector<8x256xf32>
      %267 = arith.addf %259, %266 : vector<8x256xf32>
      %268 = arith.cmpf ogt, %31, %267 : vector<8x256xf32>
      %269 = arith.extui %268 : vector<8x256xi1> to vector<8x256xi32>
      %270 = arith.sitofp %269 : vector<8x256xi32> to vector<8x256xf32>
      %271 = arith.addf %263, %270 : vector<8x256xf32>
      %cst_49 = arith.constant 0.0333333351 : f32
      %272 = vector.broadcast %cst_49 : f32 to vector<8x256xf32>
      %273 = arith.mulf %29, %272 : vector<8x256xf32>
      %274 = arith.mulf %266, %273 : vector<8x256xf32>
      %275 = arith.addf %267, %274 : vector<8x256xf32>
      %276 = arith.cmpf ogt, %31, %275 : vector<8x256xf32>
      %277 = arith.extui %276 : vector<8x256xi1> to vector<8x256xi32>
      %278 = arith.sitofp %277 : vector<8x256xi32> to vector<8x256xf32>
      %279 = arith.addf %271, %278 : vector<8x256xf32>
      %cst_50 = arith.constant 0.0322580636 : f32
      %280 = vector.broadcast %cst_50 : f32 to vector<8x256xf32>
      %281 = arith.mulf %29, %280 : vector<8x256xf32>
      %282 = arith.mulf %274, %281 : vector<8x256xf32>
      %283 = arith.addf %275, %282 : vector<8x256xf32>
      %284 = arith.cmpf ogt, %31, %283 : vector<8x256xf32>
      %285 = arith.extui %284 : vector<8x256xi1> to vector<8x256xi32>
      %286 = arith.sitofp %285 : vector<8x256xi32> to vector<8x256xf32>
      %287 = arith.addf %279, %286 : vector<8x256xf32>
      %cst_51 = arith.constant 3.125000e-02 : f32
      %288 = vector.broadcast %cst_51 : f32 to vector<8x256xf32>
      %289 = arith.mulf %29, %288 : vector<8x256xf32>
      %290 = arith.mulf %282, %289 : vector<8x256xf32>
      %291 = arith.addf %283, %290 : vector<8x256xf32>
      %292 = arith.cmpf ogt, %31, %291 : vector<8x256xf32>
      %293 = arith.extui %292 : vector<8x256xi1> to vector<8x256xi32>
      %294 = arith.sitofp %293 : vector<8x256xi32> to vector<8x256xf32>
      %295 = arith.addf %287, %294 : vector<8x256xf32>
      %cst_52 = arith.constant 0.0303030312 : f32
      %296 = vector.broadcast %cst_52 : f32 to vector<8x256xf32>
      %297 = arith.mulf %29, %296 : vector<8x256xf32>
      %298 = arith.mulf %290, %297 : vector<8x256xf32>
      %299 = arith.addf %291, %298 : vector<8x256xf32>
      %300 = arith.cmpf ogt, %31, %299 : vector<8x256xf32>
      %301 = arith.extui %300 : vector<8x256xi1> to vector<8x256xi32>
      %302 = arith.sitofp %301 : vector<8x256xi32> to vector<8x256xf32>
      %303 = arith.addf %295, %302 : vector<8x256xf32>
      %cst_53 = arith.constant 0.0294117648 : f32
      %304 = vector.broadcast %cst_53 : f32 to vector<8x256xf32>
      %305 = arith.mulf %29, %304 : vector<8x256xf32>
      %306 = arith.mulf %298, %305 : vector<8x256xf32>
      %307 = arith.addf %299, %306 : vector<8x256xf32>
      %308 = arith.cmpf ogt, %31, %307 : vector<8x256xf32>
      %309 = arith.extui %308 : vector<8x256xi1> to vector<8x256xi32>
      %310 = arith.sitofp %309 : vector<8x256xi32> to vector<8x256xf32>
      %311 = arith.addf %303, %310 : vector<8x256xf32>
      %cst_54 = arith.constant 0.0285714287 : f32
      %312 = vector.broadcast %cst_54 : f32 to vector<8x256xf32>
      %313 = arith.mulf %29, %312 : vector<8x256xf32>
      %314 = arith.mulf %306, %313 : vector<8x256xf32>
      %315 = arith.addf %307, %314 : vector<8x256xf32>
      %316 = arith.cmpf ogt, %31, %315 : vector<8x256xf32>
      %317 = arith.extui %316 : vector<8x256xi1> to vector<8x256xi32>
      %318 = arith.sitofp %317 : vector<8x256xi32> to vector<8x256xf32>
      %319 = arith.addf %311, %318 : vector<8x256xf32>
      %cst_55 = arith.constant 0.027777778 : f32
      %320 = vector.broadcast %cst_55 : f32 to vector<8x256xf32>
      %321 = arith.mulf %29, %320 : vector<8x256xf32>
      %322 = arith.mulf %314, %321 : vector<8x256xf32>
      %323 = arith.addf %315, %322 : vector<8x256xf32>
      %324 = arith.cmpf ogt, %31, %323 : vector<8x256xf32>
      %325 = arith.extui %324 : vector<8x256xi1> to vector<8x256xi32>
      %326 = arith.sitofp %325 : vector<8x256xi32> to vector<8x256xf32>
      %327 = arith.addf %319, %326 : vector<8x256xf32>
      %cst_56 = arith.constant 0.0270270277 : f32
      %328 = vector.broadcast %cst_56 : f32 to vector<8x256xf32>
      %329 = arith.mulf %29, %328 : vector<8x256xf32>
      %330 = arith.mulf %322, %329 : vector<8x256xf32>
      %331 = arith.addf %323, %330 : vector<8x256xf32>
      %332 = arith.cmpf ogt, %31, %331 : vector<8x256xf32>
      %333 = arith.extui %332 : vector<8x256xi1> to vector<8x256xi32>
      %334 = arith.sitofp %333 : vector<8x256xi32> to vector<8x256xf32>
      %335 = arith.addf %327, %334 : vector<8x256xf32>
      %cst_57 = arith.constant 0.0263157897 : f32
      %336 = vector.broadcast %cst_57 : f32 to vector<8x256xf32>
      %337 = arith.mulf %29, %336 : vector<8x256xf32>
      %338 = arith.mulf %330, %337 : vector<8x256xf32>
      %339 = arith.addf %331, %338 : vector<8x256xf32>
      %340 = arith.cmpf ogt, %31, %339 : vector<8x256xf32>
      %341 = arith.extui %340 : vector<8x256xi1> to vector<8x256xi32>
      %342 = arith.sitofp %341 : vector<8x256xi32> to vector<8x256xf32>
      %343 = arith.addf %335, %342 : vector<8x256xf32>
      %cst_58 = arith.constant 0.025641026 : f32
      %344 = vector.broadcast %cst_58 : f32 to vector<8x256xf32>
      %345 = arith.mulf %29, %344 : vector<8x256xf32>
      %346 = arith.mulf %338, %345 : vector<8x256xf32>
      %347 = arith.addf %339, %346 : vector<8x256xf32>
      %348 = arith.cmpf ogt, %31, %347 : vector<8x256xf32>
      %349 = arith.extui %348 : vector<8x256xi1> to vector<8x256xi32>
      %350 = arith.sitofp %349 : vector<8x256xi32> to vector<8x256xf32>
      %351 = arith.addf %343, %350 : vector<8x256xf32>
      %cst_59 = arith.constant 2.500000e-02 : f32
      %352 = vector.broadcast %cst_59 : f32 to vector<8x256xf32>
      %353 = arith.mulf %29, %352 : vector<8x256xf32>
      %354 = arith.mulf %346, %353 : vector<8x256xf32>
      %355 = arith.addf %347, %354 : vector<8x256xf32>
      %356 = arith.cmpf ogt, %31, %355 : vector<8x256xf32>
      %357 = arith.extui %356 : vector<8x256xi1> to vector<8x256xi32>
      %358 = arith.sitofp %357 : vector<8x256xi32> to vector<8x256xf32>
      %359 = arith.addf %351, %358 : vector<8x256xf32>
      %cst_60 = arith.constant 0.024390243 : f32
      %360 = vector.broadcast %cst_60 : f32 to vector<8x256xf32>
      %361 = arith.mulf %29, %360 : vector<8x256xf32>
      %362 = arith.mulf %354, %361 : vector<8x256xf32>
      %363 = arith.addf %355, %362 : vector<8x256xf32>
      %364 = arith.cmpf ogt, %31, %363 : vector<8x256xf32>
      %365 = arith.extui %364 : vector<8x256xi1> to vector<8x256xi32>
      %366 = arith.sitofp %365 : vector<8x256xi32> to vector<8x256xf32>
      %367 = arith.addf %359, %366 : vector<8x256xf32>
      %cst_61 = arith.constant 0.0238095243 : f32
      %368 = vector.broadcast %cst_61 : f32 to vector<8x256xf32>
      %369 = arith.mulf %29, %368 : vector<8x256xf32>
      %370 = arith.mulf %362, %369 : vector<8x256xf32>
      %371 = arith.addf %363, %370 : vector<8x256xf32>
      %372 = arith.cmpf ogt, %31, %371 : vector<8x256xf32>
      %373 = arith.extui %372 : vector<8x256xi1> to vector<8x256xi32>
      %374 = arith.sitofp %373 : vector<8x256xi32> to vector<8x256xf32>
      %375 = arith.addf %367, %374 : vector<8x256xf32>
      %cst_62 = arith.constant 0.0232558139 : f32
      %376 = vector.broadcast %cst_62 : f32 to vector<8x256xf32>
      %377 = arith.mulf %29, %376 : vector<8x256xf32>
      %378 = arith.mulf %370, %377 : vector<8x256xf32>
      %379 = arith.addf %371, %378 : vector<8x256xf32>
      %380 = arith.cmpf ogt, %31, %379 : vector<8x256xf32>
      %381 = arith.extui %380 : vector<8x256xi1> to vector<8x256xi32>
      %382 = arith.sitofp %381 : vector<8x256xi32> to vector<8x256xf32>
      %383 = arith.addf %375, %382 : vector<8x256xf32>
      %cst_63 = arith.constant 0.0227272734 : f32
      %384 = vector.broadcast %cst_63 : f32 to vector<8x256xf32>
      %385 = arith.mulf %29, %384 : vector<8x256xf32>
      %386 = arith.mulf %378, %385 : vector<8x256xf32>
      %387 = arith.addf %379, %386 : vector<8x256xf32>
      %388 = arith.cmpf ogt, %31, %387 : vector<8x256xf32>
      %389 = arith.extui %388 : vector<8x256xi1> to vector<8x256xi32>
      %390 = arith.sitofp %389 : vector<8x256xi32> to vector<8x256xf32>
      %391 = arith.addf %383, %390 : vector<8x256xf32>
      %cst_64 = arith.constant 0.0222222228 : f32
      %392 = vector.broadcast %cst_64 : f32 to vector<8x256xf32>
      %393 = arith.mulf %29, %392 : vector<8x256xf32>
      %394 = arith.mulf %386, %393 : vector<8x256xf32>
      %395 = arith.addf %387, %394 : vector<8x256xf32>
      %396 = arith.cmpf ogt, %31, %395 : vector<8x256xf32>
      %397 = arith.extui %396 : vector<8x256xi1> to vector<8x256xi32>
      %398 = arith.sitofp %397 : vector<8x256xi32> to vector<8x256xf32>
      %399 = arith.addf %391, %398 : vector<8x256xf32>
      %cst_65 = arith.constant 0.0217391308 : f32
      %400 = vector.broadcast %cst_65 : f32 to vector<8x256xf32>
      %401 = arith.mulf %29, %400 : vector<8x256xf32>
      %402 = arith.mulf %394, %401 : vector<8x256xf32>
      %403 = arith.addf %395, %402 : vector<8x256xf32>
      %404 = arith.cmpf ogt, %31, %403 : vector<8x256xf32>
      %405 = arith.extui %404 : vector<8x256xi1> to vector<8x256xi32>
      %406 = arith.sitofp %405 : vector<8x256xi32> to vector<8x256xf32>
      %407 = arith.addf %399, %406 : vector<8x256xf32>
      %cst_66 = arith.constant 1.000000e+01 : f32
      %408 = vector.broadcast %cst_66 : f32 to vector<8x256xf32>
      %409 = arith.maximumf %8, %408 : vector<8x256xf32>
      %410 = math.log %409 : vector<8x256xf32>
      %411 = math.sqrt %409 : vector<8x256xf32>
      %cst_67 = arith.constant 2.530000e+00 : f32
      %412 = vector.broadcast %cst_67 : f32 to vector<8x256xf32>
      %413 = arith.mulf %412, %411 : vector<8x256xf32>
      %cst_68 = arith.constant 9.310000e-01 : f32
      %414 = vector.broadcast %cst_68 : f32 to vector<8x256xf32>
      %415 = arith.addf %414, %413 : vector<8x256xf32>
      %cst_69 = arith.constant 2.483000e-02 : f32
      %416 = vector.broadcast %cst_69 : f32 to vector<8x256xf32>
      %417 = arith.mulf %416, %415 : vector<8x256xf32>
      %cst_70 = arith.constant -5.900000e-02 : f32
      %418 = vector.broadcast %cst_70 : f32 to vector<8x256xf32>
      %419 = arith.addf %418, %417 : vector<8x256xf32>
      %cst_71 = arith.constant 3.400000e+00 : f32
      %420 = vector.broadcast %cst_71 : f32 to vector<8x256xf32>
      %421 = arith.subf %415, %420 : vector<8x256xf32>
      %cst_72 = arith.constant 1.132800e+00 : f32
      %422 = vector.broadcast %cst_72 : f32 to vector<8x256xf32>
      %423 = arith.divf %422, %421 : vector<8x256xf32>
      %cst_73 = arith.constant 1.123900e+00 : f32
      %424 = vector.broadcast %cst_73 : f32 to vector<8x256xf32>
      %425 = arith.addf %424, %423 : vector<8x256xf32>
      %cst_74 = arith.constant 2.000000e+00 : f32
      %426 = vector.broadcast %cst_74 : f32 to vector<8x256xf32>
      %427 = arith.subf %415, %426 : vector<8x256xf32>
      %cst_75 = arith.constant 3.622400e+00 : f32
      %428 = vector.broadcast %cst_75 : f32 to vector<8x256xf32>
      %429 = arith.divf %428, %427 : vector<8x256xf32>
      %cst_76 = arith.constant 0.927699983 : f32
      %430 = vector.broadcast %cst_76 : f32 to vector<8x256xf32>
      %431 = arith.subf %430, %429 : vector<8x256xf32>
      %432 = math.floor %409 : vector<8x256xf32>
      %false = arith.constant false
      %433 = vector.broadcast %false : i1 to vector<8x256xi1>
      %c0_77 = arith.constant 0 : index
      %c0_78 = arith.constant 0 : index
      %c0_79 = arith.constant 0 : index
      %434 = vector.load %arg3[%c0_77, %c0_78, %c0_79] : memref<24x8x256xf32, #tpu.memory_space<vmem>>, vector<1x8x256xf32>
      %435 = vector.shape_cast %434 : vector<1x8x256xf32> to vector<8x256xf32>
      %cst_80 = arith.constant 5.000000e-01 : f32
      %436 = vector.broadcast %cst_80 : f32 to vector<8x256xf32>
      %437 = arith.subf %435, %436 : vector<8x256xf32>
      %c1 = arith.constant 1 : index
      %c0_81 = arith.constant 0 : index
      %c0_82 = arith.constant 0 : index
      %438 = vector.load %arg3[%c1, %c0_81, %c0_82] : memref<24x8x256xf32, #tpu.memory_space<vmem>>, vector<1x8x256xf32>
      %439 = vector.shape_cast %438 : vector<1x8x256xf32> to vector<8x256xf32>
      %440 = math.absf %437 : vector<8x256xf32>
      %cst_83 = arith.constant 5.000000e-01 : f32
      %441 = vector.broadcast %cst_83 : f32 to vector<8x256xf32>
      %442 = arith.subf %441, %440 : vector<8x256xf32>
      %cst_84 = arith.constant 9.99999997E-7 : f32
      %443 = vector.broadcast %cst_84 : f32 to vector<8x256xf32>
      %444 = arith.maximumf %442, %443 : vector<8x256xf32>
      %cst_85 = arith.constant 1.000000e+00 : f32
      %445 = vector.broadcast %cst_85 : f32 to vector<8x256xf32>
      %446 = arith.divf %445, %444 : vector<8x256xf32>
      %cst_86 = arith.constant 2.000000e+00 : f32
      %447 = vector.broadcast %cst_86 : f32 to vector<8x256xf32>
      %448 = arith.mulf %447, %419 : vector<8x256xf32>
      %449 = arith.mulf %448, %446 : vector<8x256xf32>
      %450 = arith.addf %449, %415 : vector<8x256xf32>
      %451 = arith.mulf %450, %437 : vector<8x256xf32>
      %452 = arith.addf %451, %409 : vector<8x256xf32>
      %cst_87 = arith.constant 4.300000e-01 : f32
      %453 = vector.broadcast %cst_87 : f32 to vector<8x256xf32>
      %454 = arith.addf %452, %453 : vector<8x256xf32>
      %455 = math.floor %454 : vector<8x256xf32>
      %cst_88 = arith.constant 7.000000e-02 : f32
      %456 = vector.broadcast %cst_88 : f32 to vector<8x256xf32>
      %457 = arith.cmpf oge, %444, %456 : vector<8x256xf32>
      %458 = arith.cmpf ole, %439, %431 : vector<8x256xf32>
      %459 = arith.andi %457, %458 : vector<8x256xi1>
      %cst_89 = arith.constant 0.000000e+00 : f32
      %460 = vector.broadcast %cst_89 : f32 to vector<8x256xf32>
      %461 = arith.cmpf olt, %455, %460 : vector<8x256xf32>
      %cst_90 = arith.constant 1.300000e-02 : f32
      %462 = vector.broadcast %cst_90 : f32 to vector<8x256xf32>
      %463 = arith.cmpf olt, %444, %462 : vector<8x256xf32>
      %464 = arith.cmpf ogt, %439, %444 : vector<8x256xf32>
      %465 = arith.andi %463, %464 : vector<8x256xi1>
      %466 = arith.ori %461, %465 : vector<8x256xi1>
      %467 = arith.mulf %439, %425 : vector<8x256xf32>
      %468 = arith.mulf %419, %446 : vector<8x256xf32>
      %469 = arith.mulf %468, %446 : vector<8x256xf32>
      %470 = arith.addf %469, %415 : vector<8x256xf32>
      %471 = arith.divf %467, %470 : vector<8x256xf32>
      %472 = math.log %471 : vector<8x256xf32>
      %473 = arith.mulf %455, %410 : vector<8x256xf32>
      %474 = arith.subf %473, %409 : vector<8x256xf32>
      %cst_91 = arith.constant 1.000000e+00 : f32
      %475 = vector.broadcast %cst_91 : f32 to vector<8x256xf32>
      %476 = arith.addf %455, %475 : vector<8x256xf32>
      %cst_92 = arith.constant 8.000000e+00 : f32
      %477 = vector.broadcast %cst_92 : f32 to vector<8x256xf32>
      %478 = arith.addf %476, %477 : vector<8x256xf32>
      %cst_93 = arith.constant 1.000000e+00 : f32
      %479 = vector.broadcast %cst_93 : f32 to vector<8x256xf32>
      %480 = arith.divf %479, %478 : vector<8x256xf32>
      %cst_94 = arith.constant 5.000000e-01 : f32
      %481 = vector.broadcast %cst_94 : f32 to vector<8x256xf32>
      %482 = arith.subf %478, %481 : vector<8x256xf32>
      %483 = math.log %478 : vector<8x256xf32>
      %484 = arith.mulf %482, %483 : vector<8x256xf32>
      %485 = arith.subf %484, %478 : vector<8x256xf32>
      %cst_95 = arith.constant 0.918938517 : f32
      %486 = vector.broadcast %cst_95 : f32 to vector<8x256xf32>
      %487 = arith.addf %485, %486 : vector<8x256xf32>
      %488 = arith.mulf %480, %480 : vector<8x256xf32>
      %cst_96 = arith.constant 0.00277777785 : f32
      %489 = vector.broadcast %cst_96 : f32 to vector<8x256xf32>
      %490 = arith.mulf %488, %489 : vector<8x256xf32>
      %cst_97 = arith.constant 0.0833333358 : f32
      %491 = vector.broadcast %cst_97 : f32 to vector<8x256xf32>
      %492 = arith.subf %491, %490 : vector<8x256xf32>
      %493 = arith.mulf %480, %492 : vector<8x256xf32>
      %494 = arith.addf %487, %493 : vector<8x256xf32>
      %cst_98 = arith.constant 1.000000e+00 : f32
      %495 = vector.broadcast %cst_98 : f32 to vector<8x256xf32>
      %496 = arith.addf %476, %495 : vector<8x256xf32>
      %497 = arith.mulf %476, %496 : vector<8x256xf32>
      %cst_99 = arith.constant 2.000000e+00 : f32
      %498 = vector.broadcast %cst_99 : f32 to vector<8x256xf32>
      %499 = arith.addf %476, %498 : vector<8x256xf32>
      %500 = arith.mulf %497, %499 : vector<8x256xf32>
      %cst_100 = arith.constant 3.000000e+00 : f32
      %501 = vector.broadcast %cst_100 : f32 to vector<8x256xf32>
      %502 = arith.addf %476, %501 : vector<8x256xf32>
      %503 = arith.mulf %500, %502 : vector<8x256xf32>
      %504 = math.log %503 : vector<8x256xf32>
      %cst_101 = arith.constant 4.000000e+00 : f32
      %505 = vector.broadcast %cst_101 : f32 to vector<8x256xf32>
      %506 = arith.addf %476, %505 : vector<8x256xf32>
      %cst_102 = arith.constant 5.000000e+00 : f32
      %507 = vector.broadcast %cst_102 : f32 to vector<8x256xf32>
      %508 = arith.addf %476, %507 : vector<8x256xf32>
      %509 = arith.mulf %506, %508 : vector<8x256xf32>
      %cst_103 = arith.constant 6.000000e+00 : f32
      %510 = vector.broadcast %cst_103 : f32 to vector<8x256xf32>
      %511 = arith.addf %476, %510 : vector<8x256xf32>
      %512 = arith.mulf %509, %511 : vector<8x256xf32>
      %cst_104 = arith.constant 7.000000e+00 : f32
      %513 = vector.broadcast %cst_104 : f32 to vector<8x256xf32>
      %514 = arith.addf %476, %513 : vector<8x256xf32>
      %515 = arith.mulf %512, %514 : vector<8x256xf32>
      %516 = math.log %515 : vector<8x256xf32>
      %517 = arith.addf %504, %516 : vector<8x256xf32>
      %518 = arith.subf %494, %517 : vector<8x256xf32>
      %519 = arith.subf %474, %518 : vector<8x256xf32>
      %cst_105 = arith.constant dense<true> : vector<8x256xi1>
      %520 = arith.xori %466, %cst_105 : vector<8x256xi1>
      %521 = arith.cmpf ole, %472, %519 : vector<8x256xf32>
      %522 = arith.andi %520, %521 : vector<8x256xi1>
      %523 = arith.ori %459, %522 : vector<8x256xi1>
      %cst_106 = arith.constant dense<true> : vector<8x256xi1>
      %524 = arith.xori %433, %cst_106 : vector<8x256xi1>
      %525 = arith.andi %523, %524 : vector<8x256xi1>
      %526 = arith.select %525, %455, %432 : vector<8x256xi1>, vector<8x256xf32>
      %527 = arith.ori %433, %523 : vector<8x256xi1>
      %c2 = arith.constant 2 : index
      %c0_107 = arith.constant 0 : index
      %c0_108 = arith.constant 0 : index
      %528 = vector.load %arg3[%c2, %c0_107, %c0_108] : memref<24x8x256xf32, #tpu.memory_space<vmem>>, vector<1x8x256xf32>
      %529 = vector.shape_cast %528 : vector<1x8x256xf32> to vector<8x256xf32>
      %cst_109 = arith.constant 5.000000e-01 : f32
      %530 = vector.broadcast %cst_109 : f32 to vector<8x256xf32>
      %531 = arith.subf %529, %530 : vector<8x256xf32>
      %c3 = arith.constant 3 : index
      %c0_110 = arith.constant 0 : index
      %c0_111 = arith.constant 0 : index
      %532 = vector.load %arg3[%c3, %c0_110, %c0_111] : memref<24x8x256xf32, #tpu.memory_space<vmem>>, vector<1x8x256xf32>
      %533 = vector.shape_cast %532 : vector<1x8x256xf32> to vector<8x256xf32>
      %534 = math.absf %531 : vector<8x256xf32>
      %cst_112 = arith.constant 5.000000e-01 : f32
      %535 = vector.broadcast %cst_112 : f32 to vector<8x256xf32>
      %536 = arith.subf %535, %534 : vector<8x256xf32>
      %cst_113 = arith.constant 9.99999997E-7 : f32
      %537 = vector.broadcast %cst_113 : f32 to vector<8x256xf32>
      %538 = arith.maximumf %536, %537 : vector<8x256xf32>
      %cst_114 = arith.constant 1.000000e+00 : f32
      %539 = vector.broadcast %cst_114 : f32 to vector<8x256xf32>
      %540 = arith.divf %539, %538 : vector<8x256xf32>
      %cst_115 = arith.constant 2.000000e+00 : f32
      %541 = vector.broadcast %cst_115 : f32 to vector<8x256xf32>
      %542 = arith.mulf %541, %419 : vector<8x256xf32>
      %543 = arith.mulf %542, %540 : vector<8x256xf32>
      %544 = arith.addf %543, %415 : vector<8x256xf32>
      %545 = arith.mulf %544, %531 : vector<8x256xf32>
      %546 = arith.addf %545, %409 : vector<8x256xf32>
      %cst_116 = arith.constant 4.300000e-01 : f32
      %547 = vector.broadcast %cst_116 : f32 to vector<8x256xf32>
      %548 = arith.addf %546, %547 : vector<8x256xf32>
      %549 = math.floor %548 : vector<8x256xf32>
      %cst_117 = arith.constant 7.000000e-02 : f32
      %550 = vector.broadcast %cst_117 : f32 to vector<8x256xf32>
      %551 = arith.cmpf oge, %538, %550 : vector<8x256xf32>
      %552 = arith.cmpf ole, %533, %431 : vector<8x256xf32>
      %553 = arith.andi %551, %552 : vector<8x256xi1>
      %cst_118 = arith.constant 0.000000e+00 : f32
      %554 = vector.broadcast %cst_118 : f32 to vector<8x256xf32>
      %555 = arith.cmpf olt, %549, %554 : vector<8x256xf32>
      %cst_119 = arith.constant 1.300000e-02 : f32
      %556 = vector.broadcast %cst_119 : f32 to vector<8x256xf32>
      %557 = arith.cmpf olt, %538, %556 : vector<8x256xf32>
      %558 = arith.cmpf ogt, %533, %538 : vector<8x256xf32>
      %559 = arith.andi %557, %558 : vector<8x256xi1>
      %560 = arith.ori %555, %559 : vector<8x256xi1>
      %561 = arith.mulf %533, %425 : vector<8x256xf32>
      %562 = arith.mulf %419, %540 : vector<8x256xf32>
      %563 = arith.mulf %562, %540 : vector<8x256xf32>
      %564 = arith.addf %563, %415 : vector<8x256xf32>
      %565 = arith.divf %561, %564 : vector<8x256xf32>
      %566 = math.log %565 : vector<8x256xf32>
      %567 = arith.mulf %549, %410 : vector<8x256xf32>
      %568 = arith.subf %567, %409 : vector<8x256xf32>
      %cst_120 = arith.constant 1.000000e+00 : f32
      %569 = vector.broadcast %cst_120 : f32 to vector<8x256xf32>
      %570 = arith.addf %549, %569 : vector<8x256xf32>
      %cst_121 = arith.constant 8.000000e+00 : f32
      %571 = vector.broadcast %cst_121 : f32 to vector<8x256xf32>
      %572 = arith.addf %570, %571 : vector<8x256xf32>
      %cst_122 = arith.constant 1.000000e+00 : f32
      %573 = vector.broadcast %cst_122 : f32 to vector<8x256xf32>
      %574 = arith.divf %573, %572 : vector<8x256xf32>
      %cst_123 = arith.constant 5.000000e-01 : f32
      %575 = vector.broadcast %cst_123 : f32 to vector<8x256xf32>
      %576 = arith.subf %572, %575 : vector<8x256xf32>
      %577 = math.log %572 : vector<8x256xf32>
      %578 = arith.mulf %576, %577 : vector<8x256xf32>
      %579 = arith.subf %578, %572 : vector<8x256xf32>
      %cst_124 = arith.constant 0.918938517 : f32
      %580 = vector.broadcast %cst_124 : f32 to vector<8x256xf32>
      %581 = arith.addf %579, %580 : vector<8x256xf32>
      %582 = arith.mulf %574, %574 : vector<8x256xf32>
      %cst_125 = arith.constant 0.00277777785 : f32
      %583 = vector.broadcast %cst_125 : f32 to vector<8x256xf32>
      %584 = arith.mulf %582, %583 : vector<8x256xf32>
      %cst_126 = arith.constant 0.0833333358 : f32
      %585 = vector.broadcast %cst_126 : f32 to vector<8x256xf32>
      %586 = arith.subf %585, %584 : vector<8x256xf32>
      %587 = arith.mulf %574, %586 : vector<8x256xf32>
      %588 = arith.addf %581, %587 : vector<8x256xf32>
      %cst_127 = arith.constant 1.000000e+00 : f32
      %589 = vector.broadcast %cst_127 : f32 to vector<8x256xf32>
      %590 = arith.addf %570, %589 : vector<8x256xf32>
      %591 = arith.mulf %570, %590 : vector<8x256xf32>
      %cst_128 = arith.constant 2.000000e+00 : f32
      %592 = vector.broadcast %cst_128 : f32 to vector<8x256xf32>
      %593 = arith.addf %570, %592 : vector<8x256xf32>
      %594 = arith.mulf %591, %593 : vector<8x256xf32>
      %cst_129 = arith.constant 3.000000e+00 : f32
      %595 = vector.broadcast %cst_129 : f32 to vector<8x256xf32>
      %596 = arith.addf %570, %595 : vector<8x256xf32>
      %597 = arith.mulf %594, %596 : vector<8x256xf32>
      %598 = math.log %597 : vector<8x256xf32>
      %cst_130 = arith.constant 4.000000e+00 : f32
      %599 = vector.broadcast %cst_130 : f32 to vector<8x256xf32>
      %600 = arith.addf %570, %599 : vector<8x256xf32>
      %cst_131 = arith.constant 5.000000e+00 : f32
      %601 = vector.broadcast %cst_131 : f32 to vector<8x256xf32>
      %602 = arith.addf %570, %601 : vector<8x256xf32>
      %603 = arith.mulf %600, %602 : vector<8x256xf32>
      %cst_132 = arith.constant 6.000000e+00 : f32
      %604 = vector.broadcast %cst_132 : f32 to vector<8x256xf32>
      %605 = arith.addf %570, %604 : vector<8x256xf32>
      %606 = arith.mulf %603, %605 : vector<8x256xf32>
      %cst_133 = arith.constant 7.000000e+00 : f32
      %607 = vector.broadcast %cst_133 : f32 to vector<8x256xf32>
      %608 = arith.addf %570, %607 : vector<8x256xf32>
      %609 = arith.mulf %606, %608 : vector<8x256xf32>
      %610 = math.log %609 : vector<8x256xf32>
      %611 = arith.addf %598, %610 : vector<8x256xf32>
      %612 = arith.subf %588, %611 : vector<8x256xf32>
      %613 = arith.subf %568, %612 : vector<8x256xf32>
      %cst_134 = arith.constant dense<true> : vector<8x256xi1>
      %614 = arith.xori %560, %cst_134 : vector<8x256xi1>
      %615 = arith.cmpf ole, %566, %613 : vector<8x256xf32>
      %616 = arith.andi %614, %615 : vector<8x256xi1>
      %617 = arith.ori %553, %616 : vector<8x256xi1>
      %cst_135 = arith.constant dense<true> : vector<8x256xi1>
      %618 = arith.xori %527, %cst_135 : vector<8x256xi1>
      %619 = arith.andi %617, %618 : vector<8x256xi1>
      %620 = arith.select %619, %549, %526 : vector<8x256xi1>, vector<8x256xf32>
      %621 = arith.ori %527, %617 : vector<8x256xi1>
      %c4 = arith.constant 4 : index
      %c0_136 = arith.constant 0 : index
      %c0_137 = arith.constant 0 : index
      %622 = vector.load %arg3[%c4, %c0_136, %c0_137] : memref<24x8x256xf32, #tpu.memory_space<vmem>>, vector<1x8x256xf32>
      %623 = vector.shape_cast %622 : vector<1x8x256xf32> to vector<8x256xf32>
      %cst_138 = arith.constant 5.000000e-01 : f32
      %624 = vector.broadcast %cst_138 : f32 to vector<8x256xf32>
      %625 = arith.subf %623, %624 : vector<8x256xf32>
      %c5 = arith.constant 5 : index
      %c0_139 = arith.constant 0 : index
      %c0_140 = arith.constant 0 : index
      %626 = vector.load %arg3[%c5, %c0_139, %c0_140] : memref<24x8x256xf32, #tpu.memory_space<vmem>>, vector<1x8x256xf32>
      %627 = vector.shape_cast %626 : vector<1x8x256xf32> to vector<8x256xf32>
      %628 = math.absf %625 : vector<8x256xf32>
      %cst_141 = arith.constant 5.000000e-01 : f32
      %629 = vector.broadcast %cst_141 : f32 to vector<8x256xf32>
      %630 = arith.subf %629, %628 : vector<8x256xf32>
      %cst_142 = arith.constant 9.99999997E-7 : f32
      %631 = vector.broadcast %cst_142 : f32 to vector<8x256xf32>
      %632 = arith.maximumf %630, %631 : vector<8x256xf32>
      %cst_143 = arith.constant 1.000000e+00 : f32
      %633 = vector.broadcast %cst_143 : f32 to vector<8x256xf32>
      %634 = arith.divf %633, %632 : vector<8x256xf32>
      %cst_144 = arith.constant 2.000000e+00 : f32
      %635 = vector.broadcast %cst_144 : f32 to vector<8x256xf32>
      %636 = arith.mulf %635, %419 : vector<8x256xf32>
      %637 = arith.mulf %636, %634 : vector<8x256xf32>
      %638 = arith.addf %637, %415 : vector<8x256xf32>
      %639 = arith.mulf %638, %625 : vector<8x256xf32>
      %640 = arith.addf %639, %409 : vector<8x256xf32>
      %cst_145 = arith.constant 4.300000e-01 : f32
      %641 = vector.broadcast %cst_145 : f32 to vector<8x256xf32>
      %642 = arith.addf %640, %641 : vector<8x256xf32>
      %643 = math.floor %642 : vector<8x256xf32>
      %cst_146 = arith.constant 7.000000e-02 : f32
      %644 = vector.broadcast %cst_146 : f32 to vector<8x256xf32>
      %645 = arith.cmpf oge, %632, %644 : vector<8x256xf32>
      %646 = arith.cmpf ole, %627, %431 : vector<8x256xf32>
      %647 = arith.andi %645, %646 : vector<8x256xi1>
      %cst_147 = arith.constant 0.000000e+00 : f32
      %648 = vector.broadcast %cst_147 : f32 to vector<8x256xf32>
      %649 = arith.cmpf olt, %643, %648 : vector<8x256xf32>
      %cst_148 = arith.constant 1.300000e-02 : f32
      %650 = vector.broadcast %cst_148 : f32 to vector<8x256xf32>
      %651 = arith.cmpf olt, %632, %650 : vector<8x256xf32>
      %652 = arith.cmpf ogt, %627, %632 : vector<8x256xf32>
      %653 = arith.andi %651, %652 : vector<8x256xi1>
      %654 = arith.ori %649, %653 : vector<8x256xi1>
      %655 = arith.mulf %627, %425 : vector<8x256xf32>
      %656 = arith.mulf %419, %634 : vector<8x256xf32>
      %657 = arith.mulf %656, %634 : vector<8x256xf32>
      %658 = arith.addf %657, %415 : vector<8x256xf32>
      %659 = arith.divf %655, %658 : vector<8x256xf32>
      %660 = math.log %659 : vector<8x256xf32>
      %661 = arith.mulf %643, %410 : vector<8x256xf32>
      %662 = arith.subf %661, %409 : vector<8x256xf32>
      %cst_149 = arith.constant 1.000000e+00 : f32
      %663 = vector.broadcast %cst_149 : f32 to vector<8x256xf32>
      %664 = arith.addf %643, %663 : vector<8x256xf32>
      %cst_150 = arith.constant 8.000000e+00 : f32
      %665 = vector.broadcast %cst_150 : f32 to vector<8x256xf32>
      %666 = arith.addf %664, %665 : vector<8x256xf32>
      %cst_151 = arith.constant 1.000000e+00 : f32
      %667 = vector.broadcast %cst_151 : f32 to vector<8x256xf32>
      %668 = arith.divf %667, %666 : vector<8x256xf32>
      %cst_152 = arith.constant 5.000000e-01 : f32
      %669 = vector.broadcast %cst_152 : f32 to vector<8x256xf32>
      %670 = arith.subf %666, %669 : vector<8x256xf32>
      %671 = math.log %666 : vector<8x256xf32>
      %672 = arith.mulf %670, %671 : vector<8x256xf32>
      %673 = arith.subf %672, %666 : vector<8x256xf32>
      %cst_153 = arith.constant 0.918938517 : f32
      %674 = vector.broadcast %cst_153 : f32 to vector<8x256xf32>
      %675 = arith.addf %673, %674 : vector<8x256xf32>
      %676 = arith.mulf %668, %668 : vector<8x256xf32>
      %cst_154 = arith.constant 0.00277777785 : f32
      %677 = vector.broadcast %cst_154 : f32 to vector<8x256xf32>
      %678 = arith.mulf %676, %677 : vector<8x256xf32>
      %cst_155 = arith.constant 0.0833333358 : f32
      %679 = vector.broadcast %cst_155 : f32 to vector<8x256xf32>
      %680 = arith.subf %679, %678 : vector<8x256xf32>
      %681 = arith.mulf %668, %680 : vector<8x256xf32>
      %682 = arith.addf %675, %681 : vector<8x256xf32>
      %cst_156 = arith.constant 1.000000e+00 : f32
      %683 = vector.broadcast %cst_156 : f32 to vector<8x256xf32>
      %684 = arith.addf %664, %683 : vector<8x256xf32>
      %685 = arith.mulf %664, %684 : vector<8x256xf32>
      %cst_157 = arith.constant 2.000000e+00 : f32
      %686 = vector.broadcast %cst_157 : f32 to vector<8x256xf32>
      %687 = arith.addf %664, %686 : vector<8x256xf32>
      %688 = arith.mulf %685, %687 : vector<8x256xf32>
      %cst_158 = arith.constant 3.000000e+00 : f32
      %689 = vector.broadcast %cst_158 : f32 to vector<8x256xf32>
      %690 = arith.addf %664, %689 : vector<8x256xf32>
      %691 = arith.mulf %688, %690 : vector<8x256xf32>
      %692 = math.log %691 : vector<8x256xf32>
      %cst_159 = arith.constant 4.000000e+00 : f32
      %693 = vector.broadcast %cst_159 : f32 to vector<8x256xf32>
      %694 = arith.addf %664, %693 : vector<8x256xf32>
      %cst_160 = arith.constant 5.000000e+00 : f32
      %695 = vector.broadcast %cst_160 : f32 to vector<8x256xf32>
      %696 = arith.addf %664, %695 : vector<8x256xf32>
      %697 = arith.mulf %694, %696 : vector<8x256xf32>
      %cst_161 = arith.constant 6.000000e+00 : f32
      %698 = vector.broadcast %cst_161 : f32 to vector<8x256xf32>
      %699 = arith.addf %664, %698 : vector<8x256xf32>
      %700 = arith.mulf %697, %699 : vector<8x256xf32>
      %cst_162 = arith.constant 7.000000e+00 : f32
      %701 = vector.broadcast %cst_162 : f32 to vector<8x256xf32>
      %702 = arith.addf %664, %701 : vector<8x256xf32>
      %703 = arith.mulf %700, %702 : vector<8x256xf32>
      %704 = math.log %703 : vector<8x256xf32>
      %705 = arith.addf %692, %704 : vector<8x256xf32>
      %706 = arith.subf %682, %705 : vector<8x256xf32>
      %707 = arith.subf %662, %706 : vector<8x256xf32>
      %cst_163 = arith.constant dense<true> : vector<8x256xi1>
      %708 = arith.xori %654, %cst_163 : vector<8x256xi1>
      %709 = arith.cmpf ole, %660, %707 : vector<8x256xf32>
      %710 = arith.andi %708, %709 : vector<8x256xi1>
      %711 = arith.ori %647, %710 : vector<8x256xi1>
      %cst_164 = arith.constant dense<true> : vector<8x256xi1>
      %712 = arith.xori %621, %cst_164 : vector<8x256xi1>
      %713 = arith.andi %711, %712 : vector<8x256xi1>
      %714 = arith.select %713, %643, %620 : vector<8x256xi1>, vector<8x256xf32>
      %715 = arith.ori %621, %711 : vector<8x256xi1>
      %c6 = arith.constant 6 : index
      %c0_165 = arith.constant 0 : index
      %c0_166 = arith.constant 0 : index
      %716 = vector.load %arg3[%c6, %c0_165, %c0_166] : memref<24x8x256xf32, #tpu.memory_space<vmem>>, vector<1x8x256xf32>
      %717 = vector.shape_cast %716 : vector<1x8x256xf32> to vector<8x256xf32>
      %cst_167 = arith.constant 5.000000e-01 : f32
      %718 = vector.broadcast %cst_167 : f32 to vector<8x256xf32>
      %719 = arith.subf %717, %718 : vector<8x256xf32>
      %c7 = arith.constant 7 : index
      %c0_168 = arith.constant 0 : index
      %c0_169 = arith.constant 0 : index
      %720 = vector.load %arg3[%c7, %c0_168, %c0_169] : memref<24x8x256xf32, #tpu.memory_space<vmem>>, vector<1x8x256xf32>
      %721 = vector.shape_cast %720 : vector<1x8x256xf32> to vector<8x256xf32>
      %722 = math.absf %719 : vector<8x256xf32>
      %cst_170 = arith.constant 5.000000e-01 : f32
      %723 = vector.broadcast %cst_170 : f32 to vector<8x256xf32>
      %724 = arith.subf %723, %722 : vector<8x256xf32>
      %cst_171 = arith.constant 9.99999997E-7 : f32
      %725 = vector.broadcast %cst_171 : f32 to vector<8x256xf32>
      %726 = arith.maximumf %724, %725 : vector<8x256xf32>
      %cst_172 = arith.constant 1.000000e+00 : f32
      %727 = vector.broadcast %cst_172 : f32 to vector<8x256xf32>
      %728 = arith.divf %727, %726 : vector<8x256xf32>
      %cst_173 = arith.constant 2.000000e+00 : f32
      %729 = vector.broadcast %cst_173 : f32 to vector<8x256xf32>
      %730 = arith.mulf %729, %419 : vector<8x256xf32>
      %731 = arith.mulf %730, %728 : vector<8x256xf32>
      %732 = arith.addf %731, %415 : vector<8x256xf32>
      %733 = arith.mulf %732, %719 : vector<8x256xf32>
      %734 = arith.addf %733, %409 : vector<8x256xf32>
      %cst_174 = arith.constant 4.300000e-01 : f32
      %735 = vector.broadcast %cst_174 : f32 to vector<8x256xf32>
      %736 = arith.addf %734, %735 : vector<8x256xf32>
      %737 = math.floor %736 : vector<8x256xf32>
      %cst_175 = arith.constant 7.000000e-02 : f32
      %738 = vector.broadcast %cst_175 : f32 to vector<8x256xf32>
      %739 = arith.cmpf oge, %726, %738 : vector<8x256xf32>
      %740 = arith.cmpf ole, %721, %431 : vector<8x256xf32>
      %741 = arith.andi %739, %740 : vector<8x256xi1>
      %cst_176 = arith.constant 0.000000e+00 : f32
      %742 = vector.broadcast %cst_176 : f32 to vector<8x256xf32>
      %743 = arith.cmpf olt, %737, %742 : vector<8x256xf32>
      %cst_177 = arith.constant 1.300000e-02 : f32
      %744 = vector.broadcast %cst_177 : f32 to vector<8x256xf32>
      %745 = arith.cmpf olt, %726, %744 : vector<8x256xf32>
      %746 = arith.cmpf ogt, %721, %726 : vector<8x256xf32>
      %747 = arith.andi %745, %746 : vector<8x256xi1>
      %748 = arith.ori %743, %747 : vector<8x256xi1>
      %749 = arith.mulf %721, %425 : vector<8x256xf32>
      %750 = arith.mulf %419, %728 : vector<8x256xf32>
      %751 = arith.mulf %750, %728 : vector<8x256xf32>
      %752 = arith.addf %751, %415 : vector<8x256xf32>
      %753 = arith.divf %749, %752 : vector<8x256xf32>
      %754 = math.log %753 : vector<8x256xf32>
      %755 = arith.mulf %737, %410 : vector<8x256xf32>
      %756 = arith.subf %755, %409 : vector<8x256xf32>
      %cst_178 = arith.constant 1.000000e+00 : f32
      %757 = vector.broadcast %cst_178 : f32 to vector<8x256xf32>
      %758 = arith.addf %737, %757 : vector<8x256xf32>
      %cst_179 = arith.constant 8.000000e+00 : f32
      %759 = vector.broadcast %cst_179 : f32 to vector<8x256xf32>
      %760 = arith.addf %758, %759 : vector<8x256xf32>
      %cst_180 = arith.constant 1.000000e+00 : f32
      %761 = vector.broadcast %cst_180 : f32 to vector<8x256xf32>
      %762 = arith.divf %761, %760 : vector<8x256xf32>
      %cst_181 = arith.constant 5.000000e-01 : f32
      %763 = vector.broadcast %cst_181 : f32 to vector<8x256xf32>
      %764 = arith.subf %760, %763 : vector<8x256xf32>
      %765 = math.log %760 : vector<8x256xf32>
      %766 = arith.mulf %764, %765 : vector<8x256xf32>
      %767 = arith.subf %766, %760 : vector<8x256xf32>
      %cst_182 = arith.constant 0.918938517 : f32
      %768 = vector.broadcast %cst_182 : f32 to vector<8x256xf32>
      %769 = arith.addf %767, %768 : vector<8x256xf32>
      %770 = arith.mulf %762, %762 : vector<8x256xf32>
      %cst_183 = arith.constant 0.00277777785 : f32
      %771 = vector.broadcast %cst_183 : f32 to vector<8x256xf32>
      %772 = arith.mulf %770, %771 : vector<8x256xf32>
      %cst_184 = arith.constant 0.0833333358 : f32
      %773 = vector.broadcast %cst_184 : f32 to vector<8x256xf32>
      %774 = arith.subf %773, %772 : vector<8x256xf32>
      %775 = arith.mulf %762, %774 : vector<8x256xf32>
      %776 = arith.addf %769, %775 : vector<8x256xf32>
      %cst_185 = arith.constant 1.000000e+00 : f32
      %777 = vector.broadcast %cst_185 : f32 to vector<8x256xf32>
      %778 = arith.addf %758, %777 : vector<8x256xf32>
      %779 = arith.mulf %758, %778 : vector<8x256xf32>
      %cst_186 = arith.constant 2.000000e+00 : f32
      %780 = vector.broadcast %cst_186 : f32 to vector<8x256xf32>
      %781 = arith.addf %758, %780 : vector<8x256xf32>
      %782 = arith.mulf %779, %781 : vector<8x256xf32>
      %cst_187 = arith.constant 3.000000e+00 : f32
      %783 = vector.broadcast %cst_187 : f32 to vector<8x256xf32>
      %784 = arith.addf %758, %783 : vector<8x256xf32>
      %785 = arith.mulf %782, %784 : vector<8x256xf32>
      %786 = math.log %785 : vector<8x256xf32>
      %cst_188 = arith.constant 4.000000e+00 : f32
      %787 = vector.broadcast %cst_188 : f32 to vector<8x256xf32>
      %788 = arith.addf %758, %787 : vector<8x256xf32>
      %cst_189 = arith.constant 5.000000e+00 : f32
      %789 = vector.broadcast %cst_189 : f32 to vector<8x256xf32>
      %790 = arith.addf %758, %789 : vector<8x256xf32>
      %791 = arith.mulf %788, %790 : vector<8x256xf32>
      %cst_190 = arith.constant 6.000000e+00 : f32
      %792 = vector.broadcast %cst_190 : f32 to vector<8x256xf32>
      %793 = arith.addf %758, %792 : vector<8x256xf32>
      %794 = arith.mulf %791, %793 : vector<8x256xf32>
      %cst_191 = arith.constant 7.000000e+00 : f32
      %795 = vector.broadcast %cst_191 : f32 to vector<8x256xf32>
      %796 = arith.addf %758, %795 : vector<8x256xf32>
      %797 = arith.mulf %794, %796 : vector<8x256xf32>
      %798 = math.log %797 : vector<8x256xf32>
      %799 = arith.addf %786, %798 : vector<8x256xf32>
      %800 = arith.subf %776, %799 : vector<8x256xf32>
      %801 = arith.subf %756, %800 : vector<8x256xf32>
      %cst_192 = arith.constant dense<true> : vector<8x256xi1>
      %802 = arith.xori %748, %cst_192 : vector<8x256xi1>
      %803 = arith.cmpf ole, %754, %801 : vector<8x256xf32>
      %804 = arith.andi %802, %803 : vector<8x256xi1>
      %805 = arith.ori %741, %804 : vector<8x256xi1>
      %cst_193 = arith.constant dense<true> : vector<8x256xi1>
      %806 = arith.xori %715, %cst_193 : vector<8x256xi1>
      %807 = arith.andi %805, %806 : vector<8x256xi1>
      %808 = arith.select %807, %737, %714 : vector<8x256xi1>, vector<8x256xf32>
      %809 = arith.ori %715, %805 : vector<8x256xi1>
      %c8 = arith.constant 8 : index
      %c0_194 = arith.constant 0 : index
      %c0_195 = arith.constant 0 : index
      %810 = vector.load %arg3[%c8, %c0_194, %c0_195] : memref<24x8x256xf32, #tpu.memory_space<vmem>>, vector<1x8x256xf32>
      %811 = vector.shape_cast %810 : vector<1x8x256xf32> to vector<8x256xf32>
      %cst_196 = arith.constant 5.000000e-01 : f32
      %812 = vector.broadcast %cst_196 : f32 to vector<8x256xf32>
      %813 = arith.subf %811, %812 : vector<8x256xf32>
      %c9 = arith.constant 9 : index
      %c0_197 = arith.constant 0 : index
      %c0_198 = arith.constant 0 : index
      %814 = vector.load %arg3[%c9, %c0_197, %c0_198] : memref<24x8x256xf32, #tpu.memory_space<vmem>>, vector<1x8x256xf32>
      %815 = vector.shape_cast %814 : vector<1x8x256xf32> to vector<8x256xf32>
      %816 = math.absf %813 : vector<8x256xf32>
      %cst_199 = arith.constant 5.000000e-01 : f32
      %817 = vector.broadcast %cst_199 : f32 to vector<8x256xf32>
      %818 = arith.subf %817, %816 : vector<8x256xf32>
      %cst_200 = arith.constant 9.99999997E-7 : f32
      %819 = vector.broadcast %cst_200 : f32 to vector<8x256xf32>
      %820 = arith.maximumf %818, %819 : vector<8x256xf32>
      %cst_201 = arith.constant 1.000000e+00 : f32
      %821 = vector.broadcast %cst_201 : f32 to vector<8x256xf32>
      %822 = arith.divf %821, %820 : vector<8x256xf32>
      %cst_202 = arith.constant 2.000000e+00 : f32
      %823 = vector.broadcast %cst_202 : f32 to vector<8x256xf32>
      %824 = arith.mulf %823, %419 : vector<8x256xf32>
      %825 = arith.mulf %824, %822 : vector<8x256xf32>
      %826 = arith.addf %825, %415 : vector<8x256xf32>
      %827 = arith.mulf %826, %813 : vector<8x256xf32>
      %828 = arith.addf %827, %409 : vector<8x256xf32>
      %cst_203 = arith.constant 4.300000e-01 : f32
      %829 = vector.broadcast %cst_203 : f32 to vector<8x256xf32>
      %830 = arith.addf %828, %829 : vector<8x256xf32>
      %831 = math.floor %830 : vector<8x256xf32>
      %cst_204 = arith.constant 7.000000e-02 : f32
      %832 = vector.broadcast %cst_204 : f32 to vector<8x256xf32>
      %833 = arith.cmpf oge, %820, %832 : vector<8x256xf32>
      %834 = arith.cmpf ole, %815, %431 : vector<8x256xf32>
      %835 = arith.andi %833, %834 : vector<8x256xi1>
      %cst_205 = arith.constant 0.000000e+00 : f32
      %836 = vector.broadcast %cst_205 : f32 to vector<8x256xf32>
      %837 = arith.cmpf olt, %831, %836 : vector<8x256xf32>
      %cst_206 = arith.constant 1.300000e-02 : f32
      %838 = vector.broadcast %cst_206 : f32 to vector<8x256xf32>
      %839 = arith.cmpf olt, %820, %838 : vector<8x256xf32>
      %840 = arith.cmpf ogt, %815, %820 : vector<8x256xf32>
      %841 = arith.andi %839, %840 : vector<8x256xi1>
      %842 = arith.ori %837, %841 : vector<8x256xi1>
      %843 = arith.mulf %815, %425 : vector<8x256xf32>
      %844 = arith.mulf %419, %822 : vector<8x256xf32>
      %845 = arith.mulf %844, %822 : vector<8x256xf32>
      %846 = arith.addf %845, %415 : vector<8x256xf32>
      %847 = arith.divf %843, %846 : vector<8x256xf32>
      %848 = math.log %847 : vector<8x256xf32>
      %849 = arith.mulf %831, %410 : vector<8x256xf32>
      %850 = arith.subf %849, %409 : vector<8x256xf32>
      %cst_207 = arith.constant 1.000000e+00 : f32
      %851 = vector.broadcast %cst_207 : f32 to vector<8x256xf32>
      %852 = arith.addf %831, %851 : vector<8x256xf32>
      %cst_208 = arith.constant 8.000000e+00 : f32
      %853 = vector.broadcast %cst_208 : f32 to vector<8x256xf32>
      %854 = arith.addf %852, %853 : vector<8x256xf32>
      %cst_209 = arith.constant 1.000000e+00 : f32
      %855 = vector.broadcast %cst_209 : f32 to vector<8x256xf32>
      %856 = arith.divf %855, %854 : vector<8x256xf32>
      %cst_210 = arith.constant 5.000000e-01 : f32
      %857 = vector.broadcast %cst_210 : f32 to vector<8x256xf32>
      %858 = arith.subf %854, %857 : vector<8x256xf32>
      %859 = math.log %854 : vector<8x256xf32>
      %860 = arith.mulf %858, %859 : vector<8x256xf32>
      %861 = arith.subf %860, %854 : vector<8x256xf32>
      %cst_211 = arith.constant 0.918938517 : f32
      %862 = vector.broadcast %cst_211 : f32 to vector<8x256xf32>
      %863 = arith.addf %861, %862 : vector<8x256xf32>
      %864 = arith.mulf %856, %856 : vector<8x256xf32>
      %cst_212 = arith.constant 0.00277777785 : f32
      %865 = vector.broadcast %cst_212 : f32 to vector<8x256xf32>
      %866 = arith.mulf %864, %865 : vector<8x256xf32>
      %cst_213 = arith.constant 0.0833333358 : f32
      %867 = vector.broadcast %cst_213 : f32 to vector<8x256xf32>
      %868 = arith.subf %867, %866 : vector<8x256xf32>
      %869 = arith.mulf %856, %868 : vector<8x256xf32>
      %870 = arith.addf %863, %869 : vector<8x256xf32>
      %cst_214 = arith.constant 1.000000e+00 : f32
      %871 = vector.broadcast %cst_214 : f32 to vector<8x256xf32>
      %872 = arith.addf %852, %871 : vector<8x256xf32>
      %873 = arith.mulf %852, %872 : vector<8x256xf32>
      %cst_215 = arith.constant 2.000000e+00 : f32
      %874 = vector.broadcast %cst_215 : f32 to vector<8x256xf32>
      %875 = arith.addf %852, %874 : vector<8x256xf32>
      %876 = arith.mulf %873, %875 : vector<8x256xf32>
      %cst_216 = arith.constant 3.000000e+00 : f32
      %877 = vector.broadcast %cst_216 : f32 to vector<8x256xf32>
      %878 = arith.addf %852, %877 : vector<8x256xf32>
      %879 = arith.mulf %876, %878 : vector<8x256xf32>
      %880 = math.log %879 : vector<8x256xf32>
      %cst_217 = arith.constant 4.000000e+00 : f32
      %881 = vector.broadcast %cst_217 : f32 to vector<8x256xf32>
      %882 = arith.addf %852, %881 : vector<8x256xf32>
      %cst_218 = arith.constant 5.000000e+00 : f32
      %883 = vector.broadcast %cst_218 : f32 to vector<8x256xf32>
      %884 = arith.addf %852, %883 : vector<8x256xf32>
      %885 = arith.mulf %882, %884 : vector<8x256xf32>
      %cst_219 = arith.constant 6.000000e+00 : f32
      %886 = vector.broadcast %cst_219 : f32 to vector<8x256xf32>
      %887 = arith.addf %852, %886 : vector<8x256xf32>
      %888 = arith.mulf %885, %887 : vector<8x256xf32>
      %cst_220 = arith.constant 7.000000e+00 : f32
      %889 = vector.broadcast %cst_220 : f32 to vector<8x256xf32>
      %890 = arith.addf %852, %889 : vector<8x256xf32>
      %891 = arith.mulf %888, %890 : vector<8x256xf32>
      %892 = math.log %891 : vector<8x256xf32>
      %893 = arith.addf %880, %892 : vector<8x256xf32>
      %894 = arith.subf %870, %893 : vector<8x256xf32>
      %895 = arith.subf %850, %894 : vector<8x256xf32>
      %cst_221 = arith.constant dense<true> : vector<8x256xi1>
      %896 = arith.xori %842, %cst_221 : vector<8x256xi1>
      %897 = arith.cmpf ole, %848, %895 : vector<8x256xf32>
      %898 = arith.andi %896, %897 : vector<8x256xi1>
      %899 = arith.ori %835, %898 : vector<8x256xi1>
      %cst_222 = arith.constant dense<true> : vector<8x256xi1>
      %900 = arith.xori %809, %cst_222 : vector<8x256xi1>
      %901 = arith.andi %899, %900 : vector<8x256xi1>
      %902 = arith.select %901, %831, %808 : vector<8x256xi1>, vector<8x256xf32>
      %903 = arith.ori %809, %899 : vector<8x256xi1>
      %c10 = arith.constant 10 : index
      %c0_223 = arith.constant 0 : index
      %c0_224 = arith.constant 0 : index
      %904 = vector.load %arg3[%c10, %c0_223, %c0_224] : memref<24x8x256xf32, #tpu.memory_space<vmem>>, vector<1x8x256xf32>
      %905 = vector.shape_cast %904 : vector<1x8x256xf32> to vector<8x256xf32>
      %cst_225 = arith.constant 5.000000e-01 : f32
      %906 = vector.broadcast %cst_225 : f32 to vector<8x256xf32>
      %907 = arith.subf %905, %906 : vector<8x256xf32>
      %c11 = arith.constant 11 : index
      %c0_226 = arith.constant 0 : index
      %c0_227 = arith.constant 0 : index
      %908 = vector.load %arg3[%c11, %c0_226, %c0_227] : memref<24x8x256xf32, #tpu.memory_space<vmem>>, vector<1x8x256xf32>
      %909 = vector.shape_cast %908 : vector<1x8x256xf32> to vector<8x256xf32>
      %910 = math.absf %907 : vector<8x256xf32>
      %cst_228 = arith.constant 5.000000e-01 : f32
      %911 = vector.broadcast %cst_228 : f32 to vector<8x256xf32>
      %912 = arith.subf %911, %910 : vector<8x256xf32>
      %cst_229 = arith.constant 9.99999997E-7 : f32
      %913 = vector.broadcast %cst_229 : f32 to vector<8x256xf32>
      %914 = arith.maximumf %912, %913 : vector<8x256xf32>
      %cst_230 = arith.constant 1.000000e+00 : f32
      %915 = vector.broadcast %cst_230 : f32 to vector<8x256xf32>
      %916 = arith.divf %915, %914 : vector<8x256xf32>
      %cst_231 = arith.constant 2.000000e+00 : f32
      %917 = vector.broadcast %cst_231 : f32 to vector<8x256xf32>
      %918 = arith.mulf %917, %419 : vector<8x256xf32>
      %919 = arith.mulf %918, %916 : vector<8x256xf32>
      %920 = arith.addf %919, %415 : vector<8x256xf32>
      %921 = arith.mulf %920, %907 : vector<8x256xf32>
      %922 = arith.addf %921, %409 : vector<8x256xf32>
      %cst_232 = arith.constant 4.300000e-01 : f32
      %923 = vector.broadcast %cst_232 : f32 to vector<8x256xf32>
      %924 = arith.addf %922, %923 : vector<8x256xf32>
      %925 = math.floor %924 : vector<8x256xf32>
      %cst_233 = arith.constant 7.000000e-02 : f32
      %926 = vector.broadcast %cst_233 : f32 to vector<8x256xf32>
      %927 = arith.cmpf oge, %914, %926 : vector<8x256xf32>
      %928 = arith.cmpf ole, %909, %431 : vector<8x256xf32>
      %929 = arith.andi %927, %928 : vector<8x256xi1>
      %cst_234 = arith.constant 0.000000e+00 : f32
      %930 = vector.broadcast %cst_234 : f32 to vector<8x256xf32>
      %931 = arith.cmpf olt, %925, %930 : vector<8x256xf32>
      %cst_235 = arith.constant 1.300000e-02 : f32
      %932 = vector.broadcast %cst_235 : f32 to vector<8x256xf32>
      %933 = arith.cmpf olt, %914, %932 : vector<8x256xf32>
      %934 = arith.cmpf ogt, %909, %914 : vector<8x256xf32>
      %935 = arith.andi %933, %934 : vector<8x256xi1>
      %936 = arith.ori %931, %935 : vector<8x256xi1>
      %937 = arith.mulf %909, %425 : vector<8x256xf32>
      %938 = arith.mulf %419, %916 : vector<8x256xf32>
      %939 = arith.mulf %938, %916 : vector<8x256xf32>
      %940 = arith.addf %939, %415 : vector<8x256xf32>
      %941 = arith.divf %937, %940 : vector<8x256xf32>
      %942 = math.log %941 : vector<8x256xf32>
      %943 = arith.mulf %925, %410 : vector<8x256xf32>
      %944 = arith.subf %943, %409 : vector<8x256xf32>
      %cst_236 = arith.constant 1.000000e+00 : f32
      %945 = vector.broadcast %cst_236 : f32 to vector<8x256xf32>
      %946 = arith.addf %925, %945 : vector<8x256xf32>
      %cst_237 = arith.constant 8.000000e+00 : f32
      %947 = vector.broadcast %cst_237 : f32 to vector<8x256xf32>
      %948 = arith.addf %946, %947 : vector<8x256xf32>
      %cst_238 = arith.constant 1.000000e+00 : f32
      %949 = vector.broadcast %cst_238 : f32 to vector<8x256xf32>
      %950 = arith.divf %949, %948 : vector<8x256xf32>
      %cst_239 = arith.constant 5.000000e-01 : f32
      %951 = vector.broadcast %cst_239 : f32 to vector<8x256xf32>
      %952 = arith.subf %948, %951 : vector<8x256xf32>
      %953 = math.log %948 : vector<8x256xf32>
      %954 = arith.mulf %952, %953 : vector<8x256xf32>
      %955 = arith.subf %954, %948 : vector<8x256xf32>
      %cst_240 = arith.constant 0.918938517 : f32
      %956 = vector.broadcast %cst_240 : f32 to vector<8x256xf32>
      %957 = arith.addf %955, %956 : vector<8x256xf32>
      %958 = arith.mulf %950, %950 : vector<8x256xf32>
      %cst_241 = arith.constant 0.00277777785 : f32
      %959 = vector.broadcast %cst_241 : f32 to vector<8x256xf32>
      %960 = arith.mulf %958, %959 : vector<8x256xf32>
      %cst_242 = arith.constant 0.0833333358 : f32
      %961 = vector.broadcast %cst_242 : f32 to vector<8x256xf32>
      %962 = arith.subf %961, %960 : vector<8x256xf32>
      %963 = arith.mulf %950, %962 : vector<8x256xf32>
      %964 = arith.addf %957, %963 : vector<8x256xf32>
      %cst_243 = arith.constant 1.000000e+00 : f32
      %965 = vector.broadcast %cst_243 : f32 to vector<8x256xf32>
      %966 = arith.addf %946, %965 : vector<8x256xf32>
      %967 = arith.mulf %946, %966 : vector<8x256xf32>
      %cst_244 = arith.constant 2.000000e+00 : f32
      %968 = vector.broadcast %cst_244 : f32 to vector<8x256xf32>
      %969 = arith.addf %946, %968 : vector<8x256xf32>
      %970 = arith.mulf %967, %969 : vector<8x256xf32>
      %cst_245 = arith.constant 3.000000e+00 : f32
      %971 = vector.broadcast %cst_245 : f32 to vector<8x256xf32>
      %972 = arith.addf %946, %971 : vector<8x256xf32>
      %973 = arith.mulf %970, %972 : vector<8x256xf32>
      %974 = math.log %973 : vector<8x256xf32>
      %cst_246 = arith.constant 4.000000e+00 : f32
      %975 = vector.broadcast %cst_246 : f32 to vector<8x256xf32>
      %976 = arith.addf %946, %975 : vector<8x256xf32>
      %cst_247 = arith.constant 5.000000e+00 : f32
      %977 = vector.broadcast %cst_247 : f32 to vector<8x256xf32>
      %978 = arith.addf %946, %977 : vector<8x256xf32>
      %979 = arith.mulf %976, %978 : vector<8x256xf32>
      %cst_248 = arith.constant 6.000000e+00 : f32
      %980 = vector.broadcast %cst_248 : f32 to vector<8x256xf32>
      %981 = arith.addf %946, %980 : vector<8x256xf32>
      %982 = arith.mulf %979, %981 : vector<8x256xf32>
      %cst_249 = arith.constant 7.000000e+00 : f32
      %983 = vector.broadcast %cst_249 : f32 to vector<8x256xf32>
      %984 = arith.addf %946, %983 : vector<8x256xf32>
      %985 = arith.mulf %982, %984 : vector<8x256xf32>
      %986 = math.log %985 : vector<8x256xf32>
      %987 = arith.addf %974, %986 : vector<8x256xf32>
      %988 = arith.subf %964, %987 : vector<8x256xf32>
      %989 = arith.subf %944, %988 : vector<8x256xf32>
      %cst_250 = arith.constant dense<true> : vector<8x256xi1>
      %990 = arith.xori %936, %cst_250 : vector<8x256xi1>
      %991 = arith.cmpf ole, %942, %989 : vector<8x256xf32>
      %992 = arith.andi %990, %991 : vector<8x256xi1>
      %993 = arith.ori %929, %992 : vector<8x256xi1>
      %cst_251 = arith.constant dense<true> : vector<8x256xi1>
      %994 = arith.xori %903, %cst_251 : vector<8x256xi1>
      %995 = arith.andi %993, %994 : vector<8x256xi1>
      %996 = arith.select %995, %925, %902 : vector<8x256xi1>, vector<8x256xf32>
      %997 = arith.ori %903, %993 : vector<8x256xi1>
      %c12 = arith.constant 12 : index
      %c0_252 = arith.constant 0 : index
      %c0_253 = arith.constant 0 : index
      %998 = vector.load %arg3[%c12, %c0_252, %c0_253] : memref<24x8x256xf32, #tpu.memory_space<vmem>>, vector<1x8x256xf32>
      %999 = vector.shape_cast %998 : vector<1x8x256xf32> to vector<8x256xf32>
      %cst_254 = arith.constant 5.000000e-01 : f32
      %1000 = vector.broadcast %cst_254 : f32 to vector<8x256xf32>
      %1001 = arith.subf %999, %1000 : vector<8x256xf32>
      %c13 = arith.constant 13 : index
      %c0_255 = arith.constant 0 : index
      %c0_256 = arith.constant 0 : index
      %1002 = vector.load %arg3[%c13, %c0_255, %c0_256] : memref<24x8x256xf32, #tpu.memory_space<vmem>>, vector<1x8x256xf32>
      %1003 = vector.shape_cast %1002 : vector<1x8x256xf32> to vector<8x256xf32>
      %1004 = math.absf %1001 : vector<8x256xf32>
      %cst_257 = arith.constant 5.000000e-01 : f32
      %1005 = vector.broadcast %cst_257 : f32 to vector<8x256xf32>
      %1006 = arith.subf %1005, %1004 : vector<8x256xf32>
      %cst_258 = arith.constant 9.99999997E-7 : f32
      %1007 = vector.broadcast %cst_258 : f32 to vector<8x256xf32>
      %1008 = arith.maximumf %1006, %1007 : vector<8x256xf32>
      %cst_259 = arith.constant 1.000000e+00 : f32
      %1009 = vector.broadcast %cst_259 : f32 to vector<8x256xf32>
      %1010 = arith.divf %1009, %1008 : vector<8x256xf32>
      %cst_260 = arith.constant 2.000000e+00 : f32
      %1011 = vector.broadcast %cst_260 : f32 to vector<8x256xf32>
      %1012 = arith.mulf %1011, %419 : vector<8x256xf32>
      %1013 = arith.mulf %1012, %1010 : vector<8x256xf32>
      %1014 = arith.addf %1013, %415 : vector<8x256xf32>
      %1015 = arith.mulf %1014, %1001 : vector<8x256xf32>
      %1016 = arith.addf %1015, %409 : vector<8x256xf32>
      %cst_261 = arith.constant 4.300000e-01 : f32
      %1017 = vector.broadcast %cst_261 : f32 to vector<8x256xf32>
      %1018 = arith.addf %1016, %1017 : vector<8x256xf32>
      %1019 = math.floor %1018 : vector<8x256xf32>
      %cst_262 = arith.constant 7.000000e-02 : f32
      %1020 = vector.broadcast %cst_262 : f32 to vector<8x256xf32>
      %1021 = arith.cmpf oge, %1008, %1020 : vector<8x256xf32>
      %1022 = arith.cmpf ole, %1003, %431 : vector<8x256xf32>
      %1023 = arith.andi %1021, %1022 : vector<8x256xi1>
      %cst_263 = arith.constant 0.000000e+00 : f32
      %1024 = vector.broadcast %cst_263 : f32 to vector<8x256xf32>
      %1025 = arith.cmpf olt, %1019, %1024 : vector<8x256xf32>
      %cst_264 = arith.constant 1.300000e-02 : f32
      %1026 = vector.broadcast %cst_264 : f32 to vector<8x256xf32>
      %1027 = arith.cmpf olt, %1008, %1026 : vector<8x256xf32>
      %1028 = arith.cmpf ogt, %1003, %1008 : vector<8x256xf32>
      %1029 = arith.andi %1027, %1028 : vector<8x256xi1>
      %1030 = arith.ori %1025, %1029 : vector<8x256xi1>
      %1031 = arith.mulf %1003, %425 : vector<8x256xf32>
      %1032 = arith.mulf %419, %1010 : vector<8x256xf32>
      %1033 = arith.mulf %1032, %1010 : vector<8x256xf32>
      %1034 = arith.addf %1033, %415 : vector<8x256xf32>
      %1035 = arith.divf %1031, %1034 : vector<8x256xf32>
      %1036 = math.log %1035 : vector<8x256xf32>
      %1037 = arith.mulf %1019, %410 : vector<8x256xf32>
      %1038 = arith.subf %1037, %409 : vector<8x256xf32>
      %cst_265 = arith.constant 1.000000e+00 : f32
      %1039 = vector.broadcast %cst_265 : f32 to vector<8x256xf32>
      %1040 = arith.addf %1019, %1039 : vector<8x256xf32>
      %cst_266 = arith.constant 8.000000e+00 : f32
      %1041 = vector.broadcast %cst_266 : f32 to vector<8x256xf32>
      %1042 = arith.addf %1040, %1041 : vector<8x256xf32>
      %cst_267 = arith.constant 1.000000e+00 : f32
      %1043 = vector.broadcast %cst_267 : f32 to vector<8x256xf32>
      %1044 = arith.divf %1043, %1042 : vector<8x256xf32>
      %cst_268 = arith.constant 5.000000e-01 : f32
      %1045 = vector.broadcast %cst_268 : f32 to vector<8x256xf32>
      %1046 = arith.subf %1042, %1045 : vector<8x256xf32>
      %1047 = math.log %1042 : vector<8x256xf32>
      %1048 = arith.mulf %1046, %1047 : vector<8x256xf32>
      %1049 = arith.subf %1048, %1042 : vector<8x256xf32>
      %cst_269 = arith.constant 0.918938517 : f32
      %1050 = vector.broadcast %cst_269 : f32 to vector<8x256xf32>
      %1051 = arith.addf %1049, %1050 : vector<8x256xf32>
      %1052 = arith.mulf %1044, %1044 : vector<8x256xf32>
      %cst_270 = arith.constant 0.00277777785 : f32
      %1053 = vector.broadcast %cst_270 : f32 to vector<8x256xf32>
      %1054 = arith.mulf %1052, %1053 : vector<8x256xf32>
      %cst_271 = arith.constant 0.0833333358 : f32
      %1055 = vector.broadcast %cst_271 : f32 to vector<8x256xf32>
      %1056 = arith.subf %1055, %1054 : vector<8x256xf32>
      %1057 = arith.mulf %1044, %1056 : vector<8x256xf32>
      %1058 = arith.addf %1051, %1057 : vector<8x256xf32>
      %cst_272 = arith.constant 1.000000e+00 : f32
      %1059 = vector.broadcast %cst_272 : f32 to vector<8x256xf32>
      %1060 = arith.addf %1040, %1059 : vector<8x256xf32>
      %1061 = arith.mulf %1040, %1060 : vector<8x256xf32>
      %cst_273 = arith.constant 2.000000e+00 : f32
      %1062 = vector.broadcast %cst_273 : f32 to vector<8x256xf32>
      %1063 = arith.addf %1040, %1062 : vector<8x256xf32>
      %1064 = arith.mulf %1061, %1063 : vector<8x256xf32>
      %cst_274 = arith.constant 3.000000e+00 : f32
      %1065 = vector.broadcast %cst_274 : f32 to vector<8x256xf32>
      %1066 = arith.addf %1040, %1065 : vector<8x256xf32>
      %1067 = arith.mulf %1064, %1066 : vector<8x256xf32>
      %1068 = math.log %1067 : vector<8x256xf32>
      %cst_275 = arith.constant 4.000000e+00 : f32
      %1069 = vector.broadcast %cst_275 : f32 to vector<8x256xf32>
      %1070 = arith.addf %1040, %1069 : vector<8x256xf32>
      %cst_276 = arith.constant 5.000000e+00 : f32
      %1071 = vector.broadcast %cst_276 : f32 to vector<8x256xf32>
      %1072 = arith.addf %1040, %1071 : vector<8x256xf32>
      %1073 = arith.mulf %1070, %1072 : vector<8x256xf32>
      %cst_277 = arith.constant 6.000000e+00 : f32
      %1074 = vector.broadcast %cst_277 : f32 to vector<8x256xf32>
      %1075 = arith.addf %1040, %1074 : vector<8x256xf32>
      %1076 = arith.mulf %1073, %1075 : vector<8x256xf32>
      %cst_278 = arith.constant 7.000000e+00 : f32
      %1077 = vector.broadcast %cst_278 : f32 to vector<8x256xf32>
      %1078 = arith.addf %1040, %1077 : vector<8x256xf32>
      %1079 = arith.mulf %1076, %1078 : vector<8x256xf32>
      %1080 = math.log %1079 : vector<8x256xf32>
      %1081 = arith.addf %1068, %1080 : vector<8x256xf32>
      %1082 = arith.subf %1058, %1081 : vector<8x256xf32>
      %1083 = arith.subf %1038, %1082 : vector<8x256xf32>
      %cst_279 = arith.constant dense<true> : vector<8x256xi1>
      %1084 = arith.xori %1030, %cst_279 : vector<8x256xi1>
      %1085 = arith.cmpf ole, %1036, %1083 : vector<8x256xf32>
      %1086 = arith.andi %1084, %1085 : vector<8x256xi1>
      %1087 = arith.ori %1023, %1086 : vector<8x256xi1>
      %cst_280 = arith.constant dense<true> : vector<8x256xi1>
      %1088 = arith.xori %997, %cst_280 : vector<8x256xi1>
      %1089 = arith.andi %1087, %1088 : vector<8x256xi1>
      %1090 = arith.select %1089, %1019, %996 : vector<8x256xi1>, vector<8x256xf32>
      %1091 = arith.ori %997, %1087 : vector<8x256xi1>
      %c14 = arith.constant 14 : index
      %c0_281 = arith.constant 0 : index
      %c0_282 = arith.constant 0 : index
      %1092 = vector.load %arg3[%c14, %c0_281, %c0_282] : memref<24x8x256xf32, #tpu.memory_space<vmem>>, vector<1x8x256xf32>
      %1093 = vector.shape_cast %1092 : vector<1x8x256xf32> to vector<8x256xf32>
      %cst_283 = arith.constant 5.000000e-01 : f32
      %1094 = vector.broadcast %cst_283 : f32 to vector<8x256xf32>
      %1095 = arith.subf %1093, %1094 : vector<8x256xf32>
      %c15 = arith.constant 15 : index
      %c0_284 = arith.constant 0 : index
      %c0_285 = arith.constant 0 : index
      %1096 = vector.load %arg3[%c15, %c0_284, %c0_285] : memref<24x8x256xf32, #tpu.memory_space<vmem>>, vector<1x8x256xf32>
      %1097 = vector.shape_cast %1096 : vector<1x8x256xf32> to vector<8x256xf32>
      %1098 = math.absf %1095 : vector<8x256xf32>
      %cst_286 = arith.constant 5.000000e-01 : f32
      %1099 = vector.broadcast %cst_286 : f32 to vector<8x256xf32>
      %1100 = arith.subf %1099, %1098 : vector<8x256xf32>
      %cst_287 = arith.constant 9.99999997E-7 : f32
      %1101 = vector.broadcast %cst_287 : f32 to vector<8x256xf32>
      %1102 = arith.maximumf %1100, %1101 : vector<8x256xf32>
      %cst_288 = arith.constant 1.000000e+00 : f32
      %1103 = vector.broadcast %cst_288 : f32 to vector<8x256xf32>
      %1104 = arith.divf %1103, %1102 : vector<8x256xf32>
      %cst_289 = arith.constant 2.000000e+00 : f32
      %1105 = vector.broadcast %cst_289 : f32 to vector<8x256xf32>
      %1106 = arith.mulf %1105, %419 : vector<8x256xf32>
      %1107 = arith.mulf %1106, %1104 : vector<8x256xf32>
      %1108 = arith.addf %1107, %415 : vector<8x256xf32>
      %1109 = arith.mulf %1108, %1095 : vector<8x256xf32>
      %1110 = arith.addf %1109, %409 : vector<8x256xf32>
      %cst_290 = arith.constant 4.300000e-01 : f32
      %1111 = vector.broadcast %cst_290 : f32 to vector<8x256xf32>
      %1112 = arith.addf %1110, %1111 : vector<8x256xf32>
      %1113 = math.floor %1112 : vector<8x256xf32>
      %cst_291 = arith.constant 7.000000e-02 : f32
      %1114 = vector.broadcast %cst_291 : f32 to vector<8x256xf32>
      %1115 = arith.cmpf oge, %1102, %1114 : vector<8x256xf32>
      %1116 = arith.cmpf ole, %1097, %431 : vector<8x256xf32>
      %1117 = arith.andi %1115, %1116 : vector<8x256xi1>
      %cst_292 = arith.constant 0.000000e+00 : f32
      %1118 = vector.broadcast %cst_292 : f32 to vector<8x256xf32>
      %1119 = arith.cmpf olt, %1113, %1118 : vector<8x256xf32>
      %cst_293 = arith.constant 1.300000e-02 : f32
      %1120 = vector.broadcast %cst_293 : f32 to vector<8x256xf32>
      %1121 = arith.cmpf olt, %1102, %1120 : vector<8x256xf32>
      %1122 = arith.cmpf ogt, %1097, %1102 : vector<8x256xf32>
      %1123 = arith.andi %1121, %1122 : vector<8x256xi1>
      %1124 = arith.ori %1119, %1123 : vector<8x256xi1>
      %1125 = arith.mulf %1097, %425 : vector<8x256xf32>
      %1126 = arith.mulf %419, %1104 : vector<8x256xf32>
      %1127 = arith.mulf %1126, %1104 : vector<8x256xf32>
      %1128 = arith.addf %1127, %415 : vector<8x256xf32>
      %1129 = arith.divf %1125, %1128 : vector<8x256xf32>
      %1130 = math.log %1129 : vector<8x256xf32>
      %1131 = arith.mulf %1113, %410 : vector<8x256xf32>
      %1132 = arith.subf %1131, %409 : vector<8x256xf32>
      %cst_294 = arith.constant 1.000000e+00 : f32
      %1133 = vector.broadcast %cst_294 : f32 to vector<8x256xf32>
      %1134 = arith.addf %1113, %1133 : vector<8x256xf32>
      %cst_295 = arith.constant 8.000000e+00 : f32
      %1135 = vector.broadcast %cst_295 : f32 to vector<8x256xf32>
      %1136 = arith.addf %1134, %1135 : vector<8x256xf32>
      %cst_296 = arith.constant 1.000000e+00 : f32
      %1137 = vector.broadcast %cst_296 : f32 to vector<8x256xf32>
      %1138 = arith.divf %1137, %1136 : vector<8x256xf32>
      %cst_297 = arith.constant 5.000000e-01 : f32
      %1139 = vector.broadcast %cst_297 : f32 to vector<8x256xf32>
      %1140 = arith.subf %1136, %1139 : vector<8x256xf32>
      %1141 = math.log %1136 : vector<8x256xf32>
      %1142 = arith.mulf %1140, %1141 : vector<8x256xf32>
      %1143 = arith.subf %1142, %1136 : vector<8x256xf32>
      %cst_298 = arith.constant 0.918938517 : f32
      %1144 = vector.broadcast %cst_298 : f32 to vector<8x256xf32>
      %1145 = arith.addf %1143, %1144 : vector<8x256xf32>
      %1146 = arith.mulf %1138, %1138 : vector<8x256xf32>
      %cst_299 = arith.constant 0.00277777785 : f32
      %1147 = vector.broadcast %cst_299 : f32 to vector<8x256xf32>
      %1148 = arith.mulf %1146, %1147 : vector<8x256xf32>
      %cst_300 = arith.constant 0.0833333358 : f32
      %1149 = vector.broadcast %cst_300 : f32 to vector<8x256xf32>
      %1150 = arith.subf %1149, %1148 : vector<8x256xf32>
      %1151 = arith.mulf %1138, %1150 : vector<8x256xf32>
      %1152 = arith.addf %1145, %1151 : vector<8x256xf32>
      %cst_301 = arith.constant 1.000000e+00 : f32
      %1153 = vector.broadcast %cst_301 : f32 to vector<8x256xf32>
      %1154 = arith.addf %1134, %1153 : vector<8x256xf32>
      %1155 = arith.mulf %1134, %1154 : vector<8x256xf32>
      %cst_302 = arith.constant 2.000000e+00 : f32
      %1156 = vector.broadcast %cst_302 : f32 to vector<8x256xf32>
      %1157 = arith.addf %1134, %1156 : vector<8x256xf32>
      %1158 = arith.mulf %1155, %1157 : vector<8x256xf32>
      %cst_303 = arith.constant 3.000000e+00 : f32
      %1159 = vector.broadcast %cst_303 : f32 to vector<8x256xf32>
      %1160 = arith.addf %1134, %1159 : vector<8x256xf32>
      %1161 = arith.mulf %1158, %1160 : vector<8x256xf32>
      %1162 = math.log %1161 : vector<8x256xf32>
      %cst_304 = arith.constant 4.000000e+00 : f32
      %1163 = vector.broadcast %cst_304 : f32 to vector<8x256xf32>
      %1164 = arith.addf %1134, %1163 : vector<8x256xf32>
      %cst_305 = arith.constant 5.000000e+00 : f32
      %1165 = vector.broadcast %cst_305 : f32 to vector<8x256xf32>
      %1166 = arith.addf %1134, %1165 : vector<8x256xf32>
      %1167 = arith.mulf %1164, %1166 : vector<8x256xf32>
      %cst_306 = arith.constant 6.000000e+00 : f32
      %1168 = vector.broadcast %cst_306 : f32 to vector<8x256xf32>
      %1169 = arith.addf %1134, %1168 : vector<8x256xf32>
      %1170 = arith.mulf %1167, %1169 : vector<8x256xf32>
      %cst_307 = arith.constant 7.000000e+00 : f32
      %1171 = vector.broadcast %cst_307 : f32 to vector<8x256xf32>
      %1172 = arith.addf %1134, %1171 : vector<8x256xf32>
      %1173 = arith.mulf %1170, %1172 : vector<8x256xf32>
      %1174 = math.log %1173 : vector<8x256xf32>
      %1175 = arith.addf %1162, %1174 : vector<8x256xf32>
      %1176 = arith.subf %1152, %1175 : vector<8x256xf32>
      %1177 = arith.subf %1132, %1176 : vector<8x256xf32>
      %cst_308 = arith.constant dense<true> : vector<8x256xi1>
      %1178 = arith.xori %1124, %cst_308 : vector<8x256xi1>
      %1179 = arith.cmpf ole, %1130, %1177 : vector<8x256xf32>
      %1180 = arith.andi %1178, %1179 : vector<8x256xi1>
      %1181 = arith.ori %1117, %1180 : vector<8x256xi1>
      %cst_309 = arith.constant dense<true> : vector<8x256xi1>
      %1182 = arith.xori %1091, %cst_309 : vector<8x256xi1>
      %1183 = arith.andi %1181, %1182 : vector<8x256xi1>
      %1184 = arith.select %1183, %1113, %1090 : vector<8x256xi1>, vector<8x256xf32>
      %1185 = arith.ori %1091, %1181 : vector<8x256xi1>
      %c16 = arith.constant 16 : index
      %c0_310 = arith.constant 0 : index
      %c0_311 = arith.constant 0 : index
      %1186 = vector.load %arg3[%c16, %c0_310, %c0_311] : memref<24x8x256xf32, #tpu.memory_space<vmem>>, vector<1x8x256xf32>
      %1187 = vector.shape_cast %1186 : vector<1x8x256xf32> to vector<8x256xf32>
      %cst_312 = arith.constant 5.000000e-01 : f32
      %1188 = vector.broadcast %cst_312 : f32 to vector<8x256xf32>
      %1189 = arith.subf %1187, %1188 : vector<8x256xf32>
      %c17 = arith.constant 17 : index
      %c0_313 = arith.constant 0 : index
      %c0_314 = arith.constant 0 : index
      %1190 = vector.load %arg3[%c17, %c0_313, %c0_314] : memref<24x8x256xf32, #tpu.memory_space<vmem>>, vector<1x8x256xf32>
      %1191 = vector.shape_cast %1190 : vector<1x8x256xf32> to vector<8x256xf32>
      %1192 = math.absf %1189 : vector<8x256xf32>
      %cst_315 = arith.constant 5.000000e-01 : f32
      %1193 = vector.broadcast %cst_315 : f32 to vector<8x256xf32>
      %1194 = arith.subf %1193, %1192 : vector<8x256xf32>
      %cst_316 = arith.constant 9.99999997E-7 : f32
      %1195 = vector.broadcast %cst_316 : f32 to vector<8x256xf32>
      %1196 = arith.maximumf %1194, %1195 : vector<8x256xf32>
      %cst_317 = arith.constant 1.000000e+00 : f32
      %1197 = vector.broadcast %cst_317 : f32 to vector<8x256xf32>
      %1198 = arith.divf %1197, %1196 : vector<8x256xf32>
      %cst_318 = arith.constant 2.000000e+00 : f32
      %1199 = vector.broadcast %cst_318 : f32 to vector<8x256xf32>
      %1200 = arith.mulf %1199, %419 : vector<8x256xf32>
      %1201 = arith.mulf %1200, %1198 : vector<8x256xf32>
      %1202 = arith.addf %1201, %415 : vector<8x256xf32>
      %1203 = arith.mulf %1202, %1189 : vector<8x256xf32>
      %1204 = arith.addf %1203, %409 : vector<8x256xf32>
      %cst_319 = arith.constant 4.300000e-01 : f32
      %1205 = vector.broadcast %cst_319 : f32 to vector<8x256xf32>
      %1206 = arith.addf %1204, %1205 : vector<8x256xf32>
      %1207 = math.floor %1206 : vector<8x256xf32>
      %cst_320 = arith.constant 7.000000e-02 : f32
      %1208 = vector.broadcast %cst_320 : f32 to vector<8x256xf32>
      %1209 = arith.cmpf oge, %1196, %1208 : vector<8x256xf32>
      %1210 = arith.cmpf ole, %1191, %431 : vector<8x256xf32>
      %1211 = arith.andi %1209, %1210 : vector<8x256xi1>
      %cst_321 = arith.constant 0.000000e+00 : f32
      %1212 = vector.broadcast %cst_321 : f32 to vector<8x256xf32>
      %1213 = arith.cmpf olt, %1207, %1212 : vector<8x256xf32>
      %cst_322 = arith.constant 1.300000e-02 : f32
      %1214 = vector.broadcast %cst_322 : f32 to vector<8x256xf32>
      %1215 = arith.cmpf olt, %1196, %1214 : vector<8x256xf32>
      %1216 = arith.cmpf ogt, %1191, %1196 : vector<8x256xf32>
      %1217 = arith.andi %1215, %1216 : vector<8x256xi1>
      %1218 = arith.ori %1213, %1217 : vector<8x256xi1>
      %1219 = arith.mulf %1191, %425 : vector<8x256xf32>
      %1220 = arith.mulf %419, %1198 : vector<8x256xf32>
      %1221 = arith.mulf %1220, %1198 : vector<8x256xf32>
      %1222 = arith.addf %1221, %415 : vector<8x256xf32>
      %1223 = arith.divf %1219, %1222 : vector<8x256xf32>
      %1224 = math.log %1223 : vector<8x256xf32>
      %1225 = arith.mulf %1207, %410 : vector<8x256xf32>
      %1226 = arith.subf %1225, %409 : vector<8x256xf32>
      %cst_323 = arith.constant 1.000000e+00 : f32
      %1227 = vector.broadcast %cst_323 : f32 to vector<8x256xf32>
      %1228 = arith.addf %1207, %1227 : vector<8x256xf32>
      %cst_324 = arith.constant 8.000000e+00 : f32
      %1229 = vector.broadcast %cst_324 : f32 to vector<8x256xf32>
      %1230 = arith.addf %1228, %1229 : vector<8x256xf32>
      %cst_325 = arith.constant 1.000000e+00 : f32
      %1231 = vector.broadcast %cst_325 : f32 to vector<8x256xf32>
      %1232 = arith.divf %1231, %1230 : vector<8x256xf32>
      %cst_326 = arith.constant 5.000000e-01 : f32
      %1233 = vector.broadcast %cst_326 : f32 to vector<8x256xf32>
      %1234 = arith.subf %1230, %1233 : vector<8x256xf32>
      %1235 = math.log %1230 : vector<8x256xf32>
      %1236 = arith.mulf %1234, %1235 : vector<8x256xf32>
      %1237 = arith.subf %1236, %1230 : vector<8x256xf32>
      %cst_327 = arith.constant 0.918938517 : f32
      %1238 = vector.broadcast %cst_327 : f32 to vector<8x256xf32>
      %1239 = arith.addf %1237, %1238 : vector<8x256xf32>
      %1240 = arith.mulf %1232, %1232 : vector<8x256xf32>
      %cst_328 = arith.constant 0.00277777785 : f32
      %1241 = vector.broadcast %cst_328 : f32 to vector<8x256xf32>
      %1242 = arith.mulf %1240, %1241 : vector<8x256xf32>
      %cst_329 = arith.constant 0.0833333358 : f32
      %1243 = vector.broadcast %cst_329 : f32 to vector<8x256xf32>
      %1244 = arith.subf %1243, %1242 : vector<8x256xf32>
      %1245 = arith.mulf %1232, %1244 : vector<8x256xf32>
      %1246 = arith.addf %1239, %1245 : vector<8x256xf32>
      %cst_330 = arith.constant 1.000000e+00 : f32
      %1247 = vector.broadcast %cst_330 : f32 to vector<8x256xf32>
      %1248 = arith.addf %1228, %1247 : vector<8x256xf32>
      %1249 = arith.mulf %1228, %1248 : vector<8x256xf32>
      %cst_331 = arith.constant 2.000000e+00 : f32
      %1250 = vector.broadcast %cst_331 : f32 to vector<8x256xf32>
      %1251 = arith.addf %1228, %1250 : vector<8x256xf32>
      %1252 = arith.mulf %1249, %1251 : vector<8x256xf32>
      %cst_332 = arith.constant 3.000000e+00 : f32
      %1253 = vector.broadcast %cst_332 : f32 to vector<8x256xf32>
      %1254 = arith.addf %1228, %1253 : vector<8x256xf32>
      %1255 = arith.mulf %1252, %1254 : vector<8x256xf32>
      %1256 = math.log %1255 : vector<8x256xf32>
      %cst_333 = arith.constant 4.000000e+00 : f32
      %1257 = vector.broadcast %cst_333 : f32 to vector<8x256xf32>
      %1258 = arith.addf %1228, %1257 : vector<8x256xf32>
      %cst_334 = arith.constant 5.000000e+00 : f32
      %1259 = vector.broadcast %cst_334 : f32 to vector<8x256xf32>
      %1260 = arith.addf %1228, %1259 : vector<8x256xf32>
      %1261 = arith.mulf %1258, %1260 : vector<8x256xf32>
      %cst_335 = arith.constant 6.000000e+00 : f32
      %1262 = vector.broadcast %cst_335 : f32 to vector<8x256xf32>
      %1263 = arith.addf %1228, %1262 : vector<8x256xf32>
      %1264 = arith.mulf %1261, %1263 : vector<8x256xf32>
      %cst_336 = arith.constant 7.000000e+00 : f32
      %1265 = vector.broadcast %cst_336 : f32 to vector<8x256xf32>
      %1266 = arith.addf %1228, %1265 : vector<8x256xf32>
      %1267 = arith.mulf %1264, %1266 : vector<8x256xf32>
      %1268 = math.log %1267 : vector<8x256xf32>
      %1269 = arith.addf %1256, %1268 : vector<8x256xf32>
      %1270 = arith.subf %1246, %1269 : vector<8x256xf32>
      %1271 = arith.subf %1226, %1270 : vector<8x256xf32>
      %cst_337 = arith.constant dense<true> : vector<8x256xi1>
      %1272 = arith.xori %1218, %cst_337 : vector<8x256xi1>
      %1273 = arith.cmpf ole, %1224, %1271 : vector<8x256xf32>
      %1274 = arith.andi %1272, %1273 : vector<8x256xi1>
      %1275 = arith.ori %1211, %1274 : vector<8x256xi1>
      %cst_338 = arith.constant dense<true> : vector<8x256xi1>
      %1276 = arith.xori %1185, %cst_338 : vector<8x256xi1>
      %1277 = arith.andi %1275, %1276 : vector<8x256xi1>
      %1278 = arith.select %1277, %1207, %1184 : vector<8x256xi1>, vector<8x256xf32>
      %1279 = arith.ori %1185, %1275 : vector<8x256xi1>
      %c18 = arith.constant 18 : index
      %c0_339 = arith.constant 0 : index
      %c0_340 = arith.constant 0 : index
      %1280 = vector.load %arg3[%c18, %c0_339, %c0_340] : memref<24x8x256xf32, #tpu.memory_space<vmem>>, vector<1x8x256xf32>
      %1281 = vector.shape_cast %1280 : vector<1x8x256xf32> to vector<8x256xf32>
      %cst_341 = arith.constant 5.000000e-01 : f32
      %1282 = vector.broadcast %cst_341 : f32 to vector<8x256xf32>
      %1283 = arith.subf %1281, %1282 : vector<8x256xf32>
      %c19 = arith.constant 19 : index
      %c0_342 = arith.constant 0 : index
      %c0_343 = arith.constant 0 : index
      %1284 = vector.load %arg3[%c19, %c0_342, %c0_343] : memref<24x8x256xf32, #tpu.memory_space<vmem>>, vector<1x8x256xf32>
      %1285 = vector.shape_cast %1284 : vector<1x8x256xf32> to vector<8x256xf32>
      %1286 = math.absf %1283 : vector<8x256xf32>
      %cst_344 = arith.constant 5.000000e-01 : f32
      %1287 = vector.broadcast %cst_344 : f32 to vector<8x256xf32>
      %1288 = arith.subf %1287, %1286 : vector<8x256xf32>
      %cst_345 = arith.constant 9.99999997E-7 : f32
      %1289 = vector.broadcast %cst_345 : f32 to vector<8x256xf32>
      %1290 = arith.maximumf %1288, %1289 : vector<8x256xf32>
      %cst_346 = arith.constant 1.000000e+00 : f32
      %1291 = vector.broadcast %cst_346 : f32 to vector<8x256xf32>
      %1292 = arith.divf %1291, %1290 : vector<8x256xf32>
      %cst_347 = arith.constant 2.000000e+00 : f32
      %1293 = vector.broadcast %cst_347 : f32 to vector<8x256xf32>
      %1294 = arith.mulf %1293, %419 : vector<8x256xf32>
      %1295 = arith.mulf %1294, %1292 : vector<8x256xf32>
      %1296 = arith.addf %1295, %415 : vector<8x256xf32>
      %1297 = arith.mulf %1296, %1283 : vector<8x256xf32>
      %1298 = arith.addf %1297, %409 : vector<8x256xf32>
      %cst_348 = arith.constant 4.300000e-01 : f32
      %1299 = vector.broadcast %cst_348 : f32 to vector<8x256xf32>
      %1300 = arith.addf %1298, %1299 : vector<8x256xf32>
      %1301 = math.floor %1300 : vector<8x256xf32>
      %cst_349 = arith.constant 7.000000e-02 : f32
      %1302 = vector.broadcast %cst_349 : f32 to vector<8x256xf32>
      %1303 = arith.cmpf oge, %1290, %1302 : vector<8x256xf32>
      %1304 = arith.cmpf ole, %1285, %431 : vector<8x256xf32>
      %1305 = arith.andi %1303, %1304 : vector<8x256xi1>
      %cst_350 = arith.constant 0.000000e+00 : f32
      %1306 = vector.broadcast %cst_350 : f32 to vector<8x256xf32>
      %1307 = arith.cmpf olt, %1301, %1306 : vector<8x256xf32>
      %cst_351 = arith.constant 1.300000e-02 : f32
      %1308 = vector.broadcast %cst_351 : f32 to vector<8x256xf32>
      %1309 = arith.cmpf olt, %1290, %1308 : vector<8x256xf32>
      %1310 = arith.cmpf ogt, %1285, %1290 : vector<8x256xf32>
      %1311 = arith.andi %1309, %1310 : vector<8x256xi1>
      %1312 = arith.ori %1307, %1311 : vector<8x256xi1>
      %1313 = arith.mulf %1285, %425 : vector<8x256xf32>
      %1314 = arith.mulf %419, %1292 : vector<8x256xf32>
      %1315 = arith.mulf %1314, %1292 : vector<8x256xf32>
      %1316 = arith.addf %1315, %415 : vector<8x256xf32>
      %1317 = arith.divf %1313, %1316 : vector<8x256xf32>
      %1318 = math.log %1317 : vector<8x256xf32>
      %1319 = arith.mulf %1301, %410 : vector<8x256xf32>
      %1320 = arith.subf %1319, %409 : vector<8x256xf32>
      %cst_352 = arith.constant 1.000000e+00 : f32
      %1321 = vector.broadcast %cst_352 : f32 to vector<8x256xf32>
      %1322 = arith.addf %1301, %1321 : vector<8x256xf32>
      %cst_353 = arith.constant 8.000000e+00 : f32
      %1323 = vector.broadcast %cst_353 : f32 to vector<8x256xf32>
      %1324 = arith.addf %1322, %1323 : vector<8x256xf32>
      %cst_354 = arith.constant 1.000000e+00 : f32
      %1325 = vector.broadcast %cst_354 : f32 to vector<8x256xf32>
      %1326 = arith.divf %1325, %1324 : vector<8x256xf32>
      %cst_355 = arith.constant 5.000000e-01 : f32
      %1327 = vector.broadcast %cst_355 : f32 to vector<8x256xf32>
      %1328 = arith.subf %1324, %1327 : vector<8x256xf32>
      %1329 = math.log %1324 : vector<8x256xf32>
      %1330 = arith.mulf %1328, %1329 : vector<8x256xf32>
      %1331 = arith.subf %1330, %1324 : vector<8x256xf32>
      %cst_356 = arith.constant 0.918938517 : f32
      %1332 = vector.broadcast %cst_356 : f32 to vector<8x256xf32>
      %1333 = arith.addf %1331, %1332 : vector<8x256xf32>
      %1334 = arith.mulf %1326, %1326 : vector<8x256xf32>
      %cst_357 = arith.constant 0.00277777785 : f32
      %1335 = vector.broadcast %cst_357 : f32 to vector<8x256xf32>
      %1336 = arith.mulf %1334, %1335 : vector<8x256xf32>
      %cst_358 = arith.constant 0.0833333358 : f32
      %1337 = vector.broadcast %cst_358 : f32 to vector<8x256xf32>
      %1338 = arith.subf %1337, %1336 : vector<8x256xf32>
      %1339 = arith.mulf %1326, %1338 : vector<8x256xf32>
      %1340 = arith.addf %1333, %1339 : vector<8x256xf32>
      %cst_359 = arith.constant 1.000000e+00 : f32
      %1341 = vector.broadcast %cst_359 : f32 to vector<8x256xf32>
      %1342 = arith.addf %1322, %1341 : vector<8x256xf32>
      %1343 = arith.mulf %1322, %1342 : vector<8x256xf32>
      %cst_360 = arith.constant 2.000000e+00 : f32
      %1344 = vector.broadcast %cst_360 : f32 to vector<8x256xf32>
      %1345 = arith.addf %1322, %1344 : vector<8x256xf32>
      %1346 = arith.mulf %1343, %1345 : vector<8x256xf32>
      %cst_361 = arith.constant 3.000000e+00 : f32
      %1347 = vector.broadcast %cst_361 : f32 to vector<8x256xf32>
      %1348 = arith.addf %1322, %1347 : vector<8x256xf32>
      %1349 = arith.mulf %1346, %1348 : vector<8x256xf32>
      %1350 = math.log %1349 : vector<8x256xf32>
      %cst_362 = arith.constant 4.000000e+00 : f32
      %1351 = vector.broadcast %cst_362 : f32 to vector<8x256xf32>
      %1352 = arith.addf %1322, %1351 : vector<8x256xf32>
      %cst_363 = arith.constant 5.000000e+00 : f32
      %1353 = vector.broadcast %cst_363 : f32 to vector<8x256xf32>
      %1354 = arith.addf %1322, %1353 : vector<8x256xf32>
      %1355 = arith.mulf %1352, %1354 : vector<8x256xf32>
      %cst_364 = arith.constant 6.000000e+00 : f32
      %1356 = vector.broadcast %cst_364 : f32 to vector<8x256xf32>
      %1357 = arith.addf %1322, %1356 : vector<8x256xf32>
      %1358 = arith.mulf %1355, %1357 : vector<8x256xf32>
      %cst_365 = arith.constant 7.000000e+00 : f32
      %1359 = vector.broadcast %cst_365 : f32 to vector<8x256xf32>
      %1360 = arith.addf %1322, %1359 : vector<8x256xf32>
      %1361 = arith.mulf %1358, %1360 : vector<8x256xf32>
      %1362 = math.log %1361 : vector<8x256xf32>
      %1363 = arith.addf %1350, %1362 : vector<8x256xf32>
      %1364 = arith.subf %1340, %1363 : vector<8x256xf32>
      %1365 = arith.subf %1320, %1364 : vector<8x256xf32>
      %cst_366 = arith.constant dense<true> : vector<8x256xi1>
      %1366 = arith.xori %1312, %cst_366 : vector<8x256xi1>
      %1367 = arith.cmpf ole, %1318, %1365 : vector<8x256xf32>
      %1368 = arith.andi %1366, %1367 : vector<8x256xi1>
      %1369 = arith.ori %1305, %1368 : vector<8x256xi1>
      %cst_367 = arith.constant dense<true> : vector<8x256xi1>
      %1370 = arith.xori %1279, %cst_367 : vector<8x256xi1>
      %1371 = arith.andi %1369, %1370 : vector<8x256xi1>
      %1372 = arith.select %1371, %1301, %1278 : vector<8x256xi1>, vector<8x256xf32>
      %1373 = arith.ori %1279, %1369 : vector<8x256xi1>
      %c20 = arith.constant 20 : index
      %c0_368 = arith.constant 0 : index
      %c0_369 = arith.constant 0 : index
      %1374 = vector.load %arg3[%c20, %c0_368, %c0_369] : memref<24x8x256xf32, #tpu.memory_space<vmem>>, vector<1x8x256xf32>
      %1375 = vector.shape_cast %1374 : vector<1x8x256xf32> to vector<8x256xf32>
      %cst_370 = arith.constant 5.000000e-01 : f32
      %1376 = vector.broadcast %cst_370 : f32 to vector<8x256xf32>
      %1377 = arith.subf %1375, %1376 : vector<8x256xf32>
      %c21 = arith.constant 21 : index
      %c0_371 = arith.constant 0 : index
      %c0_372 = arith.constant 0 : index
      %1378 = vector.load %arg3[%c21, %c0_371, %c0_372] : memref<24x8x256xf32, #tpu.memory_space<vmem>>, vector<1x8x256xf32>
      %1379 = vector.shape_cast %1378 : vector<1x8x256xf32> to vector<8x256xf32>
      %1380 = math.absf %1377 : vector<8x256xf32>
      %cst_373 = arith.constant 5.000000e-01 : f32
      %1381 = vector.broadcast %cst_373 : f32 to vector<8x256xf32>
      %1382 = arith.subf %1381, %1380 : vector<8x256xf32>
      %cst_374 = arith.constant 9.99999997E-7 : f32
      %1383 = vector.broadcast %cst_374 : f32 to vector<8x256xf32>
      %1384 = arith.maximumf %1382, %1383 : vector<8x256xf32>
      %cst_375 = arith.constant 1.000000e+00 : f32
      %1385 = vector.broadcast %cst_375 : f32 to vector<8x256xf32>
      %1386 = arith.divf %1385, %1384 : vector<8x256xf32>
      %cst_376 = arith.constant 2.000000e+00 : f32
      %1387 = vector.broadcast %cst_376 : f32 to vector<8x256xf32>
      %1388 = arith.mulf %1387, %419 : vector<8x256xf32>
      %1389 = arith.mulf %1388, %1386 : vector<8x256xf32>
      %1390 = arith.addf %1389, %415 : vector<8x256xf32>
      %1391 = arith.mulf %1390, %1377 : vector<8x256xf32>
      %1392 = arith.addf %1391, %409 : vector<8x256xf32>
      %cst_377 = arith.constant 4.300000e-01 : f32
      %1393 = vector.broadcast %cst_377 : f32 to vector<8x256xf32>
      %1394 = arith.addf %1392, %1393 : vector<8x256xf32>
      %1395 = math.floor %1394 : vector<8x256xf32>
      %cst_378 = arith.constant 7.000000e-02 : f32
      %1396 = vector.broadcast %cst_378 : f32 to vector<8x256xf32>
      %1397 = arith.cmpf oge, %1384, %1396 : vector<8x256xf32>
      %1398 = arith.cmpf ole, %1379, %431 : vector<8x256xf32>
      %1399 = arith.andi %1397, %1398 : vector<8x256xi1>
      %cst_379 = arith.constant 0.000000e+00 : f32
      %1400 = vector.broadcast %cst_379 : f32 to vector<8x256xf32>
      %1401 = arith.cmpf olt, %1395, %1400 : vector<8x256xf32>
      %cst_380 = arith.constant 1.300000e-02 : f32
      %1402 = vector.broadcast %cst_380 : f32 to vector<8x256xf32>
      %1403 = arith.cmpf olt, %1384, %1402 : vector<8x256xf32>
      %1404 = arith.cmpf ogt, %1379, %1384 : vector<8x256xf32>
      %1405 = arith.andi %1403, %1404 : vector<8x256xi1>
      %1406 = arith.ori %1401, %1405 : vector<8x256xi1>
      %1407 = arith.mulf %1379, %425 : vector<8x256xf32>
      %1408 = arith.mulf %419, %1386 : vector<8x256xf32>
      %1409 = arith.mulf %1408, %1386 : vector<8x256xf32>
      %1410 = arith.addf %1409, %415 : vector<8x256xf32>
      %1411 = arith.divf %1407, %1410 : vector<8x256xf32>
      %1412 = math.log %1411 : vector<8x256xf32>
      %1413 = arith.mulf %1395, %410 : vector<8x256xf32>
      %1414 = arith.subf %1413, %409 : vector<8x256xf32>
      %cst_381 = arith.constant 1.000000e+00 : f32
      %1415 = vector.broadcast %cst_381 : f32 to vector<8x256xf32>
      %1416 = arith.addf %1395, %1415 : vector<8x256xf32>
      %cst_382 = arith.constant 8.000000e+00 : f32
      %1417 = vector.broadcast %cst_382 : f32 to vector<8x256xf32>
      %1418 = arith.addf %1416, %1417 : vector<8x256xf32>
      %cst_383 = arith.constant 1.000000e+00 : f32
      %1419 = vector.broadcast %cst_383 : f32 to vector<8x256xf32>
      %1420 = arith.divf %1419, %1418 : vector<8x256xf32>
      %cst_384 = arith.constant 5.000000e-01 : f32
      %1421 = vector.broadcast %cst_384 : f32 to vector<8x256xf32>
      %1422 = arith.subf %1418, %1421 : vector<8x256xf32>
      %1423 = math.log %1418 : vector<8x256xf32>
      %1424 = arith.mulf %1422, %1423 : vector<8x256xf32>
      %1425 = arith.subf %1424, %1418 : vector<8x256xf32>
      %cst_385 = arith.constant 0.918938517 : f32
      %1426 = vector.broadcast %cst_385 : f32 to vector<8x256xf32>
      %1427 = arith.addf %1425, %1426 : vector<8x256xf32>
      %1428 = arith.mulf %1420, %1420 : vector<8x256xf32>
      %cst_386 = arith.constant 0.00277777785 : f32
      %1429 = vector.broadcast %cst_386 : f32 to vector<8x256xf32>
      %1430 = arith.mulf %1428, %1429 : vector<8x256xf32>
      %cst_387 = arith.constant 0.0833333358 : f32
      %1431 = vector.broadcast %cst_387 : f32 to vector<8x256xf32>
      %1432 = arith.subf %1431, %1430 : vector<8x256xf32>
      %1433 = arith.mulf %1420, %1432 : vector<8x256xf32>
      %1434 = arith.addf %1427, %1433 : vector<8x256xf32>
      %cst_388 = arith.constant 1.000000e+00 : f32
      %1435 = vector.broadcast %cst_388 : f32 to vector<8x256xf32>
      %1436 = arith.addf %1416, %1435 : vector<8x256xf32>
      %1437 = arith.mulf %1416, %1436 : vector<8x256xf32>
      %cst_389 = arith.constant 2.000000e+00 : f32
      %1438 = vector.broadcast %cst_389 : f32 to vector<8x256xf32>
      %1439 = arith.addf %1416, %1438 : vector<8x256xf32>
      %1440 = arith.mulf %1437, %1439 : vector<8x256xf32>
      %cst_390 = arith.constant 3.000000e+00 : f32
      %1441 = vector.broadcast %cst_390 : f32 to vector<8x256xf32>
      %1442 = arith.addf %1416, %1441 : vector<8x256xf32>
      %1443 = arith.mulf %1440, %1442 : vector<8x256xf32>
      %1444 = math.log %1443 : vector<8x256xf32>
      %cst_391 = arith.constant 4.000000e+00 : f32
      %1445 = vector.broadcast %cst_391 : f32 to vector<8x256xf32>
      %1446 = arith.addf %1416, %1445 : vector<8x256xf32>
      %cst_392 = arith.constant 5.000000e+00 : f32
      %1447 = vector.broadcast %cst_392 : f32 to vector<8x256xf32>
      %1448 = arith.addf %1416, %1447 : vector<8x256xf32>
      %1449 = arith.mulf %1446, %1448 : vector<8x256xf32>
      %cst_393 = arith.constant 6.000000e+00 : f32
      %1450 = vector.broadcast %cst_393 : f32 to vector<8x256xf32>
      %1451 = arith.addf %1416, %1450 : vector<8x256xf32>
      %1452 = arith.mulf %1449, %1451 : vector<8x256xf32>
      %cst_394 = arith.constant 7.000000e+00 : f32
      %1453 = vector.broadcast %cst_394 : f32 to vector<8x256xf32>
      %1454 = arith.addf %1416, %1453 : vector<8x256xf32>
      %1455 = arith.mulf %1452, %1454 : vector<8x256xf32>
      %1456 = math.log %1455 : vector<8x256xf32>
      %1457 = arith.addf %1444, %1456 : vector<8x256xf32>
      %1458 = arith.subf %1434, %1457 : vector<8x256xf32>
      %1459 = arith.subf %1414, %1458 : vector<8x256xf32>
      %cst_395 = arith.constant dense<true> : vector<8x256xi1>
      %1460 = arith.xori %1406, %cst_395 : vector<8x256xi1>
      %1461 = arith.cmpf ole, %1412, %1459 : vector<8x256xf32>
      %1462 = arith.andi %1460, %1461 : vector<8x256xi1>
      %1463 = arith.ori %1399, %1462 : vector<8x256xi1>
      %cst_396 = arith.constant dense<true> : vector<8x256xi1>
      %1464 = arith.xori %1373, %cst_396 : vector<8x256xi1>
      %1465 = arith.andi %1463, %1464 : vector<8x256xi1>
      %1466 = arith.select %1465, %1395, %1372 : vector<8x256xi1>, vector<8x256xf32>
      %1467 = arith.ori %1373, %1463 : vector<8x256xi1>
      %c22 = arith.constant 22 : index
      %c0_397 = arith.constant 0 : index
      %c0_398 = arith.constant 0 : index
      %1468 = vector.load %arg3[%c22, %c0_397, %c0_398] : memref<24x8x256xf32, #tpu.memory_space<vmem>>, vector<1x8x256xf32>
      %1469 = vector.shape_cast %1468 : vector<1x8x256xf32> to vector<8x256xf32>
      %cst_399 = arith.constant 5.000000e-01 : f32
      %1470 = vector.broadcast %cst_399 : f32 to vector<8x256xf32>
      %1471 = arith.subf %1469, %1470 : vector<8x256xf32>
      %c23 = arith.constant 23 : index
      %c0_400 = arith.constant 0 : index
      %c0_401 = arith.constant 0 : index
      %1472 = vector.load %arg3[%c23, %c0_400, %c0_401] : memref<24x8x256xf32, #tpu.memory_space<vmem>>, vector<1x8x256xf32>
      %1473 = vector.shape_cast %1472 : vector<1x8x256xf32> to vector<8x256xf32>
      %1474 = math.absf %1471 : vector<8x256xf32>
      %cst_402 = arith.constant 5.000000e-01 : f32
      %1475 = vector.broadcast %cst_402 : f32 to vector<8x256xf32>
      %1476 = arith.subf %1475, %1474 : vector<8x256xf32>
      %cst_403 = arith.constant 9.99999997E-7 : f32
      %1477 = vector.broadcast %cst_403 : f32 to vector<8x256xf32>
      %1478 = arith.maximumf %1476, %1477 : vector<8x256xf32>
      %cst_404 = arith.constant 1.000000e+00 : f32
      %1479 = vector.broadcast %cst_404 : f32 to vector<8x256xf32>
      %1480 = arith.divf %1479, %1478 : vector<8x256xf32>
      %cst_405 = arith.constant 2.000000e+00 : f32
      %1481 = vector.broadcast %cst_405 : f32 to vector<8x256xf32>
      %1482 = arith.mulf %1481, %419 : vector<8x256xf32>
      %1483 = arith.mulf %1482, %1480 : vector<8x256xf32>
      %1484 = arith.addf %1483, %415 : vector<8x256xf32>
      %1485 = arith.mulf %1484, %1471 : vector<8x256xf32>
      %1486 = arith.addf %1485, %409 : vector<8x256xf32>
      %cst_406 = arith.constant 4.300000e-01 : f32
      %1487 = vector.broadcast %cst_406 : f32 to vector<8x256xf32>
      %1488 = arith.addf %1486, %1487 : vector<8x256xf32>
      %1489 = math.floor %1488 : vector<8x256xf32>
      %cst_407 = arith.constant 7.000000e-02 : f32
      %1490 = vector.broadcast %cst_407 : f32 to vector<8x256xf32>
      %1491 = arith.cmpf oge, %1478, %1490 : vector<8x256xf32>
      %1492 = arith.cmpf ole, %1473, %431 : vector<8x256xf32>
      %1493 = arith.andi %1491, %1492 : vector<8x256xi1>
      %cst_408 = arith.constant 0.000000e+00 : f32
      %1494 = vector.broadcast %cst_408 : f32 to vector<8x256xf32>
      %1495 = arith.cmpf olt, %1489, %1494 : vector<8x256xf32>
      %cst_409 = arith.constant 1.300000e-02 : f32
      %1496 = vector.broadcast %cst_409 : f32 to vector<8x256xf32>
      %1497 = arith.cmpf olt, %1478, %1496 : vector<8x256xf32>
      %1498 = arith.cmpf ogt, %1473, %1478 : vector<8x256xf32>
      %1499 = arith.andi %1497, %1498 : vector<8x256xi1>
      %1500 = arith.ori %1495, %1499 : vector<8x256xi1>
      %1501 = arith.mulf %1473, %425 : vector<8x256xf32>
      %1502 = arith.mulf %419, %1480 : vector<8x256xf32>
      %1503 = arith.mulf %1502, %1480 : vector<8x256xf32>
      %1504 = arith.addf %1503, %415 : vector<8x256xf32>
      %1505 = arith.divf %1501, %1504 : vector<8x256xf32>
      %1506 = math.log %1505 : vector<8x256xf32>
      %1507 = arith.mulf %1489, %410 : vector<8x256xf32>
      %1508 = arith.subf %1507, %409 : vector<8x256xf32>
      %cst_410 = arith.constant 1.000000e+00 : f32
      %1509 = vector.broadcast %cst_410 : f32 to vector<8x256xf32>
      %1510 = arith.addf %1489, %1509 : vector<8x256xf32>
      %cst_411 = arith.constant 8.000000e+00 : f32
      %1511 = vector.broadcast %cst_411 : f32 to vector<8x256xf32>
      %1512 = arith.addf %1510, %1511 : vector<8x256xf32>
      %cst_412 = arith.constant 1.000000e+00 : f32
      %1513 = vector.broadcast %cst_412 : f32 to vector<8x256xf32>
      %1514 = arith.divf %1513, %1512 : vector<8x256xf32>
      %cst_413 = arith.constant 5.000000e-01 : f32
      %1515 = vector.broadcast %cst_413 : f32 to vector<8x256xf32>
      %1516 = arith.subf %1512, %1515 : vector<8x256xf32>
      %1517 = math.log %1512 : vector<8x256xf32>
      %1518 = arith.mulf %1516, %1517 : vector<8x256xf32>
      %1519 = arith.subf %1518, %1512 : vector<8x256xf32>
      %cst_414 = arith.constant 0.918938517 : f32
      %1520 = vector.broadcast %cst_414 : f32 to vector<8x256xf32>
      %1521 = arith.addf %1519, %1520 : vector<8x256xf32>
      %1522 = arith.mulf %1514, %1514 : vector<8x256xf32>
      %cst_415 = arith.constant 0.00277777785 : f32
      %1523 = vector.broadcast %cst_415 : f32 to vector<8x256xf32>
      %1524 = arith.mulf %1522, %1523 : vector<8x256xf32>
      %cst_416 = arith.constant 0.0833333358 : f32
      %1525 = vector.broadcast %cst_416 : f32 to vector<8x256xf32>
      %1526 = arith.subf %1525, %1524 : vector<8x256xf32>
      %1527 = arith.mulf %1514, %1526 : vector<8x256xf32>
      %1528 = arith.addf %1521, %1527 : vector<8x256xf32>
      %cst_417 = arith.constant 1.000000e+00 : f32
      %1529 = vector.broadcast %cst_417 : f32 to vector<8x256xf32>
      %1530 = arith.addf %1510, %1529 : vector<8x256xf32>
      %1531 = arith.mulf %1510, %1530 : vector<8x256xf32>
      %cst_418 = arith.constant 2.000000e+00 : f32
      %1532 = vector.broadcast %cst_418 : f32 to vector<8x256xf32>
      %1533 = arith.addf %1510, %1532 : vector<8x256xf32>
      %1534 = arith.mulf %1531, %1533 : vector<8x256xf32>
      %cst_419 = arith.constant 3.000000e+00 : f32
      %1535 = vector.broadcast %cst_419 : f32 to vector<8x256xf32>
      %1536 = arith.addf %1510, %1535 : vector<8x256xf32>
      %1537 = arith.mulf %1534, %1536 : vector<8x256xf32>
      %1538 = math.log %1537 : vector<8x256xf32>
      %cst_420 = arith.constant 4.000000e+00 : f32
      %1539 = vector.broadcast %cst_420 : f32 to vector<8x256xf32>
      %1540 = arith.addf %1510, %1539 : vector<8x256xf32>
      %cst_421 = arith.constant 5.000000e+00 : f32
      %1541 = vector.broadcast %cst_421 : f32 to vector<8x256xf32>
      %1542 = arith.addf %1510, %1541 : vector<8x256xf32>
      %1543 = arith.mulf %1540, %1542 : vector<8x256xf32>
      %cst_422 = arith.constant 6.000000e+00 : f32
      %1544 = vector.broadcast %cst_422 : f32 to vector<8x256xf32>
      %1545 = arith.addf %1510, %1544 : vector<8x256xf32>
      %1546 = arith.mulf %1543, %1545 : vector<8x256xf32>
      %cst_423 = arith.constant 7.000000e+00 : f32
      %1547 = vector.broadcast %cst_423 : f32 to vector<8x256xf32>
      %1548 = arith.addf %1510, %1547 : vector<8x256xf32>
      %1549 = arith.mulf %1546, %1548 : vector<8x256xf32>
      %1550 = math.log %1549 : vector<8x256xf32>
      %1551 = arith.addf %1538, %1550 : vector<8x256xf32>
      %1552 = arith.subf %1528, %1551 : vector<8x256xf32>
      %1553 = arith.subf %1508, %1552 : vector<8x256xf32>
      %cst_424 = arith.constant dense<true> : vector<8x256xi1>
      %1554 = arith.xori %1500, %cst_424 : vector<8x256xi1>
      %1555 = arith.cmpf ole, %1506, %1553 : vector<8x256xf32>
      %1556 = arith.andi %1554, %1555 : vector<8x256xi1>
      %1557 = arith.ori %1493, %1556 : vector<8x256xi1>
      %cst_425 = arith.constant dense<true> : vector<8x256xi1>
      %1558 = arith.xori %1467, %cst_425 : vector<8x256xi1>
      %1559 = arith.andi %1557, %1558 : vector<8x256xi1>
      %1560 = arith.select %1559, %1489, %1466 : vector<8x256xi1>, vector<8x256xf32>
      %cst_426 = arith.constant 1.000000e+01 : f32
      %1561 = vector.broadcast %cst_426 : f32 to vector<8x256xf32>
      %1562 = arith.cmpf olt, %8, %1561 : vector<8x256xf32>
      %1563 = arith.select %1562, %407, %1560 : vector<8x256xi1>, vector<8x256xf32>
      %c0_427 = arith.constant 0 : index
      %c0_428 = arith.constant 0 : index
      %1564 = vector.load %arg4[%c0_427, %c0_428] : memref<8x256xf32, #tpu.memory_space<vmem>>, vector<8x256xf32>
      tpu.vector_store %arg4[%c0_427, %c0_428], %1563 {strides = array<i32>} : memref<8x256xf32, #tpu.memory_space<vmem>>, vector<8x256xf32>,
    } else {
    }
    return
  }
  func.func @transform_0(%arg0: i32) -> (i32, i32) {
    %c0_i32 = arith.constant 0 : i32
    %c0_i32_0 = arith.constant 0 : i32
    %c0_i32_1 = arith.constant 0 : i32
    return %c0_i32, %c0_i32_0 : i32, i32
  }
  func.func @transform_1(%arg0: i32) -> (i32, i32) {
    %c0_i32 = arith.constant 0 : i32
    %c0_i32_0 = arith.constant 0 : i32
    return %arg0, %c0_i32 : i32, i32
  }
  func.func @transform_2(%arg0: i32) -> (i32, i32, i32) {
    %c0_i32 = arith.constant 0 : i32
    %c0_i32_0 = arith.constant 0 : i32
    %c0_i32_1 = arith.constant 0 : i32
    return %c0_i32, %c0_i32_0, %arg0 : i32, i32, i32
  }
  func.func @transform_3(%arg0: i32) -> (i32, i32) {
    %c0_i32 = arith.constant 0 : i32
    %c0_i32_0 = arith.constant 0 : i32
    return %c0_i32, %arg0 : i32, i32
  }
}

</mosaic_0001>

<llo_original>
// kernel: tpu_custom_call.1
$region0: #{tpu_custom_call.1}
  #allocation0 [shape = 'u32[]', space=smem, size = 0x4, offset = 0x4, fixed_abs, tag = 'smem constant byte address 0x4 - core index']
  #allocation1 [shape = 'u32[144,128]{1,0:T(1,128)}', space=vmem, size = 0x12000, scoped, tag = 'internal scratch']
  %s0 = inlined_call_operand.hbm [shape: f32[8,256], index: 0, kind: input, shape index: {}]
  %s1 = inlined_call_operand.hbm [shape: f32[256,256], index: 1, kind: input, shape index: {}]
  %s2 = inlined_call_operand.hbm [shape: f32[24,8,256], index: 2, kind: input, shape index: {}]
  %s3 = inlined_call_operand.hbm [shape: f32[8,256], index: 3, kind: output, shape index: {}]
  %s4 = sld [smem:[#allocation0]]
  $region46: #{tpu_custom_call.1} parent=0
    _
  %s6 = ssub.s32 1, %s4
  %s7 = scalar_select 0, %s6, %s4
  $region1: #{tpu_custom_call.1} parent=0
    #allocation2 [shape = 'u8[8192]{0}', space=vmem, size = 0x2000, scoped, tag = 'input window, operand 0, single buffered']
    #allocation3 [shape = 's32[1]{0}', space=sflag, size = 0x4, scoped, tag = 'scoped memory for tpu_custom_call.1']
    #allocation4 [shape = 's32[1]{0}', space=sflag, size = 0x4, scoped, tag = 'scoped memory for tpu_custom_call.1']
    #allocation5 [shape = 'u8[262144]{0}', space=vmem, size = 0x40000, scoped, tag = 'input window, operand 1, single buffered']
    #allocation6 [shape = 's32[1]{0}', space=sflag, size = 0x4, scoped, tag = 'scoped memory for tpu_custom_call.1']
    #allocation7 [shape = 'u8[196608]{0}', space=vmem, size = 0x30000, scoped, tag = 'input window, operand 2, single buffered']
    #allocation8 [shape = 'u8[8192]{0}', space=vmem, size = 0x2000, scoped, tag = 'output window, operand 0, single buffered']
    %8 = vsyncpa [#allocation3], 0
    %9 = vsyncpa [#allocation6], 0
    %10 = vsyncpa [#allocation4], 0
    // Predicated region
    $region2: #{tpu_custom_call.1} parent=1 // pred_check
      _
    $region3: #{tpu_custom_call.1} parent=1 // pred_check_branch
      %12 = sbr.rel (0) target = $region5
    $region4: #{tpu_custom_call.1} parent=1 // pred_region
      %s14 = ssub.s32 256, 256
      %15 = vsyncadd [#allocation3], %s14
      %s17 = sshll.u32 [#allocation2], 4
      %s18 = int_to_ptr.vmem [resolvable:$true] %s17
      %20 = dma.hbm_to_vmem [thread:$0]  %s0, 256, %s18, [#allocation3]
    $region5: #{tpu_custom_call.1} parent=1 // pred_fallthru
      _
    // Predicated region
    $region6: #{tpu_custom_call.1} parent=1 // pred_check
      _
    $region7: #{tpu_custom_call.1} parent=1 // pred_check_branch
      %22 = sbr.rel (0) target = $region9
    $region8: #{tpu_custom_call.1} parent=1 // pred_region
      %s24 = ssub.s32 8192, 8192
      %25 = vsyncadd [#allocation6], %s24
      %s26 = sshll.u32 [#allocation5], 4
      %s27 = int_to_ptr.vmem [resolvable:$true] %s26
      %32 = dma.hbm_to_vmem [thread:$0]  %s1, 8192, %s27, [#allocation6], 256, 256, 16
    $region9: #{tpu_custom_call.1} parent=1 // pred_fallthru
      _
    // Predicated region
    $region10: #{tpu_custom_call.1} parent=1 // pred_check
      _
    $region11: #{tpu_custom_call.1} parent=1 // pred_check_branch
      %34 = sbr.rel (0) target = $region13
    $region12: #{tpu_custom_call.1} parent=1 // pred_region
      %s36 = ssub.s32 6144, 6144
      %37 = vsyncadd [#allocation6], %s36
      %s38 = sshll.u32 [#allocation7], 4
      %s39 = int_to_ptr.vmem [resolvable:$true] %s38
      %44 = dma.hbm_to_vmem [thread:$0]  %s2, 6144, %s39, [#allocation6], 256, 256, 16
    $region13: #{tpu_custom_call.1} parent=1 // pred_fallthru
      _
    // Predicated region
    $region14: #{tpu_custom_call.1} parent=1 // pred_check
      _
    $region15: #{tpu_custom_call.1} parent=1 // pred_check_branch
      %46 = sbr.rel (0) target = $region17
    $region16: #{tpu_custom_call.1} parent=1 // pred_region
      %47 = dma.done [#allocation3], 256
    $region17: #{tpu_custom_call.1} parent=1 // pred_fallthru
      _
    // Predicated region
    $region18: #{tpu_custom_call.1} parent=1 // pred_check
      _
    $region19: #{tpu_custom_call.1} parent=1 // pred_check_branch
      %49 = sbr.rel (0) target = $region21
    $region20: #{tpu_custom_call.1} parent=1 // pred_region
      %50 = dma.done [#allocation6], 8192
    $region21: #{tpu_custom_call.1} parent=1 // pred_fallthru
      _
    // Predicated region
    $region22: #{tpu_custom_call.1} parent=1 // pred_check
      _
    $region23: #{tpu_custom_call.1} parent=1 // pred_check_branch
      %52 = sbr.rel (0) target = $region25
    $region24: #{tpu_custom_call.1} parent=1 // pred_region
      %53 = dma.done [#allocation6], 6144
    $region25: #{tpu_custom_call.1} parent=1 // pred_fallthru
      _
    %v54 = vld [vmem:[#allocation2] sm:$0xff]
    %v55 = vld [vmem:[#allocation2 + $0x8] sm:$0xff]
    %v56 = vadd.f32 %v54, 1.0
    %v57 = vadd.f32 %v55, 1.0
    %v58 = vmul.f32 %v56, 5.0
    %v59 = vmul.f32 %v57, 5.0
    %v60 = vld [vmem:[#allocation5] sm:$0xff]
    %v61 = vld [vmem:[#allocation5 + $0x8] sm:$0xff]
    %v62 = vld [vmem:[#allocation5 + $0x10] sm:$0xff]
    %v63 = vld [vmem:[#allocation5 + $0x18] sm:$0xff]
    %v64 = vld [vmem:[#allocation5 + $0x20] sm:$0xff]
    %v65 = vld [vmem:[#allocation5 + $0x28] sm:$0xff]
    %v66 = vld [vmem:[#allocation5 + $0x30] sm:$0xff]
    %v67 = vld [vmem:[#allocation5 + $0x38] sm:$0xff]
    %v68 = vld [vmem:[#allocation5 + $0x40] sm:$0xff]
    %v69 = vld [vmem:[#allocation5 + $0x48] sm:$0xff]
    %v70 = vld [vmem:[#allocation5 + $0x50] sm:$0xff]
    %v71 = vld [vmem:[#allocation5 + $0x58] sm:$0xff]
    %v72 = vld [vmem:[#allocation5 + $0x60] sm:$0xff]
    %v73 = vld [vmem:[#allocation5 + $0x68] sm:$0xff]
    %v74 = vld [vmem:[#allocation5 + $0x70] sm:$0xff]
    %v75 = vld [vmem:[#allocation5 + $0x78] sm:$0xff]
    %v76 = vld [vmem:[#allocation5 + $0x80] sm:$0xff]
    %v77 = vld [vmem:[#allocation5 + $0x88] sm:$0xff]
    %v78 = vld [vmem:[#allocation5 + $0x90] sm:$0xff]
    %v79 = vld [vmem:[#allocation5 + $0x98] sm:$0xff]
    %v80 = vld [vmem:[#allocation5 + $0xa0] sm:$0xff]
    %v81 = vld [vmem:[#allocation5 + $0xa8] sm:$0xff]
    %v82 = vld [vmem:[#allocation5 + $0xb0] sm:$0xff]
    %v83 = vld [vmem:[#allocation5 + $0xb8] sm:$0xff]
    %v84 = vld [vmem:[#allocation5 + $0xc0] sm:$0xff]
    %v85 = vld [vmem:[#allocation5 + $0xc8] sm:$0xff]
    %v86 = vld [vmem:[#allocation5 + $0xd0] sm:$0xff]
    %v87 = vld [vmem:[#allocation5 + $0xd8] sm:$0xff]
    %v88 = vld [vmem:[#allocation5 + $0xe0] sm:$0xff]
    %v89 = vld [vmem:[#allocation5 + $0xe8] sm:$0xff]
    %v90 = vld [vmem:[#allocation5 + $0xf0] sm:$0xff]
    %v91 = vld [vmem:[#allocation5 + $0xf8] sm:$0xff]
    %v92 = vld [vmem:[#allocation5 + $0x100] sm:$0xff]
    %v93 = vld [vmem:[#allocation5 + $0x108] sm:$0xff]
    %v94 = vld [vmem:[#allocation5 + $0x110] sm:$0xff]
    %v95 = vld [vmem:[#allocation5 + $0x118] sm:$0xff]
    %v96 = vld [vmem:[#allocation5 + $0x120] sm:$0xff]
    %v97 = vld [vmem:[#allocation5 + $0x128] sm:$0xff]
    %v98 = vld [vmem:[#allocation5 + $0x130] sm:$0xff]
    %v99 = vld [vmem:[#allocation5 + $0x138] sm:$0xff]
    %v100 = vld [vmem:[#allocation5 + $0x140] sm:$0xff]
    %v101 = vld [vmem:[#allocation5 + $0x148] sm:$0xff]
    %v102 = vld [vmem:[#allocation5 + $0x150] sm:$0xff]
    %v103 = vld [vmem:[#allocation5 + $0x158] sm:$0xff]
    %v104 = vld [vmem:[#allocation5 + $0x160] sm:$0xff]
    %v105 = vld [vmem:[#allocation5 + $0x168] sm:$0xff]
    %v106 = vld [vmem:[#allocation5 + $0x170] sm:$0xff]
    %v107 = vld [vmem:[#allocation5 + $0x178] sm:$0xff]
    %v108 = vld [vmem:[#allocation5 + $0x180] sm:$0xff]
    %v109 = vld [vmem:[#allocation5 + $0x188] sm:$0xff]
    %v110 = vld [vmem:[#allocation5 + $0x190] sm:$0xff]
    %v111 = vld [vmem:[#allocation5 + $0x198] sm:$0xff]
    %v112 = vld [vmem:[#allocation5 + $0x1a0] sm:$0xff]
    %v113 = vld [vmem:[#allocation5 + $0x1a8] sm:$0xff]
    %v114 = vld [vmem:[#allocation5 + $0x1b0] sm:$0xff]
    %v115 = vld [vmem:[#allocation5 + $0x1b8] sm:$0xff]
    %v116 = vld [vmem:[#allocation5 + $0x1c0] sm:$0xff]
    %v117 = vld [vmem:[#allocation5 + $0x1c8] sm:$0xff]
    %v118 = vld [vmem:[#allocation5 + $0x1d0] sm:$0xff]
    %v119 = vld [vmem:[#allocation5 + $0x1d8] sm:$0xff]
    %v120 = vld [vmem:[#allocation5 + $0x1e0] sm:$0xff]
    %v121 = vld [vmem:[#allocation5 + $0x1e8] sm:$0xff]
    %v122 = vld [vmem:[#allocation5 + $0x1f0] sm:$0xff]
    %v123 = vld [vmem:[#allocation5 + $0x1f8] sm:$0xff]
    %124 = vmatprep.subr.mxu0 %v61
    %125 = vmatpush1.xpose.msra.mxu0 %v60
    %126 = vmatprep.subr.mxu0 %v63
    %127 = vmatpush1.xpose.msra.mxu0 %v62
    %128 = vmatprep.subr.mxu0 %v65
    %129 = vmatpush1.xpose.msra.mxu0 %v64
    %130 = vmatprep.subr.mxu0 %v67
    %131 = vmatpush1.xpose.msra.mxu0 %v66
    %132 = vmatprep.subr.mxu0 %v69
    %133 = vmatpush1.xpose.msra.mxu0 %v68
    %134 = vmatprep.subr.mxu0 %v71
    %135 = vmatpush1.xpose.msra.mxu0 %v70
    %136 = vmatprep.subr.mxu0 %v73
    %137 = vmatpush1.xpose.msra.mxu0 %v72
    %138 = vmatprep.subr.mxu0 %v75
    %139 = vmatpush1.xpose.msra.mxu0 %v74
    %140 = vmatprep.subr.mxu0 %v77
    %141 = vmatpush1.xpose.msra.mxu0 %v76
    %142 = vmatprep.subr.mxu0 %v79
    %143 = vmatpush1.xpose.msra.mxu0 %v78
    %144 = vmatprep.subr.mxu0 %v81
    %145 = vmatpush1.xpose.msra.mxu0 %v80
    %146 = vmatprep.subr.mxu0 %v83
    %147 = vmatpush1.xpose.msra.mxu0 %v82
    %148 = vmatprep.subr.mxu0 %v85
    %149 = vmatpush1.xpose.msra.mxu0 %v84
    %150 = vmatprep.subr.mxu0 %v87
    %151 = vmatpush1.xpose.msra.mxu0 %v86
    %152 = vmatprep.subr.mxu0 %v89
    %153 = vmatpush1.xpose.msra.mxu0 %v88
    %154 = vmatprep.subr.mxu0 %v91
    %155 = vmatpush1.xpose.msra.mxu0 %v90
    %156 = vmatprep.subr.mxu0 %v93
    %157 = vmatpush1.xpose.msra.mxu0 %v92
    %158 = vmatprep.subr.mxu0 %v95
    %159 = vmatpush1.xpose.msra.mxu0 %v94
    %160 = vmatprep.subr.mxu0 %v97
    %161 = vmatpush1.xpose.msra.mxu0 %v96
    %162 = vmatprep.subr.mxu0 %v99
    %163 = vmatpush1.xpose.msra.mxu0 %v98
    %164 = vmatprep.subr.mxu0 %v101
    %165 = vmatpush1.xpose.msra.mxu0 %v100
    %166 = vmatprep.subr.mxu0 %v103
    %167 = vmatpush1.xpose.msra.mxu0 %v102
    %168 = vmatprep.subr.mxu0 %v105
    %169 = vmatpush1.xpose.msra.mxu0 %v104
    %170 = vmatprep.subr.mxu0 %v107
    %171 = vmatpush1.xpose.msra.mxu0 %v106
    %172 = vmatprep.subr.mxu0 %v109
    %173 = vmatpush1.xpose.msra.mxu0 %v108
    %174 = vmatprep.subr.mxu0 %v111
    %175 = vmatpush1.xpose.msra.mxu0 %v110
    %176 = vmatprep.subr.mxu0 %v113
    %177 = vmatpush1.xpose.msra.mxu0 %v112
    %178 = vmatprep.subr.mxu0 %v115
    %179 = vmatpush1.xpose.msra.mxu0 %v114
    %180 = vmatprep.subr.mxu0 %v117
    %181 = vmatpush1.xpose.msra.mxu0 %v116
    %182 = vmatprep.subr.mxu0 %v119
    %183 = vmatpush1.xpose.msra.mxu0 %v118
    %184 = vmatprep.subr.mxu0 %v121
    %185 = vmatpush1.xpose.msra.mxu0 %v120
    %186 = vmatprep.subr.mxu0 %v123
    %187 = vmatpush1.xpose.msra.mxu0 %v122
    %188 = vmatprep.mubr.f32.mxu0 %v59
    %189 = vmatmul.mubr.f32.gmra.mrb[0].mxu0 %v58
    %v190 = vpop.f32.mrb[0].mxu0
    %v191 = vadd.f32 0.0, %v190
    %v192 = vpop.f32.mrb[0].mxu0
    %v193 = vadd.f32 0.0, %v192
    %194 = vdwg.mxu0
    %v195 = vmax.f32 %v191, 0.0
    %v196 = vmax.f32 %v193, 0.0
    %v197 = vmin.f32 %v195, %v196
    %198 = vmin.xlane.f32.xlu0 %v197
    %v199 = vpop.xlane.xlu0 %198
    %v200 = vrot.slane %v199, 4
    %v201 = vmin.f32 %v199, %v200
    %v202 = vrot.slane %v201, 2
    %v203 = vmin.f32 %v201, %v202
    %v204 = vrot.slane %v203, 1
    %v205 = vmin.f32 %v203, %v204
    %s206 = vtos %v205
    %v207 = vmax.f32 %v195, %v196
    %208 = vmax.xlane.f32.xlu0 %v207
    %v209 = vpop.xlane.xlu0 %208
    %v210 = vrot.slane %v209, 4
    %v211 = vmax.f32 %v209, %v210
    %v212 = vrot.slane %v211, 2
    %v213 = vmax.f32 %v211, %v212
    %v214 = vrot.slane %v213, 1
    %v215 = vmax.f32 %v213, %v214
    %s216 = vtos %v215
    %p217 = scmp.lt.f32.partialorder %s216, 10.0
    // Predicated region
    $region26: #{tpu_custom_call.1} parent=1 // pred_check
      %p218 = pneg %p217
    $region27: #{tpu_custom_call.1} parent=1 // pred_check_branch
      %220 = sbr.rel (%p218) target = $region29
    $region28: #{tpu_custom_call.1} parent=1 // pred_region
      %v221 = vld [vmem:[#allocation7] sm:$0xff]
      %v222 = vld [vmem:[#allocation7 + $0x8] sm:$0xff]
      %v223 = vsub.f32 0.0, %v195
      %v224 = vsub.f32 0.0, %v196
      %v225 = vmul.f32 %v223, 1.442695
      %v226 = vpow.pop %v225
      %v227 = vmul.f32 %v224, 1.442695
      %v228 = vpow.pop %v227
      %vm229 = vcmp.gt.f32.partialorder %v221, %v226
      %vm230 = vcmp.gt.f32.partialorder %v222, %v228
      %v231 = vsel %vm229, 1, 0
      %v232 = vsel %vm230, 1, 0
      %v233 = vcvt.s32.f32 %v231
      %v234 = vcvt.s32.f32 %v232
      %v235 = vadd.f32 %v233, 0.0
      %v236 = vadd.f32 %v234, 0.0
      %v237 = vmul.f32 %v226, %v195
      %v238 = vmul.f32 %v228, %v196
      %v239 = vadd.f32 %v226, %v237
      %v240 = vadd.f32 %v228, %v238
      %vm241 = vcmp.gt.f32.partialorder %v221, %v239
      %vm242 = vcmp.gt.f32.partialorder %v222, %v240
      %v243 = vsel %vm241, 1, 0
      %v244 = vsel %vm242, 1, 0
      %v245 = vcvt.s32.f32 %v243
      %v246 = vcvt.s32.f32 %v244
      %v247 = vadd.f32 %v235, %v245
      %v248 = vadd.f32 %v236, %v246
      %v249 = vmul.f32 %v195, 0.5
      %v250 = vmul.f32 %v196, 0.5
      %v251 = vmul.f32 %v237, %v249
      %v252 = vmul.f32 %v238, %v250
      %v253 = vadd.f32 %v239, %v251
      %v254 = vadd.f32 %v240, %v252
      %vm255 = vcmp.gt.f32.partialorder %v221, %v253
      %vm256 = vcmp.gt.f32.partialorder %v222, %v254
      %v257 = vsel %vm255, 1, 0
      %v258 = vsel %vm256, 1, 0
      %v259 = vcvt.s32.f32 %v257
      %v260 = vcvt.s32.f32 %v258
      %v261 = vadd.f32 %v247, %v259
      %v262 = vadd.f32 %v248, %v260
      %v263 = vmul.f32 %v195, 0.33333334
      %v264 = vmul.f32 %v196, 0.33333334
      %v265 = vmul.f32 %v251, %v263
      %v266 = vmul.f32 %v252, %v264
      %v267 = vadd.f32 %v253, %v265
      %v268 = vadd.f32 %v254, %v266
      %vm269 = vcmp.gt.f32.partialorder %v221, %v267
      %vm270 = vcmp.gt.f32.partialorder %v222, %v268
      %v271 = vsel %vm269, 1, 0
      %v272 = vsel %vm270, 1, 0
      %v273 = vcvt.s32.f32 %v271
      %v274 = vcvt.s32.f32 %v272
      %v275 = vadd.f32 %v261, %v273
      %v276 = vadd.f32 %v262, %v274
      %v277 = vmul.f32 %v195, 0.25
      %v278 = vmul.f32 %v196, 0.25
      %v279 = vmul.f32 %v265, %v277
      %v280 = vmul.f32 %v266, %v278
      %v281 = vadd.f32 %v267, %v279
      %v282 = vadd.f32 %v268, %v280
      %vm283 = vcmp.gt.f32.partialorder %v221, %v281
      %vm284 = vcmp.gt.f32.partialorder %v222, %v282
      %v285 = vsel %vm283, 1, 0
      %v286 = vsel %vm284, 1, 0
      %v287 = vcvt.s32.f32 %v285
      %v288 = vcvt.s32.f32 %v286
      %v289 = vadd.f32 %v275, %v287
      %v290 = vadd.f32 %v276, %v288
      %v291 = vmul.f32 %v195, 0.2
      %v292 = vmul.f32 %v196, 0.2
      %v293 = vmul.f32 %v279, %v291
      %v294 = vmul.f32 %v280, %v292
      %v295 = vadd.f32 %v281, %v293
      %v296 = vadd.f32 %v282, %v294
      %vm297 = vcmp.gt.f32.partialorder %v221, %v295
      %vm298 = vcmp.gt.f32.partialorder %v222, %v296
      %v299 = vsel %vm297, 1, 0
      %v300 = vsel %vm298, 1, 0
      %v301 = vcvt.s32.f32 %v299
      %v302 = vcvt.s32.f32 %v300
      %v303 = vadd.f32 %v289, %v301
      %v304 = vadd.f32 %v290, %v302
      %v305 = vmul.f32 %v195, 0.16666667
      %v306 = vmul.f32 %v196, 0.16666667
      %v307 = vmul.f32 %v293, %v305
      %v308 = vmul.f32 %v294, %v306
      %v309 = vadd.f32 %v295, %v307
      %v310 = vadd.f32 %v296, %v308
      %vm311 = vcmp.gt.f32.partialorder %v221, %v309
      %vm312 = vcmp.gt.f32.partialorder %v222, %v310
      %v313 = vsel %vm311, 1, 0
      %v314 = vsel %vm312, 1, 0
      %v315 = vcvt.s32.f32 %v313
      %v316 = vcvt.s32.f32 %v314
      %v317 = vadd.f32 %v303, %v315
      %v318 = vadd.f32 %v304, %v316
      %v319 = vmul.f32 %v195, 0.14285715
      %v320 = vmul.f32 %v196, 0.14285715
      %v321 = vmul.f32 %v307, %v319
      %v322 = vmul.f32 %v308, %v320
      %v323 = vadd.f32 %v309, %v321
      %v324 = vadd.f32 %v310, %v322
      %vm325 = vcmp.gt.f32.partialorder %v221, %v323
      %vm326 = vcmp.gt.f32.partialorder %v222, %v324
      %v327 = vsel %vm325, 1, 0
      %v328 = vsel %vm326, 1, 0
      %v329 = vcvt.s32.f32 %v327
      %v330 = vcvt.s32.f32 %v328
      %v331 = vadd.f32 %v317, %v329
      %v332 = vadd.f32 %v318, %v330
      %v333 = vmul.f32 %v195, 0.125
      %v334 = vmul.f32 %v196, 0.125
      %v335 = vmul.f32 %v321, %v333
      %v336 = vmul.f32 %v322, %v334
      %v337 = vadd.f32 %v323, %v335
      %v338 = vadd.f32 %v324, %v336
      %vm339 = vcmp.gt.f32.partialorder %v221, %v337
      %vm340 = vcmp.gt.f32.partialorder %v222, %v338
      %v341 = vsel %vm339, 1, 0
      %v342 = vsel %vm340, 1, 0
      %v343 = vcvt.s32.f32 %v341
      %v344 = vcvt.s32.f32 %v342
      %v345 = vadd.f32 %v331, %v343
      %v346 = vadd.f32 %v332, %v344
      %v347 = vmul.f32 %v195, 0.11111111
      %v348 = vmul.f32 %v196, 0.11111111
      %v349 = vmul.f32 %v335, %v347
      %v350 = vmul.f32 %v336, %v348
      %v351 = vadd.f32 %v337, %v349
      %v352 = vadd.f32 %v338, %v350
      %vm353 = vcmp.gt.f32.partialorder %v221, %v351
      %vm354 = vcmp.gt.f32.partialorder %v222, %v352
      %v355 = vsel %vm353, 1, 0
      %v356 = vsel %vm354, 1, 0
      %v357 = vcvt.s32.f32 %v355
      %v358 = vcvt.s32.f32 %v356
      %v359 = vadd.f32 %v345, %v357
      %v360 = vadd.f32 %v346, %v358
      %v361 = vmul.f32 %v195, 0.1
      %v362 = vmul.f32 %v196, 0.1
      %v363 = vmul.f32 %v349, %v361
      %v364 = vmul.f32 %v350, %v362
      %v365 = vadd.f32 %v351, %v363
      %v366 = vadd.f32 %v352, %v364
      %vm367 = vcmp.gt.f32.partialorder %v221, %v365
      %vm368 = vcmp.gt.f32.partialorder %v222, %v366
      %v369 = vsel %vm367, 1, 0
      %v370 = vsel %vm368, 1, 0
      %v371 = vcvt.s32.f32 %v369
      %v372 = vcvt.s32.f32 %v370
      %v373 = vadd.f32 %v359, %v371
      %v374 = vadd.f32 %v360, %v372
      %v375 = vmul.f32 %v195, 0.09090909
      %v376 = vmul.f32 %v196, 0.09090909
      %v377 = vmul.f32 %v363, %v375
      %v378 = vmul.f32 %v364, %v376
      %v379 = vadd.f32 %v365, %v377
      %v380 = vadd.f32 %v366, %v378
      %vm381 = vcmp.gt.f32.partialorder %v221, %v379
      %vm382 = vcmp.gt.f32.partialorder %v222, %v380
      %v383 = vsel %vm381, 1, 0
      %v384 = vsel %vm382, 1, 0
      %v385 = vcvt.s32.f32 %v383
      %v386 = vcvt.s32.f32 %v384
      %v387 = vadd.f32 %v373, %v385
      %v388 = vadd.f32 %v374, %v386
      %v389 = vmul.f32 %v195, 0.083333336
      %v390 = vmul.f32 %v196, 0.083333336
      %v391 = vmul.f32 %v377, %v389
      %v392 = vmul.f32 %v378, %v390
      %v393 = vadd.f32 %v379, %v391
      %v394 = vadd.f32 %v380, %v392
      %vm395 = vcmp.gt.f32.partialorder %v221, %v393
      %vm396 = vcmp.gt.f32.partialorder %v222, %v394
      %v397 = vsel %vm395, 1, 0
      %v398 = vsel %vm396, 1, 0
      %v399 = vcvt.s32.f32 %v397
      %v400 = vcvt.s32.f32 %v398
      %v401 = vadd.f32 %v387, %v399
      %v402 = vadd.f32 %v388, %v400
      %v403 = vmul.f32 %v195, 0.07692308
      %v404 = vmul.f32 %v196, 0.07692308
      %v405 = vmul.f32 %v391, %v403
      %v406 = vmul.f32 %v392, %v404
      %v407 = vadd.f32 %v393, %v405
      %v408 = vadd.f32 %v394, %v406
      %vm409 = vcmp.gt.f32.partialorder %v221, %v407
      %vm410 = vcmp.gt.f32.partialorder %v222, %v408
      %v411 = vsel %vm409, 1, 0
      %v412 = vsel %vm410, 1, 0
      %v413 = vcvt.s32.f32 %v411
      %v414 = vcvt.s32.f32 %v412
      %v415 = vadd.f32 %v401, %v413
      %v416 = vadd.f32 %v402, %v414
      %v417 = vmul.f32 %v195, 0.071428575
      %v418 = vmul.f32 %v196, 0.071428575
      %v419 = vmul.f32 %v405, %v417
      %v420 = vmul.f32 %v406, %v418
      %v421 = vadd.f32 %v407, %v419
      %v422 = vadd.f32 %v408, %v420
      %vm423 = vcmp.gt.f32.partialorder %v221, %v421
      %vm424 = vcmp.gt.f32.partialorder %v222, %v422
      %v425 = vsel %vm423, 1, 0
      %v426 = vsel %vm424, 1, 0
      %v427 = vcvt.s32.f32 %v425
      %v428 = vcvt.s32.f32 %v426
      %v429 = vadd.f32 %v415, %v427
      %v430 = vadd.f32 %v416, %v428
      %v431 = vmul.f32 %v195, 0.06666667
      %v432 = vmul.f32 %v196, 0.06666667
      %v433 = vmul.f32 %v419, %v431
      %v434 = vmul.f32 %v420, %v432
      %v435 = vadd.f32 %v421, %v433
      %v436 = vadd.f32 %v422, %v434
      %vm437 = vcmp.gt.f32.partialorder %v221, %v435
      %vm438 = vcmp.gt.f32.partialorder %v222, %v436
      %v439 = vsel %vm437, 1, 0
      %v440 = vsel %vm438, 1, 0
      %v441 = vcvt.s32.f32 %v439
      %v442 = vcvt.s32.f32 %v440
      %v443 = vadd.f32 %v429, %v441
      %v444 = vadd.f32 %v430, %v442
      %v445 = vmul.f32 %v195, 0.0625
      %v446 = vmul.f32 %v196, 0.0625
      %v447 = vmul.f32 %v433, %v445
      %v448 = vmul.f32 %v434, %v446
      %v449 = vadd.f32 %v435, %v447
      %v450 = vadd.f32 %v436, %v448
      %vm451 = vcmp.gt.f32.partialorder %v221, %v449
      %vm452 = vcmp.gt.f32.partialorder %v222, %v450
      %v453 = vsel %vm451, 1, 0
      %v454 = vsel %vm452, 1, 0
      %v455 = vcvt.s32.f32 %v453
      %v456 = vcvt.s32.f32 %v454
      %v457 = vadd.f32 %v443, %v455
      %v458 = vadd.f32 %v444, %v456
      %v459 = vmul.f32 %v195, 0.05882353
      %v460 = vmul.f32 %v196, 0.05882353
      %v461 = vmul.f32 %v447, %v459
      %v462 = vmul.f32 %v448, %v460
      %v463 = vadd.f32 %v449, %v461
      %v464 = vadd.f32 %v450, %v462
      %vm465 = vcmp.gt.f32.partialorder %v221, %v463
      %vm466 = vcmp.gt.f32.partialorder %v222, %v464
      %v467 = vsel %vm465, 1, 0
      %v468 = vsel %vm466, 1, 0
      %v469 = vcvt.s32.f32 %v467
      %v470 = vcvt.s32.f32 %v468
      %v471 = vadd.f32 %v457, %v469
      %v472 = vadd.f32 %v458, %v470
      %v473 = vmul.f32 %v195, 0.055555556
      %v474 = vmul.f32 %v196, 0.055555556
      %v475 = vmul.f32 %v461, %v473
      %v476 = vmul.f32 %v462, %v474
      %v477 = vadd.f32 %v463, %v475
      %v478 = vadd.f32 %v464, %v476
      %vm479 = vcmp.gt.f32.partialorder %v221, %v477
      %vm480 = vcmp.gt.f32.partialorder %v222, %v478
      %v481 = vsel %vm479, 1, 0
      %v482 = vsel %vm480, 1, 0
      %v483 = vcvt.s32.f32 %v481
      %v484 = vcvt.s32.f32 %v482
      %v485 = vadd.f32 %v471, %v483
      %v486 = vadd.f32 %v472, %v484
      %v487 = vmul.f32 %v195, 0.05263158
      %v488 = vmul.f32 %v196, 0.05263158
      %v489 = vmul.f32 %v475, %v487
      %v490 = vmul.f32 %v476, %v488
      %v491 = vadd.f32 %v477, %v489
      %v492 = vadd.f32 %v478, %v490
      %vm493 = vcmp.gt.f32.partialorder %v221, %v491
      %vm494 = vcmp.gt.f32.partialorder %v222, %v492
      %v495 = vsel %vm493, 1, 0
      %v496 = vsel %vm494, 1, 0
      %v497 = vcvt.s32.f32 %v495
      %v498 = vcvt.s32.f32 %v496
      %v499 = vadd.f32 %v485, %v497
      %v500 = vadd.f32 %v486, %v498
      %v501 = vmul.f32 %v195, 0.05
      %v502 = vmul.f32 %v196, 0.05
      %v503 = vmul.f32 %v489, %v501
      %v504 = vmul.f32 %v490, %v502
      %v505 = vadd.f32 %v491, %v503
      %v506 = vadd.f32 %v492, %v504
      %vm507 = vcmp.gt.f32.partialorder %v221, %v505
      %vm508 = vcmp.gt.f32.partialorder %v222, %v506
      %v509 = vsel %vm507, 1, 0
      %v510 = vsel %vm508, 1, 0
      %v511 = vcvt.s32.f32 %v509
      %v512 = vcvt.s32.f32 %v510
      %v513 = vadd.f32 %v499, %v511
      %v514 = vadd.f32 %v500, %v512
      %v515 = vmul.f32 %v195, 0.04761905
      %v516 = vmul.f32 %v196, 0.04761905
      %v517 = vmul.f32 %v503, %v515
      %v518 = vmul.f32 %v504, %v516
      %v519 = vadd.f32 %v505, %v517
      %v520 = vadd.f32 %v506, %v518
      %vm521 = vcmp.gt.f32.partialorder %v221, %v519
      %vm522 = vcmp.gt.f32.partialorder %v222, %v520
      %v523 = vsel %vm521, 1, 0
      %v524 = vsel %vm522, 1, 0
      %v525 = vcvt.s32.f32 %v523
      %v526 = vcvt.s32.f32 %v524
      %v527 = vadd.f32 %v513, %v525
      %v528 = vadd.f32 %v514, %v526
      %v529 = vmul.f32 %v195, 0.045454547
      %v530 = vmul.f32 %v196, 0.045454547
      %v531 = vmul.f32 %v517, %v529
      %v532 = vmul.f32 %v518, %v530
      %v533 = vadd.f32 %v519, %v531
      %v534 = vadd.f32 %v520, %v532
      %vm535 = vcmp.gt.f32.partialorder %v221, %v533
      %vm536 = vcmp.gt.f32.partialorder %v222, %v534
      %v537 = vsel %vm535, 1, 0
      %v538 = vsel %vm536, 1, 0
      %v539 = vcvt.s32.f32 %v537
      %v540 = vcvt.s32.f32 %v538
      %v541 = vadd.f32 %v527, %v539
      %v542 = vadd.f32 %v528, %v540
      %v543 = vmul.f32 %v195, 0.04347826
      %v544 = vmul.f32 %v196, 0.04347826
      %v545 = vmul.f32 %v531, %v543
      %v546 = vmul.f32 %v532, %v544
      %v547 = vadd.f32 %v533, %v545
      %v548 = vadd.f32 %v534, %v546
      %vm549 = vcmp.gt.f32.partialorder %v221, %v547
      %vm550 = vcmp.gt.f32.partialorder %v222, %v548
      %v551 = vsel %vm549, 1, 0
      %v552 = vsel %vm550, 1, 0
      %v553 = vcvt.s32.f32 %v551
      %v554 = vcvt.s32.f32 %v552
      %v555 = vadd.f32 %v541, %v553
      %v556 = vadd.f32 %v542, %v554
      %v557 = vmul.f32 %v195, 0.041666668
      %v558 = vmul.f32 %v196, 0.041666668
      %v559 = vmul.f32 %v545, %v557
      %v560 = vmul.f32 %v546, %v558
      %v561 = vadd.f32 %v547, %v559
      %v562 = vadd.f32 %v548, %v560
      %vm563 = vcmp.gt.f32.partialorder %v221, %v561
      %vm564 = vcmp.gt.f32.partialorder %v222, %v562
      %v565 = vsel %vm563, 1, 0
      %v566 = vsel %vm564, 1, 0
      %v567 = vcvt.s32.f32 %v565
      %v568 = vcvt.s32.f32 %v566
      %v569 = vadd.f32 %v555, %v567
      %v570 = vadd.f32 %v556, %v568
      %v571 = vmul.f32 %v195, 0.04
      %v572 = vmul.f32 %v196, 0.04
      %v573 = vmul.f32 %v559, %v571
      %v574 = vmul.f32 %v560, %v572
      %v575 = vadd.f32 %v561, %v573
      %v576 = vadd.f32 %v562, %v574
      %vm577 = vcmp.gt.f32.partialorder %v221, %v575
      %vm578 = vcmp.gt.f32.partialorder %v222, %v576
      %v579 = vsel %vm577, 1, 0
      %v580 = vsel %vm578, 1, 0
      %v581 = vcvt.s32.f32 %v579
      %v582 = vcvt.s32.f32 %v580
      %v583 = vadd.f32 %v569, %v581
      %v584 = vadd.f32 %v570, %v582
      %v585 = vmul.f32 %v195, 0.03846154
      %v586 = vmul.f32 %v196, 0.03846154
      %v587 = vmul.f32 %v573, %v585
      %v588 = vmul.f32 %v574, %v586
      %v589 = vadd.f32 %v575, %v587
      %v590 = vadd.f32 %v576, %v588
      %vm591 = vcmp.gt.f32.partialorder %v221, %v589
      %vm592 = vcmp.gt.f32.partialorder %v222, %v590
      %v593 = vsel %vm591, 1, 0
      %v594 = vsel %vm592, 1, 0
      %v595 = vcvt.s32.f32 %v593
      %v596 = vcvt.s32.f32 %v594
      %v597 = vadd.f32 %v583, %v595
      %v598 = vadd.f32 %v584, %v596
      %v599 = vmul.f32 %v195, 0.037037037
      %v600 = vmul.f32 %v196, 0.037037037
      %v601 = vmul.f32 %v587, %v599
      %v602 = vmul.f32 %v588, %v600
      %v603 = vadd.f32 %v589, %v601
      %v604 = vadd.f32 %v590, %v602
      %vm605 = vcmp.gt.f32.partialorder %v221, %v603
      %vm606 = vcmp.gt.f32.partialorder %v222, %v604
      %v607 = vsel %vm605, 1, 0
      %v608 = vsel %vm606, 1, 0
      %v609 = vcvt.s32.f32 %v607
      %v610 = vcvt.s32.f32 %v608
      %v611 = vadd.f32 %v597, %v609
      %v612 = vadd.f32 %v598, %v610
      %v613 = vmul.f32 %v195, 0.035714287
      %v614 = vmul.f32 %v196, 0.035714287
      %v615 = vmul.f32 %v601, %v613
      %v616 = vmul.f32 %v602, %v614
      %v617 = vadd.f32 %v603, %v615
      %v618 = vadd.f32 %v604, %v616
      %vm619 = vcmp.gt.f32.partialorder %v221, %v617
      %vm620 = vcmp.gt.f32.partialorder %v222, %v618
      %v621 = vsel %vm619, 1, 0
      %v622 = vsel %vm620, 1, 0
      %v623 = vcvt.s32.f32 %v621
      %v624 = vcvt.s32.f32 %v622
      %v625 = vadd.f32 %v611, %v623
      %v626 = vadd.f32 %v612, %v624
      %v627 = vmul.f32 %v195, 0.03448276
      %v628 = vmul.f32 %v196, 0.03448276
      %v629 = vmul.f32 %v615, %v627
      %v630 = vmul.f32 %v616, %v628
      %v631 = vadd.f32 %v617, %v629
      %v632 = vadd.f32 %v618, %v630
      %vm633 = vcmp.gt.f32.partialorder %v221, %v631
      %vm634 = vcmp.gt.f32.partialorder %v222, %v632
      %v635 = vsel %vm633, 1, 0
      %v636 = vsel %vm634, 1, 0
      %v637 = vcvt.s32.f32 %v635
      %v638 = vcvt.s32.f32 %v636
      %v639 = vadd.f32 %v625, %v637
      %v640 = vadd.f32 %v626, %v638
      %v641 = vmul.f32 %v195, 0.033333335
      %v642 = vmul.f32 %v196, 0.033333335
      %v643 = vmul.f32 %v629, %v641
      %v644 = vmul.f32 %v630, %v642
      %v645 = vadd.f32 %v631, %v643
      %v646 = vadd.f32 %v632, %v644
      %vm647 = vcmp.gt.f32.partialorder %v221, %v645
      %vm648 = vcmp.gt.f32.partialorder %v222, %v646
      %v649 = vsel %vm647, 1, 0
      %v650 = vsel %vm648, 1, 0
      %v651 = vcvt.s32.f32 %v649
      %v652 = vcvt.s32.f32 %v650
      %v653 = vadd.f32 %v639, %v651
      %v654 = vadd.f32 %v640, %v652
      %v655 = vmul.f32 %v195, 0.032258064
      %v656 = vmul.f32 %v196, 0.032258064
      %v657 = vmul.f32 %v643, %v655
      %v658 = vmul.f32 %v644, %v656
      %v659 = vadd.f32 %v645, %v657
      %v660 = vadd.f32 %v646, %v658
      %vm661 = vcmp.gt.f32.partialorder %v221, %v659
      %vm662 = vcmp.gt.f32.partialorder %v222, %v660
      %v663 = vsel %vm661, 1, 0
      %v664 = vsel %vm662, 1, 0
      %v665 = vcvt.s32.f32 %v663
      %v666 = vcvt.s32.f32 %v664
      %v667 = vadd.f32 %v653, %v665
      %v668 = vadd.f32 %v654, %v666
      %v669 = vmul.f32 %v195, 0.03125
      %v670 = vmul.f32 %v196, 0.03125
      %v671 = vmul.f32 %v657, %v669
      %v672 = vmul.f32 %v658, %v670
      %v673 = vadd.f32 %v659, %v671
      %v674 = vadd.f32 %v660, %v672
      %vm675 = vcmp.gt.f32.partialorder %v221, %v673
      %vm676 = vcmp.gt.f32.partialorder %v222, %v674
      %v677 = vsel %vm675, 1, 0
      %v678 = vsel %vm676, 1, 0
      %v679 = vcvt.s32.f32 %v677
      %v680 = vcvt.s32.f32 %v678
      %v681 = vadd.f32 %v667, %v679
      %v682 = vadd.f32 %v668, %v680
      %v683 = vmul.f32 %v195, 0.030303031
      %v684 = vmul.f32 %v196, 0.030303031
      %v685 = vmul.f32 %v671, %v683
      %v686 = vmul.f32 %v672, %v684
      %v687 = vadd.f32 %v673, %v685
      %v688 = vadd.f32 %v674, %v686
      %vm689 = vcmp.gt.f32.partialorder %v221, %v687
      %vm690 = vcmp.gt.f32.partialorder %v222, %v688
      %v691 = vsel %vm689, 1, 0
      %v692 = vsel %vm690, 1, 0
      %v693 = vcvt.s32.f32 %v691
      %v694 = vcvt.s32.f32 %v692
      %v695 = vadd.f32 %v681, %v693
      %v696 = vadd.f32 %v682, %v694
      %v697 = vmul.f32 %v195, 0.029411765
      %v698 = vmul.f32 %v196, 0.029411765
      %v699 = vmul.f32 %v685, %v697
      %v700 = vmul.f32 %v686, %v698
      %v701 = vadd.f32 %v687, %v699
      %v702 = vadd.f32 %v688, %v700
      %vm703 = vcmp.gt.f32.partialorder %v221, %v701
      %vm704 = vcmp.gt.f32.partialorder %v222, %v702
      %v705 = vsel %vm703, 1, 0
      %v706 = vsel %vm704, 1, 0
      %v707 = vcvt.s32.f32 %v705
      %v708 = vcvt.s32.f32 %v706
      %v709 = vadd.f32 %v695, %v707
      %v710 = vadd.f32 %v696, %v708
      %v711 = vmul.f32 %v195, 0.028571429
      %v712 = vmul.f32 %v196, 0.028571429
      %v713 = vmul.f32 %v699, %v711
      %v714 = vmul.f32 %v700, %v712
      %v715 = vadd.f32 %v701, %v713
      %v716 = vadd.f32 %v702, %v714
      %vm717 = vcmp.gt.f32.partialorder %v221, %v715
      %vm718 = vcmp.gt.f32.partialorder %v222, %v716
      %v719 = vsel %vm717, 1, 0
      %v720 = vsel %vm718, 1, 0
      %v721 = vcvt.s32.f32 %v719
      %v722 = vcvt.s32.f32 %v720
      %v723 = vadd.f32 %v709, %v721
      %v724 = vadd.f32 %v710, %v722
      %v725 = vmul.f32 %v195, 0.027777778
      %v726 = vmul.f32 %v196, 0.027777778
      %v727 = vmul.f32 %v713, %v725
      %v728 = vmul.f32 %v714, %v726
      %v729 = vadd.f32 %v715, %v727
      %v730 = vadd.f32 %v716, %v728
      %vm731 = vcmp.gt.f32.partialorder %v221, %v729
      %vm732 = vcmp.gt.f32.partialorder %v222, %v730
      %v733 = vsel %vm731, 1, 0
      %v734 = vsel %vm732, 1, 0
      %v735 = vcvt.s32.f32 %v733
      %v736 = vcvt.s32.f32 %v734
      %v737 = vadd.f32 %v723, %v735
      %v738 = vadd.f32 %v724, %v736
      %v739 = vmul.f32 %v195, 0.027027028
      %v740 = vmul.f32 %v196, 0.027027028
      %v741 = vmul.f32 %v727, %v739
      %v742 = vmul.f32 %v728, %v740
      %v743 = vadd.f32 %v729, %v741
      %v744 = vadd.f32 %v730, %v742
      %vm745 = vcmp.gt.f32.partialorder %v221, %v743
      %vm746 = vcmp.gt.f32.partialorder %v222, %v744
      %v747 = vsel %vm745, 1, 0
      %v748 = vsel %vm746, 1, 0
      %v749 = vcvt.s32.f32 %v747
      %v750 = vcvt.s32.f32 %v748
      %v751 = vadd.f32 %v737, %v749
      %v752 = vadd.f32 %v738, %v750
      %v753 = vmul.f32 %v195, 0.02631579
      %v754 = vmul.f32 %v196, 0.02631579
      %v755 = vmul.f32 %v741, %v753
      %v756 = vmul.f32 %v742, %v754
      %v757 = vadd.f32 %v743, %v755
      %v758 = vadd.f32 %v744, %v756
      %vm759 = vcmp.gt.f32.partialorder %v221, %v757
      %vm760 = vcmp.gt.f32.partialorder %v222, %v758
      %v761 = vsel %vm759, 1, 0
      %v762 = vsel %vm760, 1, 0
      %v763 = vcvt.s32.f32 %v761
      %v764 = vcvt.s32.f32 %v762
      %v765 = vadd.f32 %v751, %v763
      %v766 = vadd.f32 %v752, %v764
      %v767 = vmul.f32 %v195, 0.025641026
      %v768 = vmul.f32 %v196, 0.025641026
      %v769 = vmul.f32 %v755, %v767
      %v770 = vmul.f32 %v756, %v768
      %v771 = vadd.f32 %v757, %v769
      %v772 = vadd.f32 %v758, %v770
      %vm773 = vcmp.gt.f32.partialorder %v221, %v771
      %vm774 = vcmp.gt.f32.partialorder %v222, %v772
      %v775 = vsel %vm773, 1, 0
      %v776 = vsel %vm774, 1, 0
      %v777 = vcvt.s32.f32 %v775
      %v778 = vcvt.s32.f32 %v776
      %v779 = vadd.f32 %v765, %v777
      %v780 = vadd.f32 %v766, %v778
      %v781 = vmul.f32 %v195, 0.025
      %v782 = vmul.f32 %v196, 0.025
      %v783 = vmul.f32 %v769, %v781
      %v784 = vmul.f32 %v770, %v782
      %v785 = vadd.f32 %v771, %v783
      %v786 = vadd.f32 %v772, %v784
      %vm787 = vcmp.gt.f32.partialorder %v221, %v785
      %vm788 = vcmp.gt.f32.partialorder %v222, %v786
      %v789 = vsel %vm787, 1, 0
      %v790 = vsel %vm788, 1, 0
      %v791 = vcvt.s32.f32 %v789
      %v792 = vcvt.s32.f32 %v790
      %v793 = vadd.f32 %v779, %v791
      %v794 = vadd.f32 %v780, %v792
      %v795 = vmul.f32 %v195, 0.024390243
      %v796 = vmul.f32 %v196, 0.024390243
      %v797 = vmul.f32 %v783, %v795
      %v798 = vmul.f32 %v784, %v796
      %v799 = vadd.f32 %v785, %v797
      %v800 = vadd.f32 %v786, %v798
      %vm801 = vcmp.gt.f32.partialorder %v221, %v799
      %vm802 = vcmp.gt.f32.partialorder %v222, %v800
      %v803 = vsel %vm801, 1, 0
      %v804 = vsel %vm802, 1, 0
      %v805 = vcvt.s32.f32 %v803
      %v806 = vcvt.s32.f32 %v804
      %v807 = vadd.f32 %v793, %v805
      %v808 = vadd.f32 %v794, %v806
      %v809 = vmul.f32 %v195, 0.023809524
      %v810 = vmul.f32 %v196, 0.023809524
      %v811 = vmul.f32 %v797, %v809
      %v812 = vmul.f32 %v798, %v810
      %v813 = vadd.f32 %v799, %v811
      %v814 = vadd.f32 %v800, %v812
      %vm815 = vcmp.gt.f32.partialorder %v221, %v813
      %vm816 = vcmp.gt.f32.partialorder %v222, %v814
      %v817 = vsel %vm815, 1, 0
      %v818 = vsel %vm816, 1, 0
      %v819 = vcvt.s32.f32 %v817
      %v820 = vcvt.s32.f32 %v818
      %v821 = vadd.f32 %v807, %v819
      %v822 = vadd.f32 %v808, %v820
      %v823 = vmul.f32 %v195, 0.023255814
      %v824 = vmul.f32 %v196, 0.023255814
      %v825 = vmul.f32 %v811, %v823
      %v826 = vmul.f32 %v812, %v824
      %v827 = vadd.f32 %v813, %v825
      %v828 = vadd.f32 %v814, %v826
      %vm829 = vcmp.gt.f32.partialorder %v221, %v827
      %vm830 = vcmp.gt.f32.partialorder %v222, %v828
      %v831 = vsel %vm829, 1, 0
      %v832 = vsel %vm830, 1, 0
      %v833 = vcvt.s32.f32 %v831
      %v834 = vcvt.s32.f32 %v832
      %v835 = vadd.f32 %v821, %v833
      %v836 = vadd.f32 %v822, %v834
      %v837 = vmul.f32 %v195, 0.022727273
      %v838 = vmul.f32 %v196, 0.022727273
      %v839 = vmul.f32 %v825, %v837
      %v840 = vmul.f32 %v826, %v838
      %v841 = vadd.f32 %v827, %v839
      %v842 = vadd.f32 %v828, %v840
      %vm843 = vcmp.gt.f32.partialorder %v221, %v841
      %vm844 = vcmp.gt.f32.partialorder %v222, %v842
      %v845 = vsel %vm843, 1, 0
      %v846 = vsel %vm844, 1, 0
      %v847 = vcvt.s32.f32 %v845
      %v848 = vcvt.s32.f32 %v846
      %v849 = vadd.f32 %v835, %v847
      %v850 = vadd.f32 %v836, %v848
      %v851 = vmul.f32 %v195, 0.022222223
      %v852 = vmul.f32 %v196, 0.022222223
      %v853 = vmul.f32 %v839, %v851
      %v854 = vmul.f32 %v840, %v852
      %v855 = vadd.f32 %v841, %v853
      %v856 = vadd.f32 %v842, %v854
      %vm857 = vcmp.gt.f32.partialorder %v221, %v855
      %vm858 = vcmp.gt.f32.partialorder %v222, %v856
      %v859 = vsel %vm857, 1, 0
      %v860 = vsel %vm858, 1, 0
      %v861 = vcvt.s32.f32 %v859
      %v862 = vcvt.s32.f32 %v860
      %v863 = vadd.f32 %v849, %v861
      %v864 = vadd.f32 %v850, %v862
      %v865 = vmul.f32 %v195, 0.02173913
      %v866 = vmul.f32 %v196, 0.02173913
      %v867 = vmul.f32 %v853, %v865
      %v868 = vmul.f32 %v854, %v866
      %v869 = vadd.f32 %v855, %v867
      %v870 = vadd.f32 %v856, %v868
      %vm871 = vcmp.gt.f32.partialorder %v221, %v869
      %vm872 = vcmp.gt.f32.partialorder %v222, %v870
      %v873 = vsel %vm871, 1, 0
      %v874 = vsel %vm872, 1, 0
      %v875 = vcvt.s32.f32 %v873
      %v876 = vcvt.s32.f32 %v874
      %v877 = vadd.f32 %v863, %v875
      %v878 = vadd.f32 %v864, %v876
      %879 = vst [vmem:[#allocation8] sm:$0xff] %v877
      %880 = vst [vmem:[#allocation8 + $0x8] sm:$0xff] %v878
    $region29: #{tpu_custom_call.1} parent=1 // pred_fallthru
      _
    %p881 = scmp.ge.f32.partialorder %s206, 10.0
    // Predicated region
    $region30: #{tpu_custom_call.1} parent=1 // pred_check
      %p882 = pneg %p881
    $region31: #{tpu_custom_call.1} parent=1 // pred_check_branch
      %884 = sbr.rel (%p882) target = $region33
    $region32: #{tpu_custom_call.1} parent=1 // pred_region
      %v885 = vlog2.pop %v195
      %v886 = vmul.f32 %v885, 0.6931472
      %v887 = vlog2.pop %v196
      %v888 = vmul.f32 %v887, 0.6931472
      %v889 = vrsqrt.pop %v195
      %v890 = vmul.f32 %v195, %v889
      %vm891 = vcmp.eq.f32.partialorder %v195, inf
      %v892 = vsel %vm891, %v195, %v890
      %vm893 = vcmp.eq.f32.partialorder %v195, 0.0
      %v894 = vand.u32 %v195, 2147483648
      %v895 = vsel %vm893, %v894, %v892
      %v896 = vrsqrt.pop %v196
      %v897 = vmul.f32 %v196, %v896
      %vm898 = vcmp.eq.f32.partialorder %v196, inf
      %v899 = vsel %vm898, %v196, %v897
      %vm900 = vcmp.eq.f32.partialorder %v196, 0.0
      %v901 = vand.u32 %v196, 2147483648
      %v902 = vsel %vm900, %v901, %v899
      %v903 = vmul.f32 %v895, 2.53
      %v904 = vmul.f32 %v902, 2.53
      %v905 = vadd.f32 %v903, 0.931
      %v906 = vadd.f32 %v904, 0.931
      %v907 = vmul.f32 %v905, 0.02483
      %v908 = vmul.f32 %v906, 0.02483
      %v909 = vadd.f32 %v907, -0.059
      %v910 = vadd.f32 %v908, -0.059
      %v911 = vsub.f32 %v905, 3.4
      %v912 = vsub.f32 %v906, 3.4
      %v913 = vrcp.pop %v911
      %v914 = vmul.f32 1.1328, %v913
      %v915 = vrcp.pop %v912
      %v916 = vmul.f32 1.1328, %v915
      %v917 = vadd.f32 %v914, 1.1239
      %v918 = vadd.f32 %v916, 1.1239
      %v919 = vsub.f32 %v905, 2.0
      %v920 = vsub.f32 %v906, 2.0
      %v921 = vrcp.pop %v919
      %v922 = vmul.f32 3.6224, %v921
      %v923 = vrcp.pop %v920
      %v924 = vmul.f32 3.6224, %v923
      %v925 = vsub.f32 0.9277, %v922
      %v926 = vsub.f32 0.9277, %v924
      %v927 = vfloor.f32 %v195
      %v928 = vfloor.f32 %v196
      %v929 = vld [vmem:[#allocation7] sm:$0xff]
      %v930 = vld [vmem:[#allocation7 + $0x8] sm:$0xff]
      %v931 = vsub.f32 %v929, 0.5
      %v932 = vsub.f32 %v930, 0.5
      %s933 = scalar_lea.vmem [#allocation7], 16
      %v934 = vld [vmem:[%s933] sm:$0xff]
      %v935 = vld [vmem:[%s933 + $0x8] sm:$0xff]
      %v936 = vand.u32 2147483647, %v931
      %v937 = vand.u32 2147483647, %v932
      %v938 = vsub.f32 0.5, %v936
      %v939 = vsub.f32 0.5, %v937
      %v940 = vmax.f32 %v938, 1e-06
      %v941 = vmax.f32 %v939, 1e-06
      %v942 = vrcp.pop %v940
      %v943 = vmul.f32 1.0, %v942
      %v944 = vrcp.pop %v941
      %v945 = vmul.f32 1.0, %v944
      %v946 = vmul.f32 %v909, 2.0
      %v947 = vmul.f32 %v910, 2.0
      %v948 = vmul.f32 %v946, %v943
      %v949 = vmul.f32 %v947, %v945
      %v950 = vadd.f32 %v948, %v905
      %v951 = vadd.f32 %v949, %v906
      %v952 = vmul.f32 %v950, %v931
      %v953 = vmul.f32 %v951, %v932
      %v954 = vadd.f32 %v952, %v195
      %v955 = vadd.f32 %v953, %v196
      %v956 = vadd.f32 %v954, 0.43
      %v957 = vadd.f32 %v955, 0.43
      %v958 = vfloor.f32 %v956
      %v959 = vfloor.f32 %v957
      %vm960 = vcmp.ge.f32.partialorder %v940, 0.07
      %vm961 = vcmp.ge.f32.partialorder %v941, 0.07
      %vm962 = vcmp.le.f32.partialorder %v934, %v925
      %vm963 = vcmp.le.f32.partialorder %v935, %v926
      %vm964 = vmand %vm960, %vm962
      %vm965 = vmand %vm961, %vm963
      %vm966 = vcmp.lt.f32.partialorder %v958, 0.0
      %vm967 = vcmp.lt.f32.partialorder %v959, 0.0
      %vm968 = vcmp.lt.f32.partialorder %v940, 0.013
      %vm969 = vcmp.lt.f32.partialorder %v941, 0.013
      %vm970 = vcmp.gt.f32.partialorder %v934, %v940
      %vm971 = vcmp.gt.f32.partialorder %v935, %v941
      %vm972 = vmand %vm968, %vm970
      %vm973 = vmand %vm969, %vm971
      %vm974 = vmor %vm966, %vm972
      %vm975 = vmor %vm967, %vm973
      %v976 = vmul.f32 %v934, %v917
      %v977 = vmul.f32 %v935, %v918
      %v978 = vmul.f32 %v909, %v943
      %v979 = vmul.f32 %v910, %v945
      %v980 = vmul.f32 %v978, %v943
      %v981 = vmul.f32 %v979, %v945
      %v982 = vadd.f32 %v980, %v905
      %v983 = vadd.f32 %v981, %v906
      %v984 = vrcp.pop %v982
      %v985 = vmul.f32 %v976, %v984
      %v986 = vrcp.pop %v983
      %v987 = vmul.f32 %v977, %v986
      %v988 = vlog2.pop %v985
      %v989 = vmul.f32 %v988, 0.6931472
      %v990 = vlog2.pop %v987
      %v991 = vmul.f32 %v990, 0.6931472
      %v992 = vmul.f32 %v958, %v886
      %v993 = vmul.f32 %v959, %v888
      %v994 = vsub.f32 %v992, %v195
      %v995 = vsub.f32 %v993, %v196
      %v996 = vadd.f32 %v958, 1.0
      %v997 = vadd.f32 %v959, 1.0
      %v998 = vadd.f32 %v996, 8.0
      %v999 = vadd.f32 %v997, 8.0
      %v1000 = vrcp.pop %v998
      %v1001 = vmul.f32 1.0, %v1000
      %v1002 = vrcp.pop %v999
      %v1003 = vmul.f32 1.0, %v1002
      %v1004 = vsub.f32 %v998, 0.5
      %v1005 = vsub.f32 %v999, 0.5
      %v1006 = vlog2.pop %v998
      %v1007 = vmul.f32 %v1006, 0.6931472
      %v1008 = vlog2.pop %v999
      %v1009 = vmul.f32 %v1008, 0.6931472
      %v1010 = vmul.f32 %v1004, %v1007
      %v1011 = vmul.f32 %v1005, %v1009
      %v1012 = vsub.f32 %v1010, %v998
      %v1013 = vsub.f32 %v1011, %v999
      %v1014 = vadd.f32 %v1012, 0.9189385
      %v1015 = vadd.f32 %v1013, 0.9189385
      %v1016 = vmul.f32 %v1001, %v1001
      %v1017 = vmul.f32 %v1003, %v1003
      %v1018 = vmul.f32 %v1016, 0.0027777778
      %v1019 = vmul.f32 %v1017, 0.0027777778
      %v1020 = vsub.f32 0.083333336, %v1018
      %v1021 = vsub.f32 0.083333336, %v1019
      %v1022 = vmul.f32 %v1001, %v1020
      %v1023 = vmul.f32 %v1003, %v1021
      %v1024 = vadd.f32 %v1014, %v1022
      %v1025 = vadd.f32 %v1015, %v1023
      %v1026 = vadd.f32 %v996, 1.0
      %v1027 = vadd.f32 %v997, 1.0
      %v1028 = vmul.f32 %v996, %v1026
      %v1029 = vmul.f32 %v997, %v1027
      %v1030 = vadd.f32 %v996, 2.0
      %v1031 = vadd.f32 %v997, 2.0
      %v1032 = vmul.f32 %v1028, %v1030
      %v1033 = vmul.f32 %v1029, %v1031
      %v1034 = vadd.f32 %v996, 3.0
      %v1035 = vadd.f32 %v997, 3.0
      %v1036 = vmul.f32 %v1032, %v1034
      %v1037 = vmul.f32 %v1033, %v1035
      %v1038 = vlog2.pop %v1036
      %v1039 = vmul.f32 %v1038, 0.6931472
      %v1040 = vlog2.pop %v1037
      %v1041 = vmul.f32 %v1040, 0.6931472
      %v1042 = vadd.f32 %v996, 4.0
      %v1043 = vadd.f32 %v997, 4.0
      %v1044 = vadd.f32 %v996, 5.0
      %v1045 = vadd.f32 %v997, 5.0
      %v1046 = vmul.f32 %v1042, %v1044
      %v1047 = vmul.f32 %v1043, %v1045
      %v1048 = vadd.f32 %v996, 6.0
      %v1049 = vadd.f32 %v997, 6.0
      %v1050 = vmul.f32 %v1046, %v1048
      %v1051 = vmul.f32 %v1047, %v1049
      %v1052 = vadd.f32 %v996, 7.0
      %v1053 = vadd.f32 %v997, 7.0
      %v1054 = vmul.f32 %v1050, %v1052
      %v1055 = vmul.f32 %v1051, %v1053
      %v1056 = vlog2.pop %v1054
      %v1057 = vmul.f32 %v1056, 0.6931472
      %v1058 = vlog2.pop %v1055
      %v1059 = vmul.f32 %v1058, 0.6931472
      %v1060 = vadd.f32 %v1039, %v1057
      %v1061 = vadd.f32 %v1041, %v1059
      %v1062 = vsub.f32 %v1024, %v1060
      %v1063 = vsub.f32 %v1025, %v1061
      %v1064 = vsub.f32 %v994, %v1062
      %v1065 = vsub.f32 %v995, %v1063
      %vm1066 = vmxor %vm974, 1
      %vm1067 = vmxor %vm975, 1
      %vm1068 = vcmp.le.f32.partialorder %v989, %v1064
      %vm1069 = vcmp.le.f32.partialorder %v991, %v1065
      %vm1070 = vmand %vm1066, %vm1068
      %vm1071 = vmand %vm1067, %vm1069
      %vm1072 = vmor %vm964, %vm1070
      %vm1073 = vmor %vm965, %vm1071
      %v1074 = vsel %vm1072, %v958, %v927
      %v1075 = vsel %vm1073, %v959, %v928
      %s1076 = scalar_lea.vmem [#allocation7], 32
      %v1077 = vld [vmem:[%s1076] sm:$0xff]
      %v1078 = vld [vmem:[%s1076 + $0x8] sm:$0xff]
      %v1079 = vsub.f32 %v1077, 0.5
      %v1080 = vsub.f32 %v1078, 0.5
      %s1081 = scalar_lea.vmem [#allocation7], 48
      %v1082 = vld [vmem:[%s1081] sm:$0xff]
      %v1083 = vld [vmem:[%s1081 + $0x8] sm:$0xff]
      %v1084 = vand.u32 2147483647, %v1079
      %v1085 = vand.u32 2147483647, %v1080
      %v1086 = vsub.f32 0.5, %v1084
      %v1087 = vsub.f32 0.5, %v1085
      %v1088 = vmax.f32 %v1086, 1e-06
      %v1089 = vmax.f32 %v1087, 1e-06
      %v1090 = vrcp.pop %v1088
      %v1091 = vmul.f32 1.0, %v1090
      %v1092 = vrcp.pop %v1089
      %v1093 = vmul.f32 1.0, %v1092
      %v1094 = vmul.f32 %v946, %v1091
      %v1095 = vmul.f32 %v947, %v1093
      %v1096 = vadd.f32 %v1094, %v905
      %v1097 = vadd.f32 %v1095, %v906
      %v1098 = vmul.f32 %v1096, %v1079
      %v1099 = vmul.f32 %v1097, %v1080
      %v1100 = vadd.f32 %v1098, %v195
      %v1101 = vadd.f32 %v1099, %v196
      %v1102 = vadd.f32 %v1100, 0.43
      %v1103 = vadd.f32 %v1101, 0.43
      %v1104 = vfloor.f32 %v1102
      %v1105 = vfloor.f32 %v1103
      %vm1106 = vcmp.ge.f32.partialorder %v1088, 0.07
      %vm1107 = vcmp.ge.f32.partialorder %v1089, 0.07
      %vm1108 = vcmp.le.f32.partialorder %v1082, %v925
      %vm1109 = vcmp.le.f32.partialorder %v1083, %v926
      %vm1110 = vmand %vm1106, %vm1108
      %vm1111 = vmand %vm1107, %vm1109
      %vm1112 = vcmp.lt.f32.partialorder %v1104, 0.0
      %vm1113 = vcmp.lt.f32.partialorder %v1105, 0.0
      %vm1114 = vcmp.lt.f32.partialorder %v1088, 0.013
      %vm1115 = vcmp.lt.f32.partialorder %v1089, 0.013
      %vm1116 = vcmp.gt.f32.partialorder %v1082, %v1088
      %vm1117 = vcmp.gt.f32.partialorder %v1083, %v1089
      %vm1118 = vmand %vm1114, %vm1116
      %vm1119 = vmand %vm1115, %vm1117
      %vm1120 = vmor %vm1112, %vm1118
      %vm1121 = vmor %vm1113, %vm1119
      %v1122 = vmul.f32 %v1082, %v917
      %v1123 = vmul.f32 %v1083, %v918
      %v1124 = vmul.f32 %v909, %v1091
      %v1125 = vmul.f32 %v910, %v1093
      %v1126 = vmul.f32 %v1124, %v1091
      %v1127 = vmul.f32 %v1125, %v1093
      %v1128 = vadd.f32 %v1126, %v905
      %v1129 = vadd.f32 %v1127, %v906
      %v1130 = vrcp.pop %v1128
      %v1131 = vmul.f32 %v1122, %v1130
      %v1132 = vrcp.pop %v1129
      %v1133 = vmul.f32 %v1123, %v1132
      %v1134 = vlog2.pop %v1131
      %v1135 = vmul.f32 %v1134, 0.6931472
      %v1136 = vlog2.pop %v1133
      %v1137 = vmul.f32 %v1136, 0.6931472
      %v1138 = vmul.f32 %v1104, %v886
      %v1139 = vmul.f32 %v1105, %v888
      %v1140 = vsub.f32 %v1138, %v195
      %v1141 = vsub.f32 %v1139, %v196
      %v1142 = vadd.f32 %v1104, 1.0
      %v1143 = vadd.f32 %v1105, 1.0
      %v1144 = vadd.f32 %v1142, 8.0
      %v1145 = vadd.f32 %v1143, 8.0
      %v1146 = vrcp.pop %v1144
      %v1147 = vmul.f32 1.0, %v1146
      %v1148 = vrcp.pop %v1145
      %v1149 = vmul.f32 1.0, %v1148
      %v1150 = vsub.f32 %v1144, 0.5
      %v1151 = vsub.f32 %v1145, 0.5
      %v1152 = vlog2.pop %v1144
      %v1153 = vmul.f32 %v1152, 0.6931472
      %v1154 = vlog2.pop %v1145
      %v1155 = vmul.f32 %v1154, 0.6931472
      %v1156 = vmul.f32 %v1150, %v1153
      %v1157 = vmul.f32 %v1151, %v1155
      %v1158 = vsub.f32 %v1156, %v1144
      %v1159 = vsub.f32 %v1157, %v1145
      %v1160 = vadd.f32 %v1158, 0.9189385
      %v1161 = vadd.f32 %v1159, 0.9189385
      %v1162 = vmul.f32 %v1147, %v1147
      %v1163 = vmul.f32 %v1149, %v1149
      %v1164 = vmul.f32 %v1162, 0.0027777778
      %v1165 = vmul.f32 %v1163, 0.0027777778
      %v1166 = vsub.f32 0.083333336, %v1164
      %v1167 = vsub.f32 0.083333336, %v1165
      %v1168 = vmul.f32 %v1147, %v1166
      %v1169 = vmul.f32 %v1149, %v1167
      %v1170 = vadd.f32 %v1160, %v1168
      %v1171 = vadd.f32 %v1161, %v1169
      %v1172 = vadd.f32 %v1142, 1.0
      %v1173 = vadd.f32 %v1143, 1.0
      %v1174 = vmul.f32 %v1142, %v1172
      %v1175 = vmul.f32 %v1143, %v1173
      %v1176 = vadd.f32 %v1142, 2.0
      %v1177 = vadd.f32 %v1143, 2.0
      %v1178 = vmul.f32 %v1174, %v1176
      %v1179 = vmul.f32 %v1175, %v1177
      %v1180 = vadd.f32 %v1142, 3.0
      %v1181 = vadd.f32 %v1143, 3.0
      %v1182 = vmul.f32 %v1178, %v1180
      %v1183 = vmul.f32 %v1179, %v1181
      %v1184 = vlog2.pop %v1182
      %v1185 = vmul.f32 %v1184, 0.6931472
      %v1186 = vlog2.pop %v1183
      %v1187 = vmul.f32 %v1186, 0.6931472
      %v1188 = vadd.f32 %v1142, 4.0
      %v1189 = vadd.f32 %v1143, 4.0
      %v1190 = vadd.f32 %v1142, 5.0
      %v1191 = vadd.f32 %v1143, 5.0
      %v1192 = vmul.f32 %v1188, %v1190
      %v1193 = vmul.f32 %v1189, %v1191
      %v1194 = vadd.f32 %v1142, 6.0
      %v1195 = vadd.f32 %v1143, 6.0
      %v1196 = vmul.f32 %v1192, %v1194
      %v1197 = vmul.f32 %v1193, %v1195
      %v1198 = vadd.f32 %v1142, 7.0
      %v1199 = vadd.f32 %v1143, 7.0
      %v1200 = vmul.f32 %v1196, %v1198
      %v1201 = vmul.f32 %v1197, %v1199
      %v1202 = vlog2.pop %v1200
      %v1203 = vmul.f32 %v1202, 0.6931472
      %v1204 = vlog2.pop %v1201
      %v1205 = vmul.f32 %v1204, 0.6931472
      %v1206 = vadd.f32 %v1185, %v1203
      %v1207 = vadd.f32 %v1187, %v1205
      %v1208 = vsub.f32 %v1170, %v1206
      %v1209 = vsub.f32 %v1171, %v1207
      %v1210 = vsub.f32 %v1140, %v1208
      %v1211 = vsub.f32 %v1141, %v1209
      %vm1212 = vmxor %vm1120, 1
      %vm1213 = vmxor %vm1121, 1
      %vm1214 = vcmp.le.f32.partialorder %v1135, %v1210
      %vm1215 = vcmp.le.f32.partialorder %v1137, %v1211
      %vm1216 = vmand %vm1212, %vm1214
      %vm1217 = vmand %vm1213, %vm1215
      %vm1218 = vmor %vm1110, %vm1216
      %vm1219 = vmor %vm1111, %vm1217
      %vm1220 = vmxor %vm1072, 1
      %vm1221 = vmxor %vm1073, 1
      %vm1222 = vmand %vm1218, %vm1220
      %vm1223 = vmand %vm1219, %vm1221
      %v1224 = vsel %vm1222, %v1104, %v1074
      %v1225 = vsel %vm1223, %v1105, %v1075
      %vm1226 = vmor %vm1072, %vm1218
      %vm1227 = vmor %vm1073, %vm1219
      %s1228 = scalar_lea.vmem [#allocation7], 64
      %v1229 = vld [vmem:[%s1228] sm:$0xff]
      %v1230 = vld [vmem:[%s1228 + $0x8] sm:$0xff]
      %v1231 = vsub.f32 %v1229, 0.5
      %v1232 = vsub.f32 %v1230, 0.5
      %s1233 = scalar_lea.vmem [#allocation7], 80
      %v1234 = vld [vmem:[%s1233] sm:$0xff]
      %v1235 = vld [vmem:[%s1233 + $0x8] sm:$0xff]
      %v1236 = vand.u32 2147483647, %v1231
      %v1237 = vand.u32 2147483647, %v1232
      %v1238 = vsub.f32 0.5, %v1236
      %v1239 = vsub.f32 0.5, %v1237
      %v1240 = vmax.f32 %v1238, 1e-06
      %v1241 = vmax.f32 %v1239, 1e-06
      %v1242 = vrcp.pop %v1240
      %v1243 = vmul.f32 1.0, %v1242
      %v1244 = vrcp.pop %v1241
      %v1245 = vmul.f32 1.0, %v1244
      %v1246 = vmul.f32 %v946, %v1243
      %v1247 = vmul.f32 %v947, %v1245
      %v1248 = vadd.f32 %v1246, %v905
      %v1249 = vadd.f32 %v1247, %v906
      %v1250 = vmul.f32 %v1248, %v1231
      %v1251 = vmul.f32 %v1249, %v1232
      %v1252 = vadd.f32 %v1250, %v195
      %v1253 = vadd.f32 %v1251, %v196
      %v1254 = vadd.f32 %v1252, 0.43
      %v1255 = vadd.f32 %v1253, 0.43
      %v1256 = vfloor.f32 %v1254
      %v1257 = vfloor.f32 %v1255
      %vm1258 = vcmp.ge.f32.partialorder %v1240, 0.07
      %vm1259 = vcmp.ge.f32.partialorder %v1241, 0.07
      %vm1260 = vcmp.le.f32.partialorder %v1234, %v925
      %vm1261 = vcmp.le.f32.partialorder %v1235, %v926
      %vm1262 = vmand %vm1258, %vm1260
      %vm1263 = vmand %vm1259, %vm1261
      %vm1264 = vcmp.lt.f32.partialorder %v1256, 0.0
      %vm1265 = vcmp.lt.f32.partialorder %v1257, 0.0
      %vm1266 = vcmp.lt.f32.partialorder %v1240, 0.013
      %vm1267 = vcmp.lt.f32.partialorder %v1241, 0.013
      %vm1268 = vcmp.gt.f32.partialorder %v1234, %v1240
      %vm1269 = vcmp.gt.f32.partialorder %v1235, %v1241
      %vm1270 = vmand %vm1266, %vm1268
      %vm1271 = vmand %vm1267, %vm1269
      %vm1272 = vmor %vm1264, %vm1270
      %vm1273 = vmor %vm1265, %vm1271
      %v1274 = vmul.f32 %v1234, %v917
      %v1275 = vmul.f32 %v1235, %v918
      %v1276 = vmul.f32 %v909, %v1243
      %v1277 = vmul.f32 %v910, %v1245
      %v1278 = vmul.f32 %v1276, %v1243
      %v1279 = vmul.f32 %v1277, %v1245
      %v1280 = vadd.f32 %v1278, %v905
      %v1281 = vadd.f32 %v1279, %v906
      %v1282 = vrcp.pop %v1280
      %v1283 = vmul.f32 %v1274, %v1282
      %v1284 = vrcp.pop %v1281
      %v1285 = vmul.f32 %v1275, %v1284
      %v1286 = vlog2.pop %v1283
      %v1287 = vmul.f32 %v1286, 0.6931472
      %v1288 = vlog2.pop %v1285
      %v1289 = vmul.f32 %v1288, 0.6931472
      %v1290 = vmul.f32 %v1256, %v886
      %v1291 = vmul.f32 %v1257, %v888
      %v1292 = vsub.f32 %v1290, %v195
      %v1293 = vsub.f32 %v1291, %v196
      %v1294 = vadd.f32 %v1256, 1.0
      %v1295 = vadd.f32 %v1257, 1.0
      %v1296 = vadd.f32 %v1294, 8.0
      %v1297 = vadd.f32 %v1295, 8.0
      %v1298 = vrcp.pop %v1296
      %v1299 = vmul.f32 1.0, %v1298
      %v1300 = vrcp.pop %v1297
      %v1301 = vmul.f32 1.0, %v1300
      %v1302 = vsub.f32 %v1296, 0.5
      %v1303 = vsub.f32 %v1297, 0.5
      %v1304 = vlog2.pop %v1296
      %v1305 = vmul.f32 %v1304, 0.6931472
      %v1306 = vlog2.pop %v1297
      %v1307 = vmul.f32 %v1306, 0.6931472
      %v1308 = vmul.f32 %v1302, %v1305
      %v1309 = vmul.f32 %v1303, %v1307
      %v1310 = vsub.f32 %v1308, %v1296
      %v1311 = vsub.f32 %v1309, %v1297
      %v1312 = vadd.f32 %v1310, 0.9189385
      %v1313 = vadd.f32 %v1311, 0.9189385
      %v1314 = vmul.f32 %v1299, %v1299
      %v1315 = vmul.f32 %v1301, %v1301
      %v1316 = vmul.f32 %v1314, 0.0027777778
      %v1317 = vmul.f32 %v1315, 0.0027777778
      %v1318 = vsub.f32 0.083333336, %v1316
      %v1319 = vsub.f32 0.083333336, %v1317
      %v1320 = vmul.f32 %v1299, %v1318
      %v1321 = vmul.f32 %v1301, %v1319
      %v1322 = vadd.f32 %v1312, %v1320
      %v1323 = vadd.f32 %v1313, %v1321
      %v1324 = vadd.f32 %v1294, 1.0
      %v1325 = vadd.f32 %v1295, 1.0
      %v1326 = vmul.f32 %v1294, %v1324
      %v1327 = vmul.f32 %v1295, %v1325
      %v1328 = vadd.f32 %v1294, 2.0
      %v1329 = vadd.f32 %v1295, 2.0
      %v1330 = vmul.f32 %v1326, %v1328
      %v1331 = vmul.f32 %v1327, %v1329
      %v1332 = vadd.f32 %v1294, 3.0
      %v1333 = vadd.f32 %v1295, 3.0
      %v1334 = vmul.f32 %v1330, %v1332
      %v1335 = vmul.f32 %v1331, %v1333
      %v1336 = vlog2.pop %v1334
      %v1337 = vmul.f32 %v1336, 0.6931472
      %v1338 = vlog2.pop %v1335
      %v1339 = vmul.f32 %v1338, 0.6931472
      %v1340 = vadd.f32 %v1294, 4.0
      %v1341 = vadd.f32 %v1295, 4.0
      %v1342 = vadd.f32 %v1294, 5.0
      %v1343 = vadd.f32 %v1295, 5.0
      %v1344 = vmul.f32 %v1340, %v1342
      %v1345 = vmul.f32 %v1341, %v1343
      %v1346 = vadd.f32 %v1294, 6.0
      %v1347 = vadd.f32 %v1295, 6.0
      %v1348 = vmul.f32 %v1344, %v1346
      %v1349 = vmul.f32 %v1345, %v1347
      %v1350 = vadd.f32 %v1294, 7.0
      %v1351 = vadd.f32 %v1295, 7.0
      %v1352 = vmul.f32 %v1348, %v1350
      %v1353 = vmul.f32 %v1349, %v1351
      %v1354 = vlog2.pop %v1352
      %v1355 = vmul.f32 %v1354, 0.6931472
      %v1356 = vlog2.pop %v1353
      %v1357 = vmul.f32 %v1356, 0.6931472
      %v1358 = vadd.f32 %v1337, %v1355
      %v1359 = vadd.f32 %v1339, %v1357
      %v1360 = vsub.f32 %v1322, %v1358
      %v1361 = vsub.f32 %v1323, %v1359
      %v1362 = vsub.f32 %v1292, %v1360
      %v1363 = vsub.f32 %v1293, %v1361
      %vm1364 = vmxor %vm1272, 1
      %vm1365 = vmxor %vm1273, 1
      %vm1366 = vcmp.le.f32.partialorder %v1287, %v1362
      %vm1367 = vcmp.le.f32.partialorder %v1289, %v1363
      %vm1368 = vmand %vm1364, %vm1366
      %vm1369 = vmand %vm1365, %vm1367
      %vm1370 = vmor %vm1262, %vm1368
      %vm1371 = vmor %vm1263, %vm1369
      %vm1372 = vmxor %vm1226, 1
      %vm1373 = vmxor %vm1227, 1
      %vm1374 = vmand %vm1370, %vm1372
      %vm1375 = vmand %vm1371, %vm1373
      %v1376 = vsel %vm1374, %v1256, %v1224
      %v1377 = vsel %vm1375, %v1257, %v1225
      %vm1378 = vmor %vm1226, %vm1370
      %vm1379 = vmor %vm1227, %vm1371
      %s1380 = scalar_lea.vmem [#allocation7], 96
      %v1381 = vld [vmem:[%s1380] sm:$0xff]
      %v1382 = vld [vmem:[%s1380 + $0x8] sm:$0xff]
      %v1383 = vsub.f32 %v1381, 0.5
      %v1384 = vsub.f32 %v1382, 0.5
      %s1385 = scalar_lea.vmem [#allocation7], 112
      %v1386 = vld [vmem:[%s1385] sm:$0xff]
      %v1387 = vld [vmem:[%s1385 + $0x8] sm:$0xff]
      %v1388 = vand.u32 2147483647, %v1383
      %v1389 = vand.u32 2147483647, %v1384
      %v1390 = vsub.f32 0.5, %v1388
      %v1391 = vsub.f32 0.5, %v1389
      %v1392 = vmax.f32 %v1390, 1e-06
      %v1393 = vmax.f32 %v1391, 1e-06
      %v1394 = vrcp.pop %v1392
      %v1395 = vmul.f32 1.0, %v1394
      %v1396 = vrcp.pop %v1393
      %v1397 = vmul.f32 1.0, %v1396
      %v1398 = vmul.f32 %v946, %v1395
      %v1399 = vmul.f32 %v947, %v1397
      %v1400 = vadd.f32 %v1398, %v905
      %v1401 = vadd.f32 %v1399, %v906
      %v1402 = vmul.f32 %v1400, %v1383
      %v1403 = vmul.f32 %v1401, %v1384
      %v1404 = vadd.f32 %v1402, %v195
      %v1405 = vadd.f32 %v1403, %v196
      %v1406 = vadd.f32 %v1404, 0.43
      %v1407 = vadd.f32 %v1405, 0.43
      %v1408 = vfloor.f32 %v1406
      %v1409 = vfloor.f32 %v1407
      %vm1410 = vcmp.ge.f32.partialorder %v1392, 0.07
      %vm1411 = vcmp.ge.f32.partialorder %v1393, 0.07
      %vm1412 = vcmp.le.f32.partialorder %v1386, %v925
      %vm1413 = vcmp.le.f32.partialorder %v1387, %v926
      %vm1414 = vmand %vm1410, %vm1412
      %vm1415 = vmand %vm1411, %vm1413
      %vm1416 = vcmp.lt.f32.partialorder %v1408, 0.0
      %vm1417 = vcmp.lt.f32.partialorder %v1409, 0.0
      %vm1418 = vcmp.lt.f32.partialorder %v1392, 0.013
      %vm1419 = vcmp.lt.f32.partialorder %v1393, 0.013
      %vm1420 = vcmp.gt.f32.partialorder %v1386, %v1392
      %vm1421 = vcmp.gt.f32.partialorder %v1387, %v1393
      %vm1422 = vmand %vm1418, %vm1420
      %vm1423 = vmand %vm1419, %vm1421
      %vm1424 = vmor %vm1416, %vm1422
      %vm1425 = vmor %vm1417, %vm1423
      %v1426 = vmul.f32 %v1386, %v917
      %v1427 = vmul.f32 %v1387, %v918
      %v1428 = vmul.f32 %v909, %v1395
      %v1429 = vmul.f32 %v910, %v1397
      %v1430 = vmul.f32 %v1428, %v1395
      %v1431 = vmul.f32 %v1429, %v1397
      %v1432 = vadd.f32 %v1430, %v905
      %v1433 = vadd.f32 %v1431, %v906
      %v1434 = vrcp.pop %v1432
      %v1435 = vmul.f32 %v1426, %v1434
      %v1436 = vrcp.pop %v1433
      %v1437 = vmul.f32 %v1427, %v1436
      %v1438 = vlog2.pop %v1435
      %v1439 = vmul.f32 %v1438, 0.6931472
      %v1440 = vlog2.pop %v1437
      %v1441 = vmul.f32 %v1440, 0.6931472
      %v1442 = vmul.f32 %v1408, %v886
      %v1443 = vmul.f32 %v1409, %v888
      %v1444 = vsub.f32 %v1442, %v195
      %v1445 = vsub.f32 %v1443, %v196
      %v1446 = vadd.f32 %v1408, 1.0
      %v1447 = vadd.f32 %v1409, 1.0
      %v1448 = vadd.f32 %v1446, 8.0
      %v1449 = vadd.f32 %v1447, 8.0
      %v1450 = vrcp.pop %v1448
      %v1451 = vmul.f32 1.0, %v1450
      %v1452 = vrcp.pop %v1449
      %v1453 = vmul.f32 1.0, %v1452
      %v1454 = vsub.f32 %v1448, 0.5
      %v1455 = vsub.f32 %v1449, 0.5
      %v1456 = vlog2.pop %v1448
      %v1457 = vmul.f32 %v1456, 0.6931472
      %v1458 = vlog2.pop %v1449
      %v1459 = vmul.f32 %v1458, 0.6931472
      %v1460 = vmul.f32 %v1454, %v1457
      %v1461 = vmul.f32 %v1455, %v1459
      %v1462 = vsub.f32 %v1460, %v1448
      %v1463 = vsub.f32 %v1461, %v1449
      %v1464 = vadd.f32 %v1462, 0.9189385
      %v1465 = vadd.f32 %v1463, 0.9189385
      %v1466 = vmul.f32 %v1451, %v1451
      %v1467 = vmul.f32 %v1453, %v1453
      %v1468 = vmul.f32 %v1466, 0.0027777778
      %v1469 = vmul.f32 %v1467, 0.0027777778
      %v1470 = vsub.f32 0.083333336, %v1468
      %v1471 = vsub.f32 0.083333336, %v1469
      %v1472 = vmul.f32 %v1451, %v1470
      %v1473 = vmul.f32 %v1453, %v1471
      %v1474 = vadd.f32 %v1464, %v1472
      %v1475 = vadd.f32 %v1465, %v1473
      %v1476 = vadd.f32 %v1446, 1.0
      %v1477 = vadd.f32 %v1447, 1.0
      %v1478 = vmul.f32 %v1446, %v1476
      %v1479 = vmul.f32 %v1447, %v1477
      %v1480 = vadd.f32 %v1446, 2.0
      %v1481 = vadd.f32 %v1447, 2.0
      %v1482 = vmul.f32 %v1478, %v1480
      %v1483 = vmul.f32 %v1479, %v1481
      %v1484 = vadd.f32 %v1446, 3.0
      %v1485 = vadd.f32 %v1447, 3.0
      %v1486 = vmul.f32 %v1482, %v1484
      %v1487 = vmul.f32 %v1483, %v1485
      %v1488 = vlog2.pop %v1486
      %v1489 = vmul.f32 %v1488, 0.6931472
      %v1490 = vlog2.pop %v1487
      %v1491 = vmul.f32 %v1490, 0.6931472
      %v1492 = vadd.f32 %v1446, 4.0
      %v1493 = vadd.f32 %v1447, 4.0
      %v1494 = vadd.f32 %v1446, 5.0
      %v1495 = vadd.f32 %v1447, 5.0
      %v1496 = vmul.f32 %v1492, %v1494
      %v1497 = vmul.f32 %v1493, %v1495
      %v1498 = vadd.f32 %v1446, 6.0
      %v1499 = vadd.f32 %v1447, 6.0
      %v1500 = vmul.f32 %v1496, %v1498
      %v1501 = vmul.f32 %v1497, %v1499
      %v1502 = vadd.f32 %v1446, 7.0
      %v1503 = vadd.f32 %v1447, 7.0
      %v1504 = vmul.f32 %v1500, %v1502
      %v1505 = vmul.f32 %v1501, %v1503
      %v1506 = vlog2.pop %v1504
      %v1507 = vmul.f32 %v1506, 0.6931472
      %v1508 = vlog2.pop %v1505
      %v1509 = vmul.f32 %v1508, 0.6931472
      %v1510 = vadd.f32 %v1489, %v1507
      %v1511 = vadd.f32 %v1491, %v1509
      %v1512 = vsub.f32 %v1474, %v1510
      %v1513 = vsub.f32 %v1475, %v1511
      %v1514 = vsub.f32 %v1444, %v1512
      %v1515 = vsub.f32 %v1445, %v1513
      %vm1516 = vmxor %vm1424, 1
      %vm1517 = vmxor %vm1425, 1
      %vm1518 = vcmp.le.f32.partialorder %v1439, %v1514
      %vm1519 = vcmp.le.f32.partialorder %v1441, %v1515
      %vm1520 = vmand %vm1516, %vm1518
      %vm1521 = vmand %vm1517, %vm1519
      %vm1522 = vmor %vm1414, %vm1520
      %vm1523 = vmor %vm1415, %vm1521
      %vm1524 = vmxor %vm1378, 1
      %vm1525 = vmxor %vm1379, 1
      %vm1526 = vmand %vm1522, %vm1524
      %vm1527 = vmand %vm1523, %vm1525
      %v1528 = vsel %vm1526, %v1408, %v1376
      %v1529 = vsel %vm1527, %v1409, %v1377
      %vm1530 = vmor %vm1378, %vm1522
      %vm1531 = vmor %vm1379, %vm1523
      %s1532 = scalar_lea.vmem [#allocation7], 128
      %v1533 = vld [vmem:[%s1532] sm:$0xff]
      %v1534 = vld [vmem:[%s1532 + $0x8] sm:$0xff]
      %v1535 = vsub.f32 %v1533, 0.5
      %v1536 = vsub.f32 %v1534, 0.5
      %s1537 = scalar_lea.vmem [#allocation7], 144
      %v1538 = vld [vmem:[%s1537] sm:$0xff]
      %v1539 = vld [vmem:[%s1537 + $0x8] sm:$0xff]
      %v1540 = vand.u32 2147483647, %v1535
      %v1541 = vand.u32 2147483647, %v1536
      %v1542 = vsub.f32 0.5, %v1540
      %v1543 = vsub.f32 0.5, %v1541
      %v1544 = vmax.f32 %v1542, 1e-06
      %v1545 = vmax.f32 %v1543, 1e-06
      %v1546 = vrcp.pop %v1544
      %v1547 = vmul.f32 1.0, %v1546
      %v1548 = vrcp.pop %v1545
      %v1549 = vmul.f32 1.0, %v1548
      %v1550 = vmul.f32 %v946, %v1547
      %v1551 = vmul.f32 %v947, %v1549
      %v1552 = vadd.f32 %v1550, %v905
      %v1553 = vadd.f32 %v1551, %v906
      %v1554 = vmul.f32 %v1552, %v1535
      %v1555 = vmul.f32 %v1553, %v1536
      %v1556 = vadd.f32 %v1554, %v195
      %v1557 = vadd.f32 %v1555, %v196
      %v1558 = vadd.f32 %v1556, 0.43
      %v1559 = vadd.f32 %v1557, 0.43
      %v1560 = vfloor.f32 %v1558
      %v1561 = vfloor.f32 %v1559
      %vm1562 = vcmp.ge.f32.partialorder %v1544, 0.07
      %vm1563 = vcmp.ge.f32.partialorder %v1545, 0.07
      %vm1564 = vcmp.le.f32.partialorder %v1538, %v925
      %vm1565 = vcmp.le.f32.partialorder %v1539, %v926
      %vm1566 = vmand %vm1562, %vm1564
      %vm1567 = vmand %vm1563, %vm1565
      %vm1568 = vcmp.lt.f32.partialorder %v1560, 0.0
      %vm1569 = vcmp.lt.f32.partialorder %v1561, 0.0
      %vm1570 = vcmp.lt.f32.partialorder %v1544, 0.013
      %vm1571 = vcmp.lt.f32.partialorder %v1545, 0.013
      %vm1572 = vcmp.gt.f32.partialorder %v1538, %v1544
      %vm1573 = vcmp.gt.f32.partialorder %v1539, %v1545
      %vm1574 = vmand %vm1570, %vm1572
      %vm1575 = vmand %vm1571, %vm1573
      %vm1576 = vmor %vm1568, %vm1574
      %vm1577 = vmor %vm1569, %vm1575
      %v1578 = vmul.f32 %v1538, %v917
      %v1579 = vmul.f32 %v1539, %v918
      %v1580 = vmul.f32 %v909, %v1547
      %v1581 = vmul.f32 %v910, %v1549
      %v1582 = vmul.f32 %v1580, %v1547
      %v1583 = vmul.f32 %v1581, %v1549
      %v1584 = vadd.f32 %v1582, %v905
      %v1585 = vadd.f32 %v1583, %v906
      %v1586 = vrcp.pop %v1584
      %v1587 = vmul.f32 %v1578, %v1586
      %v1588 = vrcp.pop %v1585
      %v1589 = vmul.f32 %v1579, %v1588
      %v1590 = vlog2.pop %v1587
      %v1591 = vmul.f32 %v1590, 0.6931472
      %v1592 = vlog2.pop %v1589
      %v1593 = vmul.f32 %v1592, 0.6931472
      %v1594 = vmul.f32 %v1560, %v886
      %v1595 = vmul.f32 %v1561, %v888
      %v1596 = vsub.f32 %v1594, %v195
      %v1597 = vsub.f32 %v1595, %v196
      %v1598 = vadd.f32 %v1560, 1.0
      %v1599 = vadd.f32 %v1561, 1.0
      %v1600 = vadd.f32 %v1598, 8.0
      %v1601 = vadd.f32 %v1599, 8.0
      %v1602 = vrcp.pop %v1600
      %v1603 = vmul.f32 1.0, %v1602
      %v1604 = vrcp.pop %v1601
      %v1605 = vmul.f32 1.0, %v1604
      %v1606 = vsub.f32 %v1600, 0.5
      %v1607 = vsub.f32 %v1601, 0.5
      %v1608 = vlog2.pop %v1600
      %v1609 = vmul.f32 %v1608, 0.6931472
      %v1610 = vlog2.pop %v1601
      %v1611 = vmul.f32 %v1610, 0.6931472
      %v1612 = vmul.f32 %v1606, %v1609
      %v1613 = vmul.f32 %v1607, %v1611
      %v1614 = vsub.f32 %v1612, %v1600
      %v1615 = vsub.f32 %v1613, %v1601
      %v1616 = vadd.f32 %v1614, 0.9189385
      %v1617 = vadd.f32 %v1615, 0.9189385
      %v1618 = vmul.f32 %v1603, %v1603
      %v1619 = vmul.f32 %v1605, %v1605
      %v1620 = vmul.f32 %v1618, 0.0027777778
      %v1621 = vmul.f32 %v1619, 0.0027777778
      %v1622 = vsub.f32 0.083333336, %v1620
      %v1623 = vsub.f32 0.083333336, %v1621
      %v1624 = vmul.f32 %v1603, %v1622
      %v1625 = vmul.f32 %v1605, %v1623
      %v1626 = vadd.f32 %v1616, %v1624
      %v1627 = vadd.f32 %v1617, %v1625
      %v1628 = vadd.f32 %v1598, 1.0
      %v1629 = vadd.f32 %v1599, 1.0
      %v1630 = vmul.f32 %v1598, %v1628
      %v1631 = vmul.f32 %v1599, %v1629
      %v1632 = vadd.f32 %v1598, 2.0
      %v1633 = vadd.f32 %v1599, 2.0
      %v1634 = vmul.f32 %v1630, %v1632
      %v1635 = vmul.f32 %v1631, %v1633
      %v1636 = vadd.f32 %v1598, 3.0
      %v1637 = vadd.f32 %v1599, 3.0
      %v1638 = vmul.f32 %v1634, %v1636
      %v1639 = vmul.f32 %v1635, %v1637
      %v1640 = vlog2.pop %v1638
      %v1641 = vmul.f32 %v1640, 0.6931472
      %v1642 = vlog2.pop %v1639
      %v1643 = vmul.f32 %v1642, 0.6931472
      %v1644 = vadd.f32 %v1598, 4.0
      %v1645 = vadd.f32 %v1599, 4.0
      %v1646 = vadd.f32 %v1598, 5.0
      %v1647 = vadd.f32 %v1599, 5.0
      %v1648 = vmul.f32 %v1644, %v1646
      %v1649 = vmul.f32 %v1645, %v1647
      %v1650 = vadd.f32 %v1598, 6.0
      %v1651 = vadd.f32 %v1599, 6.0
      %v1652 = vmul.f32 %v1648, %v1650
      %v1653 = vmul.f32 %v1649, %v1651
      %v1654 = vadd.f32 %v1598, 7.0
      %v1655 = vadd.f32 %v1599, 7.0
      %v1656 = vmul.f32 %v1652, %v1654
      %v1657 = vmul.f32 %v1653, %v1655
      %v1658 = vlog2.pop %v1656
      %v1659 = vmul.f32 %v1658, 0.6931472
      %v1660 = vlog2.pop %v1657
      %v1661 = vmul.f32 %v1660, 0.6931472
      %v1662 = vadd.f32 %v1641, %v1659
      %v1663 = vadd.f32 %v1643, %v1661
      %v1664 = vsub.f32 %v1626, %v1662
      %v1665 = vsub.f32 %v1627, %v1663
      %v1666 = vsub.f32 %v1596, %v1664
      %v1667 = vsub.f32 %v1597, %v1665
      %vm1668 = vmxor %vm1576, 1
      %vm1669 = vmxor %vm1577, 1
      %vm1670 = vcmp.le.f32.partialorder %v1591, %v1666
      %vm1671 = vcmp.le.f32.partialorder %v1593, %v1667
      %vm1672 = vmand %vm1668, %vm1670
      %vm1673 = vmand %vm1669, %vm1671
      %vm1674 = vmor %vm1566, %vm1672
      %vm1675 = vmor %vm1567, %vm1673
      %vm1676 = vmxor %vm1530, 1
      %vm1677 = vmxor %vm1531, 1
      %vm1678 = vmand %vm1674, %vm1676
      %vm1679 = vmand %vm1675, %vm1677
      %v1680 = vsel %vm1678, %v1560, %v1528
      %v1681 = vsel %vm1679, %v1561, %v1529
      %vm1682 = vmor %vm1530, %vm1674
      %vm1683 = vmor %vm1531, %vm1675
      %s1684 = scalar_lea.vmem [#allocation7], 160
      %v1685 = vld [vmem:[%s1684] sm:$0xff]
      %v1686 = vld [vmem:[%s1684 + $0x8] sm:$0xff]
      %v1687 = vsub.f32 %v1685, 0.5
      %v1688 = vsub.f32 %v1686, 0.5
      %s1689 = scalar_lea.vmem [#allocation7], 176
      %v1690 = vld [vmem:[%s1689] sm:$0xff]
      %v1691 = vld [vmem:[%s1689 + $0x8] sm:$0xff]
      %v1692 = vand.u32 2147483647, %v1687
      %v1693 = vand.u32 2147483647, %v1688
      %v1694 = vsub.f32 0.5, %v1692
      %v1695 = vsub.f32 0.5, %v1693
      %v1696 = vmax.f32 %v1694, 1e-06
      %v1697 = vmax.f32 %v1695, 1e-06
      %v1698 = vrcp.pop %v1696
      %v1699 = vmul.f32 1.0, %v1698
      %v1700 = vrcp.pop %v1697
      %v1701 = vmul.f32 1.0, %v1700
      %v1702 = vmul.f32 %v946, %v1699
      %v1703 = vmul.f32 %v947, %v1701
      %v1704 = vadd.f32 %v1702, %v905
      %v1705 = vadd.f32 %v1703, %v906
      %v1706 = vmul.f32 %v1704, %v1687
      %v1707 = vmul.f32 %v1705, %v1688
      %v1708 = vadd.f32 %v1706, %v195
      %v1709 = vadd.f32 %v1707, %v196
      %v1710 = vadd.f32 %v1708, 0.43
      %v1711 = vadd.f32 %v1709, 0.43
      %v1712 = vfloor.f32 %v1710
      %v1713 = vfloor.f32 %v1711
      %vm1714 = vcmp.ge.f32.partialorder %v1696, 0.07
      %vm1715 = vcmp.ge.f32.partialorder %v1697, 0.07
      %vm1716 = vcmp.le.f32.partialorder %v1690, %v925
      %vm1717 = vcmp.le.f32.partialorder %v1691, %v926
      %vm1718 = vmand %vm1714, %vm1716
      %vm1719 = vmand %vm1715, %vm1717
      %vm1720 = vcmp.lt.f32.partialorder %v1712, 0.0
      %vm1721 = vcmp.lt.f32.partialorder %v1713, 0.0
      %vm1722 = vcmp.lt.f32.partialorder %v1696, 0.013
      %vm1723 = vcmp.lt.f32.partialorder %v1697, 0.013
      %vm1724 = vcmp.gt.f32.partialorder %v1690, %v1696
      %vm1725 = vcmp.gt.f32.partialorder %v1691, %v1697
      %vm1726 = vmand %vm1722, %vm1724
      %vm1727 = vmand %vm1723, %vm1725
      %vm1728 = vmor %vm1720, %vm1726
      %vm1729 = vmor %vm1721, %vm1727
      %v1730 = vmul.f32 %v1690, %v917
      %v1731 = vmul.f32 %v1691, %v918
      %v1732 = vmul.f32 %v909, %v1699
      %v1733 = vmul.f32 %v910, %v1701
      %v1734 = vmul.f32 %v1732, %v1699
      %v1735 = vmul.f32 %v1733, %v1701
      %v1736 = vadd.f32 %v1734, %v905
      %v1737 = vadd.f32 %v1735, %v906
      %v1738 = vrcp.pop %v1736
      %v1739 = vmul.f32 %v1730, %v1738
      %v1740 = vrcp.pop %v1737
      %v1741 = vmul.f32 %v1731, %v1740
      %v1742 = vlog2.pop %v1739
      %v1743 = vmul.f32 %v1742, 0.6931472
      %v1744 = vlog2.pop %v1741
      %v1745 = vmul.f32 %v1744, 0.6931472
      %v1746 = vmul.f32 %v1712, %v886
      %v1747 = vmul.f32 %v1713, %v888
      %v1748 = vsub.f32 %v1746, %v195
      %v1749 = vsub.f32 %v1747, %v196
      %v1750 = vadd.f32 %v1712, 1.0
      %v1751 = vadd.f32 %v1713, 1.0
      %v1752 = vadd.f32 %v1750, 8.0
      %v1753 = vadd.f32 %v1751, 8.0
      %v1754 = vrcp.pop %v1752
      %v1755 = vmul.f32 1.0, %v1754
      %v1756 = vrcp.pop %v1753
      %v1757 = vmul.f32 1.0, %v1756
      %v1758 = vsub.f32 %v1752, 0.5
      %v1759 = vsub.f32 %v1753, 0.5
      %v1760 = vlog2.pop %v1752
      %v1761 = vmul.f32 %v1760, 0.6931472
      %v1762 = vlog2.pop %v1753
      %v1763 = vmul.f32 %v1762, 0.6931472
      %v1764 = vmul.f32 %v1758, %v1761
      %v1765 = vmul.f32 %v1759, %v1763
      %v1766 = vsub.f32 %v1764, %v1752
      %v1767 = vsub.f32 %v1765, %v1753
      %v1768 = vadd.f32 %v1766, 0.9189385
      %v1769 = vadd.f32 %v1767, 0.9189385
      %v1770 = vmul.f32 %v1755, %v1755
      %v1771 = vmul.f32 %v1757, %v1757
      %v1772 = vmul.f32 %v1770, 0.0027777778
      %v1773 = vmul.f32 %v1771, 0.0027777778
      %v1774 = vsub.f32 0.083333336, %v1772
      %v1775 = vsub.f32 0.083333336, %v1773
      %v1776 = vmul.f32 %v1755, %v1774
      %v1777 = vmul.f32 %v1757, %v1775
      %v1778 = vadd.f32 %v1768, %v1776
      %v1779 = vadd.f32 %v1769, %v1777
      %v1780 = vadd.f32 %v1750, 1.0
      %v1781 = vadd.f32 %v1751, 1.0
      %v1782 = vmul.f32 %v1750, %v1780
      %v1783 = vmul.f32 %v1751, %v1781
      %v1784 = vadd.f32 %v1750, 2.0
      %v1785 = vadd.f32 %v1751, 2.0
      %v1786 = vmul.f32 %v1782, %v1784
      %v1787 = vmul.f32 %v1783, %v1785
      %v1788 = vadd.f32 %v1750, 3.0
      %v1789 = vadd.f32 %v1751, 3.0
      %v1790 = vmul.f32 %v1786, %v1788
      %v1791 = vmul.f32 %v1787, %v1789
      %v1792 = vlog2.pop %v1790
      %v1793 = vmul.f32 %v1792, 0.6931472
      %v1794 = vlog2.pop %v1791
      %v1795 = vmul.f32 %v1794, 0.6931472
      %v1796 = vadd.f32 %v1750, 4.0
      %v1797 = vadd.f32 %v1751, 4.0
      %v1798 = vadd.f32 %v1750, 5.0
      %v1799 = vadd.f32 %v1751, 5.0
      %v1800 = vmul.f32 %v1796, %v1798
      %v1801 = vmul.f32 %v1797, %v1799
      %v1802 = vadd.f32 %v1750, 6.0
      %v1803 = vadd.f32 %v1751, 6.0
      %v1804 = vmul.f32 %v1800, %v1802
      %v1805 = vmul.f32 %v1801, %v1803
      %v1806 = vadd.f32 %v1750, 7.0
      %v1807 = vadd.f32 %v1751, 7.0
      %v1808 = vmul.f32 %v1804, %v1806
      %v1809 = vmul.f32 %v1805, %v1807
      %v1810 = vlog2.pop %v1808
      %v1811 = vmul.f32 %v1810, 0.6931472
      %v1812 = vlog2.pop %v1809
      %v1813 = vmul.f32 %v1812, 0.6931472
      %v1814 = vadd.f32 %v1793, %v1811
      %v1815 = vadd.f32 %v1795, %v1813
      %v1816 = vsub.f32 %v1778, %v1814
      %v1817 = vsub.f32 %v1779, %v1815
      %v1818 = vsub.f32 %v1748, %v1816
      %v1819 = vsub.f32 %v1749, %v1817
      %vm1820 = vmxor %vm1728, 1
      %vm1821 = vmxor %vm1729, 1
      %vm1822 = vcmp.le.f32.partialorder %v1743, %v1818
      %vm1823 = vcmp.le.f32.partialorder %v1745, %v1819
      %vm1824 = vmand %vm1820, %vm1822
      %vm1825 = vmand %vm1821, %vm1823
      %vm1826 = vmor %vm1718, %vm1824
      %vm1827 = vmor %vm1719, %vm1825
      %vm1828 = vmxor %vm1682, 1
      %vm1829 = vmxor %vm1683, 1
      %vm1830 = vmand %vm1826, %vm1828
      %vm1831 = vmand %vm1827, %vm1829
      %v1832 = vsel %vm1830, %v1712, %v1680
      %v1833 = vsel %vm1831, %v1713, %v1681
      %vm1834 = vmor %vm1682, %vm1826
      %vm1835 = vmor %vm1683, %vm1827
      %s1836 = scalar_lea.vmem [#allocation7], 192
      %v1837 = vld [vmem:[%s1836] sm:$0xff]
      %v1838 = vld [vmem:[%s1836 + $0x8] sm:$0xff]
      %v1839 = vsub.f32 %v1837, 0.5
      %v1840 = vsub.f32 %v1838, 0.5
      %s1841 = scalar_lea.vmem [#allocation7], 208
      %v1842 = vld [vmem:[%s1841] sm:$0xff]
      %v1843 = vld [vmem:[%s1841 + $0x8] sm:$0xff]
      %v1844 = vand.u32 2147483647, %v1839
      %v1845 = vand.u32 2147483647, %v1840
      %v1846 = vsub.f32 0.5, %v1844
      %v1847 = vsub.f32 0.5, %v1845
      %v1848 = vmax.f32 %v1846, 1e-06
      %v1849 = vmax.f32 %v1847, 1e-06
      %v1850 = vrcp.pop %v1848
      %v1851 = vmul.f32 1.0, %v1850
      %v1852 = vrcp.pop %v1849
      %v1853 = vmul.f32 1.0, %v1852
      %v1854 = vmul.f32 %v946, %v1851
      %v1855 = vmul.f32 %v947, %v1853
      %v1856 = vadd.f32 %v1854, %v905
      %v1857 = vadd.f32 %v1855, %v906
      %v1858 = vmul.f32 %v1856, %v1839
      %v1859 = vmul.f32 %v1857, %v1840
      %v1860 = vadd.f32 %v1858, %v195
      %v1861 = vadd.f32 %v1859, %v196
      %v1862 = vadd.f32 %v1860, 0.43
      %v1863 = vadd.f32 %v1861, 0.43
      %v1864 = vfloor.f32 %v1862
      %v1865 = vfloor.f32 %v1863
      %vm1866 = vcmp.ge.f32.partialorder %v1848, 0.07
      %vm1867 = vcmp.ge.f32.partialorder %v1849, 0.07
      %vm1868 = vcmp.le.f32.partialorder %v1842, %v925
      %vm1869 = vcmp.le.f32.partialorder %v1843, %v926
      %vm1870 = vmand %vm1866, %vm1868
      %vm1871 = vmand %vm1867, %vm1869
      %vm1872 = vcmp.lt.f32.partialorder %v1864, 0.0
      %vm1873 = vcmp.lt.f32.partialorder %v1865, 0.0
      %vm1874 = vcmp.lt.f32.partialorder %v1848, 0.013
      %vm1875 = vcmp.lt.f32.partialorder %v1849, 0.013
      %vm1876 = vcmp.gt.f32.partialorder %v1842, %v1848
      %vm1877 = vcmp.gt.f32.partialorder %v1843, %v1849
      %vm1878 = vmand %vm1874, %vm1876
      %vm1879 = vmand %vm1875, %vm1877
      %vm1880 = vmor %vm1872, %vm1878
      %vm1881 = vmor %vm1873, %vm1879
      %v1882 = vmul.f32 %v1842, %v917
      %v1883 = vmul.f32 %v1843, %v918
      %v1884 = vmul.f32 %v909, %v1851
      %v1885 = vmul.f32 %v910, %v1853
      %v1886 = vmul.f32 %v1884, %v1851
      %v1887 = vmul.f32 %v1885, %v1853
      %v1888 = vadd.f32 %v1886, %v905
      %v1889 = vadd.f32 %v1887, %v906
      %v1890 = vrcp.pop %v1888
      %v1891 = vmul.f32 %v1882, %v1890
      %v1892 = vrcp.pop %v1889
      %v1893 = vmul.f32 %v1883, %v1892
      %v1894 = vlog2.pop %v1891
      %v1895 = vmul.f32 %v1894, 0.6931472
      %v1896 = vlog2.pop %v1893
      %v1897 = vmul.f32 %v1896, 0.6931472
      %v1898 = vmul.f32 %v1864, %v886
      %v1899 = vmul.f32 %v1865, %v888
      %v1900 = vsub.f32 %v1898, %v195
      %v1901 = vsub.f32 %v1899, %v196
      %v1902 = vadd.f32 %v1864, 1.0
      %v1903 = vadd.f32 %v1865, 1.0
      %v1904 = vadd.f32 %v1902, 8.0
      %v1905 = vadd.f32 %v1903, 8.0
      %v1906 = vrcp.pop %v1904
      %v1907 = vmul.f32 1.0, %v1906
      %v1908 = vrcp.pop %v1905
      %v1909 = vmul.f32 1.0, %v1908
      %v1910 = vsub.f32 %v1904, 0.5
      %v1911 = vsub.f32 %v1905, 0.5
      %v1912 = vlog2.pop %v1904
      %v1913 = vmul.f32 %v1912, 0.6931472
      %v1914 = vlog2.pop %v1905
      %v1915 = vmul.f32 %v1914, 0.6931472
      %v1916 = vmul.f32 %v1910, %v1913
      %v1917 = vmul.f32 %v1911, %v1915
      %v1918 = vsub.f32 %v1916, %v1904
      %v1919 = vsub.f32 %v1917, %v1905
      %v1920 = vadd.f32 %v1918, 0.9189385
      %v1921 = vadd.f32 %v1919, 0.9189385
      %v1922 = vmul.f32 %v1907, %v1907
      %v1923 = vmul.f32 %v1909, %v1909
      %v1924 = vmul.f32 %v1922, 0.0027777778
      %v1925 = vmul.f32 %v1923, 0.0027777778
      %v1926 = vsub.f32 0.083333336, %v1924
      %v1927 = vsub.f32 0.083333336, %v1925
      %v1928 = vmul.f32 %v1907, %v1926
      %v1929 = vmul.f32 %v1909, %v1927
      %v1930 = vadd.f32 %v1920, %v1928
      %v1931 = vadd.f32 %v1921, %v1929
      %v1932 = vadd.f32 %v1902, 1.0
      %v1933 = vadd.f32 %v1903, 1.0
      %v1934 = vmul.f32 %v1902, %v1932
      %v1935 = vmul.f32 %v1903, %v1933
      %v1936 = vadd.f32 %v1902, 2.0
      %v1937 = vadd.f32 %v1903, 2.0
      %v1938 = vmul.f32 %v1934, %v1936
      %v1939 = vmul.f32 %v1935, %v1937
      %v1940 = vadd.f32 %v1902, 3.0
      %v1941 = vadd.f32 %v1903, 3.0
      %v1942 = vmul.f32 %v1938, %v1940
      %v1943 = vmul.f32 %v1939, %v1941
      %v1944 = vlog2.pop %v1942
      %v1945 = vmul.f32 %v1944, 0.6931472
      %v1946 = vlog2.pop %v1943
      %v1947 = vmul.f32 %v1946, 0.6931472
      %v1948 = vadd.f32 %v1902, 4.0
      %v1949 = vadd.f32 %v1903, 4.0
      %v1950 = vadd.f32 %v1902, 5.0
      %v1951 = vadd.f32 %v1903, 5.0
      %v1952 = vmul.f32 %v1948, %v1950
      %v1953 = vmul.f32 %v1949, %v1951
      %v1954 = vadd.f32 %v1902, 6.0
      %v1955 = vadd.f32 %v1903, 6.0
      %v1956 = vmul.f32 %v1952, %v1954
      %v1957 = vmul.f32 %v1953, %v1955
      %v1958 = vadd.f32 %v1902, 7.0
      %v1959 = vadd.f32 %v1903, 7.0
      %v1960 = vmul.f32 %v1956, %v1958
      %v1961 = vmul.f32 %v1957, %v1959
      %v1962 = vlog2.pop %v1960
      %v1963 = vmul.f32 %v1962, 0.6931472
      %v1964 = vlog2.pop %v1961
      %v1965 = vmul.f32 %v1964, 0.6931472
      %v1966 = vadd.f32 %v1945, %v1963
      %v1967 = vadd.f32 %v1947, %v1965
      %v1968 = vsub.f32 %v1930, %v1966
      %v1969 = vsub.f32 %v1931, %v1967
      %v1970 = vsub.f32 %v1900, %v1968
      %v1971 = vsub.f32 %v1901, %v1969
      %vm1972 = vmxor %vm1880, 1
      %vm1973 = vmxor %vm1881, 1
      %vm1974 = vcmp.le.f32.partialorder %v1895, %v1970
      %vm1975 = vcmp.le.f32.partialorder %v1897, %v1971
      %vm1976 = vmand %vm1972, %vm1974
      %vm1977 = vmand %vm1973, %vm1975
      %vm1978 = vmor %vm1870, %vm1976
      %vm1979 = vmor %vm1871, %vm1977
      %vm1980 = vmxor %vm1834, 1
      %vm1981 = vmxor %vm1835, 1
      %vm1982 = vmand %vm1978, %vm1980
      %vm1983 = vmand %vm1979, %vm1981
      %v1984 = vsel %vm1982, %v1864, %v1832
      %v1985 = vsel %vm1983, %v1865, %v1833
      %vm1986 = vmor %vm1834, %vm1978
      %vm1987 = vmor %vm1835, %vm1979
      %s1988 = scalar_lea.vmem [#allocation7], 224
      %v1989 = vld [vmem:[%s1988] sm:$0xff]
      %v1990 = vld [vmem:[%s1988 + $0x8] sm:$0xff]
      %v1991 = vsub.f32 %v1989, 0.5
      %v1992 = vsub.f32 %v1990, 0.5
      %s1993 = scalar_lea.vmem [#allocation7], 240
      %v1994 = vld [vmem:[%s1993] sm:$0xff]
      %v1995 = vld [vmem:[%s1993 + $0x8] sm:$0xff]
      %v1996 = vand.u32 2147483647, %v1991
      %v1997 = vand.u32 2147483647, %v1992
      %v1998 = vsub.f32 0.5, %v1996
      %v1999 = vsub.f32 0.5, %v1997
      %v2000 = vmax.f32 %v1998, 1e-06
      %v2001 = vmax.f32 %v1999, 1e-06
      %v2002 = vrcp.pop %v2000
      %v2003 = vmul.f32 1.0, %v2002
      %v2004 = vrcp.pop %v2001
      %v2005 = vmul.f32 1.0, %v2004
      %v2006 = vmul.f32 %v946, %v2003
      %v2007 = vmul.f32 %v947, %v2005
      %v2008 = vadd.f32 %v2006, %v905
      %v2009 = vadd.f32 %v2007, %v906
      %v2010 = vmul.f32 %v2008, %v1991
      %v2011 = vmul.f32 %v2009, %v1992
      %v2012 = vadd.f32 %v2010, %v195
      %v2013 = vadd.f32 %v2011, %v196
      %v2014 = vadd.f32 %v2012, 0.43
      %v2015 = vadd.f32 %v2013, 0.43
      %v2016 = vfloor.f32 %v2014
      %v2017 = vfloor.f32 %v2015
      %vm2018 = vcmp.ge.f32.partialorder %v2000, 0.07
      %vm2019 = vcmp.ge.f32.partialorder %v2001, 0.07
      %vm2020 = vcmp.le.f32.partialorder %v1994, %v925
      %vm2021 = vcmp.le.f32.partialorder %v1995, %v926
      %vm2022 = vmand %vm2018, %vm2020
      %vm2023 = vmand %vm2019, %vm2021
      %vm2024 = vcmp.lt.f32.partialorder %v2016, 0.0
      %vm2025 = vcmp.lt.f32.partialorder %v2017, 0.0
      %vm2026 = vcmp.lt.f32.partialorder %v2000, 0.013
      %vm2027 = vcmp.lt.f32.partialorder %v2001, 0.013
      %vm2028 = vcmp.gt.f32.partialorder %v1994, %v2000
      %vm2029 = vcmp.gt.f32.partialorder %v1995, %v2001
      %vm2030 = vmand %vm2026, %vm2028
      %vm2031 = vmand %vm2027, %vm2029
      %vm2032 = vmor %vm2024, %vm2030
      %vm2033 = vmor %vm2025, %vm2031
      %v2034 = vmul.f32 %v1994, %v917
      %v2035 = vmul.f32 %v1995, %v918
      %v2036 = vmul.f32 %v909, %v2003
      %v2037 = vmul.f32 %v910, %v2005
      %v2038 = vmul.f32 %v2036, %v2003
      %v2039 = vmul.f32 %v2037, %v2005
      %v2040 = vadd.f32 %v2038, %v905
      %v2041 = vadd.f32 %v2039, %v906
      %v2042 = vrcp.pop %v2040
      %v2043 = vmul.f32 %v2034, %v2042
      %v2044 = vrcp.pop %v2041
      %v2045 = vmul.f32 %v2035, %v2044
      %v2046 = vlog2.pop %v2043
      %v2047 = vmul.f32 %v2046, 0.6931472
      %v2048 = vlog2.pop %v2045
      %v2049 = vmul.f32 %v2048, 0.6931472
      %v2050 = vmul.f32 %v2016, %v886
      %v2051 = vmul.f32 %v2017, %v888
      %v2052 = vsub.f32 %v2050, %v195
      %v2053 = vsub.f32 %v2051, %v196
      %v2054 = vadd.f32 %v2016, 1.0
      %v2055 = vadd.f32 %v2017, 1.0
      %v2056 = vadd.f32 %v2054, 8.0
      %v2057 = vadd.f32 %v2055, 8.0
      %v2058 = vrcp.pop %v2056
      %v2059 = vmul.f32 1.0, %v2058
      %v2060 = vrcp.pop %v2057
      %v2061 = vmul.f32 1.0, %v2060
      %v2062 = vsub.f32 %v2056, 0.5
      %v2063 = vsub.f32 %v2057, 0.5
      %v2064 = vlog2.pop %v2056
      %v2065 = vmul.f32 %v2064, 0.6931472
      %v2066 = vlog2.pop %v2057
      %v2067 = vmul.f32 %v2066, 0.6931472
      %v2068 = vmul.f32 %v2062, %v2065
      %v2069 = vmul.f32 %v2063, %v2067
      %v2070 = vsub.f32 %v2068, %v2056
      %v2071 = vsub.f32 %v2069, %v2057
      %v2072 = vadd.f32 %v2070, 0.9189385
      %v2073 = vadd.f32 %v2071, 0.9189385
      %v2074 = vmul.f32 %v2059, %v2059
      %v2075 = vmul.f32 %v2061, %v2061
      %v2076 = vmul.f32 %v2074, 0.0027777778
      %v2077 = vmul.f32 %v2075, 0.0027777778
      %v2078 = vsub.f32 0.083333336, %v2076
      %v2079 = vsub.f32 0.083333336, %v2077
      %v2080 = vmul.f32 %v2059, %v2078
      %v2081 = vmul.f32 %v2061, %v2079
      %v2082 = vadd.f32 %v2072, %v2080
      %v2083 = vadd.f32 %v2073, %v2081
      %v2084 = vadd.f32 %v2054, 1.0
      %v2085 = vadd.f32 %v2055, 1.0
      %v2086 = vmul.f32 %v2054, %v2084
      %v2087 = vmul.f32 %v2055, %v2085
      %v2088 = vadd.f32 %v2054, 2.0
      %v2089 = vadd.f32 %v2055, 2.0
      %v2090 = vmul.f32 %v2086, %v2088
      %v2091 = vmul.f32 %v2087, %v2089
      %v2092 = vadd.f32 %v2054, 3.0
      %v2093 = vadd.f32 %v2055, 3.0
      %v2094 = vmul.f32 %v2090, %v2092
      %v2095 = vmul.f32 %v2091, %v2093
      %v2096 = vlog2.pop %v2094
      %v2097 = vmul.f32 %v2096, 0.6931472
      %v2098 = vlog2.pop %v2095
      %v2099 = vmul.f32 %v2098, 0.6931472
      %v2100 = vadd.f32 %v2054, 4.0
      %v2101 = vadd.f32 %v2055, 4.0
      %v2102 = vadd.f32 %v2054, 5.0
      %v2103 = vadd.f32 %v2055, 5.0
      %v2104 = vmul.f32 %v2100, %v2102
      %v2105 = vmul.f32 %v2101, %v2103
      %v2106 = vadd.f32 %v2054, 6.0
      %v2107 = vadd.f32 %v2055, 6.0
      %v2108 = vmul.f32 %v2104, %v2106
      %v2109 = vmul.f32 %v2105, %v2107
      %v2110 = vadd.f32 %v2054, 7.0
      %v2111 = vadd.f32 %v2055, 7.0
      %v2112 = vmul.f32 %v2108, %v2110
      %v2113 = vmul.f32 %v2109, %v2111
      %v2114 = vlog2.pop %v2112
      %v2115 = vmul.f32 %v2114, 0.6931472
      %v2116 = vlog2.pop %v2113
      %v2117 = vmul.f32 %v2116, 0.6931472
      %v2118 = vadd.f32 %v2097, %v2115
      %v2119 = vadd.f32 %v2099, %v2117
      %v2120 = vsub.f32 %v2082, %v2118
      %v2121 = vsub.f32 %v2083, %v2119
      %v2122 = vsub.f32 %v2052, %v2120
      %v2123 = vsub.f32 %v2053, %v2121
      %vm2124 = vmxor %vm2032, 1
      %vm2125 = vmxor %vm2033, 1
      %vm2126 = vcmp.le.f32.partialorder %v2047, %v2122
      %vm2127 = vcmp.le.f32.partialorder %v2049, %v2123
      %vm2128 = vmand %vm2124, %vm2126
      %vm2129 = vmand %vm2125, %vm2127
      %vm2130 = vmor %vm2022, %vm2128
      %vm2131 = vmor %vm2023, %vm2129
      %vm2132 = vmxor %vm1986, 1
      %vm2133 = vmxor %vm1987, 1
      %vm2134 = vmand %vm2130, %vm2132
      %vm2135 = vmand %vm2131, %vm2133
      %v2136 = vsel %vm2134, %v2016, %v1984
      %v2137 = vsel %vm2135, %v2017, %v1985
      %vm2138 = vmor %vm1986, %vm2130
      %vm2139 = vmor %vm1987, %vm2131
      %s2140 = scalar_lea.vmem [#allocation7], 256
      %v2141 = vld [vmem:[%s2140] sm:$0xff]
      %v2142 = vld [vmem:[%s2140 + $0x8] sm:$0xff]
      %v2143 = vsub.f32 %v2141, 0.5
      %v2144 = vsub.f32 %v2142, 0.5
      %s2145 = scalar_lea.vmem [#allocation7], 272
      %v2146 = vld [vmem:[%s2145] sm:$0xff]
      %v2147 = vld [vmem:[%s2145 + $0x8] sm:$0xff]
      %v2148 = vand.u32 2147483647, %v2143
      %v2149 = vand.u32 2147483647, %v2144
      %v2150 = vsub.f32 0.5, %v2148
      %v2151 = vsub.f32 0.5, %v2149
      %v2152 = vmax.f32 %v2150, 1e-06
      %v2153 = vmax.f32 %v2151, 1e-06
      %v2154 = vrcp.pop %v2152
      %v2155 = vmul.f32 1.0, %v2154
      %v2156 = vrcp.pop %v2153
      %v2157 = vmul.f32 1.0, %v2156
      %v2158 = vmul.f32 %v946, %v2155
      %v2159 = vmul.f32 %v947, %v2157
      %v2160 = vadd.f32 %v2158, %v905
      %v2161 = vadd.f32 %v2159, %v906
      %v2162 = vmul.f32 %v2160, %v2143
      %v2163 = vmul.f32 %v2161, %v2144
      %v2164 = vadd.f32 %v2162, %v195
      %v2165 = vadd.f32 %v2163, %v196
      %v2166 = vadd.f32 %v2164, 0.43
      %v2167 = vadd.f32 %v2165, 0.43
      %v2168 = vfloor.f32 %v2166
      %v2169 = vfloor.f32 %v2167
      %vm2170 = vcmp.ge.f32.partialorder %v2152, 0.07
      %vm2171 = vcmp.ge.f32.partialorder %v2153, 0.07
      %vm2172 = vcmp.le.f32.partialorder %v2146, %v925
      %vm2173 = vcmp.le.f32.partialorder %v2147, %v926
      %vm2174 = vmand %vm2170, %vm2172
      %vm2175 = vmand %vm2171, %vm2173
      %vm2176 = vcmp.lt.f32.partialorder %v2168, 0.0
      %vm2177 = vcmp.lt.f32.partialorder %v2169, 0.0
      %vm2178 = vcmp.lt.f32.partialorder %v2152, 0.013
      %vm2179 = vcmp.lt.f32.partialorder %v2153, 0.013
      %vm2180 = vcmp.gt.f32.partialorder %v2146, %v2152
      %vm2181 = vcmp.gt.f32.partialorder %v2147, %v2153
      %vm2182 = vmand %vm2178, %vm2180
      %vm2183 = vmand %vm2179, %vm2181
      %vm2184 = vmor %vm2176, %vm2182
      %vm2185 = vmor %vm2177, %vm2183
      %v2186 = vmul.f32 %v2146, %v917
      %v2187 = vmul.f32 %v2147, %v918
      %v2188 = vmul.f32 %v909, %v2155
      %v2189 = vmul.f32 %v910, %v2157
      %v2190 = vmul.f32 %v2188, %v2155
      %v2191 = vmul.f32 %v2189, %v2157
      %v2192 = vadd.f32 %v2190, %v905
      %v2193 = vadd.f32 %v2191, %v906
      %v2194 = vrcp.pop %v2192
      %v2195 = vmul.f32 %v2186, %v2194
      %v2196 = vrcp.pop %v2193
      %v2197 = vmul.f32 %v2187, %v2196
      %v2198 = vlog2.pop %v2195
      %v2199 = vmul.f32 %v2198, 0.6931472
      %v2200 = vlog2.pop %v2197
      %v2201 = vmul.f32 %v2200, 0.6931472
      %v2202 = vmul.f32 %v2168, %v886
      %v2203 = vmul.f32 %v2169, %v888
      %v2204 = vsub.f32 %v2202, %v195
      %v2205 = vsub.f32 %v2203, %v196
      %v2206 = vadd.f32 %v2168, 1.0
      %v2207 = vadd.f32 %v2169, 1.0
      %v2208 = vadd.f32 %v2206, 8.0
      %v2209 = vadd.f32 %v2207, 8.0
      %v2210 = vrcp.pop %v2208
      %v2211 = vmul.f32 1.0, %v2210
      %v2212 = vrcp.pop %v2209
      %v2213 = vmul.f32 1.0, %v2212
      %v2214 = vsub.f32 %v2208, 0.5
      %v2215 = vsub.f32 %v2209, 0.5
      %v2216 = vlog2.pop %v2208
      %v2217 = vmul.f32 %v2216, 0.6931472
      %v2218 = vlog2.pop %v2209
      %v2219 = vmul.f32 %v2218, 0.6931472
      %v2220 = vmul.f32 %v2214, %v2217
      %v2221 = vmul.f32 %v2215, %v2219
      %v2222 = vsub.f32 %v2220, %v2208
      %v2223 = vsub.f32 %v2221, %v2209
      %v2224 = vadd.f32 %v2222, 0.9189385
      %v2225 = vadd.f32 %v2223, 0.9189385
      %v2226 = vmul.f32 %v2211, %v2211
      %v2227 = vmul.f32 %v2213, %v2213
      %v2228 = vmul.f32 %v2226, 0.0027777778
      %v2229 = vmul.f32 %v2227, 0.0027777778
      %v2230 = vsub.f32 0.083333336, %v2228
      %v2231 = vsub.f32 0.083333336, %v2229
      %v2232 = vmul.f32 %v2211, %v2230
      %v2233 = vmul.f32 %v2213, %v2231
      %v2234 = vadd.f32 %v2224, %v2232
      %v2235 = vadd.f32 %v2225, %v2233
      %v2236 = vadd.f32 %v2206, 1.0
      %v2237 = vadd.f32 %v2207, 1.0
      %v2238 = vmul.f32 %v2206, %v2236
      %v2239 = vmul.f32 %v2207, %v2237
      %v2240 = vadd.f32 %v2206, 2.0
      %v2241 = vadd.f32 %v2207, 2.0
      %v2242 = vmul.f32 %v2238, %v2240
      %v2243 = vmul.f32 %v2239, %v2241
      %v2244 = vadd.f32 %v2206, 3.0
      %v2245 = vadd.f32 %v2207, 3.0
      %v2246 = vmul.f32 %v2242, %v2244
      %v2247 = vmul.f32 %v2243, %v2245
      %v2248 = vlog2.pop %v2246
      %v2249 = vmul.f32 %v2248, 0.6931472
      %v2250 = vlog2.pop %v2247
      %v2251 = vmul.f32 %v2250, 0.6931472
      %v2252 = vadd.f32 %v2206, 4.0
      %v2253 = vadd.f32 %v2207, 4.0
      %v2254 = vadd.f32 %v2206, 5.0
      %v2255 = vadd.f32 %v2207, 5.0
      %v2256 = vmul.f32 %v2252, %v2254
      %v2257 = vmul.f32 %v2253, %v2255
      %v2258 = vadd.f32 %v2206, 6.0
      %v2259 = vadd.f32 %v2207, 6.0
      %v2260 = vmul.f32 %v2256, %v2258
      %v2261 = vmul.f32 %v2257, %v2259
      %v2262 = vadd.f32 %v2206, 7.0
      %v2263 = vadd.f32 %v2207, 7.0
      %v2264 = vmul.f32 %v2260, %v2262
      %v2265 = vmul.f32 %v2261, %v2263
      %v2266 = vlog2.pop %v2264
      %v2267 = vmul.f32 %v2266, 0.6931472
      %v2268 = vlog2.pop %v2265
      %v2269 = vmul.f32 %v2268, 0.6931472
      %v2270 = vadd.f32 %v2249, %v2267
      %v2271 = vadd.f32 %v2251, %v2269
      %v2272 = vsub.f32 %v2234, %v2270
      %v2273 = vsub.f32 %v2235, %v2271
      %v2274 = vsub.f32 %v2204, %v2272
      %v2275 = vsub.f32 %v2205, %v2273
      %vm2276 = vmxor %vm2184, 1
      %vm2277 = vmxor %vm2185, 1
      %vm2278 = vcmp.le.f32.partialorder %v2199, %v2274
      %vm2279 = vcmp.le.f32.partialorder %v2201, %v2275
      %vm2280 = vmand %vm2276, %vm2278
      %vm2281 = vmand %vm2277, %vm2279
      %vm2282 = vmor %vm2174, %vm2280
      %vm2283 = vmor %vm2175, %vm2281
      %vm2284 = vmxor %vm2138, 1
      %vm2285 = vmxor %vm2139, 1
      %vm2286 = vmand %vm2282, %vm2284
      %vm2287 = vmand %vm2283, %vm2285
      %v2288 = vsel %vm2286, %v2168, %v2136
      %v2289 = vsel %vm2287, %v2169, %v2137
      %vm2290 = vmor %vm2138, %vm2282
      %vm2291 = vmor %vm2139, %vm2283
      %s2292 = scalar_lea.vmem [#allocation7], 288
      %v2293 = vld [vmem:[%s2292] sm:$0xff]
      %v2294 = vld [vmem:[%s2292 + $0x8] sm:$0xff]
      %v2295 = vsub.f32 %v2293, 0.5
      %v2296 = vsub.f32 %v2294, 0.5
      %s2297 = scalar_lea.vmem [#allocation7], 304
      %v2298 = vld [vmem:[%s2297] sm:$0xff]
      %v2299 = vld [vmem:[%s2297 + $0x8] sm:$0xff]
      %v2300 = vand.u32 2147483647, %v2295
      %v2301 = vand.u32 2147483647, %v2296
      %v2302 = vsub.f32 0.5, %v2300
      %v2303 = vsub.f32 0.5, %v2301
      %v2304 = vmax.f32 %v2302, 1e-06
      %v2305 = vmax.f32 %v2303, 1e-06
      %v2306 = vrcp.pop %v2304
      %v2307 = vmul.f32 1.0, %v2306
      %v2308 = vrcp.pop %v2305
      %v2309 = vmul.f32 1.0, %v2308
      %v2310 = vmul.f32 %v946, %v2307
      %v2311 = vmul.f32 %v947, %v2309
      %v2312 = vadd.f32 %v2310, %v905
      %v2313 = vadd.f32 %v2311, %v906
      %v2314 = vmul.f32 %v2312, %v2295
      %v2315 = vmul.f32 %v2313, %v2296
      %v2316 = vadd.f32 %v2314, %v195
      %v2317 = vadd.f32 %v2315, %v196
      %v2318 = vadd.f32 %v2316, 0.43
      %v2319 = vadd.f32 %v2317, 0.43
      %v2320 = vfloor.f32 %v2318
      %v2321 = vfloor.f32 %v2319
      %vm2322 = vcmp.ge.f32.partialorder %v2304, 0.07
      %vm2323 = vcmp.ge.f32.partialorder %v2305, 0.07
      %vm2324 = vcmp.le.f32.partialorder %v2298, %v925
      %vm2325 = vcmp.le.f32.partialorder %v2299, %v926
      %vm2326 = vmand %vm2322, %vm2324
      %vm2327 = vmand %vm2323, %vm2325
      %vm2328 = vcmp.lt.f32.partialorder %v2320, 0.0
      %vm2329 = vcmp.lt.f32.partialorder %v2321, 0.0
      %vm2330 = vcmp.lt.f32.partialorder %v2304, 0.013
      %vm2331 = vcmp.lt.f32.partialorder %v2305, 0.013
      %vm2332 = vcmp.gt.f32.partialorder %v2298, %v2304
      %vm2333 = vcmp.gt.f32.partialorder %v2299, %v2305
      %vm2334 = vmand %vm2330, %vm2332
      %vm2335 = vmand %vm2331, %vm2333
      %vm2336 = vmor %vm2328, %vm2334
      %vm2337 = vmor %vm2329, %vm2335
      %v2338 = vmul.f32 %v2298, %v917
      %v2339 = vmul.f32 %v2299, %v918
      %v2340 = vmul.f32 %v909, %v2307
      %v2341 = vmul.f32 %v910, %v2309
      %v2342 = vmul.f32 %v2340, %v2307
      %v2343 = vmul.f32 %v2341, %v2309
      %v2344 = vadd.f32 %v2342, %v905
      %v2345 = vadd.f32 %v2343, %v906
      %v2346 = vrcp.pop %v2344
      %v2347 = vmul.f32 %v2338, %v2346
      %v2348 = vrcp.pop %v2345
      %v2349 = vmul.f32 %v2339, %v2348
      %v2350 = vlog2.pop %v2347
      %v2351 = vmul.f32 %v2350, 0.6931472
      %v2352 = vlog2.pop %v2349
      %v2353 = vmul.f32 %v2352, 0.6931472
      %v2354 = vmul.f32 %v2320, %v886
      %v2355 = vmul.f32 %v2321, %v888
      %v2356 = vsub.f32 %v2354, %v195
      %v2357 = vsub.f32 %v2355, %v196
      %v2358 = vadd.f32 %v2320, 1.0
      %v2359 = vadd.f32 %v2321, 1.0
      %v2360 = vadd.f32 %v2358, 8.0
      %v2361 = vadd.f32 %v2359, 8.0
      %v2362 = vrcp.pop %v2360
      %v2363 = vmul.f32 1.0, %v2362
      %v2364 = vrcp.pop %v2361
      %v2365 = vmul.f32 1.0, %v2364
      %v2366 = vsub.f32 %v2360, 0.5
      %v2367 = vsub.f32 %v2361, 0.5
      %v2368 = vlog2.pop %v2360
      %v2369 = vmul.f32 %v2368, 0.6931472
      %v2370 = vlog2.pop %v2361
      %v2371 = vmul.f32 %v2370, 0.6931472
      %v2372 = vmul.f32 %v2366, %v2369
      %v2373 = vmul.f32 %v2367, %v2371
      %v2374 = vsub.f32 %v2372, %v2360
      %v2375 = vsub.f32 %v2373, %v2361
      %v2376 = vadd.f32 %v2374, 0.9189385
      %v2377 = vadd.f32 %v2375, 0.9189385
      %v2378 = vmul.f32 %v2363, %v2363
      %v2379 = vmul.f32 %v2365, %v2365
      %v2380 = vmul.f32 %v2378, 0.0027777778
      %v2381 = vmul.f32 %v2379, 0.0027777778
      %v2382 = vsub.f32 0.083333336, %v2380
      %v2383 = vsub.f32 0.083333336, %v2381
      %v2384 = vmul.f32 %v2363, %v2382
      %v2385 = vmul.f32 %v2365, %v2383
      %v2386 = vadd.f32 %v2376, %v2384
      %v2387 = vadd.f32 %v2377, %v2385
      %v2388 = vadd.f32 %v2358, 1.0
      %v2389 = vadd.f32 %v2359, 1.0
      %v2390 = vmul.f32 %v2358, %v2388
      %v2391 = vmul.f32 %v2359, %v2389
      %v2392 = vadd.f32 %v2358, 2.0
      %v2393 = vadd.f32 %v2359, 2.0
      %v2394 = vmul.f32 %v2390, %v2392
      %v2395 = vmul.f32 %v2391, %v2393
      %v2396 = vadd.f32 %v2358, 3.0
      %v2397 = vadd.f32 %v2359, 3.0
      %v2398 = vmul.f32 %v2394, %v2396
      %v2399 = vmul.f32 %v2395, %v2397
      %v2400 = vlog2.pop %v2398
      %v2401 = vmul.f32 %v2400, 0.6931472
      %v2402 = vlog2.pop %v2399
      %v2403 = vmul.f32 %v2402, 0.6931472
      %v2404 = vadd.f32 %v2358, 4.0
      %v2405 = vadd.f32 %v2359, 4.0
      %v2406 = vadd.f32 %v2358, 5.0
      %v2407 = vadd.f32 %v2359, 5.0
      %v2408 = vmul.f32 %v2404, %v2406
      %v2409 = vmul.f32 %v2405, %v2407
      %v2410 = vadd.f32 %v2358, 6.0
      %v2411 = vadd.f32 %v2359, 6.0
      %v2412 = vmul.f32 %v2408, %v2410
      %v2413 = vmul.f32 %v2409, %v2411
      %v2414 = vadd.f32 %v2358, 7.0
      %v2415 = vadd.f32 %v2359, 7.0
      %v2416 = vmul.f32 %v2412, %v2414
      %v2417 = vmul.f32 %v2413, %v2415
      %v2418 = vlog2.pop %v2416
      %v2419 = vmul.f32 %v2418, 0.6931472
      %v2420 = vlog2.pop %v2417
      %v2421 = vmul.f32 %v2420, 0.6931472
      %v2422 = vadd.f32 %v2401, %v2419
      %v2423 = vadd.f32 %v2403, %v2421
      %v2424 = vsub.f32 %v2386, %v2422
      %v2425 = vsub.f32 %v2387, %v2423
      %v2426 = vsub.f32 %v2356, %v2424
      %v2427 = vsub.f32 %v2357, %v2425
      %vm2428 = vmxor %vm2336, 1
      %vm2429 = vmxor %vm2337, 1
      %vm2430 = vcmp.le.f32.partialorder %v2351, %v2426
      %vm2431 = vcmp.le.f32.partialorder %v2353, %v2427
      %vm2432 = vmand %vm2428, %vm2430
      %vm2433 = vmand %vm2429, %vm2431
      %vm2434 = vmor %vm2326, %vm2432
      %vm2435 = vmor %vm2327, %vm2433
      %vm2436 = vmxor %vm2290, 1
      %vm2437 = vmxor %vm2291, 1
      %vm2438 = vmand %vm2434, %vm2436
      %vm2439 = vmand %vm2435, %vm2437
      %v2440 = vsel %vm2438, %v2320, %v2288
      %v2441 = vsel %vm2439, %v2321, %v2289
      %vm2442 = vmor %vm2290, %vm2434
      %vm2443 = vmor %vm2291, %vm2435
      %s2444 = scalar_lea.vmem [#allocation7], 320
      %v2445 = vld [vmem:[%s2444] sm:$0xff]
      %v2446 = vld [vmem:[%s2444 + $0x8] sm:$0xff]
      %v2447 = vsub.f32 %v2445, 0.5
      %v2448 = vsub.f32 %v2446, 0.5
      %s2449 = scalar_lea.vmem [#allocation7], 336
      %v2450 = vld [vmem:[%s2449] sm:$0xff]
      %v2451 = vld [vmem:[%s2449 + $0x8] sm:$0xff]
      %v2452 = vand.u32 2147483647, %v2447
      %v2453 = vand.u32 2147483647, %v2448
      %v2454 = vsub.f32 0.5, %v2452
      %v2455 = vsub.f32 0.5, %v2453
      %v2456 = vmax.f32 %v2454, 1e-06
      %v2457 = vmax.f32 %v2455, 1e-06
      %v2458 = vrcp.pop %v2456
      %v2459 = vmul.f32 1.0, %v2458
      %v2460 = vrcp.pop %v2457
      %v2461 = vmul.f32 1.0, %v2460
      %v2462 = vmul.f32 %v946, %v2459
      %v2463 = vmul.f32 %v947, %v2461
      %v2464 = vadd.f32 %v2462, %v905
      %v2465 = vadd.f32 %v2463, %v906
      %v2466 = vmul.f32 %v2464, %v2447
      %v2467 = vmul.f32 %v2465, %v2448
      %v2468 = vadd.f32 %v2466, %v195
      %v2469 = vadd.f32 %v2467, %v196
      %v2470 = vadd.f32 %v2468, 0.43
      %v2471 = vadd.f32 %v2469, 0.43
      %v2472 = vfloor.f32 %v2470
      %v2473 = vfloor.f32 %v2471
      %vm2474 = vcmp.ge.f32.partialorder %v2456, 0.07
      %vm2475 = vcmp.ge.f32.partialorder %v2457, 0.07
      %vm2476 = vcmp.le.f32.partialorder %v2450, %v925
      %vm2477 = vcmp.le.f32.partialorder %v2451, %v926
      %vm2478 = vmand %vm2474, %vm2476
      %vm2479 = vmand %vm2475, %vm2477
      %vm2480 = vcmp.lt.f32.partialorder %v2472, 0.0
      %vm2481 = vcmp.lt.f32.partialorder %v2473, 0.0
      %vm2482 = vcmp.lt.f32.partialorder %v2456, 0.013
      %vm2483 = vcmp.lt.f32.partialorder %v2457, 0.013
      %vm2484 = vcmp.gt.f32.partialorder %v2450, %v2456
      %vm2485 = vcmp.gt.f32.partialorder %v2451, %v2457
      %vm2486 = vmand %vm2482, %vm2484
      %vm2487 = vmand %vm2483, %vm2485
      %vm2488 = vmor %vm2480, %vm2486
      %vm2489 = vmor %vm2481, %vm2487
      %v2490 = vmul.f32 %v2450, %v917
      %v2491 = vmul.f32 %v2451, %v918
      %v2492 = vmul.f32 %v909, %v2459
      %v2493 = vmul.f32 %v910, %v2461
      %v2494 = vmul.f32 %v2492, %v2459
      %v2495 = vmul.f32 %v2493, %v2461
      %v2496 = vadd.f32 %v2494, %v905
      %v2497 = vadd.f32 %v2495, %v906
      %v2498 = vrcp.pop %v2496
      %v2499 = vmul.f32 %v2490, %v2498
      %v2500 = vrcp.pop %v2497
      %v2501 = vmul.f32 %v2491, %v2500
      %v2502 = vlog2.pop %v2499
      %v2503 = vmul.f32 %v2502, 0.6931472
      %v2504 = vlog2.pop %v2501
      %v2505 = vmul.f32 %v2504, 0.6931472
      %v2506 = vmul.f32 %v2472, %v886
      %v2507 = vmul.f32 %v2473, %v888
      %v2508 = vsub.f32 %v2506, %v195
      %v2509 = vsub.f32 %v2507, %v196
      %v2510 = vadd.f32 %v2472, 1.0
      %v2511 = vadd.f32 %v2473, 1.0
      %v2512 = vadd.f32 %v2510, 8.0
      %v2513 = vadd.f32 %v2511, 8.0
      %v2514 = vrcp.pop %v2512
      %v2515 = vmul.f32 1.0, %v2514
      %v2516 = vrcp.pop %v2513
      %v2517 = vmul.f32 1.0, %v2516
      %v2518 = vsub.f32 %v2512, 0.5
      %v2519 = vsub.f32 %v2513, 0.5
      %v2520 = vlog2.pop %v2512
      %v2521 = vmul.f32 %v2520, 0.6931472
      %v2522 = vlog2.pop %v2513
      %v2523 = vmul.f32 %v2522, 0.6931472
      %v2524 = vmul.f32 %v2518, %v2521
      %v2525 = vmul.f32 %v2519, %v2523
      %v2526 = vsub.f32 %v2524, %v2512
      %v2527 = vsub.f32 %v2525, %v2513
      %v2528 = vadd.f32 %v2526, 0.9189385
      %v2529 = vadd.f32 %v2527, 0.9189385
      %v2530 = vmul.f32 %v2515, %v2515
      %v2531 = vmul.f32 %v2517, %v2517
      %v2532 = vmul.f32 %v2530, 0.0027777778
      %v2533 = vmul.f32 %v2531, 0.0027777778
      %v2534 = vsub.f32 0.083333336, %v2532
      %v2535 = vsub.f32 0.083333336, %v2533
      %v2536 = vmul.f32 %v2515, %v2534
      %v2537 = vmul.f32 %v2517, %v2535
      %v2538 = vadd.f32 %v2528, %v2536
      %v2539 = vadd.f32 %v2529, %v2537
      %v2540 = vadd.f32 %v2510, 1.0
      %v2541 = vadd.f32 %v2511, 1.0
      %v2542 = vmul.f32 %v2510, %v2540
      %v2543 = vmul.f32 %v2511, %v2541
      %v2544 = vadd.f32 %v2510, 2.0
      %v2545 = vadd.f32 %v2511, 2.0
      %v2546 = vmul.f32 %v2542, %v2544
      %v2547 = vmul.f32 %v2543, %v2545
      %v2548 = vadd.f32 %v2510, 3.0
      %v2549 = vadd.f32 %v2511, 3.0
      %v2550 = vmul.f32 %v2546, %v2548
      %v2551 = vmul.f32 %v2547, %v2549
      %v2552 = vlog2.pop %v2550
      %v2553 = vmul.f32 %v2552, 0.6931472
      %v2554 = vlog2.pop %v2551
      %v2555 = vmul.f32 %v2554, 0.6931472
      %v2556 = vadd.f32 %v2510, 4.0
      %v2557 = vadd.f32 %v2511, 4.0
      %v2558 = vadd.f32 %v2510, 5.0
      %v2559 = vadd.f32 %v2511, 5.0
      %v2560 = vmul.f32 %v2556, %v2558
      %v2561 = vmul.f32 %v2557, %v2559
      %v2562 = vadd.f32 %v2510, 6.0
      %v2563 = vadd.f32 %v2511, 6.0
      %v2564 = vmul.f32 %v2560, %v2562
      %v2565 = vmul.f32 %v2561, %v2563
      %v2566 = vadd.f32 %v2510, 7.0
      %v2567 = vadd.f32 %v2511, 7.0
      %v2568 = vmul.f32 %v2564, %v2566
      %v2569 = vmul.f32 %v2565, %v2567
      %v2570 = vlog2.pop %v2568
      %v2571 = vmul.f32 %v2570, 0.6931472
      %v2572 = vlog2.pop %v2569
      %v2573 = vmul.f32 %v2572, 0.6931472
      %v2574 = vadd.f32 %v2553, %v2571
      %v2575 = vadd.f32 %v2555, %v2573
      %v2576 = vsub.f32 %v2538, %v2574
      %v2577 = vsub.f32 %v2539, %v2575
      %v2578 = vsub.f32 %v2508, %v2576
      %v2579 = vsub.f32 %v2509, %v2577
      %vm2580 = vmxor %vm2488, 1
      %vm2581 = vmxor %vm2489, 1
      %vm2582 = vcmp.le.f32.partialorder %v2503, %v2578
      %vm2583 = vcmp.le.f32.partialorder %v2505, %v2579
      %vm2584 = vmand %vm2580, %vm2582
      %vm2585 = vmand %vm2581, %vm2583
      %vm2586 = vmor %vm2478, %vm2584
      %vm2587 = vmor %vm2479, %vm2585
      %vm2588 = vmxor %vm2442, 1
      %vm2589 = vmxor %vm2443, 1
      %vm2590 = vmand %vm2586, %vm2588
      %vm2591 = vmand %vm2587, %vm2589
      %v2592 = vsel %vm2590, %v2472, %v2440
      %v2593 = vsel %vm2591, %v2473, %v2441
      %vm2594 = vmor %vm2442, %vm2586
      %vm2595 = vmor %vm2443, %vm2587
      %s2596 = scalar_lea.vmem [#allocation7], 352
      %v2597 = vld [vmem:[%s2596] sm:$0xff]
      %v2598 = vld [vmem:[%s2596 + $0x8] sm:$0xff]
      %v2599 = vsub.f32 %v2597, 0.5
      %v2600 = vsub.f32 %v2598, 0.5
      %s2601 = scalar_lea.vmem [#allocation7], 368
      %v2602 = vld [vmem:[%s2601] sm:$0xff]
      %v2603 = vld [vmem:[%s2601 + $0x8] sm:$0xff]
      %v2604 = vand.u32 2147483647, %v2599
      %v2605 = vand.u32 2147483647, %v2600
      %v2606 = vsub.f32 0.5, %v2604
      %v2607 = vsub.f32 0.5, %v2605
      %v2608 = vmax.f32 %v2606, 1e-06
      %v2609 = vmax.f32 %v2607, 1e-06
      %v2610 = vrcp.pop %v2608
      %v2611 = vmul.f32 1.0, %v2610
      %v2612 = vrcp.pop %v2609
      %v2613 = vmul.f32 1.0, %v2612
      %v2614 = vmul.f32 %v946, %v2611
      %v2615 = vmul.f32 %v947, %v2613
      %v2616 = vadd.f32 %v2614, %v905
      %v2617 = vadd.f32 %v2615, %v906
      %v2618 = vmul.f32 %v2616, %v2599
      %v2619 = vmul.f32 %v2617, %v2600
      %v2620 = vadd.f32 %v2618, %v195
      %v2621 = vadd.f32 %v2619, %v196
      %v2622 = vadd.f32 %v2620, 0.43
      %v2623 = vadd.f32 %v2621, 0.43
      %v2624 = vfloor.f32 %v2622
      %v2625 = vfloor.f32 %v2623
      %vm2626 = vcmp.ge.f32.partialorder %v2608, 0.07
      %vm2627 = vcmp.ge.f32.partialorder %v2609, 0.07
      %vm2628 = vcmp.le.f32.partialorder %v2602, %v925
      %vm2629 = vcmp.le.f32.partialorder %v2603, %v926
      %vm2630 = vmand %vm2626, %vm2628
      %vm2631 = vmand %vm2627, %vm2629
      %vm2632 = vcmp.lt.f32.partialorder %v2624, 0.0
      %vm2633 = vcmp.lt.f32.partialorder %v2625, 0.0
      %vm2634 = vcmp.lt.f32.partialorder %v2608, 0.013
      %vm2635 = vcmp.lt.f32.partialorder %v2609, 0.013
      %vm2636 = vcmp.gt.f32.partialorder %v2602, %v2608
      %vm2637 = vcmp.gt.f32.partialorder %v2603, %v2609
      %vm2638 = vmand %vm2634, %vm2636
      %vm2639 = vmand %vm2635, %vm2637
      %vm2640 = vmor %vm2632, %vm2638
      %vm2641 = vmor %vm2633, %vm2639
      %v2642 = vmul.f32 %v2602, %v917
      %v2643 = vmul.f32 %v2603, %v918
      %v2644 = vmul.f32 %v909, %v2611
      %v2645 = vmul.f32 %v910, %v2613
      %v2646 = vmul.f32 %v2644, %v2611
      %v2647 = vmul.f32 %v2645, %v2613
      %v2648 = vadd.f32 %v2646, %v905
      %v2649 = vadd.f32 %v2647, %v906
      %v2650 = vrcp.pop %v2648
      %v2651 = vmul.f32 %v2642, %v2650
      %v2652 = vrcp.pop %v2649
      %v2653 = vmul.f32 %v2643, %v2652
      %v2654 = vlog2.pop %v2651
      %v2655 = vmul.f32 %v2654, 0.6931472
      %v2656 = vlog2.pop %v2653
      %v2657 = vmul.f32 %v2656, 0.6931472
      %v2658 = vmul.f32 %v2624, %v886
      %v2659 = vmul.f32 %v2625, %v888
      %v2660 = vsub.f32 %v2658, %v195
      %v2661 = vsub.f32 %v2659, %v196
      %v2662 = vadd.f32 %v2624, 1.0
      %v2663 = vadd.f32 %v2625, 1.0
      %v2664 = vadd.f32 %v2662, 8.0
      %v2665 = vadd.f32 %v2663, 8.0
      %v2666 = vrcp.pop %v2664
      %v2667 = vmul.f32 1.0, %v2666
      %v2668 = vrcp.pop %v2665
      %v2669 = vmul.f32 1.0, %v2668
      %v2670 = vsub.f32 %v2664, 0.5
      %v2671 = vsub.f32 %v2665, 0.5
      %v2672 = vlog2.pop %v2664
      %v2673 = vmul.f32 %v2672, 0.6931472
      %v2674 = vlog2.pop %v2665
      %v2675 = vmul.f32 %v2674, 0.6931472
      %v2676 = vmul.f32 %v2670, %v2673
      %v2677 = vmul.f32 %v2671, %v2675
      %v2678 = vsub.f32 %v2676, %v2664
      %v2679 = vsub.f32 %v2677, %v2665
      %v2680 = vadd.f32 %v2678, 0.9189385
      %v2681 = vadd.f32 %v2679, 0.9189385
      %v2682 = vmul.f32 %v2667, %v2667
      %v2683 = vmul.f32 %v2669, %v2669
      %v2684 = vmul.f32 %v2682, 0.0027777778
      %v2685 = vmul.f32 %v2683, 0.0027777778
      %v2686 = vsub.f32 0.083333336, %v2684
      %v2687 = vsub.f32 0.083333336, %v2685
      %v2688 = vmul.f32 %v2667, %v2686
      %v2689 = vmul.f32 %v2669, %v2687
      %v2690 = vadd.f32 %v2680, %v2688
      %v2691 = vadd.f32 %v2681, %v2689
      %v2692 = vadd.f32 %v2662, 1.0
      %v2693 = vadd.f32 %v2663, 1.0
      %v2694 = vmul.f32 %v2662, %v2692
      %v2695 = vmul.f32 %v2663, %v2693
      %v2696 = vadd.f32 %v2662, 2.0
      %v2697 = vadd.f32 %v2663, 2.0
      %v2698 = vmul.f32 %v2694, %v2696
      %v2699 = vmul.f32 %v2695, %v2697
      %v2700 = vadd.f32 %v2662, 3.0
      %v2701 = vadd.f32 %v2663, 3.0
      %v2702 = vmul.f32 %v2698, %v2700
      %v2703 = vmul.f32 %v2699, %v2701
      %v2704 = vlog2.pop %v2702
      %v2705 = vmul.f32 %v2704, 0.6931472
      %v2706 = vlog2.pop %v2703
      %v2707 = vmul.f32 %v2706, 0.6931472
      %v2708 = vadd.f32 %v2662, 4.0
      %v2709 = vadd.f32 %v2663, 4.0
      %v2710 = vadd.f32 %v2662, 5.0
      %v2711 = vadd.f32 %v2663, 5.0
      %v2712 = vmul.f32 %v2708, %v2710
      %v2713 = vmul.f32 %v2709, %v2711
      %v2714 = vadd.f32 %v2662, 6.0
      %v2715 = vadd.f32 %v2663, 6.0
      %v2716 = vmul.f32 %v2712, %v2714
      %v2717 = vmul.f32 %v2713, %v2715
      %v2718 = vadd.f32 %v2662, 7.0
      %v2719 = vadd.f32 %v2663, 7.0
      %v2720 = vmul.f32 %v2716, %v2718
      %v2721 = vmul.f32 %v2717, %v2719
      %v2722 = vlog2.pop %v2720
      %v2723 = vmul.f32 %v2722, 0.6931472
      %v2724 = vlog2.pop %v2721
      %v2725 = vmul.f32 %v2724, 0.6931472
      %v2726 = vadd.f32 %v2705, %v2723
      %v2727 = vadd.f32 %v2707, %v2725
      %v2728 = vsub.f32 %v2690, %v2726
      %v2729 = vsub.f32 %v2691, %v2727
      %v2730 = vsub.f32 %v2660, %v2728
      %v2731 = vsub.f32 %v2661, %v2729
      %vm2732 = vmxor %vm2640, 1
      %vm2733 = vmxor %vm2641, 1
      %vm2734 = vcmp.le.f32.partialorder %v2655, %v2730
      %vm2735 = vcmp.le.f32.partialorder %v2657, %v2731
      %vm2736 = vmand %vm2732, %vm2734
      %vm2737 = vmand %vm2733, %vm2735
      %vm2738 = vmor %vm2630, %vm2736
      %vm2739 = vmor %vm2631, %vm2737
      %vm2740 = vmxor %vm2594, 1
      %vm2741 = vmxor %vm2595, 1
      %vm2742 = vmand %vm2738, %vm2740
      %vm2743 = vmand %vm2739, %vm2741
      %v2744 = vsel %vm2742, %v2624, %v2592
      %v2745 = vsel %vm2743, %v2625, %v2593
      %2746 = vst [vmem:[#allocation8] sm:$0xff] %v2744
      %2747 = vst [vmem:[#allocation8 + $0x8] sm:$0xff] %v2745
    $region33: #{tpu_custom_call.1} parent=1 // pred_fallthru
      _
    %p2748 = scmp.lt.f32.partialorder %s206, 10.0
    %p2749 = scmp.ge.f32.partialorder %s216, 10.0
    %p2750 = pnand %p2748, %p2749
    %p2751 = pneg %p2750
    // Predicated region
    $region34: #{tpu_custom_call.1} parent=1 // pred_check
      _
    $region35: #{tpu_custom_call.1} parent=1 // pred_check_branch
      %2753 = sbr.rel (%p2750) target = $region37
    $region36: #{tpu_custom_call.1} parent=1 // pred_region
      %v2754 = vmin.f32 %v195, 10.0
      %v2755 = vmin.f32 %v196, 10.0
      %v2756 = vld [vmem:[#allocation7] sm:$0xff]
      %v2757 = vld [vmem:[#allocation7 + $0x8] sm:$0xff]
      %v2758 = vsub.f32 0.0, %v2754
      %v2759 = vsub.f32 0.0, %v2755
      %v2760 = vmul.f32 %v2758, 1.442695
      %v2761 = vpow.pop %v2760
      %v2762 = vmul.f32 %v2759, 1.442695
      %v2763 = vpow.pop %v2762
      %vm2764 = vcmp.gt.f32.partialorder %v2756, %v2761
      %vm2765 = vcmp.gt.f32.partialorder %v2757, %v2763
      %v2766 = vsel %vm2764, 1, 0
      %v2767 = vsel %vm2765, 1, 0
      %v2768 = vcvt.s32.f32 %v2766
      %v2769 = vcvt.s32.f32 %v2767
      %v2770 = vadd.f32 %v2768, 0.0
      %v2771 = vadd.f32 %v2769, 0.0
      %v2772 = vmul.f32 %v2761, %v2754
      %v2773 = vmul.f32 %v2763, %v2755
      %v2774 = vadd.f32 %v2761, %v2772
      %v2775 = vadd.f32 %v2763, %v2773
      %vm2776 = vcmp.gt.f32.partialorder %v2756, %v2774
      %vm2777 = vcmp.gt.f32.partialorder %v2757, %v2775
      %v2778 = vsel %vm2776, 1, 0
      %v2779 = vsel %vm2777, 1, 0
      %v2780 = vcvt.s32.f32 %v2778
      %v2781 = vcvt.s32.f32 %v2779
      %v2782 = vadd.f32 %v2770, %v2780
      %v2783 = vadd.f32 %v2771, %v2781
      %v2784 = vmul.f32 %v2754, 0.5
      %v2785 = vmul.f32 %v2755, 0.5
      %v2786 = vmul.f32 %v2772, %v2784
      %v2787 = vmul.f32 %v2773, %v2785
      %v2788 = vadd.f32 %v2774, %v2786
      %v2789 = vadd.f32 %v2775, %v2787
      %vm2790 = vcmp.gt.f32.partialorder %v2756, %v2788
      %vm2791 = vcmp.gt.f32.partialorder %v2757, %v2789
      %v2792 = vsel %vm2790, 1, 0
      %v2793 = vsel %vm2791, 1, 0
      %v2794 = vcvt.s32.f32 %v2792
      %v2795 = vcvt.s32.f32 %v2793
      %v2796 = vadd.f32 %v2782, %v2794
      %v2797 = vadd.f32 %v2783, %v2795
      %v2798 = vmul.f32 %v2754, 0.33333334
      %v2799 = vmul.f32 %v2755, 0.33333334
      %v2800 = vmul.f32 %v2786, %v2798
      %v2801 = vmul.f32 %v2787, %v2799
      %v2802 = vadd.f32 %v2788, %v2800
      %v2803 = vadd.f32 %v2789, %v2801
      %vm2804 = vcmp.gt.f32.partialorder %v2756, %v2802
      %vm2805 = vcmp.gt.f32.partialorder %v2757, %v2803
      %v2806 = vsel %vm2804, 1, 0
      %v2807 = vsel %vm2805, 1, 0
      %v2808 = vcvt.s32.f32 %v2806
      %v2809 = vcvt.s32.f32 %v2807
      %v2810 = vadd.f32 %v2796, %v2808
      %v2811 = vadd.f32 %v2797, %v2809
      %v2812 = vmul.f32 %v2754, 0.25
      %v2813 = vmul.f32 %v2755, 0.25
      %v2814 = vmul.f32 %v2800, %v2812
      %v2815 = vmul.f32 %v2801, %v2813
      %v2816 = vadd.f32 %v2802, %v2814
      %v2817 = vadd.f32 %v2803, %v2815
      %vm2818 = vcmp.gt.f32.partialorder %v2756, %v2816
      %vm2819 = vcmp.gt.f32.partialorder %v2757, %v2817
      %v2820 = vsel %vm2818, 1, 0
      %v2821 = vsel %vm2819, 1, 0
      %v2822 = vcvt.s32.f32 %v2820
      %v2823 = vcvt.s32.f32 %v2821
      %v2824 = vadd.f32 %v2810, %v2822
      %v2825 = vadd.f32 %v2811, %v2823
      %v2826 = vmul.f32 %v2754, 0.2
      %v2827 = vmul.f32 %v2755, 0.2
      %v2828 = vmul.f32 %v2814, %v2826
      %v2829 = vmul.f32 %v2815, %v2827
      %v2830 = vadd.f32 %v2816, %v2828
      %v2831 = vadd.f32 %v2817, %v2829
      %vm2832 = vcmp.gt.f32.partialorder %v2756, %v2830
      %vm2833 = vcmp.gt.f32.partialorder %v2757, %v2831
      %v2834 = vsel %vm2832, 1, 0
      %v2835 = vsel %vm2833, 1, 0
      %v2836 = vcvt.s32.f32 %v2834
      %v2837 = vcvt.s32.f32 %v2835
      %v2838 = vadd.f32 %v2824, %v2836
      %v2839 = vadd.f32 %v2825, %v2837
      %v2840 = vmul.f32 %v2754, 0.16666667
      %v2841 = vmul.f32 %v2755, 0.16666667
      %v2842 = vmul.f32 %v2828, %v2840
      %v2843 = vmul.f32 %v2829, %v2841
      %v2844 = vadd.f32 %v2830, %v2842
      %v2845 = vadd.f32 %v2831, %v2843
      %vm2846 = vcmp.gt.f32.partialorder %v2756, %v2844
      %vm2847 = vcmp.gt.f32.partialorder %v2757, %v2845
      %v2848 = vsel %vm2846, 1, 0
      %v2849 = vsel %vm2847, 1, 0
      %v2850 = vcvt.s32.f32 %v2848
      %v2851 = vcvt.s32.f32 %v2849
      %v2852 = vadd.f32 %v2838, %v2850
      %v2853 = vadd.f32 %v2839, %v2851
      %v2854 = vmul.f32 %v2754, 0.14285715
      %v2855 = vmul.f32 %v2755, 0.14285715
      %v2856 = vmul.f32 %v2842, %v2854
      %v2857 = vmul.f32 %v2843, %v2855
      %v2858 = vadd.f32 %v2844, %v2856
      %v2859 = vadd.f32 %v2845, %v2857
      %vm2860 = vcmp.gt.f32.partialorder %v2756, %v2858
      %vm2861 = vcmp.gt.f32.partialorder %v2757, %v2859
      %v2862 = vsel %vm2860, 1, 0
      %v2863 = vsel %vm2861, 1, 0
      %v2864 = vcvt.s32.f32 %v2862
      %v2865 = vcvt.s32.f32 %v2863
      %v2866 = vadd.f32 %v2852, %v2864
      %v2867 = vadd.f32 %v2853, %v2865
      %v2868 = vmul.f32 %v2754, 0.125
      %v2869 = vmul.f32 %v2755, 0.125
      %v2870 = vmul.f32 %v2856, %v2868
      %v2871 = vmul.f32 %v2857, %v2869
      %v2872 = vadd.f32 %v2858, %v2870
      %v2873 = vadd.f32 %v2859, %v2871
      %vm2874 = vcmp.gt.f32.partialorder %v2756, %v2872
      %vm2875 = vcmp.gt.f32.partialorder %v2757, %v2873
      %v2876 = vsel %vm2874, 1, 0
      %v2877 = vsel %vm2875, 1, 0
      %v2878 = vcvt.s32.f32 %v2876
      %v2879 = vcvt.s32.f32 %v2877
      %v2880 = vadd.f32 %v2866, %v2878
      %v2881 = vadd.f32 %v2867, %v2879
      %v2882 = vmul.f32 %v2754, 0.11111111
      %v2883 = vmul.f32 %v2755, 0.11111111
      %v2884 = vmul.f32 %v2870, %v2882
      %v2885 = vmul.f32 %v2871, %v2883
      %v2886 = vadd.f32 %v2872, %v2884
      %v2887 = vadd.f32 %v2873, %v2885
      %vm2888 = vcmp.gt.f32.partialorder %v2756, %v2886
      %vm2889 = vcmp.gt.f32.partialorder %v2757, %v2887
      %v2890 = vsel %vm2888, 1, 0
      %v2891 = vsel %vm2889, 1, 0
      %v2892 = vcvt.s32.f32 %v2890
      %v2893 = vcvt.s32.f32 %v2891
      %v2894 = vadd.f32 %v2880, %v2892
      %v2895 = vadd.f32 %v2881, %v2893
      %v2896 = vmul.f32 %v2754, 0.1
      %v2897 = vmul.f32 %v2755, 0.1
      %v2898 = vmul.f32 %v2884, %v2896
      %v2899 = vmul.f32 %v2885, %v2897
      %v2900 = vadd.f32 %v2886, %v2898
      %v2901 = vadd.f32 %v2887, %v2899
      %vm2902 = vcmp.gt.f32.partialorder %v2756, %v2900
      %vm2903 = vcmp.gt.f32.partialorder %v2757, %v2901
      %v2904 = vsel %vm2902, 1, 0
      %v2905 = vsel %vm2903, 1, 0
      %v2906 = vcvt.s32.f32 %v2904
      %v2907 = vcvt.s32.f32 %v2905
      %v2908 = vadd.f32 %v2894, %v2906
      %v2909 = vadd.f32 %v2895, %v2907
      %v2910 = vmul.f32 %v2754, 0.09090909
      %v2911 = vmul.f32 %v2755, 0.09090909
      %v2912 = vmul.f32 %v2898, %v2910
      %v2913 = vmul.f32 %v2899, %v2911
      %v2914 = vadd.f32 %v2900, %v2912
      %v2915 = vadd.f32 %v2901, %v2913
      %vm2916 = vcmp.gt.f32.partialorder %v2756, %v2914
      %vm2917 = vcmp.gt.f32.partialorder %v2757, %v2915
      %v2918 = vsel %vm2916, 1, 0
      %v2919 = vsel %vm2917, 1, 0
      %v2920 = vcvt.s32.f32 %v2918
      %v2921 = vcvt.s32.f32 %v2919
      %v2922 = vadd.f32 %v2908, %v2920
      %v2923 = vadd.f32 %v2909, %v2921
      %v2924 = vmul.f32 %v2754, 0.083333336
      %v2925 = vmul.f32 %v2755, 0.083333336
      %v2926 = vmul.f32 %v2912, %v2924
      %v2927 = vmul.f32 %v2913, %v2925
      %v2928 = vadd.f32 %v2914, %v2926
      %v2929 = vadd.f32 %v2915, %v2927
      %vm2930 = vcmp.gt.f32.partialorder %v2756, %v2928
      %vm2931 = vcmp.gt.f32.partialorder %v2757, %v2929
      %v2932 = vsel %vm2930, 1, 0
      %v2933 = vsel %vm2931, 1, 0
      %v2934 = vcvt.s32.f32 %v2932
      %v2935 = vcvt.s32.f32 %v2933
      %v2936 = vadd.f32 %v2922, %v2934
      %v2937 = vadd.f32 %v2923, %v2935
      %v2938 = vmul.f32 %v2754, 0.07692308
      %v2939 = vmul.f32 %v2755, 0.07692308
      %v2940 = vmul.f32 %v2926, %v2938
      %v2941 = vmul.f32 %v2927, %v2939
      %v2942 = vadd.f32 %v2928, %v2940
      %v2943 = vadd.f32 %v2929, %v2941
      %vm2944 = vcmp.gt.f32.partialorder %v2756, %v2942
      %vm2945 = vcmp.gt.f32.partialorder %v2757, %v2943
      %v2946 = vsel %vm2944, 1, 0
      %v2947 = vsel %vm2945, 1, 0
      %v2948 = vcvt.s32.f32 %v2946
      %v2949 = vcvt.s32.f32 %v2947
      %v2950 = vadd.f32 %v2936, %v2948
      %v2951 = vadd.f32 %v2937, %v2949
      %v2952 = vmul.f32 %v2754, 0.071428575
      %v2953 = vmul.f32 %v2755, 0.071428575
      %v2954 = vmul.f32 %v2940, %v2952
      %v2955 = vmul.f32 %v2941, %v2953
      %v2956 = vadd.f32 %v2942, %v2954
      %v2957 = vadd.f32 %v2943, %v2955
      %vm2958 = vcmp.gt.f32.partialorder %v2756, %v2956
      %vm2959 = vcmp.gt.f32.partialorder %v2757, %v2957
      %v2960 = vsel %vm2958, 1, 0
      %v2961 = vsel %vm2959, 1, 0
      %v2962 = vcvt.s32.f32 %v2960
      %v2963 = vcvt.s32.f32 %v2961
      %v2964 = vadd.f32 %v2950, %v2962
      %v2965 = vadd.f32 %v2951, %v2963
      %v2966 = vmul.f32 %v2754, 0.06666667
      %v2967 = vmul.f32 %v2755, 0.06666667
      %v2968 = vmul.f32 %v2954, %v2966
      %v2969 = vmul.f32 %v2955, %v2967
      %v2970 = vadd.f32 %v2956, %v2968
      %v2971 = vadd.f32 %v2957, %v2969
      %vm2972 = vcmp.gt.f32.partialorder %v2756, %v2970
      %vm2973 = vcmp.gt.f32.partialorder %v2757, %v2971
      %v2974 = vsel %vm2972, 1, 0
      %v2975 = vsel %vm2973, 1, 0
      %v2976 = vcvt.s32.f32 %v2974
      %v2977 = vcvt.s32.f32 %v2975
      %v2978 = vadd.f32 %v2964, %v2976
      %v2979 = vadd.f32 %v2965, %v2977
      %v2980 = vmul.f32 %v2754, 0.0625
      %v2981 = vmul.f32 %v2755, 0.0625
      %v2982 = vmul.f32 %v2968, %v2980
      %v2983 = vmul.f32 %v2969, %v2981
      %v2984 = vadd.f32 %v2970, %v2982
      %v2985 = vadd.f32 %v2971, %v2983
      %vm2986 = vcmp.gt.f32.partialorder %v2756, %v2984
      %vm2987 = vcmp.gt.f32.partialorder %v2757, %v2985
      %v2988 = vsel %vm2986, 1, 0
      %v2989 = vsel %vm2987, 1, 0
      %v2990 = vcvt.s32.f32 %v2988
      %v2991 = vcvt.s32.f32 %v2989
      %v2992 = vadd.f32 %v2978, %v2990
      %v2993 = vadd.f32 %v2979, %v2991
      %v2994 = vmul.f32 %v2754, 0.05882353
      %v2995 = vmul.f32 %v2755, 0.05882353
      %v2996 = vmul.f32 %v2982, %v2994
      %v2997 = vmul.f32 %v2983, %v2995
      %v2998 = vadd.f32 %v2984, %v2996
      %v2999 = vadd.f32 %v2985, %v2997
      %vm3000 = vcmp.gt.f32.partialorder %v2756, %v2998
      %vm3001 = vcmp.gt.f32.partialorder %v2757, %v2999
      %v3002 = vsel %vm3000, 1, 0
      %v3003 = vsel %vm3001, 1, 0
      %v3004 = vcvt.s32.f32 %v3002
      %v3005 = vcvt.s32.f32 %v3003
      %v3006 = vadd.f32 %v2992, %v3004
      %v3007 = vadd.f32 %v2993, %v3005
      %v3008 = vmul.f32 %v2754, 0.055555556
      %v3009 = vmul.f32 %v2755, 0.055555556
      %v3010 = vmul.f32 %v2996, %v3008
      %v3011 = vmul.f32 %v2997, %v3009
      %v3012 = vadd.f32 %v2998, %v3010
      %v3013 = vadd.f32 %v2999, %v3011
      %vm3014 = vcmp.gt.f32.partialorder %v2756, %v3012
      %vm3015 = vcmp.gt.f32.partialorder %v2757, %v3013
      %v3016 = vsel %vm3014, 1, 0
      %v3017 = vsel %vm3015, 1, 0
      %v3018 = vcvt.s32.f32 %v3016
      %v3019 = vcvt.s32.f32 %v3017
      %v3020 = vadd.f32 %v3006, %v3018
      %v3021 = vadd.f32 %v3007, %v3019
      %v3022 = vmul.f32 %v2754, 0.05263158
      %v3023 = vmul.f32 %v2755, 0.05263158
      %v3024 = vmul.f32 %v3010, %v3022
      %v3025 = vmul.f32 %v3011, %v3023
      %v3026 = vadd.f32 %v3012, %v3024
      %v3027 = vadd.f32 %v3013, %v3025
      %vm3028 = vcmp.gt.f32.partialorder %v2756, %v3026
      %vm3029 = vcmp.gt.f32.partialorder %v2757, %v3027
      %v3030 = vsel %vm3028, 1, 0
      %v3031 = vsel %vm3029, 1, 0
      %v3032 = vcvt.s32.f32 %v3030
      %v3033 = vcvt.s32.f32 %v3031
      %v3034 = vadd.f32 %v3020, %v3032
      %v3035 = vadd.f32 %v3021, %v3033
      %v3036 = vmul.f32 %v2754, 0.05
      %v3037 = vmul.f32 %v2755, 0.05
      %v3038 = vmul.f32 %v3024, %v3036
      %v3039 = vmul.f32 %v3025, %v3037
      %v3040 = vadd.f32 %v3026, %v3038
      %v3041 = vadd.f32 %v3027, %v3039
      %vm3042 = vcmp.gt.f32.partialorder %v2756, %v3040
      %vm3043 = vcmp.gt.f32.partialorder %v2757, %v3041
      %v3044 = vsel %vm3042, 1, 0
      %v3045 = vsel %vm3043, 1, 0
      %v3046 = vcvt.s32.f32 %v3044
      %v3047 = vcvt.s32.f32 %v3045
      %v3048 = vadd.f32 %v3034, %v3046
      %v3049 = vadd.f32 %v3035, %v3047
      %v3050 = vmul.f32 %v2754, 0.04761905
      %v3051 = vmul.f32 %v2755, 0.04761905
      %v3052 = vmul.f32 %v3038, %v3050
      %v3053 = vmul.f32 %v3039, %v3051
      %v3054 = vadd.f32 %v3040, %v3052
      %v3055 = vadd.f32 %v3041, %v3053
      %vm3056 = vcmp.gt.f32.partialorder %v2756, %v3054
      %vm3057 = vcmp.gt.f32.partialorder %v2757, %v3055
      %v3058 = vsel %vm3056, 1, 0
      %v3059 = vsel %vm3057, 1, 0
      %v3060 = vcvt.s32.f32 %v3058
      %v3061 = vcvt.s32.f32 %v3059
      %v3062 = vadd.f32 %v3048, %v3060
      %v3063 = vadd.f32 %v3049, %v3061
      %v3064 = vmul.f32 %v2754, 0.045454547
      %v3065 = vmul.f32 %v2755, 0.045454547
      %v3066 = vmul.f32 %v3052, %v3064
      %v3067 = vmul.f32 %v3053, %v3065
      %v3068 = vadd.f32 %v3054, %v3066
      %v3069 = vadd.f32 %v3055, %v3067
      %vm3070 = vcmp.gt.f32.partialorder %v2756, %v3068
      %vm3071 = vcmp.gt.f32.partialorder %v2757, %v3069
      %v3072 = vsel %vm3070, 1, 0
      %v3073 = vsel %vm3071, 1, 0
      %v3074 = vcvt.s32.f32 %v3072
      %v3075 = vcvt.s32.f32 %v3073
      %v3076 = vadd.f32 %v3062, %v3074
      %v3077 = vadd.f32 %v3063, %v3075
      %v3078 = vmul.f32 %v2754, 0.04347826
      %v3079 = vmul.f32 %v2755, 0.04347826
      %v3080 = vmul.f32 %v3066, %v3078
      %v3081 = vmul.f32 %v3067, %v3079
      %v3082 = vadd.f32 %v3068, %v3080
      %v3083 = vadd.f32 %v3069, %v3081
      %vm3084 = vcmp.gt.f32.partialorder %v2756, %v3082
      %vm3085 = vcmp.gt.f32.partialorder %v2757, %v3083
      %v3086 = vsel %vm3084, 1, 0
      %v3087 = vsel %vm3085, 1, 0
      %v3088 = vcvt.s32.f32 %v3086
      %v3089 = vcvt.s32.f32 %v3087
      %v3090 = vadd.f32 %v3076, %v3088
      %v3091 = vadd.f32 %v3077, %v3089
      %v3092 = vmul.f32 %v2754, 0.041666668
      %v3093 = vmul.f32 %v2755, 0.041666668
      %v3094 = vmul.f32 %v3080, %v3092
      %v3095 = vmul.f32 %v3081, %v3093
      %v3096 = vadd.f32 %v3082, %v3094
      %v3097 = vadd.f32 %v3083, %v3095
      %vm3098 = vcmp.gt.f32.partialorder %v2756, %v3096
      %vm3099 = vcmp.gt.f32.partialorder %v2757, %v3097
      %v3100 = vsel %vm3098, 1, 0
      %v3101 = vsel %vm3099, 1, 0
      %v3102 = vcvt.s32.f32 %v3100
      %v3103 = vcvt.s32.f32 %v3101
      %v3104 = vadd.f32 %v3090, %v3102
      %v3105 = vadd.f32 %v3091, %v3103
      %v3106 = vmul.f32 %v2754, 0.04
      %v3107 = vmul.f32 %v2755, 0.04
      %v3108 = vmul.f32 %v3094, %v3106
      %v3109 = vmul.f32 %v3095, %v3107
      %v3110 = vadd.f32 %v3096, %v3108
      %v3111 = vadd.f32 %v3097, %v3109
      %vm3112 = vcmp.gt.f32.partialorder %v2756, %v3110
      %vm3113 = vcmp.gt.f32.partialorder %v2757, %v3111
      %v3114 = vsel %vm3112, 1, 0
      %v3115 = vsel %vm3113, 1, 0
      %v3116 = vcvt.s32.f32 %v3114
      %v3117 = vcvt.s32.f32 %v3115
      %v3118 = vadd.f32 %v3104, %v3116
      %v3119 = vadd.f32 %v3105, %v3117
      %v3120 = vmul.f32 %v2754, 0.03846154
      %v3121 = vmul.f32 %v2755, 0.03846154
      %v3122 = vmul.f32 %v3108, %v3120
      %v3123 = vmul.f32 %v3109, %v3121
      %v3124 = vadd.f32 %v3110, %v3122
      %v3125 = vadd.f32 %v3111, %v3123
      %vm3126 = vcmp.gt.f32.partialorder %v2756, %v3124
      %vm3127 = vcmp.gt.f32.partialorder %v2757, %v3125
      %v3128 = vsel %vm3126, 1, 0
      %v3129 = vsel %vm3127, 1, 0
      %v3130 = vcvt.s32.f32 %v3128
      %v3131 = vcvt.s32.f32 %v3129
      %v3132 = vadd.f32 %v3118, %v3130
      %v3133 = vadd.f32 %v3119, %v3131
      %v3134 = vmul.f32 %v2754, 0.037037037
      %v3135 = vmul.f32 %v2755, 0.037037037
      %v3136 = vmul.f32 %v3122, %v3134
      %v3137 = vmul.f32 %v3123, %v3135
      %v3138 = vadd.f32 %v3124, %v3136
      %v3139 = vadd.f32 %v3125, %v3137
      %vm3140 = vcmp.gt.f32.partialorder %v2756, %v3138
      %vm3141 = vcmp.gt.f32.partialorder %v2757, %v3139
      %v3142 = vsel %vm3140, 1, 0
      %v3143 = vsel %vm3141, 1, 0
      %v3144 = vcvt.s32.f32 %v3142
      %v3145 = vcvt.s32.f32 %v3143
      %v3146 = vadd.f32 %v3132, %v3144
      %v3147 = vadd.f32 %v3133, %v3145
      %v3148 = vmul.f32 %v2754, 0.035714287
      %v3149 = vmul.f32 %v2755, 0.035714287
      %v3150 = vmul.f32 %v3136, %v3148
      %v3151 = vmul.f32 %v3137, %v3149
      %v3152 = vadd.f32 %v3138, %v3150
      %v3153 = vadd.f32 %v3139, %v3151
      %vm3154 = vcmp.gt.f32.partialorder %v2756, %v3152
      %vm3155 = vcmp.gt.f32.partialorder %v2757, %v3153
      %v3156 = vsel %vm3154, 1, 0
      %v3157 = vsel %vm3155, 1, 0
      %v3158 = vcvt.s32.f32 %v3156
      %v3159 = vcvt.s32.f32 %v3157
      %v3160 = vadd.f32 %v3146, %v3158
      %v3161 = vadd.f32 %v3147, %v3159
      %v3162 = vmul.f32 %v2754, 0.03448276
      %v3163 = vmul.f32 %v2755, 0.03448276
      %v3164 = vmul.f32 %v3150, %v3162
      %v3165 = vmul.f32 %v3151, %v3163
      %v3166 = vadd.f32 %v3152, %v3164
      %v3167 = vadd.f32 %v3153, %v3165
      %vm3168 = vcmp.gt.f32.partialorder %v2756, %v3166
      %vm3169 = vcmp.gt.f32.partialorder %v2757, %v3167
      %v3170 = vsel %vm3168, 1, 0
      %v3171 = vsel %vm3169, 1, 0
      %v3172 = vcvt.s32.f32 %v3170
      %v3173 = vcvt.s32.f32 %v3171
      %v3174 = vadd.f32 %v3160, %v3172
      %v3175 = vadd.f32 %v3161, %v3173
      %v3176 = vmul.f32 %v2754, 0.033333335
      %v3177 = vmul.f32 %v2755, 0.033333335
      %v3178 = vmul.f32 %v3164, %v3176
      %v3179 = vmul.f32 %v3165, %v3177
      %v3180 = vadd.f32 %v3166, %v3178
      %v3181 = vadd.f32 %v3167, %v3179
      %vm3182 = vcmp.gt.f32.partialorder %v2756, %v3180
      %vm3183 = vcmp.gt.f32.partialorder %v2757, %v3181
      %v3184 = vsel %vm3182, 1, 0
      %v3185 = vsel %vm3183, 1, 0
      %v3186 = vcvt.s32.f32 %v3184
      %v3187 = vcvt.s32.f32 %v3185
      %v3188 = vadd.f32 %v3174, %v3186
      %v3189 = vadd.f32 %v3175, %v3187
      %v3190 = vmul.f32 %v2754, 0.032258064
      %v3191 = vmul.f32 %v2755, 0.032258064
      %v3192 = vmul.f32 %v3178, %v3190
      %v3193 = vmul.f32 %v3179, %v3191
      %v3194 = vadd.f32 %v3180, %v3192
      %v3195 = vadd.f32 %v3181, %v3193
      %vm3196 = vcmp.gt.f32.partialorder %v2756, %v3194
      %vm3197 = vcmp.gt.f32.partialorder %v2757, %v3195
      %v3198 = vsel %vm3196, 1, 0
      %v3199 = vsel %vm3197, 1, 0
      %v3200 = vcvt.s32.f32 %v3198
      %v3201 = vcvt.s32.f32 %v3199
      %v3202 = vadd.f32 %v3188, %v3200
      %v3203 = vadd.f32 %v3189, %v3201
      %v3204 = vmul.f32 %v2754, 0.03125
      %v3205 = vmul.f32 %v2755, 0.03125
      %v3206 = vmul.f32 %v3192, %v3204
      %v3207 = vmul.f32 %v3193, %v3205
      %v3208 = vadd.f32 %v3194, %v3206
      %v3209 = vadd.f32 %v3195, %v3207
      %vm3210 = vcmp.gt.f32.partialorder %v2756, %v3208
      %vm3211 = vcmp.gt.f32.partialorder %v2757, %v3209
      %v3212 = vsel %vm3210, 1, 0
      %v3213 = vsel %vm3211, 1, 0
      %v3214 = vcvt.s32.f32 %v3212
      %v3215 = vcvt.s32.f32 %v3213
      %v3216 = vadd.f32 %v3202, %v3214
      %v3217 = vadd.f32 %v3203, %v3215
      %v3218 = vmul.f32 %v2754, 0.030303031
      %v3219 = vmul.f32 %v2755, 0.030303031
      %v3220 = vmul.f32 %v3206, %v3218
      %v3221 = vmul.f32 %v3207, %v3219
      %v3222 = vadd.f32 %v3208, %v3220
      %v3223 = vadd.f32 %v3209, %v3221
      %vm3224 = vcmp.gt.f32.partialorder %v2756, %v3222
      %vm3225 = vcmp.gt.f32.partialorder %v2757, %v3223
      %v3226 = vsel %vm3224, 1, 0
      %v3227 = vsel %vm3225, 1, 0
      %v3228 = vcvt.s32.f32 %v3226
      %v3229 = vcvt.s32.f32 %v3227
      %v3230 = vadd.f32 %v3216, %v3228
      %v3231 = vadd.f32 %v3217, %v3229
      %v3232 = vmul.f32 %v2754, 0.029411765
      %v3233 = vmul.f32 %v2755, 0.029411765
      %v3234 = vmul.f32 %v3220, %v3232
      %v3235 = vmul.f32 %v3221, %v3233
      %v3236 = vadd.f32 %v3222, %v3234
      %v3237 = vadd.f32 %v3223, %v3235
      %vm3238 = vcmp.gt.f32.partialorder %v2756, %v3236
      %vm3239 = vcmp.gt.f32.partialorder %v2757, %v3237
      %v3240 = vsel %vm3238, 1, 0
      %v3241 = vsel %vm3239, 1, 0
      %v3242 = vcvt.s32.f32 %v3240
      %v3243 = vcvt.s32.f32 %v3241
      %v3244 = vadd.f32 %v3230, %v3242
      %v3245 = vadd.f32 %v3231, %v3243
      %v3246 = vmul.f32 %v2754, 0.028571429
      %v3247 = vmul.f32 %v2755, 0.028571429
      %v3248 = vmul.f32 %v3234, %v3246
      %v3249 = vmul.f32 %v3235, %v3247
      %v3250 = vadd.f32 %v3236, %v3248
      %v3251 = vadd.f32 %v3237, %v3249
      %vm3252 = vcmp.gt.f32.partialorder %v2756, %v3250
      %vm3253 = vcmp.gt.f32.partialorder %v2757, %v3251
      %v3254 = vsel %vm3252, 1, 0
      %v3255 = vsel %vm3253, 1, 0
      %v3256 = vcvt.s32.f32 %v3254
      %v3257 = vcvt.s32.f32 %v3255
      %v3258 = vadd.f32 %v3244, %v3256
      %v3259 = vadd.f32 %v3245, %v3257
      %v3260 = vmul.f32 %v2754, 0.027777778
      %v3261 = vmul.f32 %v2755, 0.027777778
      %v3262 = vmul.f32 %v3248, %v3260
      %v3263 = vmul.f32 %v3249, %v3261
      %v3264 = vadd.f32 %v3250, %v3262
      %v3265 = vadd.f32 %v3251, %v3263
      %vm3266 = vcmp.gt.f32.partialorder %v2756, %v3264
      %vm3267 = vcmp.gt.f32.partialorder %v2757, %v3265
      %v3268 = vsel %vm3266, 1, 0
      %v3269 = vsel %vm3267, 1, 0
      %v3270 = vcvt.s32.f32 %v3268
      %v3271 = vcvt.s32.f32 %v3269
      %v3272 = vadd.f32 %v3258, %v3270
      %v3273 = vadd.f32 %v3259, %v3271
      %v3274 = vmul.f32 %v2754, 0.027027028
      %v3275 = vmul.f32 %v2755, 0.027027028
      %v3276 = vmul.f32 %v3262, %v3274
      %v3277 = vmul.f32 %v3263, %v3275
      %v3278 = vadd.f32 %v3264, %v3276
      %v3279 = vadd.f32 %v3265, %v3277
      %vm3280 = vcmp.gt.f32.partialorder %v2756, %v3278
      %vm3281 = vcmp.gt.f32.partialorder %v2757, %v3279
      %v3282 = vsel %vm3280, 1, 0
      %v3283 = vsel %vm3281, 1, 0
      %v3284 = vcvt.s32.f32 %v3282
      %v3285 = vcvt.s32.f32 %v3283
      %v3286 = vadd.f32 %v3272, %v3284
      %v3287 = vadd.f32 %v3273, %v3285
      %v3288 = vmul.f32 %v2754, 0.02631579
      %v3289 = vmul.f32 %v2755, 0.02631579
      %v3290 = vmul.f32 %v3276, %v3288
      %v3291 = vmul.f32 %v3277, %v3289
      %v3292 = vadd.f32 %v3278, %v3290
      %v3293 = vadd.f32 %v3279, %v3291
      %vm3294 = vcmp.gt.f32.partialorder %v2756, %v3292
      %vm3295 = vcmp.gt.f32.partialorder %v2757, %v3293
      %v3296 = vsel %vm3294, 1, 0
      %v3297 = vsel %vm3295, 1, 0
      %v3298 = vcvt.s32.f32 %v3296
      %v3299 = vcvt.s32.f32 %v3297
      %v3300 = vadd.f32 %v3286, %v3298
      %v3301 = vadd.f32 %v3287, %v3299
      %v3302 = vmul.f32 %v2754, 0.025641026
      %v3303 = vmul.f32 %v2755, 0.025641026
      %v3304 = vmul.f32 %v3290, %v3302
      %v3305 = vmul.f32 %v3291, %v3303
      %v3306 = vadd.f32 %v3292, %v3304
      %v3307 = vadd.f32 %v3293, %v3305
      %vm3308 = vcmp.gt.f32.partialorder %v2756, %v3306
      %vm3309 = vcmp.gt.f32.partialorder %v2757, %v3307
      %v3310 = vsel %vm3308, 1, 0
      %v3311 = vsel %vm3309, 1, 0
      %v3312 = vcvt.s32.f32 %v3310
      %v3313 = vcvt.s32.f32 %v3311
      %v3314 = vadd.f32 %v3300, %v3312
      %v3315 = vadd.f32 %v3301, %v3313
      %v3316 = vmul.f32 %v2754, 0.025
      %v3317 = vmul.f32 %v2755, 0.025
      %v3318 = vmul.f32 %v3304, %v3316
      %v3319 = vmul.f32 %v3305, %v3317
      %v3320 = vadd.f32 %v3306, %v3318
      %v3321 = vadd.f32 %v3307, %v3319
      %vm3322 = vcmp.gt.f32.partialorder %v2756, %v3320
      %vm3323 = vcmp.gt.f32.partialorder %v2757, %v3321
      %v3324 = vsel %vm3322, 1, 0
      %v3325 = vsel %vm3323, 1, 0
      %v3326 = vcvt.s32.f32 %v3324
      %v3327 = vcvt.s32.f32 %v3325
      %v3328 = vadd.f32 %v3314, %v3326
      %v3329 = vadd.f32 %v3315, %v3327
      %v3330 = vmul.f32 %v2754, 0.024390243
      %v3331 = vmul.f32 %v2755, 0.024390243
      %v3332 = vmul.f32 %v3318, %v3330
      %v3333 = vmul.f32 %v3319, %v3331
      %v3334 = vadd.f32 %v3320, %v3332
      %v3335 = vadd.f32 %v3321, %v3333
      %vm3336 = vcmp.gt.f32.partialorder %v2756, %v3334
      %vm3337 = vcmp.gt.f32.partialorder %v2757, %v3335
      %v3338 = vsel %vm3336, 1, 0
      %v3339 = vsel %vm3337, 1, 0
      %v3340 = vcvt.s32.f32 %v3338
      %v3341 = vcvt.s32.f32 %v3339
      %v3342 = vadd.f32 %v3328, %v3340
      %v3343 = vadd.f32 %v3329, %v3341
      %v3344 = vmul.f32 %v2754, 0.023809524
      %v3345 = vmul.f32 %v2755, 0.023809524
      %v3346 = vmul.f32 %v3332, %v3344
      %v3347 = vmul.f32 %v3333, %v3345
      %v3348 = vadd.f32 %v3334, %v3346
      %v3349 = vadd.f32 %v3335, %v3347
      %vm3350 = vcmp.gt.f32.partialorder %v2756, %v3348
      %vm3351 = vcmp.gt.f32.partialorder %v2757, %v3349
      %v3352 = vsel %vm3350, 1, 0
      %v3353 = vsel %vm3351, 1, 0
      %v3354 = vcvt.s32.f32 %v3352
      %v3355 = vcvt.s32.f32 %v3353
      %v3356 = vadd.f32 %v3342, %v3354
      %v3357 = vadd.f32 %v3343, %v3355
      %v3358 = vmul.f32 %v2754, 0.023255814
      %v3359 = vmul.f32 %v2755, 0.023255814
      %v3360 = vmul.f32 %v3346, %v3358
      %v3361 = vmul.f32 %v3347, %v3359
      %v3362 = vadd.f32 %v3348, %v3360
      %v3363 = vadd.f32 %v3349, %v3361
      %vm3364 = vcmp.gt.f32.partialorder %v2756, %v3362
      %vm3365 = vcmp.gt.f32.partialorder %v2757, %v3363
      %v3366 = vsel %vm3364, 1, 0
      %v3367 = vsel %vm3365, 1, 0
      %v3368 = vcvt.s32.f32 %v3366
      %v3369 = vcvt.s32.f32 %v3367
      %v3370 = vadd.f32 %v3356, %v3368
      %v3371 = vadd.f32 %v3357, %v3369
      %v3372 = vmul.f32 %v2754, 0.022727273
      %v3373 = vmul.f32 %v2755, 0.022727273
      %v3374 = vmul.f32 %v3360, %v3372
      %v3375 = vmul.f32 %v3361, %v3373
      %v3376 = vadd.f32 %v3362, %v3374
      %v3377 = vadd.f32 %v3363, %v3375
      %vm3378 = vcmp.gt.f32.partialorder %v2756, %v3376
      %vm3379 = vcmp.gt.f32.partialorder %v2757, %v3377
      %v3380 = vsel %vm3378, 1, 0
      %v3381 = vsel %vm3379, 1, 0
      %v3382 = vcvt.s32.f32 %v3380
      %v3383 = vcvt.s32.f32 %v3381
      %v3384 = vadd.f32 %v3370, %v3382
      %v3385 = vadd.f32 %v3371, %v3383
      %v3386 = vmul.f32 %v2754, 0.022222223
      %v3387 = vmul.f32 %v2755, 0.022222223
      %v3388 = vmul.f32 %v3374, %v3386
      %v3389 = vmul.f32 %v3375, %v3387
      %v3390 = vadd.f32 %v3376, %v3388
      %v3391 = vadd.f32 %v3377, %v3389
      %vm3392 = vcmp.gt.f32.partialorder %v2756, %v3390
      %vm3393 = vcmp.gt.f32.partialorder %v2757, %v3391
      %v3394 = vsel %vm3392, 1, 0
      %v3395 = vsel %vm3393, 1, 0
      %v3396 = vcvt.s32.f32 %v3394
      %v3397 = vcvt.s32.f32 %v3395
      %v3398 = vadd.f32 %v3384, %v3396
      %v3399 = vadd.f32 %v3385, %v3397
      %v3400 = vmul.f32 %v2754, 0.02173913
      %v3401 = vmul.f32 %v2755, 0.02173913
      %v3402 = vmul.f32 %v3388, %v3400
      %v3403 = vmul.f32 %v3389, %v3401
      %v3404 = vadd.f32 %v3390, %v3402
      %v3405 = vadd.f32 %v3391, %v3403
      %vm3406 = vcmp.gt.f32.partialorder %v2756, %v3404
      %vm3407 = vcmp.gt.f32.partialorder %v2757, %v3405
      %v3408 = vsel %vm3406, 1, 0
      %v3409 = vsel %vm3407, 1, 0
      %v3410 = vcvt.s32.f32 %v3408
      %v3411 = vcvt.s32.f32 %v3409
      %v3412 = vadd.f32 %v3398, %v3410
      %v3413 = vadd.f32 %v3399, %v3411
      %v3414 = vmax.f32 %v195, 10.0
      %v3415 = vmax.f32 %v196, 10.0
      %v3416 = vlog2.pop %v3414
      %v3417 = vmul.f32 %v3416, 0.6931472
      %v3418 = vlog2.pop %v3415
      %v3419 = vmul.f32 %v3418, 0.6931472
      %v3420 = vrsqrt.pop %v3414
      %v3421 = vmul.f32 %v3414, %v3420
      %vm3422 = vcmp.eq.f32.partialorder %v3414, inf
      %v3423 = vsel %vm3422, %v3414, %v3421
      %vm3424 = vcmp.eq.f32.partialorder %v3414, 0.0
      %v3425 = vand.u32 %v3414, 2147483648
      %v3426 = vsel %vm3424, %v3425, %v3423
      %v3427 = vrsqrt.pop %v3415
      %v3428 = vmul.f32 %v3415, %v3427
      %vm3429 = vcmp.eq.f32.partialorder %v3415, inf
      %v3430 = vsel %vm3429, %v3415, %v3428
      %vm3431 = vcmp.eq.f32.partialorder %v3415, 0.0
      %v3432 = vand.u32 %v3415, 2147483648
      %v3433 = vsel %vm3431, %v3432, %v3430
      %v3434 = vmul.f32 %v3426, 2.53
      %v3435 = vmul.f32 %v3433, 2.53
      %v3436 = vadd.f32 %v3434, 0.931
      %v3437 = vadd.f32 %v3435, 0.931
      %v3438 = vmul.f32 %v3436, 0.02483
      %v3439 = vmul.f32 %v3437, 0.02483
      %v3440 = vadd.f32 %v3438, -0.059
      %v3441 = vadd.f32 %v3439, -0.059
      %v3442 = vsub.f32 %v3436, 3.4
      %v3443 = vsub.f32 %v3437, 3.4
      %v3444 = vrcp.pop %v3442
      %v3445 = vmul.f32 1.1328, %v3444
      %v3446 = vrcp.pop %v3443
      %v3447 = vmul.f32 1.1328, %v3446
      %v3448 = vadd.f32 %v3445, 1.1239
      %v3449 = vadd.f32 %v3447, 1.1239
      %v3450 = vsub.f32 %v3436, 2.0
      %v3451 = vsub.f32 %v3437, 2.0
      %v3452 = vrcp.pop %v3450
      %v3453 = vmul.f32 3.6224, %v3452
      %v3454 = vrcp.pop %v3451
      %v3455 = vmul.f32 3.6224, %v3454
      %v3456 = vsub.f32 0.9277, %v3453
      %v3457 = vsub.f32 0.9277, %v3455
      %v3458 = vfloor.f32 %v3414
      %v3459 = vfloor.f32 %v3415
      %v3460 = vsub.f32 %v2756, 0.5
      %v3461 = vsub.f32 %v2757, 0.5
      %s3462 = scalar_lea.vmem [#allocation7], 16
      %v3463 = vld [vmem:[%s3462] sm:$0xff]
      %v3464 = vld [vmem:[%s3462 + $0x8] sm:$0xff]
      %v3465 = vand.u32 2147483647, %v3460
      %v3466 = vand.u32 2147483647, %v3461
      %v3467 = vsub.f32 0.5, %v3465
      %v3468 = vsub.f32 0.5, %v3466
      %v3469 = vmax.f32 %v3467, 1e-06
      %v3470 = vmax.f32 %v3468, 1e-06
      %v3471 = vrcp.pop %v3469
      %v3472 = vmul.f32 1.0, %v3471
      %v3473 = vrcp.pop %v3470
      %v3474 = vmul.f32 1.0, %v3473
      %v3475 = vmul.f32 %v3440, 2.0
      %v3476 = vmul.f32 %v3441, 2.0
      %v3477 = vmul.f32 %v3475, %v3472
      %v3478 = vmul.f32 %v3476, %v3474
      %v3479 = vadd.f32 %v3477, %v3436
      %v3480 = vadd.f32 %v3478, %v3437
      %v3481 = vmul.f32 %v3479, %v3460
      %v3482 = vmul.f32 %v3480, %v3461
      %v3483 = vadd.f32 %v3481, %v3414
      %v3484 = vadd.f32 %v3482, %v3415
      %v3485 = vadd.f32 %v3483, 0.43
      %v3486 = vadd.f32 %v3484, 0.43
      %v3487 = vfloor.f32 %v3485
      %v3488 = vfloor.f32 %v3486
      %vm3489 = vcmp.ge.f32.partialorder %v3469, 0.07
      %vm3490 = vcmp.ge.f32.partialorder %v3470, 0.07
      %vm3491 = vcmp.le.f32.partialorder %v3463, %v3456
      %vm3492 = vcmp.le.f32.partialorder %v3464, %v3457
      %vm3493 = vmand %vm3489, %vm3491
      %vm3494 = vmand %vm3490, %vm3492
      %vm3495 = vcmp.lt.f32.partialorder %v3487, 0.0
      %vm3496 = vcmp.lt.f32.partialorder %v3488, 0.0
      %vm3497 = vcmp.lt.f32.partialorder %v3469, 0.013
      %vm3498 = vcmp.lt.f32.partialorder %v3470, 0.013
      %vm3499 = vcmp.gt.f32.partialorder %v3463, %v3469
      %vm3500 = vcmp.gt.f32.partialorder %v3464, %v3470
      %vm3501 = vmand %vm3497, %vm3499
      %vm3502 = vmand %vm3498, %vm3500
      %vm3503 = vmor %vm3495, %vm3501
      %vm3504 = vmor %vm3496, %vm3502
      %v3505 = vmul.f32 %v3463, %v3448
      %v3506 = vmul.f32 %v3464, %v3449
      %v3507 = vmul.f32 %v3440, %v3472
      %v3508 = vmul.f32 %v3441, %v3474
      %v3509 = vmul.f32 %v3507, %v3472
      %v3510 = vmul.f32 %v3508, %v3474
      %v3511 = vadd.f32 %v3509, %v3436
      %v3512 = vadd.f32 %v3510, %v3437
      %v3513 = vrcp.pop %v3511
      %v3514 = vmul.f32 %v3505, %v3513
      %v3515 = vrcp.pop %v3512
      %v3516 = vmul.f32 %v3506, %v3515
      %v3517 = vlog2.pop %v3514
      %v3518 = vmul.f32 %v3517, 0.6931472
      %v3519 = vlog2.pop %v3516
      %v3520 = vmul.f32 %v3519, 0.6931472
      %v3521 = vmul.f32 %v3487, %v3417
      %v3522 = vmul.f32 %v3488, %v3419
      %v3523 = vsub.f32 %v3521, %v3414
      %v3524 = vsub.f32 %v3522, %v3415
      %v3525 = vadd.f32 %v3487, 1.0
      %v3526 = vadd.f32 %v3488, 1.0
      %v3527 = vadd.f32 %v3525, 8.0
      %v3528 = vadd.f32 %v3526, 8.0
      %v3529 = vrcp.pop %v3527
      %v3530 = vmul.f32 1.0, %v3529
      %v3531 = vrcp.pop %v3528
      %v3532 = vmul.f32 1.0, %v3531
      %v3533 = vsub.f32 %v3527, 0.5
      %v3534 = vsub.f32 %v3528, 0.5
      %v3535 = vlog2.pop %v3527
      %v3536 = vmul.f32 %v3535, 0.6931472
      %v3537 = vlog2.pop %v3528
      %v3538 = vmul.f32 %v3537, 0.6931472
      %v3539 = vmul.f32 %v3533, %v3536
      %v3540 = vmul.f32 %v3534, %v3538
      %v3541 = vsub.f32 %v3539, %v3527
      %v3542 = vsub.f32 %v3540, %v3528
      %v3543 = vadd.f32 %v3541, 0.9189385
      %v3544 = vadd.f32 %v3542, 0.9189385
      %v3545 = vmul.f32 %v3530, %v3530
      %v3546 = vmul.f32 %v3532, %v3532
      %v3547 = vmul.f32 %v3545, 0.0027777778
      %v3548 = vmul.f32 %v3546, 0.0027777778
      %v3549 = vsub.f32 0.083333336, %v3547
      %v3550 = vsub.f32 0.083333336, %v3548
      %v3551 = vmul.f32 %v3530, %v3549
      %v3552 = vmul.f32 %v3532, %v3550
      %v3553 = vadd.f32 %v3543, %v3551
      %v3554 = vadd.f32 %v3544, %v3552
      %v3555 = vadd.f32 %v3525, 1.0
      %v3556 = vadd.f32 %v3526, 1.0
      %v3557 = vmul.f32 %v3525, %v3555
      %v3558 = vmul.f32 %v3526, %v3556
      %v3559 = vadd.f32 %v3525, 2.0
      %v3560 = vadd.f32 %v3526, 2.0
      %v3561 = vmul.f32 %v3557, %v3559
      %v3562 = vmul.f32 %v3558, %v3560
      %v3563 = vadd.f32 %v3525, 3.0
      %v3564 = vadd.f32 %v3526, 3.0
      %v3565 = vmul.f32 %v3561, %v3563
      %v3566 = vmul.f32 %v3562, %v3564
      %v3567 = vlog2.pop %v3565
      %v3568 = vmul.f32 %v3567, 0.6931472
      %v3569 = vlog2.pop %v3566
      %v3570 = vmul.f32 %v3569, 0.6931472
      %v3571 = vadd.f32 %v3525, 4.0
      %v3572 = vadd.f32 %v3526, 4.0
      %v3573 = vadd.f32 %v3525, 5.0
      %v3574 = vadd.f32 %v3526, 5.0
      %v3575 = vmul.f32 %v3571, %v3573
      %v3576 = vmul.f32 %v3572, %v3574
      %v3577 = vadd.f32 %v3525, 6.0
      %v3578 = vadd.f32 %v3526, 6.0
      %v3579 = vmul.f32 %v3575, %v3577
      %v3580 = vmul.f32 %v3576, %v3578
      %v3581 = vadd.f32 %v3525, 7.0
      %v3582 = vadd.f32 %v3526, 7.0
      %v3583 = vmul.f32 %v3579, %v3581
      %v3584 = vmul.f32 %v3580, %v3582
      %v3585 = vlog2.pop %v3583
      %v3586 = vmul.f32 %v3585, 0.6931472
      %v3587 = vlog2.pop %v3584
      %v3588 = vmul.f32 %v3587, 0.6931472
      %v3589 = vadd.f32 %v3568, %v3586
      %v3590 = vadd.f32 %v3570, %v3588
      %v3591 = vsub.f32 %v3553, %v3589
      %v3592 = vsub.f32 %v3554, %v3590
      %v3593 = vsub.f32 %v3523, %v3591
      %v3594 = vsub.f32 %v3524, %v3592
      %vm3595 = vmxor %vm3503, 1
      %vm3596 = vmxor %vm3504, 1
      %vm3597 = vcmp.le.f32.partialorder %v3518, %v3593
      %vm3598 = vcmp.le.f32.partialorder %v3520, %v3594
      %vm3599 = vmand %vm3595, %vm3597
      %vm3600 = vmand %vm3596, %vm3598
      %vm3601 = vmor %vm3493, %vm3599
      %vm3602 = vmor %vm3494, %vm3600
      %v3603 = vsel %vm3601, %v3487, %v3458
      %v3604 = vsel %vm3602, %v3488, %v3459
      %s3605 = scalar_lea.vmem [#allocation7], 32
      %v3606 = vld [vmem:[%s3605] sm:$0xff]
      %v3607 = vld [vmem:[%s3605 + $0x8] sm:$0xff]
      %v3608 = vsub.f32 %v3606, 0.5
      %v3609 = vsub.f32 %v3607, 0.5
      %s3610 = scalar_lea.vmem [#allocation7], 48
      %v3611 = vld [vmem:[%s3610] sm:$0xff]
      %v3612 = vld [vmem:[%s3610 + $0x8] sm:$0xff]
      %v3613 = vand.u32 2147483647, %v3608
      %v3614 = vand.u32 2147483647, %v3609
      %v3615 = vsub.f32 0.5, %v3613
      %v3616 = vsub.f32 0.5, %v3614
      %v3617 = vmax.f32 %v3615, 1e-06
      %v3618 = vmax.f32 %v3616, 1e-06
      %v3619 = vrcp.pop %v3617
      %v3620 = vmul.f32 1.0, %v3619
      %v3621 = vrcp.pop %v3618
      %v3622 = vmul.f32 1.0, %v3621
      %v3623 = vmul.f32 %v3475, %v3620
      %v3624 = vmul.f32 %v3476, %v3622
      %v3625 = vadd.f32 %v3623, %v3436
      %v3626 = vadd.f32 %v3624, %v3437
      %v3627 = vmul.f32 %v3625, %v3608
      %v3628 = vmul.f32 %v3626, %v3609
      %v3629 = vadd.f32 %v3627, %v3414
      %v3630 = vadd.f32 %v3628, %v3415
      %v3631 = vadd.f32 %v3629, 0.43
      %v3632 = vadd.f32 %v3630, 0.43
      %v3633 = vfloor.f32 %v3631
      %v3634 = vfloor.f32 %v3632
      %vm3635 = vcmp.ge.f32.partialorder %v3617, 0.07
      %vm3636 = vcmp.ge.f32.partialorder %v3618, 0.07
      %vm3637 = vcmp.le.f32.partialorder %v3611, %v3456
      %vm3638 = vcmp.le.f32.partialorder %v3612, %v3457
      %vm3639 = vmand %vm3635, %vm3637
      %vm3640 = vmand %vm3636, %vm3638
      %vm3641 = vcmp.lt.f32.partialorder %v3633, 0.0
      %vm3642 = vcmp.lt.f32.partialorder %v3634, 0.0
      %vm3643 = vcmp.lt.f32.partialorder %v3617, 0.013
      %vm3644 = vcmp.lt.f32.partialorder %v3618, 0.013
      %vm3645 = vcmp.gt.f32.partialorder %v3611, %v3617
      %vm3646 = vcmp.gt.f32.partialorder %v3612, %v3618
      %vm3647 = vmand %vm3643, %vm3645
      %vm3648 = vmand %vm3644, %vm3646
      %vm3649 = vmor %vm3641, %vm3647
      %vm3650 = vmor %vm3642, %vm3648
      %v3651 = vmul.f32 %v3611, %v3448
      %v3652 = vmul.f32 %v3612, %v3449
      %v3653 = vmul.f32 %v3440, %v3620
      %v3654 = vmul.f32 %v3441, %v3622
      %v3655 = vmul.f32 %v3653, %v3620
      %v3656 = vmul.f32 %v3654, %v3622
      %v3657 = vadd.f32 %v3655, %v3436
      %v3658 = vadd.f32 %v3656, %v3437
      %v3659 = vrcp.pop %v3657
      %v3660 = vmul.f32 %v3651, %v3659
      %v3661 = vrcp.pop %v3658
      %v3662 = vmul.f32 %v3652, %v3661
      %v3663 = vlog2.pop %v3660
      %v3664 = vmul.f32 %v3663, 0.6931472
      %v3665 = vlog2.pop %v3662
      %v3666 = vmul.f32 %v3665, 0.6931472
      %v3667 = vmul.f32 %v3633, %v3417
      %v3668 = vmul.f32 %v3634, %v3419
      %v3669 = vsub.f32 %v3667, %v3414
      %v3670 = vsub.f32 %v3668, %v3415
      %v3671 = vadd.f32 %v3633, 1.0
      %v3672 = vadd.f32 %v3634, 1.0
      %v3673 = vadd.f32 %v3671, 8.0
      %v3674 = vadd.f32 %v3672, 8.0
      %v3675 = vrcp.pop %v3673
      %v3676 = vmul.f32 1.0, %v3675
      %v3677 = vrcp.pop %v3674
      %v3678 = vmul.f32 1.0, %v3677
      %v3679 = vsub.f32 %v3673, 0.5
      %v3680 = vsub.f32 %v3674, 0.5
      %v3681 = vlog2.pop %v3673
      %v3682 = vmul.f32 %v3681, 0.6931472
      %v3683 = vlog2.pop %v3674
      %v3684 = vmul.f32 %v3683, 0.6931472
      %v3685 = vmul.f32 %v3679, %v3682
      %v3686 = vmul.f32 %v3680, %v3684
      %v3687 = vsub.f32 %v3685, %v3673
      %v3688 = vsub.f32 %v3686, %v3674
      %v3689 = vadd.f32 %v3687, 0.9189385
      %v3690 = vadd.f32 %v3688, 0.9189385
      %v3691 = vmul.f32 %v3676, %v3676
      %v3692 = vmul.f32 %v3678, %v3678
      %v3693 = vmul.f32 %v3691, 0.0027777778
      %v3694 = vmul.f32 %v3692, 0.0027777778
      %v3695 = vsub.f32 0.083333336, %v3693
      %v3696 = vsub.f32 0.083333336, %v3694
      %v3697 = vmul.f32 %v3676, %v3695
      %v3698 = vmul.f32 %v3678, %v3696
      %v3699 = vadd.f32 %v3689, %v3697
      %v3700 = vadd.f32 %v3690, %v3698
      %v3701 = vadd.f32 %v3671, 1.0
      %v3702 = vadd.f32 %v3672, 1.0
      %v3703 = vmul.f32 %v3671, %v3701
      %v3704 = vmul.f32 %v3672, %v3702
      %v3705 = vadd.f32 %v3671, 2.0
      %v3706 = vadd.f32 %v3672, 2.0
      %v3707 = vmul.f32 %v3703, %v3705
      %v3708 = vmul.f32 %v3704, %v3706
      %v3709 = vadd.f32 %v3671, 3.0
      %v3710 = vadd.f32 %v3672, 3.0
      %v3711 = vmul.f32 %v3707, %v3709
      %v3712 = vmul.f32 %v3708, %v3710
      %v3713 = vlog2.pop %v3711
      %v3714 = vmul.f32 %v3713, 0.6931472
      %v3715 = vlog2.pop %v3712
      %v3716 = vmul.f32 %v3715, 0.6931472
      %v3717 = vadd.f32 %v3671, 4.0
      %v3718 = vadd.f32 %v3672, 4.0
      %v3719 = vadd.f32 %v3671, 5.0
      %v3720 = vadd.f32 %v3672, 5.0
      %v3721 = vmul.f32 %v3717, %v3719
      %v3722 = vmul.f32 %v3718, %v3720
      %v3723 = vadd.f32 %v3671, 6.0
      %v3724 = vadd.f32 %v3672, 6.0
      %v3725 = vmul.f32 %v3721, %v3723
      %v3726 = vmul.f32 %v3722, %v3724
      %v3727 = vadd.f32 %v3671, 7.0
      %v3728 = vadd.f32 %v3672, 7.0
      %v3729 = vmul.f32 %v3725, %v3727
      %v3730 = vmul.f32 %v3726, %v3728
      %v3731 = vlog2.pop %v3729
      %v3732 = vmul.f32 %v3731, 0.6931472
      %v3733 = vlog2.pop %v3730
      %v3734 = vmul.f32 %v3733, 0.6931472
      %v3735 = vadd.f32 %v3714, %v3732
      %v3736 = vadd.f32 %v3716, %v3734
      %v3737 = vsub.f32 %v3699, %v3735
      %v3738 = vsub.f32 %v3700, %v3736
      %v3739 = vsub.f32 %v3669, %v3737
      %v3740 = vsub.f32 %v3670, %v3738
      %vm3741 = vmxor %vm3649, 1
      %vm3742 = vmxor %vm3650, 1
      %vm3743 = vcmp.le.f32.partialorder %v3664, %v3739
      %vm3744 = vcmp.le.f32.partialorder %v3666, %v3740
      %vm3745 = vmand %vm3741, %vm3743
      %vm3746 = vmand %vm3742, %vm3744
      %vm3747 = vmor %vm3639, %vm3745
      %vm3748 = vmor %vm3640, %vm3746
      %vm3749 = vmxor %vm3601, 1
      %vm3750 = vmxor %vm3602, 1
      %vm3751 = vmand %vm3747, %vm3749
      %vm3752 = vmand %vm3748, %vm3750
      %v3753 = vsel %vm3751, %v3633, %v3603
      %v3754 = vsel %vm3752, %v3634, %v3604
      %vm3755 = vmor %vm3601, %vm3747
      %vm3756 = vmor %vm3602, %vm3748
      %s3757 = scalar_lea.vmem [#allocation7], 64
      %v3758 = vld [vmem:[%s3757] sm:$0xff]
      %v3759 = vld [vmem:[%s3757 + $0x8] sm:$0xff]
      %v3760 = vsub.f32 %v3758, 0.5
      %v3761 = vsub.f32 %v3759, 0.5
      %s3762 = scalar_lea.vmem [#allocation7], 80
      %v3763 = vld [vmem:[%s3762] sm:$0xff]
      %v3764 = vld [vmem:[%s3762 + $0x8] sm:$0xff]
      %v3765 = vand.u32 2147483647, %v3760
      %v3766 = vand.u32 2147483647, %v3761
      %v3767 = vsub.f32 0.5, %v3765
      %v3768 = vsub.f32 0.5, %v3766
      %v3769 = vmax.f32 %v3767, 1e-06
      %v3770 = vmax.f32 %v3768, 1e-06
      %v3771 = vrcp.pop %v3769
      %v3772 = vmul.f32 1.0, %v3771
      %v3773 = vrcp.pop %v3770
      %v3774 = vmul.f32 1.0, %v3773
      %v3775 = vmul.f32 %v3475, %v3772
      %v3776 = vmul.f32 %v3476, %v3774
      %v3777 = vadd.f32 %v3775, %v3436
      %v3778 = vadd.f32 %v3776, %v3437
      %v3779 = vmul.f32 %v3777, %v3760
      %v3780 = vmul.f32 %v3778, %v3761
      %v3781 = vadd.f32 %v3779, %v3414
      %v3782 = vadd.f32 %v3780, %v3415
      %v3783 = vadd.f32 %v3781, 0.43
      %v3784 = vadd.f32 %v3782, 0.43
      %v3785 = vfloor.f32 %v3783
      %v3786 = vfloor.f32 %v3784
      %vm3787 = vcmp.ge.f32.partialorder %v3769, 0.07
      %vm3788 = vcmp.ge.f32.partialorder %v3770, 0.07
      %vm3789 = vcmp.le.f32.partialorder %v3763, %v3456
      %vm3790 = vcmp.le.f32.partialorder %v3764, %v3457
      %vm3791 = vmand %vm3787, %vm3789
      %vm3792 = vmand %vm3788, %vm3790
      %vm3793 = vcmp.lt.f32.partialorder %v3785, 0.0
      %vm3794 = vcmp.lt.f32.partialorder %v3786, 0.0
      %vm3795 = vcmp.lt.f32.partialorder %v3769, 0.013
      %vm3796 = vcmp.lt.f32.partialorder %v3770, 0.013
      %vm3797 = vcmp.gt.f32.partialorder %v3763, %v3769
      %vm3798 = vcmp.gt.f32.partialorder %v3764, %v3770
      %vm3799 = vmand %vm3795, %vm3797
      %vm3800 = vmand %vm3796, %vm3798
      %vm3801 = vmor %vm3793, %vm3799
      %vm3802 = vmor %vm3794, %vm3800
      %v3803 = vmul.f32 %v3763, %v3448
      %v3804 = vmul.f32 %v3764, %v3449
      %v3805 = vmul.f32 %v3440, %v3772
      %v3806 = vmul.f32 %v3441, %v3774
      %v3807 = vmul.f32 %v3805, %v3772
      %v3808 = vmul.f32 %v3806, %v3774
      %v3809 = vadd.f32 %v3807, %v3436
      %v3810 = vadd.f32 %v3808, %v3437
      %v3811 = vrcp.pop %v3809
      %v3812 = vmul.f32 %v3803, %v3811
      %v3813 = vrcp.pop %v3810
      %v3814 = vmul.f32 %v3804, %v3813
      %v3815 = vlog2.pop %v3812
      %v3816 = vmul.f32 %v3815, 0.6931472
      %v3817 = vlog2.pop %v3814
      %v3818 = vmul.f32 %v3817, 0.6931472
      %v3819 = vmul.f32 %v3785, %v3417
      %v3820 = vmul.f32 %v3786, %v3419
      %v3821 = vsub.f32 %v3819, %v3414
      %v3822 = vsub.f32 %v3820, %v3415
      %v3823 = vadd.f32 %v3785, 1.0
      %v3824 = vadd.f32 %v3786, 1.0
      %v3825 = vadd.f32 %v3823, 8.0
      %v3826 = vadd.f32 %v3824, 8.0
      %v3827 = vrcp.pop %v3825
      %v3828 = vmul.f32 1.0, %v3827
      %v3829 = vrcp.pop %v3826
      %v3830 = vmul.f32 1.0, %v3829
      %v3831 = vsub.f32 %v3825, 0.5
      %v3832 = vsub.f32 %v3826, 0.5
      %v3833 = vlog2.pop %v3825
      %v3834 = vmul.f32 %v3833, 0.6931472
      %v3835 = vlog2.pop %v3826
      %v3836 = vmul.f32 %v3835, 0.6931472
      %v3837 = vmul.f32 %v3831, %v3834
      %v3838 = vmul.f32 %v3832, %v3836
      %v3839 = vsub.f32 %v3837, %v3825
      %v3840 = vsub.f32 %v3838, %v3826
      %v3841 = vadd.f32 %v3839, 0.9189385
      %v3842 = vadd.f32 %v3840, 0.9189385
      %v3843 = vmul.f32 %v3828, %v3828
      %v3844 = vmul.f32 %v3830, %v3830
      %v3845 = vmul.f32 %v3843, 0.0027777778
      %v3846 = vmul.f32 %v3844, 0.0027777778
      %v3847 = vsub.f32 0.083333336, %v3845
      %v3848 = vsub.f32 0.083333336, %v3846
      %v3849 = vmul.f32 %v3828, %v3847
      %v3850 = vmul.f32 %v3830, %v3848
      %v3851 = vadd.f32 %v3841, %v3849
      %v3852 = vadd.f32 %v3842, %v3850
      %v3853 = vadd.f32 %v3823, 1.0
      %v3854 = vadd.f32 %v3824, 1.0
      %v3855 = vmul.f32 %v3823, %v3853
      %v3856 = vmul.f32 %v3824, %v3854
      %v3857 = vadd.f32 %v3823, 2.0
      %v3858 = vadd.f32 %v3824, 2.0
      %v3859 = vmul.f32 %v3855, %v3857
      %v3860 = vmul.f32 %v3856, %v3858
      %v3861 = vadd.f32 %v3823, 3.0
      %v3862 = vadd.f32 %v3824, 3.0
      %v3863 = vmul.f32 %v3859, %v3861
      %v3864 = vmul.f32 %v3860, %v3862
      %v3865 = vlog2.pop %v3863
      %v3866 = vmul.f32 %v3865, 0.6931472
      %v3867 = vlog2.pop %v3864
      %v3868 = vmul.f32 %v3867, 0.6931472
      %v3869 = vadd.f32 %v3823, 4.0
      %v3870 = vadd.f32 %v3824, 4.0
      %v3871 = vadd.f32 %v3823, 5.0
      %v3872 = vadd.f32 %v3824, 5.0
      %v3873 = vmul.f32 %v3869, %v3871
      %v3874 = vmul.f32 %v3870, %v3872
      %v3875 = vadd.f32 %v3823, 6.0
      %v3876 = vadd.f32 %v3824, 6.0
      %v3877 = vmul.f32 %v3873, %v3875
      %v3878 = vmul.f32 %v3874, %v3876
      %v3879 = vadd.f32 %v3823, 7.0
      %v3880 = vadd.f32 %v3824, 7.0
      %v3881 = vmul.f32 %v3877, %v3879
      %v3882 = vmul.f32 %v3878, %v3880
      %v3883 = vlog2.pop %v3881
      %v3884 = vmul.f32 %v3883, 0.6931472
      %v3885 = vlog2.pop %v3882
      %v3886 = vmul.f32 %v3885, 0.6931472
      %v3887 = vadd.f32 %v3866, %v3884
      %v3888 = vadd.f32 %v3868, %v3886
      %v3889 = vsub.f32 %v3851, %v3887
      %v3890 = vsub.f32 %v3852, %v3888
      %v3891 = vsub.f32 %v3821, %v3889
      %v3892 = vsub.f32 %v3822, %v3890
      %vm3893 = vmxor %vm3801, 1
      %vm3894 = vmxor %vm3802, 1
      %vm3895 = vcmp.le.f32.partialorder %v3816, %v3891
      %vm3896 = vcmp.le.f32.partialorder %v3818, %v3892
      %vm3897 = vmand %vm3893, %vm3895
      %vm3898 = vmand %vm3894, %vm3896
      %vm3899 = vmor %vm3791, %vm3897
      %vm3900 = vmor %vm3792, %vm3898
      %vm3901 = vmxor %vm3755, 1
      %vm3902 = vmxor %vm3756, 1
      %vm3903 = vmand %vm3899, %vm3901
      %vm3904 = vmand %vm3900, %vm3902
      %v3905 = vsel %vm3903, %v3785, %v3753
      %v3906 = vsel %vm3904, %v3786, %v3754
      %vm3907 = vmor %vm3755, %vm3899
      %vm3908 = vmor %vm3756, %vm3900
      %s3909 = scalar_lea.vmem [#allocation7], 96
      %v3910 = vld [vmem:[%s3909] sm:$0xff]
      %v3911 = vld [vmem:[%s3909 + $0x8] sm:$0xff]
      %v3912 = vsub.f32 %v3910, 0.5
      %v3913 = vsub.f32 %v3911, 0.5
      %s3914 = scalar_lea.vmem [#allocation7], 112
      %v3915 = vld [vmem:[%s3914] sm:$0xff]
      %v3916 = vld [vmem:[%s3914 + $0x8] sm:$0xff]
      %v3917 = vand.u32 2147483647, %v3912
      %v3918 = vand.u32 2147483647, %v3913
      %v3919 = vsub.f32 0.5, %v3917
      %v3920 = vsub.f32 0.5, %v3918
      %v3921 = vmax.f32 %v3919, 1e-06
      %v3922 = vmax.f32 %v3920, 1e-06
      %v3923 = vrcp.pop %v3921
      %v3924 = vmul.f32 1.0, %v3923
      %v3925 = vrcp.pop %v3922
      %v3926 = vmul.f32 1.0, %v3925
      %v3927 = vmul.f32 %v3475, %v3924
      %v3928 = vmul.f32 %v3476, %v3926
      %v3929 = vadd.f32 %v3927, %v3436
      %v3930 = vadd.f32 %v3928, %v3437
      %v3931 = vmul.f32 %v3929, %v3912
      %v3932 = vmul.f32 %v3930, %v3913
      %v3933 = vadd.f32 %v3931, %v3414
      %v3934 = vadd.f32 %v3932, %v3415
      %v3935 = vadd.f32 %v3933, 0.43
      %v3936 = vadd.f32 %v3934, 0.43
      %v3937 = vfloor.f32 %v3935
      %v3938 = vfloor.f32 %v3936
      %vm3939 = vcmp.ge.f32.partialorder %v3921, 0.07
      %vm3940 = vcmp.ge.f32.partialorder %v3922, 0.07
      %vm3941 = vcmp.le.f32.partialorder %v3915, %v3456
      %vm3942 = vcmp.le.f32.partialorder %v3916, %v3457
      %vm3943 = vmand %vm3939, %vm3941
      %vm3944 = vmand %vm3940, %vm3942
      %vm3945 = vcmp.lt.f32.partialorder %v3937, 0.0
      %vm3946 = vcmp.lt.f32.partialorder %v3938, 0.0
      %vm3947 = vcmp.lt.f32.partialorder %v3921, 0.013
      %vm3948 = vcmp.lt.f32.partialorder %v3922, 0.013
      %vm3949 = vcmp.gt.f32.partialorder %v3915, %v3921
      %vm3950 = vcmp.gt.f32.partialorder %v3916, %v3922
      %vm3951 = vmand %vm3947, %vm3949
      %vm3952 = vmand %vm3948, %vm3950
      %vm3953 = vmor %vm3945, %vm3951
      %vm3954 = vmor %vm3946, %vm3952
      %v3955 = vmul.f32 %v3915, %v3448
      %v3956 = vmul.f32 %v3916, %v3449
      %v3957 = vmul.f32 %v3440, %v3924
      %v3958 = vmul.f32 %v3441, %v3926
      %v3959 = vmul.f32 %v3957, %v3924
      %v3960 = vmul.f32 %v3958, %v3926
      %v3961 = vadd.f32 %v3959, %v3436
      %v3962 = vadd.f32 %v3960, %v3437
      %v3963 = vrcp.pop %v3961
      %v3964 = vmul.f32 %v3955, %v3963
      %v3965 = vrcp.pop %v3962
      %v3966 = vmul.f32 %v3956, %v3965
      %v3967 = vlog2.pop %v3964
      %v3968 = vmul.f32 %v3967, 0.6931472
      %v3969 = vlog2.pop %v3966
      %v3970 = vmul.f32 %v3969, 0.6931472
      %v3971 = vmul.f32 %v3937, %v3417
      %v3972 = vmul.f32 %v3938, %v3419
      %v3973 = vsub.f32 %v3971, %v3414
      %v3974 = vsub.f32 %v3972, %v3415
      %v3975 = vadd.f32 %v3937, 1.0
      %v3976 = vadd.f32 %v3938, 1.0
      %v3977 = vadd.f32 %v3975, 8.0
      %v3978 = vadd.f32 %v3976, 8.0
      %v3979 = vrcp.pop %v3977
      %v3980 = vmul.f32 1.0, %v3979
      %v3981 = vrcp.pop %v3978
      %v3982 = vmul.f32 1.0, %v3981
      %v3983 = vsub.f32 %v3977, 0.5
      %v3984 = vsub.f32 %v3978, 0.5
      %v3985 = vlog2.pop %v3977
      %v3986 = vmul.f32 %v3985, 0.6931472
      %v3987 = vlog2.pop %v3978
      %v3988 = vmul.f32 %v3987, 0.6931472
      %v3989 = vmul.f32 %v3983, %v3986
      %v3990 = vmul.f32 %v3984, %v3988
      %v3991 = vsub.f32 %v3989, %v3977
      %v3992 = vsub.f32 %v3990, %v3978
      %v3993 = vadd.f32 %v3991, 0.9189385
      %v3994 = vadd.f32 %v3992, 0.9189385
      %v3995 = vmul.f32 %v3980, %v3980
      %v3996 = vmul.f32 %v3982, %v3982
      %v3997 = vmul.f32 %v3995, 0.0027777778
      %v3998 = vmul.f32 %v3996, 0.0027777778
      %v3999 = vsub.f32 0.083333336, %v3997
      %v4000 = vsub.f32 0.083333336, %v3998
      %v4001 = vmul.f32 %v3980, %v3999
      %v4002 = vmul.f32 %v3982, %v4000
      %v4003 = vadd.f32 %v3993, %v4001
      %v4004 = vadd.f32 %v3994, %v4002
      %v4005 = vadd.f32 %v3975, 1.0
      %v4006 = vadd.f32 %v3976, 1.0
      %v4007 = vmul.f32 %v3975, %v4005
      %v4008 = vmul.f32 %v3976, %v4006
      %v4009 = vadd.f32 %v3975, 2.0
      %v4010 = vadd.f32 %v3976, 2.0
      %v4011 = vmul.f32 %v4007, %v4009
      %v4012 = vmul.f32 %v4008, %v4010
      %v4013 = vadd.f32 %v3975, 3.0
      %v4014 = vadd.f32 %v3976, 3.0
      %v4015 = vmul.f32 %v4011, %v4013
      %v4016 = vmul.f32 %v4012, %v4014
      %v4017 = vlog2.pop %v4015
      %v4018 = vmul.f32 %v4017, 0.6931472
      %v4019 = vlog2.pop %v4016
      %v4020 = vmul.f32 %v4019, 0.6931472
      %v4021 = vadd.f32 %v3975, 4.0
      %v4022 = vadd.f32 %v3976, 4.0
      %v4023 = vadd.f32 %v3975, 5.0
      %v4024 = vadd.f32 %v3976, 5.0
      %v4025 = vmul.f32 %v4021, %v4023
      %v4026 = vmul.f32 %v4022, %v4024
      %v4027 = vadd.f32 %v3975, 6.0
      %v4028 = vadd.f32 %v3976, 6.0
      %v4029 = vmul.f32 %v4025, %v4027
      %v4030 = vmul.f32 %v4026, %v4028
      %v4031 = vadd.f32 %v3975, 7.0
      %v4032 = vadd.f32 %v3976, 7.0
      %v4033 = vmul.f32 %v4029, %v4031
      %v4034 = vmul.f32 %v4030, %v4032
      %v4035 = vlog2.pop %v4033
      %v4036 = vmul.f32 %v4035, 0.6931472
      %v4037 = vlog2.pop %v4034
      %v4038 = vmul.f32 %v4037, 0.6931472
      %v4039 = vadd.f32 %v4018, %v4036
      %v4040 = vadd.f32 %v4020, %v4038
      %v4041 = vsub.f32 %v4003, %v4039
      %v4042 = vsub.f32 %v4004, %v4040
      %v4043 = vsub.f32 %v3973, %v4041
      %v4044 = vsub.f32 %v3974, %v4042
      %vm4045 = vmxor %vm3953, 1
      %vm4046 = vmxor %vm3954, 1
      %vm4047 = vcmp.le.f32.partialorder %v3968, %v4043
      %vm4048 = vcmp.le.f32.partialorder %v3970, %v4044
      %vm4049 = vmand %vm4045, %vm4047
      %vm4050 = vmand %vm4046, %vm4048
      %vm4051 = vmor %vm3943, %vm4049
      %vm4052 = vmor %vm3944, %vm4050
      %vm4053 = vmxor %vm3907, 1
      %vm4054 = vmxor %vm3908, 1
      %vm4055 = vmand %vm4051, %vm4053
      %vm4056 = vmand %vm4052, %vm4054
      %v4057 = vsel %vm4055, %v3937, %v3905
      %v4058 = vsel %vm4056, %v3938, %v3906
      %vm4059 = vmor %vm3907, %vm4051
      %vm4060 = vmor %vm3908, %vm4052
      %s4061 = scalar_lea.vmem [#allocation7], 128
      %v4062 = vld [vmem:[%s4061] sm:$0xff]
      %v4063 = vld [vmem:[%s4061 + $0x8] sm:$0xff]
      %v4064 = vsub.f32 %v4062, 0.5
      %v4065 = vsub.f32 %v4063, 0.5
      %s4066 = scalar_lea.vmem [#allocation7], 144
      %v4067 = vld [vmem:[%s4066] sm:$0xff]
      %v4068 = vld [vmem:[%s4066 + $0x8] sm:$0xff]
      %v4069 = vand.u32 2147483647, %v4064
      %v4070 = vand.u32 2147483647, %v4065
      %v4071 = vsub.f32 0.5, %v4069
      %v4072 = vsub.f32 0.5, %v4070
      %v4073 = vmax.f32 %v4071, 1e-06
      %v4074 = vmax.f32 %v4072, 1e-06
      %v4075 = vrcp.pop %v4073
      %v4076 = vmul.f32 1.0, %v4075
      %v4077 = vrcp.pop %v4074
      %v4078 = vmul.f32 1.0, %v4077
      %v4079 = vmul.f32 %v3475, %v4076
      %v4080 = vmul.f32 %v3476, %v4078
      %v4081 = vadd.f32 %v4079, %v3436
      %v4082 = vadd.f32 %v4080, %v3437
      %v4083 = vmul.f32 %v4081, %v4064
      %v4084 = vmul.f32 %v4082, %v4065
      %v4085 = vadd.f32 %v4083, %v3414
      %v4086 = vadd.f32 %v4084, %v3415
      %v4087 = vadd.f32 %v4085, 0.43
      %v4088 = vadd.f32 %v4086, 0.43
      %v4089 = vfloor.f32 %v4087
      %v4090 = vfloor.f32 %v4088
      %vm4091 = vcmp.ge.f32.partialorder %v4073, 0.07
      %vm4092 = vcmp.ge.f32.partialorder %v4074, 0.07
      %vm4093 = vcmp.le.f32.partialorder %v4067, %v3456
      %vm4094 = vcmp.le.f32.partialorder %v4068, %v3457
      %vm4095 = vmand %vm4091, %vm4093
      %vm4096 = vmand %vm4092, %vm4094
      %vm4097 = vcmp.lt.f32.partialorder %v4089, 0.0
      %vm4098 = vcmp.lt.f32.partialorder %v4090, 0.0
      %vm4099 = vcmp.lt.f32.partialorder %v4073, 0.013
      %vm4100 = vcmp.lt.f32.partialorder %v4074, 0.013
      %vm4101 = vcmp.gt.f32.partialorder %v4067, %v4073
      %vm4102 = vcmp.gt.f32.partialorder %v4068, %v4074
      %vm4103 = vmand %vm4099, %vm4101
      %vm4104 = vmand %vm4100, %vm4102
      %vm4105 = vmor %vm4097, %vm4103
      %vm4106 = vmor %vm4098, %vm4104
      %v4107 = vmul.f32 %v4067, %v3448
      %v4108 = vmul.f32 %v4068, %v3449
      %v4109 = vmul.f32 %v3440, %v4076
      %v4110 = vmul.f32 %v3441, %v4078
      %v4111 = vmul.f32 %v4109, %v4076
      %v4112 = vmul.f32 %v4110, %v4078
      %v4113 = vadd.f32 %v4111, %v3436
      %v4114 = vadd.f32 %v4112, %v3437
      %v4115 = vrcp.pop %v4113
      %v4116 = vmul.f32 %v4107, %v4115
      %v4117 = vrcp.pop %v4114
      %v4118 = vmul.f32 %v4108, %v4117
      %v4119 = vlog2.pop %v4116
      %v4120 = vmul.f32 %v4119, 0.6931472
      %v4121 = vlog2.pop %v4118
      %v4122 = vmul.f32 %v4121, 0.6931472
      %v4123 = vmul.f32 %v4089, %v3417
      %v4124 = vmul.f32 %v4090, %v3419
      %v4125 = vsub.f32 %v4123, %v3414
      %v4126 = vsub.f32 %v4124, %v3415
      %v4127 = vadd.f32 %v4089, 1.0
      %v4128 = vadd.f32 %v4090, 1.0
      %v4129 = vadd.f32 %v4127, 8.0
      %v4130 = vadd.f32 %v4128, 8.0
      %v4131 = vrcp.pop %v4129
      %v4132 = vmul.f32 1.0, %v4131
      %v4133 = vrcp.pop %v4130
      %v4134 = vmul.f32 1.0, %v4133
      %v4135 = vsub.f32 %v4129, 0.5
      %v4136 = vsub.f32 %v4130, 0.5
      %v4137 = vlog2.pop %v4129
      %v4138 = vmul.f32 %v4137, 0.6931472
      %v4139 = vlog2.pop %v4130
      %v4140 = vmul.f32 %v4139, 0.6931472
      %v4141 = vmul.f32 %v4135, %v4138
      %v4142 = vmul.f32 %v4136, %v4140
      %v4143 = vsub.f32 %v4141, %v4129
      %v4144 = vsub.f32 %v4142, %v4130
      %v4145 = vadd.f32 %v4143, 0.9189385
      %v4146 = vadd.f32 %v4144, 0.9189385
      %v4147 = vmul.f32 %v4132, %v4132
      %v4148 = vmul.f32 %v4134, %v4134
      %v4149 = vmul.f32 %v4147, 0.0027777778
      %v4150 = vmul.f32 %v4148, 0.0027777778
      %v4151 = vsub.f32 0.083333336, %v4149
      %v4152 = vsub.f32 0.083333336, %v4150
      %v4153 = vmul.f32 %v4132, %v4151
      %v4154 = vmul.f32 %v4134, %v4152
      %v4155 = vadd.f32 %v4145, %v4153
      %v4156 = vadd.f32 %v4146, %v4154
      %v4157 = vadd.f32 %v4127, 1.0
      %v4158 = vadd.f32 %v4128, 1.0
      %v4159 = vmul.f32 %v4127, %v4157
      %v4160 = vmul.f32 %v4128, %v4158
      %v4161 = vadd.f32 %v4127, 2.0
      %v4162 = vadd.f32 %v4128, 2.0
      %v4163 = vmul.f32 %v4159, %v4161
      %v4164 = vmul.f32 %v4160, %v4162
      %v4165 = vadd.f32 %v4127, 3.0
      %v4166 = vadd.f32 %v4128, 3.0
      %v4167 = vmul.f32 %v4163, %v4165
      %v4168 = vmul.f32 %v4164, %v4166
      %v4169 = vlog2.pop %v4167
      %v4170 = vmul.f32 %v4169, 0.6931472
      %v4171 = vlog2.pop %v4168
      %v4172 = vmul.f32 %v4171, 0.6931472
      %v4173 = vadd.f32 %v4127, 4.0
      %v4174 = vadd.f32 %v4128, 4.0
      %v4175 = vadd.f32 %v4127, 5.0
      %v4176 = vadd.f32 %v4128, 5.0
      %v4177 = vmul.f32 %v4173, %v4175
      %v4178 = vmul.f32 %v4174, %v4176
      %v4179 = vadd.f32 %v4127, 6.0
      %v4180 = vadd.f32 %v4128, 6.0
      %v4181 = vmul.f32 %v4177, %v4179
      %v4182 = vmul.f32 %v4178, %v4180
      %v4183 = vadd.f32 %v4127, 7.0
      %v4184 = vadd.f32 %v4128, 7.0
      %v4185 = vmul.f32 %v4181, %v4183
      %v4186 = vmul.f32 %v4182, %v4184
      %v4187 = vlog2.pop %v4185
      %v4188 = vmul.f32 %v4187, 0.6931472
      %v4189 = vlog2.pop %v4186
      %v4190 = vmul.f32 %v4189, 0.6931472
      %v4191 = vadd.f32 %v4170, %v4188
      %v4192 = vadd.f32 %v4172, %v4190
      %v4193 = vsub.f32 %v4155, %v4191
      %v4194 = vsub.f32 %v4156, %v4192
      %v4195 = vsub.f32 %v4125, %v4193
      %v4196 = vsub.f32 %v4126, %v4194
      %vm4197 = vmxor %vm4105, 1
      %vm4198 = vmxor %vm4106, 1
      %vm4199 = vcmp.le.f32.partialorder %v4120, %v4195
      %vm4200 = vcmp.le.f32.partialorder %v4122, %v4196
      %vm4201 = vmand %vm4197, %vm4199
      %vm4202 = vmand %vm4198, %vm4200
      %vm4203 = vmor %vm4095, %vm4201
      %vm4204 = vmor %vm4096, %vm4202
      %vm4205 = vmxor %vm4059, 1
      %vm4206 = vmxor %vm4060, 1
      %vm4207 = vmand %vm4203, %vm4205
      %vm4208 = vmand %vm4204, %vm4206
      %v4209 = vsel %vm4207, %v4089, %v4057
      %v4210 = vsel %vm4208, %v4090, %v4058
      %vm4211 = vmor %vm4059, %vm4203
      %vm4212 = vmor %vm4060, %vm4204
      %s4213 = scalar_lea.vmem [#allocation7], 160
      %v4214 = vld [vmem:[%s4213] sm:$0xff]
      %v4215 = vld [vmem:[%s4213 + $0x8] sm:$0xff]
      %v4216 = vsub.f32 %v4214, 0.5
      %v4217 = vsub.f32 %v4215, 0.5
      %s4218 = scalar_lea.vmem [#allocation7], 176
      %v4219 = vld [vmem:[%s4218] sm:$0xff]
      %v4220 = vld [vmem:[%s4218 + $0x8] sm:$0xff]
      %v4221 = vand.u32 2147483647, %v4216
      %v4222 = vand.u32 2147483647, %v4217
      %v4223 = vsub.f32 0.5, %v4221
      %v4224 = vsub.f32 0.5, %v4222
      %v4225 = vmax.f32 %v4223, 1e-06
      %v4226 = vmax.f32 %v4224, 1e-06
      %v4227 = vrcp.pop %v4225
      %v4228 = vmul.f32 1.0, %v4227
      %v4229 = vrcp.pop %v4226
      %v4230 = vmul.f32 1.0, %v4229
      %v4231 = vmul.f32 %v3475, %v4228
      %v4232 = vmul.f32 %v3476, %v4230
      %v4233 = vadd.f32 %v4231, %v3436
      %v4234 = vadd.f32 %v4232, %v3437
      %v4235 = vmul.f32 %v4233, %v4216
      %v4236 = vmul.f32 %v4234, %v4217
      %v4237 = vadd.f32 %v4235, %v3414
      %v4238 = vadd.f32 %v4236, %v3415
      %v4239 = vadd.f32 %v4237, 0.43
      %v4240 = vadd.f32 %v4238, 0.43
      %v4241 = vfloor.f32 %v4239
      %v4242 = vfloor.f32 %v4240
      %vm4243 = vcmp.ge.f32.partialorder %v4225, 0.07
      %vm4244 = vcmp.ge.f32.partialorder %v4226, 0.07
      %vm4245 = vcmp.le.f32.partialorder %v4219, %v3456
      %vm4246 = vcmp.le.f32.partialorder %v4220, %v3457
      %vm4247 = vmand %vm4243, %vm4245
      %vm4248 = vmand %vm4244, %vm4246
      %vm4249 = vcmp.lt.f32.partialorder %v4241, 0.0
      %vm4250 = vcmp.lt.f32.partialorder %v4242, 0.0
      %vm4251 = vcmp.lt.f32.partialorder %v4225, 0.013
      %vm4252 = vcmp.lt.f32.partialorder %v4226, 0.013
      %vm4253 = vcmp.gt.f32.partialorder %v4219, %v4225
      %vm4254 = vcmp.gt.f32.partialorder %v4220, %v4226
      %vm4255 = vmand %vm4251, %vm4253
      %vm4256 = vmand %vm4252, %vm4254
      %vm4257 = vmor %vm4249, %vm4255
      %vm4258 = vmor %vm4250, %vm4256
      %v4259 = vmul.f32 %v4219, %v3448
      %v4260 = vmul.f32 %v4220, %v3449
      %v4261 = vmul.f32 %v3440, %v4228
      %v4262 = vmul.f32 %v3441, %v4230
      %v4263 = vmul.f32 %v4261, %v4228
      %v4264 = vmul.f32 %v4262, %v4230
      %v4265 = vadd.f32 %v4263, %v3436
      %v4266 = vadd.f32 %v4264, %v3437
      %v4267 = vrcp.pop %v4265
      %v4268 = vmul.f32 %v4259, %v4267
      %v4269 = vrcp.pop %v4266
      %v4270 = vmul.f32 %v4260, %v4269
      %v4271 = vlog2.pop %v4268
      %v4272 = vmul.f32 %v4271, 0.6931472
      %v4273 = vlog2.pop %v4270
      %v4274 = vmul.f32 %v4273, 0.6931472
      %v4275 = vmul.f32 %v4241, %v3417
      %v4276 = vmul.f32 %v4242, %v3419
      %v4277 = vsub.f32 %v4275, %v3414
      %v4278 = vsub.f32 %v4276, %v3415
      %v4279 = vadd.f32 %v4241, 1.0
      %v4280 = vadd.f32 %v4242, 1.0
      %v4281 = vadd.f32 %v4279, 8.0
      %v4282 = vadd.f32 %v4280, 8.0
      %v4283 = vrcp.pop %v4281
      %v4284 = vmul.f32 1.0, %v4283
      %v4285 = vrcp.pop %v4282
      %v4286 = vmul.f32 1.0, %v4285
      %v4287 = vsub.f32 %v4281, 0.5
      %v4288 = vsub.f32 %v4282, 0.5
      %v4289 = vlog2.pop %v4281
      %v4290 = vmul.f32 %v4289, 0.6931472
      %v4291 = vlog2.pop %v4282
      %v4292 = vmul.f32 %v4291, 0.6931472
      %v4293 = vmul.f32 %v4287, %v4290
      %v4294 = vmul.f32 %v4288, %v4292
      %v4295 = vsub.f32 %v4293, %v4281
      %v4296 = vsub.f32 %v4294, %v4282
      %v4297 = vadd.f32 %v4295, 0.9189385
      %v4298 = vadd.f32 %v4296, 0.9189385
      %v4299 = vmul.f32 %v4284, %v4284
      %v4300 = vmul.f32 %v4286, %v4286
      %v4301 = vmul.f32 %v4299, 0.0027777778
      %v4302 = vmul.f32 %v4300, 0.0027777778
      %v4303 = vsub.f32 0.083333336, %v4301
      %v4304 = vsub.f32 0.083333336, %v4302
      %v4305 = vmul.f32 %v4284, %v4303
      %v4306 = vmul.f32 %v4286, %v4304
      %v4307 = vadd.f32 %v4297, %v4305
      %v4308 = vadd.f32 %v4298, %v4306
      %v4309 = vadd.f32 %v4279, 1.0
      %v4310 = vadd.f32 %v4280, 1.0
      %v4311 = vmul.f32 %v4279, %v4309
      %v4312 = vmul.f32 %v4280, %v4310
      %v4313 = vadd.f32 %v4279, 2.0
      %v4314 = vadd.f32 %v4280, 2.0
      %v4315 = vmul.f32 %v4311, %v4313
      %v4316 = vmul.f32 %v4312, %v4314
      %v4317 = vadd.f32 %v4279, 3.0
      %v4318 = vadd.f32 %v4280, 3.0
      %v4319 = vmul.f32 %v4315, %v4317
      %v4320 = vmul.f32 %v4316, %v4318
      %v4321 = vlog2.pop %v4319
      %v4322 = vmul.f32 %v4321, 0.6931472
      %v4323 = vlog2.pop %v4320
      %v4324 = vmul.f32 %v4323, 0.6931472
      %v4325 = vadd.f32 %v4279, 4.0
      %v4326 = vadd.f32 %v4280, 4.0
      %v4327 = vadd.f32 %v4279, 5.0
      %v4328 = vadd.f32 %v4280, 5.0
      %v4329 = vmul.f32 %v4325, %v4327
      %v4330 = vmul.f32 %v4326, %v4328
      %v4331 = vadd.f32 %v4279, 6.0
      %v4332 = vadd.f32 %v4280, 6.0
      %v4333 = vmul.f32 %v4329, %v4331
      %v4334 = vmul.f32 %v4330, %v4332
      %v4335 = vadd.f32 %v4279, 7.0
      %v4336 = vadd.f32 %v4280, 7.0
      %v4337 = vmul.f32 %v4333, %v4335
      %v4338 = vmul.f32 %v4334, %v4336
      %v4339 = vlog2.pop %v4337
      %v4340 = vmul.f32 %v4339, 0.6931472
      %v4341 = vlog2.pop %v4338
      %v4342 = vmul.f32 %v4341, 0.6931472
      %v4343 = vadd.f32 %v4322, %v4340
      %v4344 = vadd.f32 %v4324, %v4342
      %v4345 = vsub.f32 %v4307, %v4343
      %v4346 = vsub.f32 %v4308, %v4344
      %v4347 = vsub.f32 %v4277, %v4345
      %v4348 = vsub.f32 %v4278, %v4346
      %vm4349 = vmxor %vm4257, 1
      %vm4350 = vmxor %vm4258, 1
      %vm4351 = vcmp.le.f32.partialorder %v4272, %v4347
      %vm4352 = vcmp.le.f32.partialorder %v4274, %v4348
      %vm4353 = vmand %vm4349, %vm4351
      %vm4354 = vmand %vm4350, %vm4352
      %vm4355 = vmor %vm4247, %vm4353
      %vm4356 = vmor %vm4248, %vm4354
      %vm4357 = vmxor %vm4211, 1
      %vm4358 = vmxor %vm4212, 1
      %vm4359 = vmand %vm4355, %vm4357
      %vm4360 = vmand %vm4356, %vm4358
      %v4361 = vsel %vm4359, %v4241, %v4209
      %v4362 = vsel %vm4360, %v4242, %v4210
      %vm4363 = vmor %vm4211, %vm4355
      %vm4364 = vmor %vm4212, %vm4356
      %s4365 = scalar_lea.vmem [#allocation7], 192
      %v4366 = vld [vmem:[%s4365] sm:$0xff]
      %v4367 = vld [vmem:[%s4365 + $0x8] sm:$0xff]
      %v4368 = vsub.f32 %v4366, 0.5
      %v4369 = vsub.f32 %v4367, 0.5
      %s4370 = scalar_lea.vmem [#allocation7], 208
      %v4371 = vld [vmem:[%s4370] sm:$0xff]
      %v4372 = vld [vmem:[%s4370 + $0x8] sm:$0xff]
      %v4373 = vand.u32 2147483647, %v4368
      %v4374 = vand.u32 2147483647, %v4369
      %v4375 = vsub.f32 0.5, %v4373
      %v4376 = vsub.f32 0.5, %v4374
      %v4377 = vmax.f32 %v4375, 1e-06
      %v4378 = vmax.f32 %v4376, 1e-06
      %v4379 = vrcp.pop %v4377
      %v4380 = vmul.f32 1.0, %v4379
      %v4381 = vrcp.pop %v4378
      %v4382 = vmul.f32 1.0, %v4381
      %v4383 = vmul.f32 %v3475, %v4380
      %v4384 = vmul.f32 %v3476, %v4382
      %v4385 = vadd.f32 %v4383, %v3436
      %v4386 = vadd.f32 %v4384, %v3437
      %v4387 = vmul.f32 %v4385, %v4368
      %v4388 = vmul.f32 %v4386, %v4369
      %v4389 = vadd.f32 %v4387, %v3414
      %v4390 = vadd.f32 %v4388, %v3415
      %v4391 = vadd.f32 %v4389, 0.43
      %v4392 = vadd.f32 %v4390, 0.43
      %v4393 = vfloor.f32 %v4391
      %v4394 = vfloor.f32 %v4392
      %vm4395 = vcmp.ge.f32.partialorder %v4377, 0.07
      %vm4396 = vcmp.ge.f32.partialorder %v4378, 0.07
      %vm4397 = vcmp.le.f32.partialorder %v4371, %v3456
      %vm4398 = vcmp.le.f32.partialorder %v4372, %v3457
      %vm4399 = vmand %vm4395, %vm4397
      %vm4400 = vmand %vm4396, %vm4398
      %vm4401 = vcmp.lt.f32.partialorder %v4393, 0.0
      %vm4402 = vcmp.lt.f32.partialorder %v4394, 0.0
      %vm4403 = vcmp.lt.f32.partialorder %v4377, 0.013
      %vm4404 = vcmp.lt.f32.partialorder %v4378, 0.013
      %vm4405 = vcmp.gt.f32.partialorder %v4371, %v4377
      %vm4406 = vcmp.gt.f32.partialorder %v4372, %v4378
      %vm4407 = vmand %vm4403, %vm4405
      %vm4408 = vmand %vm4404, %vm4406
      %vm4409 = vmor %vm4401, %vm4407
      %vm4410 = vmor %vm4402, %vm4408
      %v4411 = vmul.f32 %v4371, %v3448
      %v4412 = vmul.f32 %v4372, %v3449
      %v4413 = vmul.f32 %v3440, %v4380
      %v4414 = vmul.f32 %v3441, %v4382
      %v4415 = vmul.f32 %v4413, %v4380
      %v4416 = vmul.f32 %v4414, %v4382
      %v4417 = vadd.f32 %v4415, %v3436
      %v4418 = vadd.f32 %v4416, %v3437
      %v4419 = vrcp.pop %v4417
      %v4420 = vmul.f32 %v4411, %v4419
      %v4421 = vrcp.pop %v4418
      %v4422 = vmul.f32 %v4412, %v4421
      %v4423 = vlog2.pop %v4420
      %v4424 = vmul.f32 %v4423, 0.6931472
      %v4425 = vlog2.pop %v4422
      %v4426 = vmul.f32 %v4425, 0.6931472
      %v4427 = vmul.f32 %v4393, %v3417
      %v4428 = vmul.f32 %v4394, %v3419
      %v4429 = vsub.f32 %v4427, %v3414
      %v4430 = vsub.f32 %v4428, %v3415
      %v4431 = vadd.f32 %v4393, 1.0
      %v4432 = vadd.f32 %v4394, 1.0
      %v4433 = vadd.f32 %v4431, 8.0
      %v4434 = vadd.f32 %v4432, 8.0
      %v4435 = vrcp.pop %v4433
      %v4436 = vmul.f32 1.0, %v4435
      %v4437 = vrcp.pop %v4434
      %v4438 = vmul.f32 1.0, %v4437
      %v4439 = vsub.f32 %v4433, 0.5
      %v4440 = vsub.f32 %v4434, 0.5
      %v4441 = vlog2.pop %v4433
      %v4442 = vmul.f32 %v4441, 0.6931472
      %v4443 = vlog2.pop %v4434
      %v4444 = vmul.f32 %v4443, 0.6931472
      %v4445 = vmul.f32 %v4439, %v4442
      %v4446 = vmul.f32 %v4440, %v4444
      %v4447 = vsub.f32 %v4445, %v4433
      %v4448 = vsub.f32 %v4446, %v4434
      %v4449 = vadd.f32 %v4447, 0.9189385
      %v4450 = vadd.f32 %v4448, 0.9189385
      %v4451 = vmul.f32 %v4436, %v4436
      %v4452 = vmul.f32 %v4438, %v4438
      %v4453 = vmul.f32 %v4451, 0.0027777778
      %v4454 = vmul.f32 %v4452, 0.0027777778
      %v4455 = vsub.f32 0.083333336, %v4453
      %v4456 = vsub.f32 0.083333336, %v4454
      %v4457 = vmul.f32 %v4436, %v4455
      %v4458 = vmul.f32 %v4438, %v4456
      %v4459 = vadd.f32 %v4449, %v4457
      %v4460 = vadd.f32 %v4450, %v4458
      %v4461 = vadd.f32 %v4431, 1.0
      %v4462 = vadd.f32 %v4432, 1.0
      %v4463 = vmul.f32 %v4431, %v4461
      %v4464 = vmul.f32 %v4432, %v4462
      %v4465 = vadd.f32 %v4431, 2.0
      %v4466 = vadd.f32 %v4432, 2.0
      %v4467 = vmul.f32 %v4463, %v4465
      %v4468 = vmul.f32 %v4464, %v4466
      %v4469 = vadd.f32 %v4431, 3.0
      %v4470 = vadd.f32 %v4432, 3.0
      %v4471 = vmul.f32 %v4467, %v4469
      %v4472 = vmul.f32 %v4468, %v4470
      %v4473 = vlog2.pop %v4471
      %v4474 = vmul.f32 %v4473, 0.6931472
      %v4475 = vlog2.pop %v4472
      %v4476 = vmul.f32 %v4475, 0.6931472
      %v4477 = vadd.f32 %v4431, 4.0
      %v4478 = vadd.f32 %v4432, 4.0
      %v4479 = vadd.f32 %v4431, 5.0
      %v4480 = vadd.f32 %v4432, 5.0
      %v4481 = vmul.f32 %v4477, %v4479
      %v4482 = vmul.f32 %v4478, %v4480
      %v4483 = vadd.f32 %v4431, 6.0
      %v4484 = vadd.f32 %v4432, 6.0
      %v4485 = vmul.f32 %v4481, %v4483
      %v4486 = vmul.f32 %v4482, %v4484
      %v4487 = vadd.f32 %v4431, 7.0
      %v4488 = vadd.f32 %v4432, 7.0
      %v4489 = vmul.f32 %v4485, %v4487
      %v4490 = vmul.f32 %v4486, %v4488
      %v4491 = vlog2.pop %v4489
      %v4492 = vmul.f32 %v4491, 0.6931472
      %v4493 = vlog2.pop %v4490
      %v4494 = vmul.f32 %v4493, 0.6931472
      %v4495 = vadd.f32 %v4474, %v4492
      %v4496 = vadd.f32 %v4476, %v4494
      %v4497 = vsub.f32 %v4459, %v4495
      %v4498 = vsub.f32 %v4460, %v4496
      %v4499 = vsub.f32 %v4429, %v4497
      %v4500 = vsub.f32 %v4430, %v4498
      %vm4501 = vmxor %vm4409, 1
      %vm4502 = vmxor %vm4410, 1
      %vm4503 = vcmp.le.f32.partialorder %v4424, %v4499
      %vm4504 = vcmp.le.f32.partialorder %v4426, %v4500
      %vm4505 = vmand %vm4501, %vm4503
      %vm4506 = vmand %vm4502, %vm4504
      %vm4507 = vmor %vm4399, %vm4505
      %vm4508 = vmor %vm4400, %vm4506
      %vm4509 = vmxor %vm4363, 1
      %vm4510 = vmxor %vm4364, 1
      %vm4511 = vmand %vm4507, %vm4509
      %vm4512 = vmand %vm4508, %vm4510
      %v4513 = vsel %vm4511, %v4393, %v4361
      %v4514 = vsel %vm4512, %v4394, %v4362
      %vm4515 = vmor %vm4363, %vm4507
      %vm4516 = vmor %vm4364, %vm4508
      %s4517 = scalar_lea.vmem [#allocation7], 224
      %v4518 = vld [vmem:[%s4517] sm:$0xff]
      %v4519 = vld [vmem:[%s4517 + $0x8] sm:$0xff]
      %v4520 = vsub.f32 %v4518, 0.5
      %v4521 = vsub.f32 %v4519, 0.5
      %s4522 = scalar_lea.vmem [#allocation7], 240
      %v4523 = vld [vmem:[%s4522] sm:$0xff]
      %v4524 = vld [vmem:[%s4522 + $0x8] sm:$0xff]
      %v4525 = vand.u32 2147483647, %v4520
      %v4526 = vand.u32 2147483647, %v4521
      %v4527 = vsub.f32 0.5, %v4525
      %v4528 = vsub.f32 0.5, %v4526
      %v4529 = vmax.f32 %v4527, 1e-06
      %v4530 = vmax.f32 %v4528, 1e-06
      %v4531 = vrcp.pop %v4529
      %v4532 = vmul.f32 1.0, %v4531
      %v4533 = vrcp.pop %v4530
      %v4534 = vmul.f32 1.0, %v4533
      %v4535 = vmul.f32 %v3475, %v4532
      %v4536 = vmul.f32 %v3476, %v4534
      %v4537 = vadd.f32 %v4535, %v3436
      %v4538 = vadd.f32 %v4536, %v3437
      %v4539 = vmul.f32 %v4537, %v4520
      %v4540 = vmul.f32 %v4538, %v4521
      %v4541 = vadd.f32 %v4539, %v3414
      %v4542 = vadd.f32 %v4540, %v3415
      %v4543 = vadd.f32 %v4541, 0.43
      %v4544 = vadd.f32 %v4542, 0.43
      %v4545 = vfloor.f32 %v4543
      %v4546 = vfloor.f32 %v4544
      %vm4547 = vcmp.ge.f32.partialorder %v4529, 0.07
      %vm4548 = vcmp.ge.f32.partialorder %v4530, 0.07
      %vm4549 = vcmp.le.f32.partialorder %v4523, %v3456
      %vm4550 = vcmp.le.f32.partialorder %v4524, %v3457
      %vm4551 = vmand %vm4547, %vm4549
      %vm4552 = vmand %vm4548, %vm4550
      %vm4553 = vcmp.lt.f32.partialorder %v4545, 0.0
      %vm4554 = vcmp.lt.f32.partialorder %v4546, 0.0
      %vm4555 = vcmp.lt.f32.partialorder %v4529, 0.013
      %vm4556 = vcmp.lt.f32.partialorder %v4530, 0.013
      %vm4557 = vcmp.gt.f32.partialorder %v4523, %v4529
      %vm4558 = vcmp.gt.f32.partialorder %v4524, %v4530
      %vm4559 = vmand %vm4555, %vm4557
      %vm4560 = vmand %vm4556, %vm4558
      %vm4561 = vmor %vm4553, %vm4559
      %vm4562 = vmor %vm4554, %vm4560
      %v4563 = vmul.f32 %v4523, %v3448
      %v4564 = vmul.f32 %v4524, %v3449
      %v4565 = vmul.f32 %v3440, %v4532
      %v4566 = vmul.f32 %v3441, %v4534
      %v4567 = vmul.f32 %v4565, %v4532
      %v4568 = vmul.f32 %v4566, %v4534
      %v4569 = vadd.f32 %v4567, %v3436
      %v4570 = vadd.f32 %v4568, %v3437
      %v4571 = vrcp.pop %v4569
      %v4572 = vmul.f32 %v4563, %v4571
      %v4573 = vrcp.pop %v4570
      %v4574 = vmul.f32 %v4564, %v4573
      %v4575 = vlog2.pop %v4572
      %v4576 = vmul.f32 %v4575, 0.6931472
      %v4577 = vlog2.pop %v4574
      %v4578 = vmul.f32 %v4577, 0.6931472
      %v4579 = vmul.f32 %v4545, %v3417
      %v4580 = vmul.f32 %v4546, %v3419
      %v4581 = vsub.f32 %v4579, %v3414
      %v4582 = vsub.f32 %v4580, %v3415
      %v4583 = vadd.f32 %v4545, 1.0
      %v4584 = vadd.f32 %v4546, 1.0
      %v4585 = vadd.f32 %v4583, 8.0
      %v4586 = vadd.f32 %v4584, 8.0
      %v4587 = vrcp.pop %v4585
      %v4588 = vmul.f32 1.0, %v4587
      %v4589 = vrcp.pop %v4586
      %v4590 = vmul.f32 1.0, %v4589
      %v4591 = vsub.f32 %v4585, 0.5
      %v4592 = vsub.f32 %v4586, 0.5
      %v4593 = vlog2.pop %v4585
      %v4594 = vmul.f32 %v4593, 0.6931472
      %v4595 = vlog2.pop %v4586
      %v4596 = vmul.f32 %v4595, 0.6931472
      %v4597 = vmul.f32 %v4591, %v4594
      %v4598 = vmul.f32 %v4592, %v4596
      %v4599 = vsub.f32 %v4597, %v4585
      %v4600 = vsub.f32 %v4598, %v4586
      %v4601 = vadd.f32 %v4599, 0.9189385
      %v4602 = vadd.f32 %v4600, 0.9189385
      %v4603 = vmul.f32 %v4588, %v4588
      %v4604 = vmul.f32 %v4590, %v4590
      %v4605 = vmul.f32 %v4603, 0.0027777778
      %v4606 = vmul.f32 %v4604, 0.0027777778
      %v4607 = vsub.f32 0.083333336, %v4605
      %v4608 = vsub.f32 0.083333336, %v4606
      %v4609 = vmul.f32 %v4588, %v4607
      %v4610 = vmul.f32 %v4590, %v4608
      %v4611 = vadd.f32 %v4601, %v4609
      %v4612 = vadd.f32 %v4602, %v4610
      %v4613 = vadd.f32 %v4583, 1.0
      %v4614 = vadd.f32 %v4584, 1.0
      %v4615 = vmul.f32 %v4583, %v4613
      %v4616 = vmul.f32 %v4584, %v4614
      %v4617 = vadd.f32 %v4583, 2.0
      %v4618 = vadd.f32 %v4584, 2.0
      %v4619 = vmul.f32 %v4615, %v4617
      %v4620 = vmul.f32 %v4616, %v4618
      %v4621 = vadd.f32 %v4583, 3.0
      %v4622 = vadd.f32 %v4584, 3.0
      %v4623 = vmul.f32 %v4619, %v4621
      %v4624 = vmul.f32 %v4620, %v4622
      %v4625 = vlog2.pop %v4623
      %v4626 = vmul.f32 %v4625, 0.6931472
      %v4627 = vlog2.pop %v4624
      %v4628 = vmul.f32 %v4627, 0.6931472
      %v4629 = vadd.f32 %v4583, 4.0
      %v4630 = vadd.f32 %v4584, 4.0
      %v4631 = vadd.f32 %v4583, 5.0
      %v4632 = vadd.f32 %v4584, 5.0
      %v4633 = vmul.f32 %v4629, %v4631
      %v4634 = vmul.f32 %v4630, %v4632
      %v4635 = vadd.f32 %v4583, 6.0
      %v4636 = vadd.f32 %v4584, 6.0
      %v4637 = vmul.f32 %v4633, %v4635
      %v4638 = vmul.f32 %v4634, %v4636
      %v4639 = vadd.f32 %v4583, 7.0
      %v4640 = vadd.f32 %v4584, 7.0
      %v4641 = vmul.f32 %v4637, %v4639
      %v4642 = vmul.f32 %v4638, %v4640
      %v4643 = vlog2.pop %v4641
      %v4644 = vmul.f32 %v4643, 0.6931472
      %v4645 = vlog2.pop %v4642
      %v4646 = vmul.f32 %v4645, 0.6931472
      %v4647 = vadd.f32 %v4626, %v4644
      %v4648 = vadd.f32 %v4628, %v4646
      %v4649 = vsub.f32 %v4611, %v4647
      %v4650 = vsub.f32 %v4612, %v4648
      %v4651 = vsub.f32 %v4581, %v4649
      %v4652 = vsub.f32 %v4582, %v4650
      %vm4653 = vmxor %vm4561, 1
      %vm4654 = vmxor %vm4562, 1
      %vm4655 = vcmp.le.f32.partialorder %v4576, %v4651
      %vm4656 = vcmp.le.f32.partialorder %v4578, %v4652
      %vm4657 = vmand %vm4653, %vm4655
      %vm4658 = vmand %vm4654, %vm4656
      %vm4659 = vmor %vm4551, %vm4657
      %vm4660 = vmor %vm4552, %vm4658
      %vm4661 = vmxor %vm4515, 1
      %vm4662 = vmxor %vm4516, 1
      %vm4663 = vmand %vm4659, %vm4661
      %vm4664 = vmand %vm4660, %vm4662
      %v4665 = vsel %vm4663, %v4545, %v4513
      %v4666 = vsel %vm4664, %v4546, %v4514
      %vm4667 = vmor %vm4515, %vm4659
      %vm4668 = vmor %vm4516, %vm4660
      %s4669 = scalar_lea.vmem [#allocation7], 256
      %v4670 = vld [vmem:[%s4669] sm:$0xff]
      %v4671 = vld [vmem:[%s4669 + $0x8] sm:$0xff]
      %v4672 = vsub.f32 %v4670, 0.5
      %v4673 = vsub.f32 %v4671, 0.5
      %s4674 = scalar_lea.vmem [#allocation7], 272
      %v4675 = vld [vmem:[%s4674] sm:$0xff]
      %v4676 = vld [vmem:[%s4674 + $0x8] sm:$0xff]
      %v4677 = vand.u32 2147483647, %v4672
      %v4678 = vand.u32 2147483647, %v4673
      %v4679 = vsub.f32 0.5, %v4677
      %v4680 = vsub.f32 0.5, %v4678
      %v4681 = vmax.f32 %v4679, 1e-06
      %v4682 = vmax.f32 %v4680, 1e-06
      %v4683 = vrcp.pop %v4681
      %v4684 = vmul.f32 1.0, %v4683
      %v4685 = vrcp.pop %v4682
      %v4686 = vmul.f32 1.0, %v4685
      %v4687 = vmul.f32 %v3475, %v4684
      %v4688 = vmul.f32 %v3476, %v4686
      %v4689 = vadd.f32 %v4687, %v3436
      %v4690 = vadd.f32 %v4688, %v3437
      %v4691 = vmul.f32 %v4689, %v4672
      %v4692 = vmul.f32 %v4690, %v4673
      %v4693 = vadd.f32 %v4691, %v3414
      %v4694 = vadd.f32 %v4692, %v3415
      %v4695 = vadd.f32 %v4693, 0.43
      %v4696 = vadd.f32 %v4694, 0.43
      %v4697 = vfloor.f32 %v4695
      %v4698 = vfloor.f32 %v4696
      %vm4699 = vcmp.ge.f32.partialorder %v4681, 0.07
      %vm4700 = vcmp.ge.f32.partialorder %v4682, 0.07
      %vm4701 = vcmp.le.f32.partialorder %v4675, %v3456
      %vm4702 = vcmp.le.f32.partialorder %v4676, %v3457
      %vm4703 = vmand %vm4699, %vm4701
      %vm4704 = vmand %vm4700, %vm4702
      %vm4705 = vcmp.lt.f32.partialorder %v4697, 0.0
      %vm4706 = vcmp.lt.f32.partialorder %v4698, 0.0
      %vm4707 = vcmp.lt.f32.partialorder %v4681, 0.013
      %vm4708 = vcmp.lt.f32.partialorder %v4682, 0.013
      %vm4709 = vcmp.gt.f32.partialorder %v4675, %v4681
      %vm4710 = vcmp.gt.f32.partialorder %v4676, %v4682
      %vm4711 = vmand %vm4707, %vm4709
      %vm4712 = vmand %vm4708, %vm4710
      %vm4713 = vmor %vm4705, %vm4711
      %vm4714 = vmor %vm4706, %vm4712
      %v4715 = vmul.f32 %v4675, %v3448
      %v4716 = vmul.f32 %v4676, %v3449
      %v4717 = vmul.f32 %v3440, %v4684
      %v4718 = vmul.f32 %v3441, %v4686
      %v4719 = vmul.f32 %v4717, %v4684
      %v4720 = vmul.f32 %v4718, %v4686
      %v4721 = vadd.f32 %v4719, %v3436
      %v4722 = vadd.f32 %v4720, %v3437
      %v4723 = vrcp.pop %v4721
      %v4724 = vmul.f32 %v4715, %v4723
      %v4725 = vrcp.pop %v4722
      %v4726 = vmul.f32 %v4716, %v4725
      %v4727 = vlog2.pop %v4724
      %v4728 = vmul.f32 %v4727, 0.6931472
      %v4729 = vlog2.pop %v4726
      %v4730 = vmul.f32 %v4729, 0.6931472
      %v4731 = vmul.f32 %v4697, %v3417
      %v4732 = vmul.f32 %v4698, %v3419
      %v4733 = vsub.f32 %v4731, %v3414
      %v4734 = vsub.f32 %v4732, %v3415
      %v4735 = vadd.f32 %v4697, 1.0
      %v4736 = vadd.f32 %v4698, 1.0
      %v4737 = vadd.f32 %v4735, 8.0
      %v4738 = vadd.f32 %v4736, 8.0
      %v4739 = vrcp.pop %v4737
      %v4740 = vmul.f32 1.0, %v4739
      %v4741 = vrcp.pop %v4738
      %v4742 = vmul.f32 1.0, %v4741
      %v4743 = vsub.f32 %v4737, 0.5
      %v4744 = vsub.f32 %v4738, 0.5
      %v4745 = vlog2.pop %v4737
      %v4746 = vmul.f32 %v4745, 0.6931472
      %v4747 = vlog2.pop %v4738
      %v4748 = vmul.f32 %v4747, 0.6931472
      %v4749 = vmul.f32 %v4743, %v4746
      %v4750 = vmul.f32 %v4744, %v4748
      %v4751 = vsub.f32 %v4749, %v4737
      %v4752 = vsub.f32 %v4750, %v4738
      %v4753 = vadd.f32 %v4751, 0.9189385
      %v4754 = vadd.f32 %v4752, 0.9189385
      %v4755 = vmul.f32 %v4740, %v4740
      %v4756 = vmul.f32 %v4742, %v4742
      %v4757 = vmul.f32 %v4755, 0.0027777778
      %v4758 = vmul.f32 %v4756, 0.0027777778
      %v4759 = vsub.f32 0.083333336, %v4757
      %v4760 = vsub.f32 0.083333336, %v4758
      %v4761 = vmul.f32 %v4740, %v4759
      %v4762 = vmul.f32 %v4742, %v4760
      %v4763 = vadd.f32 %v4753, %v4761
      %v4764 = vadd.f32 %v4754, %v4762
      %v4765 = vadd.f32 %v4735, 1.0
      %v4766 = vadd.f32 %v4736, 1.0
      %v4767 = vmul.f32 %v4735, %v4765
      %v4768 = vmul.f32 %v4736, %v4766
      %v4769 = vadd.f32 %v4735, 2.0
      %v4770 = vadd.f32 %v4736, 2.0
      %v4771 = vmul.f32 %v4767, %v4769
      %v4772 = vmul.f32 %v4768, %v4770
      %v4773 = vadd.f32 %v4735, 3.0
      %v4774 = vadd.f32 %v4736, 3.0
      %v4775 = vmul.f32 %v4771, %v4773
      %v4776 = vmul.f32 %v4772, %v4774
      %v4777 = vlog2.pop %v4775
      %v4778 = vmul.f32 %v4777, 0.6931472
      %v4779 = vlog2.pop %v4776
      %v4780 = vmul.f32 %v4779, 0.6931472
      %v4781 = vadd.f32 %v4735, 4.0
      %v4782 = vadd.f32 %v4736, 4.0
      %v4783 = vadd.f32 %v4735, 5.0
      %v4784 = vadd.f32 %v4736, 5.0
      %v4785 = vmul.f32 %v4781, %v4783
      %v4786 = vmul.f32 %v4782, %v4784
      %v4787 = vadd.f32 %v4735, 6.0
      %v4788 = vadd.f32 %v4736, 6.0
      %v4789 = vmul.f32 %v4785, %v4787
      %v4790 = vmul.f32 %v4786, %v4788
      %v4791 = vadd.f32 %v4735, 7.0
      %v4792 = vadd.f32 %v4736, 7.0
      %v4793 = vmul.f32 %v4789, %v4791
      %v4794 = vmul.f32 %v4790, %v4792
      %v4795 = vlog2.pop %v4793
      %v4796 = vmul.f32 %v4795, 0.6931472
      %v4797 = vlog2.pop %v4794
      %v4798 = vmul.f32 %v4797, 0.6931472
      %v4799 = vadd.f32 %v4778, %v4796
      %v4800 = vadd.f32 %v4780, %v4798
      %v4801 = vsub.f32 %v4763, %v4799
      %v4802 = vsub.f32 %v4764, %v4800
      %v4803 = vsub.f32 %v4733, %v4801
      %v4804 = vsub.f32 %v4734, %v4802
      %vm4805 = vmxor %vm4713, 1
      %vm4806 = vmxor %vm4714, 1
      %vm4807 = vcmp.le.f32.partialorder %v4728, %v4803
      %vm4808 = vcmp.le.f32.partialorder %v4730, %v4804
      %vm4809 = vmand %vm4805, %vm4807
      %vm4810 = vmand %vm4806, %vm4808
      %vm4811 = vmor %vm4703, %vm4809
      %vm4812 = vmor %vm4704, %vm4810
      %vm4813 = vmxor %vm4667, 1
      %vm4814 = vmxor %vm4668, 1
      %vm4815 = vmand %vm4811, %vm4813
      %vm4816 = vmand %vm4812, %vm4814
      %v4817 = vsel %vm4815, %v4697, %v4665
      %v4818 = vsel %vm4816, %v4698, %v4666
      %vm4819 = vmor %vm4667, %vm4811
      %vm4820 = vmor %vm4668, %vm4812
      %s4821 = scalar_lea.vmem [#allocation7], 288
      %v4822 = vld [vmem:[%s4821] sm:$0xff]
      %v4823 = vld [vmem:[%s4821 + $0x8] sm:$0xff]
      %v4824 = vsub.f32 %v4822, 0.5
      %v4825 = vsub.f32 %v4823, 0.5
      %s4826 = scalar_lea.vmem [#allocation7], 304
      %v4827 = vld [vmem:[%s4826] sm:$0xff]
      %v4828 = vld [vmem:[%s4826 + $0x8] sm:$0xff]
      %v4829 = vand.u32 2147483647, %v4824
      %v4830 = vand.u32 2147483647, %v4825
      %v4831 = vsub.f32 0.5, %v4829
      %v4832 = vsub.f32 0.5, %v4830
      %v4833 = vmax.f32 %v4831, 1e-06
      %v4834 = vmax.f32 %v4832, 1e-06
      %v4835 = vrcp.pop %v4833
      %v4836 = vmul.f32 1.0, %v4835
      %v4837 = vrcp.pop %v4834
      %v4838 = vmul.f32 1.0, %v4837
      %v4839 = vmul.f32 %v3475, %v4836
      %v4840 = vmul.f32 %v3476, %v4838
      %v4841 = vadd.f32 %v4839, %v3436
      %v4842 = vadd.f32 %v4840, %v3437
      %v4843 = vmul.f32 %v4841, %v4824
      %v4844 = vmul.f32 %v4842, %v4825
      %v4845 = vadd.f32 %v4843, %v3414
      %v4846 = vadd.f32 %v4844, %v3415
      %v4847 = vadd.f32 %v4845, 0.43
      %v4848 = vadd.f32 %v4846, 0.43
      %v4849 = vfloor.f32 %v4847
      %v4850 = vfloor.f32 %v4848
      %vm4851 = vcmp.ge.f32.partialorder %v4833, 0.07
      %vm4852 = vcmp.ge.f32.partialorder %v4834, 0.07
      %vm4853 = vcmp.le.f32.partialorder %v4827, %v3456
      %vm4854 = vcmp.le.f32.partialorder %v4828, %v3457
      %vm4855 = vmand %vm4851, %vm4853
      %vm4856 = vmand %vm4852, %vm4854
      %vm4857 = vcmp.lt.f32.partialorder %v4849, 0.0
      %vm4858 = vcmp.lt.f32.partialorder %v4850, 0.0
      %vm4859 = vcmp.lt.f32.partialorder %v4833, 0.013
      %vm4860 = vcmp.lt.f32.partialorder %v4834, 0.013
      %vm4861 = vcmp.gt.f32.partialorder %v4827, %v4833
      %vm4862 = vcmp.gt.f32.partialorder %v4828, %v4834
      %vm4863 = vmand %vm4859, %vm4861
      %vm4864 = vmand %vm4860, %vm4862
      %vm4865 = vmor %vm4857, %vm4863
      %vm4866 = vmor %vm4858, %vm4864
      %v4867 = vmul.f32 %v4827, %v3448
      %v4868 = vmul.f32 %v4828, %v3449
      %v4869 = vmul.f32 %v3440, %v4836
      %v4870 = vmul.f32 %v3441, %v4838
      %v4871 = vmul.f32 %v4869, %v4836
      %v4872 = vmul.f32 %v4870, %v4838
      %v4873 = vadd.f32 %v4871, %v3436
      %v4874 = vadd.f32 %v4872, %v3437
      %v4875 = vrcp.pop %v4873
      %v4876 = vmul.f32 %v4867, %v4875
      %v4877 = vrcp.pop %v4874
      %v4878 = vmul.f32 %v4868, %v4877
      %v4879 = vlog2.pop %v4876
      %v4880 = vmul.f32 %v4879, 0.6931472
      %v4881 = vlog2.pop %v4878
      %v4882 = vmul.f32 %v4881, 0.6931472
      %v4883 = vmul.f32 %v4849, %v3417
      %v4884 = vmul.f32 %v4850, %v3419
      %v4885 = vsub.f32 %v4883, %v3414
      %v4886 = vsub.f32 %v4884, %v3415
      %v4887 = vadd.f32 %v4849, 1.0
      %v4888 = vadd.f32 %v4850, 1.0
      %v4889 = vadd.f32 %v4887, 8.0
      %v4890 = vadd.f32 %v4888, 8.0
      %v4891 = vrcp.pop %v4889
      %v4892 = vmul.f32 1.0, %v4891
      %v4893 = vrcp.pop %v4890
      %v4894 = vmul.f32 1.0, %v4893
      %v4895 = vsub.f32 %v4889, 0.5
      %v4896 = vsub.f32 %v4890, 0.5
      %v4897 = vlog2.pop %v4889
      %v4898 = vmul.f32 %v4897, 0.6931472
      %v4899 = vlog2.pop %v4890
      %v4900 = vmul.f32 %v4899, 0.6931472
      %v4901 = vmul.f32 %v4895, %v4898
      %v4902 = vmul.f32 %v4896, %v4900
      %v4903 = vsub.f32 %v4901, %v4889
      %v4904 = vsub.f32 %v4902, %v4890
      %v4905 = vadd.f32 %v4903, 0.9189385
      %v4906 = vadd.f32 %v4904, 0.9189385
      %v4907 = vmul.f32 %v4892, %v4892
      %v4908 = vmul.f32 %v4894, %v4894
      %v4909 = vmul.f32 %v4907, 0.0027777778
      %v4910 = vmul.f32 %v4908, 0.0027777778
      %v4911 = vsub.f32 0.083333336, %v4909
      %v4912 = vsub.f32 0.083333336, %v4910
      %v4913 = vmul.f32 %v4892, %v4911
      %v4914 = vmul.f32 %v4894, %v4912
      %v4915 = vadd.f32 %v4905, %v4913
      %v4916 = vadd.f32 %v4906, %v4914
      %v4917 = vadd.f32 %v4887, 1.0
      %v4918 = vadd.f32 %v4888, 1.0
      %v4919 = vmul.f32 %v4887, %v4917
      %v4920 = vmul.f32 %v4888, %v4918
      %v4921 = vadd.f32 %v4887, 2.0
      %v4922 = vadd.f32 %v4888, 2.0
      %v4923 = vmul.f32 %v4919, %v4921
      %v4924 = vmul.f32 %v4920, %v4922
      %v4925 = vadd.f32 %v4887, 3.0
      %v4926 = vadd.f32 %v4888, 3.0
      %v4927 = vmul.f32 %v4923, %v4925
      %v4928 = vmul.f32 %v4924, %v4926
      %v4929 = vlog2.pop %v4927
      %v4930 = vmul.f32 %v4929, 0.6931472
      %v4931 = vlog2.pop %v4928
      %v4932 = vmul.f32 %v4931, 0.6931472
      %v4933 = vadd.f32 %v4887, 4.0
      %v4934 = vadd.f32 %v4888, 4.0
      %v4935 = vadd.f32 %v4887, 5.0
      %v4936 = vadd.f32 %v4888, 5.0
      %v4937 = vmul.f32 %v4933, %v4935
      %v4938 = vmul.f32 %v4934, %v4936
      %v4939 = vadd.f32 %v4887, 6.0
      %v4940 = vadd.f32 %v4888, 6.0
      %v4941 = vmul.f32 %v4937, %v4939
      %v4942 = vmul.f32 %v4938, %v4940
      %v4943 = vadd.f32 %v4887, 7.0
      %v4944 = vadd.f32 %v4888, 7.0
      %v4945 = vmul.f32 %v4941, %v4943
      %v4946 = vmul.f32 %v4942, %v4944
      %v4947 = vlog2.pop %v4945
      %v4948 = vmul.f32 %v4947, 0.6931472
      %v4949 = vlog2.pop %v4946
      %v4950 = vmul.f32 %v4949, 0.6931472
      %v4951 = vadd.f32 %v4930, %v4948
      %v4952 = vadd.f32 %v4932, %v4950
      %v4953 = vsub.f32 %v4915, %v4951
      %v4954 = vsub.f32 %v4916, %v4952
      %v4955 = vsub.f32 %v4885, %v4953
      %v4956 = vsub.f32 %v4886, %v4954
      %vm4957 = vmxor %vm4865, 1
      %vm4958 = vmxor %vm4866, 1
      %vm4959 = vcmp.le.f32.partialorder %v4880, %v4955
      %vm4960 = vcmp.le.f32.partialorder %v4882, %v4956
      %vm4961 = vmand %vm4957, %vm4959
      %vm4962 = vmand %vm4958, %vm4960
      %vm4963 = vmor %vm4855, %vm4961
      %vm4964 = vmor %vm4856, %vm4962
      %vm4965 = vmxor %vm4819, 1
      %vm4966 = vmxor %vm4820, 1
      %vm4967 = vmand %vm4963, %vm4965
      %vm4968 = vmand %vm4964, %vm4966
      %v4969 = vsel %vm4967, %v4849, %v4817
      %v4970 = vsel %vm4968, %v4850, %v4818
      %vm4971 = vmor %vm4819, %vm4963
      %vm4972 = vmor %vm4820, %vm4964
      %s4973 = scalar_lea.vmem [#allocation7], 320
      %v4974 = vld [vmem:[%s4973] sm:$0xff]
      %v4975 = vld [vmem:[%s4973 + $0x8] sm:$0xff]
      %v4976 = vsub.f32 %v4974, 0.5
      %v4977 = vsub.f32 %v4975, 0.5
      %s4978 = scalar_lea.vmem [#allocation7], 336
      %v4979 = vld [vmem:[%s4978] sm:$0xff]
      %v4980 = vld [vmem:[%s4978 + $0x8] sm:$0xff]
      %v4981 = vand.u32 2147483647, %v4976
      %v4982 = vand.u32 2147483647, %v4977
      %v4983 = vsub.f32 0.5, %v4981
      %v4984 = vsub.f32 0.5, %v4982
      %v4985 = vmax.f32 %v4983, 1e-06
      %v4986 = vmax.f32 %v4984, 1e-06
      %v4987 = vrcp.pop %v4985
      %v4988 = vmul.f32 1.0, %v4987
      %v4989 = vrcp.pop %v4986
      %v4990 = vmul.f32 1.0, %v4989
      %v4991 = vmul.f32 %v3475, %v4988
      %v4992 = vmul.f32 %v3476, %v4990
      %v4993 = vadd.f32 %v4991, %v3436
      %v4994 = vadd.f32 %v4992, %v3437
      %v4995 = vmul.f32 %v4993, %v4976
      %v4996 = vmul.f32 %v4994, %v4977
      %v4997 = vadd.f32 %v4995, %v3414
      %v4998 = vadd.f32 %v4996, %v3415
      %v4999 = vadd.f32 %v4997, 0.43
      %v5000 = vadd.f32 %v4998, 0.43
      %v5001 = vfloor.f32 %v4999
      %v5002 = vfloor.f32 %v5000
      %vm5003 = vcmp.ge.f32.partialorder %v4985, 0.07
      %vm5004 = vcmp.ge.f32.partialorder %v4986, 0.07
      %vm5005 = vcmp.le.f32.partialorder %v4979, %v3456
      %vm5006 = vcmp.le.f32.partialorder %v4980, %v3457
      %vm5007 = vmand %vm5003, %vm5005
      %vm5008 = vmand %vm5004, %vm5006
      %vm5009 = vcmp.lt.f32.partialorder %v5001, 0.0
      %vm5010 = vcmp.lt.f32.partialorder %v5002, 0.0
      %vm5011 = vcmp.lt.f32.partialorder %v4985, 0.013
      %vm5012 = vcmp.lt.f32.partialorder %v4986, 0.013
      %vm5013 = vcmp.gt.f32.partialorder %v4979, %v4985
      %vm5014 = vcmp.gt.f32.partialorder %v4980, %v4986
      %vm5015 = vmand %vm5011, %vm5013
      %vm5016 = vmand %vm5012, %vm5014
      %vm5017 = vmor %vm5009, %vm5015
      %vm5018 = vmor %vm5010, %vm5016
      %v5019 = vmul.f32 %v4979, %v3448
      %v5020 = vmul.f32 %v4980, %v3449
      %v5021 = vmul.f32 %v3440, %v4988
      %v5022 = vmul.f32 %v3441, %v4990
      %v5023 = vmul.f32 %v5021, %v4988
      %v5024 = vmul.f32 %v5022, %v4990
      %v5025 = vadd.f32 %v5023, %v3436
      %v5026 = vadd.f32 %v5024, %v3437
      %v5027 = vrcp.pop %v5025
      %v5028 = vmul.f32 %v5019, %v5027
      %v5029 = vrcp.pop %v5026
      %v5030 = vmul.f32 %v5020, %v5029
      %v5031 = vlog2.pop %v5028
      %v5032 = vmul.f32 %v5031, 0.6931472
      %v5033 = vlog2.pop %v5030
      %v5034 = vmul.f32 %v5033, 0.6931472
      %v5035 = vmul.f32 %v5001, %v3417
      %v5036 = vmul.f32 %v5002, %v3419
      %v5037 = vsub.f32 %v5035, %v3414
      %v5038 = vsub.f32 %v5036, %v3415
      %v5039 = vadd.f32 %v5001, 1.0
      %v5040 = vadd.f32 %v5002, 1.0
      %v5041 = vadd.f32 %v5039, 8.0
      %v5042 = vadd.f32 %v5040, 8.0
      %v5043 = vrcp.pop %v5041
      %v5044 = vmul.f32 1.0, %v5043
      %v5045 = vrcp.pop %v5042
      %v5046 = vmul.f32 1.0, %v5045
      %v5047 = vsub.f32 %v5041, 0.5
      %v5048 = vsub.f32 %v5042, 0.5
      %v5049 = vlog2.pop %v5041
      %v5050 = vmul.f32 %v5049, 0.6931472
      %v5051 = vlog2.pop %v5042
      %v5052 = vmul.f32 %v5051, 0.6931472
      %v5053 = vmul.f32 %v5047, %v5050
      %v5054 = vmul.f32 %v5048, %v5052
      %v5055 = vsub.f32 %v5053, %v5041
      %v5056 = vsub.f32 %v5054, %v5042
      %v5057 = vadd.f32 %v5055, 0.9189385
      %v5058 = vadd.f32 %v5056, 0.9189385
      %v5059 = vmul.f32 %v5044, %v5044
      %v5060 = vmul.f32 %v5046, %v5046
      %v5061 = vmul.f32 %v5059, 0.0027777778
      %v5062 = vmul.f32 %v5060, 0.0027777778
      %v5063 = vsub.f32 0.083333336, %v5061
      %v5064 = vsub.f32 0.083333336, %v5062
      %v5065 = vmul.f32 %v5044, %v5063
      %v5066 = vmul.f32 %v5046, %v5064
      %v5067 = vadd.f32 %v5057, %v5065
      %v5068 = vadd.f32 %v5058, %v5066
      %v5069 = vadd.f32 %v5039, 1.0
      %v5070 = vadd.f32 %v5040, 1.0
      %v5071 = vmul.f32 %v5039, %v5069
      %v5072 = vmul.f32 %v5040, %v5070
      %v5073 = vadd.f32 %v5039, 2.0
      %v5074 = vadd.f32 %v5040, 2.0
      %v5075 = vmul.f32 %v5071, %v5073
      %v5076 = vmul.f32 %v5072, %v5074
      %v5077 = vadd.f32 %v5039, 3.0
      %v5078 = vadd.f32 %v5040, 3.0
      %v5079 = vmul.f32 %v5075, %v5077
      %v5080 = vmul.f32 %v5076, %v5078
      %v5081 = vlog2.pop %v5079
      %v5082 = vmul.f32 %v5081, 0.6931472
      %v5083 = vlog2.pop %v5080
      %v5084 = vmul.f32 %v5083, 0.6931472
      %v5085 = vadd.f32 %v5039, 4.0
      %v5086 = vadd.f32 %v5040, 4.0
      %v5087 = vadd.f32 %v5039, 5.0
      %v5088 = vadd.f32 %v5040, 5.0
      %v5089 = vmul.f32 %v5085, %v5087
      %v5090 = vmul.f32 %v5086, %v5088
      %v5091 = vadd.f32 %v5039, 6.0
      %v5092 = vadd.f32 %v5040, 6.0
      %v5093 = vmul.f32 %v5089, %v5091
      %v5094 = vmul.f32 %v5090, %v5092
      %v5095 = vadd.f32 %v5039, 7.0
      %v5096 = vadd.f32 %v5040, 7.0
      %v5097 = vmul.f32 %v5093, %v5095
      %v5098 = vmul.f32 %v5094, %v5096
      %v5099 = vlog2.pop %v5097
      %v5100 = vmul.f32 %v5099, 0.6931472
      %v5101 = vlog2.pop %v5098
      %v5102 = vmul.f32 %v5101, 0.6931472
      %v5103 = vadd.f32 %v5082, %v5100
      %v5104 = vadd.f32 %v5084, %v5102
      %v5105 = vsub.f32 %v5067, %v5103
      %v5106 = vsub.f32 %v5068, %v5104
      %v5107 = vsub.f32 %v5037, %v5105
      %v5108 = vsub.f32 %v5038, %v5106
      %vm5109 = vmxor %vm5017, 1
      %vm5110 = vmxor %vm5018, 1
      %vm5111 = vcmp.le.f32.partialorder %v5032, %v5107
      %vm5112 = vcmp.le.f32.partialorder %v5034, %v5108
      %vm5113 = vmand %vm5109, %vm5111
      %vm5114 = vmand %vm5110, %vm5112
      %vm5115 = vmor %vm5007, %vm5113
      %vm5116 = vmor %vm5008, %vm5114
      %vm5117 = vmxor %vm4971, 1
      %vm5118 = vmxor %vm4972, 1
      %vm5119 = vmand %vm5115, %vm5117
      %vm5120 = vmand %vm5116, %vm5118
      %v5121 = vsel %vm5119, %v5001, %v4969
      %v5122 = vsel %vm5120, %v5002, %v4970
      %vm5123 = vmor %vm4971, %vm5115
      %vm5124 = vmor %vm4972, %vm5116
      %s5125 = scalar_lea.vmem [#allocation7], 352
      %v5126 = vld [vmem:[%s5125] sm:$0xff]
      %v5127 = vld [vmem:[%s5125 + $0x8] sm:$0xff]
      %v5128 = vsub.f32 %v5126, 0.5
      %v5129 = vsub.f32 %v5127, 0.5
      %s5130 = scalar_lea.vmem [#allocation7], 368
      %v5131 = vld [vmem:[%s5130] sm:$0xff]
      %v5132 = vld [vmem:[%s5130 + $0x8] sm:$0xff]
      %v5133 = vand.u32 2147483647, %v5128
      %v5134 = vand.u32 2147483647, %v5129
      %v5135 = vsub.f32 0.5, %v5133
      %v5136 = vsub.f32 0.5, %v5134
      %v5137 = vmax.f32 %v5135, 1e-06
      %v5138 = vmax.f32 %v5136, 1e-06
      %v5139 = vrcp.pop %v5137
      %v5140 = vmul.f32 1.0, %v5139
      %v5141 = vrcp.pop %v5138
      %v5142 = vmul.f32 1.0, %v5141
      %v5143 = vmul.f32 %v3475, %v5140
      %v5144 = vmul.f32 %v3476, %v5142
      %v5145 = vadd.f32 %v5143, %v3436
      %v5146 = vadd.f32 %v5144, %v3437
      %v5147 = vmul.f32 %v5145, %v5128
      %v5148 = vmul.f32 %v5146, %v5129
      %v5149 = vadd.f32 %v5147, %v3414
      %v5150 = vadd.f32 %v5148, %v3415
      %v5151 = vadd.f32 %v5149, 0.43
      %v5152 = vadd.f32 %v5150, 0.43
      %v5153 = vfloor.f32 %v5151
      %v5154 = vfloor.f32 %v5152
      %vm5155 = vcmp.ge.f32.partialorder %v5137, 0.07
      %vm5156 = vcmp.ge.f32.partialorder %v5138, 0.07
      %vm5157 = vcmp.le.f32.partialorder %v5131, %v3456
      %vm5158 = vcmp.le.f32.partialorder %v5132, %v3457
      %vm5159 = vmand %vm5155, %vm5157
      %vm5160 = vmand %vm5156, %vm5158
      %vm5161 = vcmp.lt.f32.partialorder %v5153, 0.0
      %vm5162 = vcmp.lt.f32.partialorder %v5154, 0.0
      %vm5163 = vcmp.lt.f32.partialorder %v5137, 0.013
      %vm5164 = vcmp.lt.f32.partialorder %v5138, 0.013
      %vm5165 = vcmp.gt.f32.partialorder %v5131, %v5137
      %vm5166 = vcmp.gt.f32.partialorder %v5132, %v5138
      %vm5167 = vmand %vm5163, %vm5165
      %vm5168 = vmand %vm5164, %vm5166
      %vm5169 = vmor %vm5161, %vm5167
      %vm5170 = vmor %vm5162, %vm5168
      %v5171 = vmul.f32 %v5131, %v3448
      %v5172 = vmul.f32 %v5132, %v3449
      %v5173 = vmul.f32 %v3440, %v5140
      %v5174 = vmul.f32 %v3441, %v5142
      %v5175 = vmul.f32 %v5173, %v5140
      %v5176 = vmul.f32 %v5174, %v5142
      %v5177 = vadd.f32 %v5175, %v3436
      %v5178 = vadd.f32 %v5176, %v3437
      %v5179 = vrcp.pop %v5177
      %v5180 = vmul.f32 %v5171, %v5179
      %v5181 = vrcp.pop %v5178
      %v5182 = vmul.f32 %v5172, %v5181
      %v5183 = vlog2.pop %v5180
      %v5184 = vmul.f32 %v5183, 0.6931472
      %v5185 = vlog2.pop %v5182
      %v5186 = vmul.f32 %v5185, 0.6931472
      %v5187 = vmul.f32 %v5153, %v3417
      %v5188 = vmul.f32 %v5154, %v3419
      %v5189 = vsub.f32 %v5187, %v3414
      %v5190 = vsub.f32 %v5188, %v3415
      %v5191 = vadd.f32 %v5153, 1.0
      %v5192 = vadd.f32 %v5154, 1.0
      %v5193 = vadd.f32 %v5191, 8.0
      %v5194 = vadd.f32 %v5192, 8.0
      %v5195 = vrcp.pop %v5193
      %v5196 = vmul.f32 1.0, %v5195
      %v5197 = vrcp.pop %v5194
      %v5198 = vmul.f32 1.0, %v5197
      %v5199 = vsub.f32 %v5193, 0.5
      %v5200 = vsub.f32 %v5194, 0.5
      %v5201 = vlog2.pop %v5193
      %v5202 = vmul.f32 %v5201, 0.6931472
      %v5203 = vlog2.pop %v5194
      %v5204 = vmul.f32 %v5203, 0.6931472
      %v5205 = vmul.f32 %v5199, %v5202
      %v5206 = vmul.f32 %v5200, %v5204
      %v5207 = vsub.f32 %v5205, %v5193
      %v5208 = vsub.f32 %v5206, %v5194
      %v5209 = vadd.f32 %v5207, 0.9189385
      %v5210 = vadd.f32 %v5208, 0.9189385
      %v5211 = vmul.f32 %v5196, %v5196
      %v5212 = vmul.f32 %v5198, %v5198
      %v5213 = vmul.f32 %v5211, 0.0027777778
      %v5214 = vmul.f32 %v5212, 0.0027777778
      %v5215 = vsub.f32 0.083333336, %v5213
      %v5216 = vsub.f32 0.083333336, %v5214
      %v5217 = vmul.f32 %v5196, %v5215
      %v5218 = vmul.f32 %v5198, %v5216
      %v5219 = vadd.f32 %v5209, %v5217
      %v5220 = vadd.f32 %v5210, %v5218
      %v5221 = vadd.f32 %v5191, 1.0
      %v5222 = vadd.f32 %v5192, 1.0
      %v5223 = vmul.f32 %v5191, %v5221
      %v5224 = vmul.f32 %v5192, %v5222
      %v5225 = vadd.f32 %v5191, 2.0
      %v5226 = vadd.f32 %v5192, 2.0
      %v5227 = vmul.f32 %v5223, %v5225
      %v5228 = vmul.f32 %v5224, %v5226
      %v5229 = vadd.f32 %v5191, 3.0
      %v5230 = vadd.f32 %v5192, 3.0
      %v5231 = vmul.f32 %v5227, %v5229
      %v5232 = vmul.f32 %v5228, %v5230
      %v5233 = vlog2.pop %v5231
      %v5234 = vmul.f32 %v5233, 0.6931472
      %v5235 = vlog2.pop %v5232
      %v5236 = vmul.f32 %v5235, 0.6931472
      %v5237 = vadd.f32 %v5191, 4.0
      %v5238 = vadd.f32 %v5192, 4.0
      %v5239 = vadd.f32 %v5191, 5.0
      %v5240 = vadd.f32 %v5192, 5.0
      %v5241 = vmul.f32 %v5237, %v5239
      %v5242 = vmul.f32 %v5238, %v5240
      %v5243 = vadd.f32 %v5191, 6.0
      %v5244 = vadd.f32 %v5192, 6.0
      %v5245 = vmul.f32 %v5241, %v5243
      %v5246 = vmul.f32 %v5242, %v5244
      %v5247 = vadd.f32 %v5191, 7.0
      %v5248 = vadd.f32 %v5192, 7.0
      %v5249 = vmul.f32 %v5245, %v5247
      %v5250 = vmul.f32 %v5246, %v5248
      %v5251 = vlog2.pop %v5249
      %v5252 = vmul.f32 %v5251, 0.6931472
      %v5253 = vlog2.pop %v5250
      %v5254 = vmul.f32 %v5253, 0.6931472
      %v5255 = vadd.f32 %v5234, %v5252
      %v5256 = vadd.f32 %v5236, %v5254
      %v5257 = vsub.f32 %v5219, %v5255
      %v5258 = vsub.f32 %v5220, %v5256
      %v5259 = vsub.f32 %v5189, %v5257
      %v5260 = vsub.f32 %v5190, %v5258
      %vm5261 = vmxor %vm5169, 1
      %vm5262 = vmxor %vm5170, 1
      %vm5263 = vcmp.le.f32.partialorder %v5184, %v5259
      %vm5264 = vcmp.le.f32.partialorder %v5186, %v5260
      %vm5265 = vmand %vm5261, %vm5263
      %vm5266 = vmand %vm5262, %vm5264
      %vm5267 = vmor %vm5159, %vm5265
      %vm5268 = vmor %vm5160, %vm5266
      %vm5269 = vmxor %vm5123, 1
      %vm5270 = vmxor %vm5124, 1
      %vm5271 = vmand %vm5267, %vm5269
      %vm5272 = vmand %vm5268, %vm5270
      %v5273 = vsel %vm5271, %v5153, %v5121
      %v5274 = vsel %vm5272, %v5154, %v5122
      %vm5275 = vcmp.lt.f32.partialorder %v195, 10.0
      %vm5276 = vcmp.lt.f32.partialorder %v196, 10.0
      %v5277 = vsel %vm5275, %v3412, %v5273
      %v5278 = vsel %vm5276, %v3413, %v5274
      %5279 = vst [vmem:[#allocation8] sm:$0xff] %v5277
      %5280 = vst [vmem:[#allocation8 + $0x8] sm:$0xff] %v5278
    $region37: #{tpu_custom_call.1} parent=1 // pred_fallthru
      _
    // Predicated region
    $region38: #{tpu_custom_call.1} parent=1 // pred_check
      _
    $region39: #{tpu_custom_call.1} parent=1 // pred_check_branch
      %5282 = sbr.rel (0) target = $region41
    $region40: #{tpu_custom_call.1} parent=1 // pred_region
      %s5284 = ssub.s32 256, 256
      %5285 = vsyncadd [#allocation4], %s5284
      %s5287 = sshll.u32 [#allocation8], 4
      %s5288 = int_to_ptr.vmem [resolvable:$true] %s5287
      %5290 = dma.vmem_to_hbm [thread:$0]  %s5288, 256, %s3, [#allocation4]
    $region41: #{tpu_custom_call.1} parent=1 // pred_fallthru
      _
    // Predicated region
    $region42: #{tpu_custom_call.1} parent=1 // pred_check
      _
    $region43: #{tpu_custom_call.1} parent=1 // pred_check_branch
      %5292 = sbr.rel (0) target = $region45
    $region44: #{tpu_custom_call.1} parent=1 // pred_region
      %5293 = dma.done [#allocation4], 256
    $region45: #{tpu_custom_call.1} parent=1 // pred_fallthru
      _
    %5294 = vsyncpa [#allocation3], 1
    %5295 = vsyncpa [#allocation6], 1
    %5296 = vsyncpa [#allocation4], 1

</llo_original>
